<compile_context>
chip_gen: v7x
topology: tpu7x:2x2x1
jax: 0.10.0
libtpu: 0.0.40
codegen_flags: <defaults>
</compile_context>

<pallas_src>
import functools

import jax
import jax.numpy as jnp
from jax.experimental import pallas as pl
from jax.experimental.pallas import tpu as pltpu


# Storage dtype for inter-kernel activations (f_pc, gathered neighbor features,
# per-block outputs).  bfloat16 halves HBM traffic of this memory-bound model;
# kernels upcast to f32 on load and accumulate in f32.  Flip to jnp.float32 if
# exact f32 parity with the PyTorch reference is required.
STORAGE_DTYPE = jnp.bfloat16
_GEO_DTYPE = jnp.float32   # xyz / relative distances kept in f32 for accuracy


# ------------------------------ small helpers -------------------------------

def _pad8(r):
    return -(-int(r) // 8) * 8


def _pick_tile_n(n, tile_n, d1):
    """Lane-tile size: large enough to sit near the HBM roofline (>=512 lanes
    where possible), small enough that the unrolled k-neighbor loop's (d1, tn)
    f32 accumulators stay well inside the 64-entry vreg file (d1*tn <= 16K)."""
    cap = max(256, (16384 // max(int(d1), 8)) // 128 * 128)
    tn = min(int(n), int(tile_n), cap)
    if tn < n:
        tn = max(128, (tn // 128) * 128)
    return tn


def _mosaic_params(vmem_tile_bytes):
    # Default scoped VMEM: 16 MiB (v5e) / 32 MiB (v6e, v7x); physical: 128 MiB
    # (v5e/v6e) / 64 MiB per core (v7x).  Ask for enough to double-buffer the
    # tiles plus headroom, never more than v7x physically has.
    limit = int(min(64 * 2**20, max(32 * 2**20, 3 * int(vmem_tile_bytes) + 8 * 2**20)))
    return pltpu.CompilerParams(
        dimension_semantics=("parallel", "parallel"),
        vmem_limit_bytes=limit)


# ----------------------------- pointwise kernel -----------------------------

def _pointwise_cf_kernel(x_ref, w_ref, b_ref, o_ref):
    # x_ref: (1, Cin, TN)  w_ref: (Cout, Cin)  b_ref: (Cout, 1)  o_ref: (1, Cout, TN)
    x = x_ref[0].astype(jnp.float32)
    y = jnp.dot(w_ref[...], x, preferred_element_type=jnp.float32) + b_ref[...]
    o_ref[0] = jnp.maximum(y, 0.0).astype(o_ref.dtype)


def pointwise_conv_bn_relu_cf(x, w, b, *, tile_n=1024, out_dtype=None):
    """ReLU(w @ x + b) over channels, channels-first, lane-dense output.
    x: (B, Cin, N)   w: (Cout, Cin)   b: (Cout,)   ->   (B, Cout, N)"""
    B, cin, n = x.shape
    cout = w.shape[0]
    out_dtype = out_dtype or x.dtype
    tn = min(n, tile_n)
    if tn < n:
        tn = max(128, (tn // 128) * 128)
    nt = pl.cdiv(n, tn)

    in_b = jnp.dtype(x.dtype).itemsize
    out_b = jnp.dtype(out_dtype).itemsize
    tile_bytes = tn * (_pad8(cin) * in_b + _pad8(cout) * out_b)
    flops = 2 * B * n * cin * cout
    bytes_accessed = int(B * n * (cin * in_b + cout * out_b) + cout * (cin + 1) * 4)

    return pl.pallas_call(
        _pointwise_cf_kernel,
        out_shape=jax.ShapeDtypeStruct((B, cout, n), out_dtype),
        grid=(B, nt),
        in_specs=[
            pl.BlockSpec((1, cin, tn), lambda bi, ni: (bi, 0, ni)),
            pl.BlockSpec((cout, cin), lambda bi, ni: (0, 0)),
            pl.BlockSpec((cout, 1), lambda bi, ni: (0, 0)),
        ],
        out_specs=pl.BlockSpec((1, cout, tn), lambda bi, ni: (bi, 0, ni)),
        compiler_params=_mosaic_params(tile_bytes),
        cost_estimate=pl.CostEstimate(flops=flops, transcendentals=0,
                                      bytes_accessed=bytes_accessed),
    )(x, w.astype(jnp.float32), b.reshape(cout, 1).astype(jnp.float32))


# ------------------------------- fused kernel -------------------------------

def _block_fused_kernel(*refs, k, d1, d_in, d_out, d1n):
    has_next = d1n > 0
    if has_next:
        (geo_ref, fpcg_ref, feat_ref, w1p_ref, w3s_ref, w4s_ref, wss_ref,
         w2n_ref, fcw_ref, fcb_ref, o_ref, onext_ref) = refs
    else:
        (geo_ref, fpcg_ref, feat_ref, w1p_ref, w3s_ref, w4s_ref, wss_ref,
         fcw_ref, fcb_ref, o_ref) = refs

    # Packed geometry rows: [xyz(3) | nbr_0(3) | ... | nbr_{k-1}(3)].
    gx = geo_ref[0, 0:1, :].astype(jnp.float32)            # (1, TN)
    gy = geo_ref[0, 1:2, :].astype(jnp.float32)
    gz = geo_ref[0, 2:3, :].astype(jnp.float32)

    # mlp1 weight columns, algebraically folded over geo = [dist|rel|tile|nbr]
    # with rel = tile - nbr:  W1 @ geo = w1d*dist + w1te@tile + w1ne@nbr + b1.
    w1d = w1p_ref[:, 0:1]
    w1tx, w1ty, w1tz = w1p_ref[:, 1:2], w1p_ref[:, 2:3], w1p_ref[:, 3:4]
    w1nx, w1ny, w1nz = w1p_ref[:, 4:5], w1p_ref[:, 5:6], w1p_ref[:, 6:7]
    b1 = w1p_ref[:, 7:8]
    w3p = w3s_ref[:, 0:d1]                                 # applies to f_pc
    w3x = w3s_ref[:, d1:2 * d1]                            # applies to f_xyz
    b3 = w3s_ref[:, 2 * d1:2 * d1 + 1]

    # The xyz-tile part of mlp1 is identical for every neighbor -> hoist.
    # Done as VPU broadcast-FMAs (no padded K=3 MXU matmul).
    base = w1tx * gx + w1ty * gy + w1tz * gz + b1          # (d1, TN)

    f_max = None
    s_acc = None
    for j in range(k):                                     # k is small & static
        r = 3 + 3 * j
        nx = geo_ref[0, r:r + 1, :].astype(jnp.float32)    # (1, TN)
        ny = geo_ref[0, r + 1:r + 2, :].astype(jnp.float32)
        nz = geo_ref[0, r + 2:r + 3, :].astype(jnp.float32)
        rx, ry, rz = gx - nx, gy - ny, gz - nz
        dist = jnp.sqrt(rx * rx + ry * ry + rz * rz)       # (1, TN)
        f_xyz = jnp.maximum(
            base + w1d * dist + w1nx * nx + w1ny * ny + w1nz * nz, 0.0)   # (d1, TN)
        f_pc = fpcg_ref[0, j].astype(jnp.float32)          # (d1, TN)
        # mlp3 over concat([f_pc, f_xyz], dim=1); the weight is split so no
        # (2*d1, TN) concat is ever built.
        h = jnp.maximum(
            jnp.dot(w3p, f_pc, preferred_element_type=jnp.float32)
            + jnp.dot(w3x, f_xyz, preferred_element_type=jnp.float32)
            + b3, 0.0)                                     # (d1, TN)
        contrib = fcw_ref[j] * h                           # nn.Linear(k, 1) over neighbors
        if j == 0:
            f_max, s_acc = h, contrib
        else:
            f_max = jnp.maximum(f_max, h)
            s_acc = s_acc + contrib

    # Attentive pooling exactly as the reference: fc over neighbors, softmax
    # over the CHANNEL axis (dim=-1 of the (B, N, d) score tensor), max over
    # neighbors, residual re-weighting.
    s = s_acc + fcb_ref[0]
    mx = jnp.max(s, axis=0, keepdims=True)
    e = jnp.exp(s - mx)
    inv = 1.0 / jnp.sum(e, axis=0, keepdims=True)          # exact reciprocal
    f_sum = f_max * (1.0 + e * inv)                        # (d1, TN)

    # mlp4 + shortcut (each branch conv+BN+ReLU), then the residual add.
    feat = feat_ref[0].astype(jnp.float32)                 # (d_in, TN)
    w4, b4 = w4s_ref[:, 0:d1], w4s_ref[:, d1:d1 + 1]
    ws, bs = wss_ref[:, 0:d_in], wss_ref[:, d_in:d_in + 1]
    y4 = jnp.maximum(jnp.dot(w4, f_sum, preferred_element_type=jnp.float32) + b4, 0.0)
    ysc = jnp.maximum(jnp.dot(ws, feat, preferred_element_type=jnp.float32) + bs, 0.0)
    out = y4 + ysc                                         # (d_out, TN)
    o_ref[0] = out.astype(o_ref.dtype)

    if has_next:
        # Next block's mlp2 fused into the epilogue: `out` is still resident in
        # vregs, so this saves one pallas_call and one HBM re-read of the
        # (B, d_out, N) activation.
        w2n, b2n = w2n_ref[:, 0:d_out], w2n_ref[:, d_out:d_out + 1]
        nxt = jnp.maximum(
            jnp.dot(w2n, out, preferred_element_type=jnp.float32) + b2n, 0.0)
        onext_ref[0] = nxt.astype(onext_ref.dtype)


def block_attention_fused(geo, f_pc_g, feature_cf, p, *, next_mlp2=None,
                          tile_n=1024, out_dtype=None, next_dtype=None):
    """Fused rel-pos-encoding + mlp1 + mlp3 + attention + mlp4 + shortcut
    (+ optional next-block mlp2 epilogue output)."""
    B, R, N = geo.shape
    k = f_pc_g.shape[1]
    d1 = f_pc_g.shape[2]
    d_in = feature_cf.shape[1]
    d_out = p["w4"].shape[0]
    out_dtype = out_dtype or feature_cf.dtype
    tn = _pick_tile_n(N, tile_n, d1)
    nt = pl.cdiv(N, tn)

    # --- packed weight slabs (fewer DMA streams / VMEM tiles) ---------------
    w1, b1 = p["w1"], p["b1"]                              # (d1, 10), (d1,)
    w1p = jnp.concatenate(
        [w1[:, 0:1],                       # dist
         w1[:, 4:7] + w1[:, 1:4],          # tile  (rel = tile - nbr folded)
         w1[:, 7:10] - w1[:, 1:4],         # nbr
         b1.reshape(d1, 1)], axis=1).astype(jnp.float32)               # (d1, 8)
    w3s = jnp.concatenate([p["w3"], p["b3"].reshape(d1, 1)],
                          axis=1).astype(jnp.float32)                  # (d1, 2*d1+1)
    w4s = jnp.concatenate([p["w4"], p["b4"].reshape(d_out, 1)],
                          axis=1).astype(jnp.float32)                  # (d_out, d1+1)
    wss = jnp.concatenate([p["ws"], p["bs"].reshape(d_out, 1)],
                          axis=1).astype(jnp.float32)                  # (d_out, d_in+1)

    weight_args = [w1p, w3s, w4s, wss]
    weight_specs = [
        pl.BlockSpec((d1, 8), lambda b, n: (0, 0)),
        pl.BlockSpec((d1, 2 * d1 + 1), lambda b, n: (0, 0)),
        pl.BlockSpec((d_out, d1 + 1), lambda b, n: (0, 0)),
        pl.BlockSpec((d_out, d_in + 1), lambda b, n: (0, 0)),
    ]

    out_shapes = [jax.ShapeDtypeStruct((B, d_out, N), out_dtype)]
    out_specs = [pl.BlockSpec((1, d_out, tn), lambda b, n: (b, 0, n))]
    d1n = 0
    if next_mlp2 is not None:
        w2n, b2n = next_mlp2
        d1n = w2n.shape[0]
        next_dtype = next_dtype or out_dtype
        w2ns = jnp.concatenate([w2n, b2n.reshape(d1n, 1)],
                               axis=1).astype(jnp.float32)             # (d1n, d_out+1)
        weight_args.append(w2ns)
        weight_specs.append(pl.BlockSpec((d1n, d_out + 1), lambda b, n: (0, 0)))
        out_shapes.append(jax.ShapeDtypeStruct((B, d1n, N), next_dtype))
        out_specs.append(pl.BlockSpec((1, d1n, tn), lambda b, n: (b, 0, n)))

    kernel = functools.partial(_block_fused_kernel, k=k, d1=d1, d_in=d_in,
                               d_out=d_out, d1n=d1n)

    geo_b = jnp.dtype(geo.dtype).itemsize
    pcg_b = jnp.dtype(f_pc_g.dtype).itemsize
    ft_b = jnp.dtype(feature_cf.dtype).itemsize
    out_b = jnp.dtype(out_dtype).itemsize
    nxt_b = jnp.dtype(next_dtype).itemsize if d1n else 0
    tile_bytes = tn * (_pad8(R) * geo_b + k * _pad8(d1) * pcg_b
                       + _pad8(d_in) * ft_b + _pad8(d_out) * out_b
                       + _pad8(d1n) * nxt_b)

    flops = int(B * N * (k * (4 * d1 * d1 + 18 * d1)
                         + 2 * d_out * (d1 + d_in) + 2 * d1n * d_out))
    transcendentals = int(B * N * (k + d1 + 1))
    bytes_accessed = int(B * N * (R * geo_b + k * d1 * pcg_b + d_in * ft_b
                                  + d_out * out_b + d1n * nxt_b))

    res = pl.pallas_call(
        kernel,
        out_shape=out_shapes,
        grid=(B, nt),   # both axes "parallel": megacore-shardable on v7x
        in_specs=[
            pl.BlockSpec((1, R, tn), lambda b, n: (b, 0, n)),
            pl.BlockSpec((1, k, d1, tn), lambda b, n: (b, 0, 0, n)),
            pl.BlockSpec((1, d_in, tn), lambda b, n: (b, 0, n)),
            *weight_specs,
            pl.BlockSpec(memory_space=pltpu.MemorySpace.SMEM),   # fc_w (k,)
            pl.BlockSpec(memory_space=pltpu.MemorySpace.SMEM),   # fc_b (1,)
        ],
        out_specs=out_specs,
        compiler_params=_mosaic_params(tile_bytes),
        cost_estimate=pl.CostEstimate(flops=flops, transcendentals=transcendentals,
                                      bytes_accessed=bytes_accessed),
    )(geo, f_pc_g, feature_cf, *weight_args, p["fc_w"], p["fc_b"])

    if d1n:
        return res[0], res[1]
    return res[0]


# -------------------------------- JAX glue ----------------------------------

def gather_neighbour_cf(pc_cf, neigh_idx):
    """pc_cf: (B, C, N), neigh_idx: (B, N, k) -> (B, k, C, N) with
    out[b, j, c, n] = pc_cf[b, c, neigh_idx[b, n, j]]  (torch.gather semantics).
    Single fused XLA gather; no (B,k,C,N) index/source broadcast is materialized."""
    idx = jnp.transpose(neigh_idx, (0, 2, 1))                       # (B, k, N)
    return jnp.take_along_axis(pc_cf[:, None, :, :], idx[:, :, None, :], axis=3)


@functools.partial(jax.jit, static_argnames=("tile_n",))
def lfa_forward(params, feature_nchw, xyz, neigh_idx, *, tile_n=1024):
    # feature_nchw: (B, d_in, N, 1) PyTorch NCHW; xyz: (B, N, 3); idx: (B, N, k)
    p1, p2 = params["block1"], params["block2"]
    feature_cf = feature_nchw[..., 0]                               # (B, d_in, N)
    xyz_cf = jnp.transpose(xyz, (0, 2, 1)).astype(_GEO_DTYPE)       # (B, 3, N)
    B, _, N = xyz_cf.shape
    k = neigh_idx.shape[-1]

    # Packed geometry slab shared by both blocks: [xyz | nbr_0 | ... | nbr_{k-1}].
    nbr = gather_neighbour_cf(xyz_cf, neigh_idx)                    # (B, k, 3, N)
    geo = jnp.concatenate([xyz_cf, nbr.reshape(B, 3 * k, N)], axis=1)

    # ---- Block 1 ----
    f_pc1 = pointwise_conv_bn_relu_cf(feature_cf, p1["w2"], p1["b2"],
                                      tile_n=tile_n, out_dtype=STORAGE_DTYPE)
    f_pc1_g = gather_neighbour_cf(f_pc1, neigh_idx)                 # (B, k, d1, N)
    out1, f_pc2 = block_attention_fused(
        geo, f_pc1_g, feature_cf, p1, next_mlp2=(p2["w2"], p2["b2"]),
        tile_n=tile_n, out_dtype=STORAGE_DTYPE, next_dtype=STORAGE_DTYPE)

    # ---- Block 2 (its mlp2 was emitted by block1's fused epilogue) ----
    f_pc2_g = gather_neighbour_cf(f_pc2, neigh_idx)
    out2 = block_attention_fused(geo, f_pc2_g, out1, p2,
                                 tile_n=tile_n, out_dtype=jnp.float32)
    return out2[..., None]                                          # (B, 2*d_out, N, 1)


# -------------------------- deterministic parameters ------------------------

def _conv_bn_params(key, cin, cout):
    # pt_utils.Conv2d(1x1, bn=True): conv(no bias) -> BN -> ReLU.
    # BN folded in eval mode (running_mean=0, running_var=1, eps=1e-5).
    kw, kg, kb = jax.random.split(key, 3)
    w = jax.random.normal(kw, (cout, cin), jnp.float32) / jnp.sqrt(cin)
    gamma = 1.0 + 0.1 * jax.random.normal(kg, (cout,), jnp.float32)
    beta = 0.1 * jax.random.normal(kb, (cout,), jnp.float32)
    scale = gamma / jnp.sqrt(1.0 + 1e-5)
    return w * scale[:, None], beta


def init_block_params(key, d_in, d_out, m, k_n):
    d1 = d_out // m
    ks = jax.random.split(key, 7)
    w1, b1 = _conv_bn_params(ks[0], 10, d1)        # mlp1 (d_geo = 10)
    w2, b2 = _conv_bn_params(ks[1], d_in, d1)      # mlp2
    w3, b3 = _conv_bn_params(ks[2], 2 * d1, d1)    # mlp3
    fc_w = jax.random.normal(ks[3], (k_n,), jnp.float32) / jnp.sqrt(k_n)
    fc_b = 0.1 * jax.random.normal(ks[4], (1,), jnp.float32)
    w4, b4 = _conv_bn_params(ks[5], d1, d_out)     # mlp4
    ws, bs = _conv_bn_params(ks[6], d_in, d_out)   # shortcut
    return dict(w1=w1, b1=b1, w2=w2, b2=b2, w3=w3, b3=b3,
                fc_w=fc_w, fc_b=fc_b, w4=w4, b4=b4, ws=ws, bs=bs)


def init_lfa_params(key, d_in, d_out, m, k_n):
    k1, k2 = jax.random.split(key)
    return dict(block1=init_block_params(k1, d_in, d_out, m, k_n),
                block2=init_block_params(k2, d_out, 2 * d_out, m, k_n))


# ----------------------------------- main -----------------------------------

if __name__ == "__main__":
    B, N, K = 2, 256, 8          # batch, points, neighbors (config.k_n)
    d_in, d_out, m = 8, 16, 2    # block1: 8 -> 16, block2: 16 -> 32 ; m = lfa_param

    key = jax.random.PRNGKey(0)
    kf, kx, ki = jax.random.split(key, 3)
    feature = jax.random.normal(kf, (B, d_in, N, 1), jnp.float32)
    xyz = jax.random.normal(kx, (B, N, 3), jnp.float32)
    neigh_idx = jax.random.randint(ki, (B, N, K), 0, N, dtype=jnp.int32)

    params = init_lfa_params(jax.random.PRNGKey(42), d_in, d_out, m, K)

    out = lfa_forward(params, feature, xyz, neigh_idx)
    jax.block_until_ready(out)
    assert out.shape == (B, 2 * d_out, N, 1), out.shape
    assert out.dtype == jnp.float32, out.dtype
    print("KERNEL_OK")
</pallas_src>

<mosaic_0001>
module attributes {stable_mosaic.version = 11 : i64} {
  func.func @_pointwise_cf_kernel(%arg0: i32, %arg1: i32, %arg2: memref<1x8x256xf32, #tpu.memory_space<vmem>>, %arg3: memref<8x8xf32, #tpu.memory_space<vmem>>, %arg4: memref<8x1xf32, #tpu.memory_space<vmem>>, %arg5: memref<1x8x256xbf16, #tpu.memory_space<vmem>>) attributes {dimension_semantics = [#tpu.dimension_semantics<parallel>, #tpu.dimension_semantics<parallel>], iteration_bounds = array<i64: 2, 1>, scalar_prefetch = 0 : i64, scratch_operands = 0 : i64, tpu.core_type = #tpu.core_type<tc>, window_params = [{transform_indices = @transform_0, window_bounds = array<i64: 1, 8, 256>}, {pipeline_mode = #tpu.pipeline_mode<synchronous>, transform_indices = @transform_1, window_bounds = array<i64: 8, 8>}, {pipeline_mode = #tpu.pipeline_mode<synchronous>, transform_indices = @transform_2, window_bounds = array<i64: 8, 1>}, {transform_indices = @transform_3, window_bounds = array<i64: 1, 8, 256>}]} {
    %c0 = arith.constant 0 : index
    %c0_0 = arith.constant 0 : index
    %c0_1 = arith.constant 0 : index
    %0 = vector.load %arg2[%c0, %c0_0, %c0_1] : memref<1x8x256xf32, #tpu.memory_space<vmem>>, vector<1x8x256xf32>
    %1 = vector.shape_cast %0 : vector<1x8x256xf32> to vector<8x256xf32>
    %c0_2 = arith.constant 0 : index
    %c0_3 = arith.constant 0 : index
    %2 = vector.load %arg3[%c0_2, %c0_3] : memref<8x8xf32, #tpu.memory_space<vmem>>, vector<8x8xf32>
    %cst = arith.constant dense<0.000000e+00> : vector<8x256xf32>
    %3 = tpu.matmul %2, %1, %cst {dimension_numbers = #tpu.dot_dimension_numbers<[1], [0], [0], [1], [0, 0, 1, 1], [], []>} : vector<8x8xf32>, vector<8x256xf32>, vector<8x256xf32> -> vector<8x256xf32>
    %c0_4 = arith.constant 0 : index
    %c0_5 = arith.constant 0 : index
    %4 = vector.load %arg4[%c0_4, %c0_5] : memref<8x1xf32, #tpu.memory_space<vmem>>, vector<8x1xf32>
    %5 = vector.broadcast %4 : vector<8x1xf32> to vector<8x256xf32>
    %6 = arith.addf %3, %5 : vector<8x256xf32>
    %cst_6 = arith.constant 0.000000e+00 : f32
    %7 = vector.broadcast %cst_6 : f32 to vector<8x256xf32>
    %8 = arith.maximumf %6, %7 : vector<8x256xf32>
    %9 = arith.truncf %8 : vector<8x256xf32> to vector<8x256xbf16>
    %c0_7 = arith.constant 0 : index
    %c0_8 = arith.constant 0 : index
    %c0_9 = arith.constant 0 : index
    %10 = vector.load %arg5[%c0_7, %c0_8, %c0_9] : memref<1x8x256xbf16, #tpu.memory_space<vmem>>, vector<1x8x256xbf16>
    %11 = vector.shape_cast %10 : vector<1x8x256xbf16> to vector<8x256xbf16>
    %12 = vector.shape_cast %9 : vector<8x256xbf16> to vector<1x8x256xbf16>
    tpu.vector_store %arg5[%c0_7, %c0_8, %c0_9], %12 {strides = array<i32>} : memref<1x8x256xbf16, #tpu.memory_space<vmem>>, vector<1x8x256xbf16>,
    return
  }
  func.func @transform_0(%arg0: i32, %arg1: i32) -> (i32, i32, i32) {
    %c0_i32 = arith.constant 0 : i32
    %c0_i32_0 = arith.constant 0 : i32
    return %arg0, %c0_i32, %arg1 : i32, i32, i32
  }
  func.func @transform_1(%arg0: i32, %arg1: i32) -> (i32, i32) {
    %c0_i32 = arith.constant 0 : i32
    %c0_i32_0 = arith.constant 0 : i32
    %c0_i32_1 = arith.constant 0 : i32
    return %c0_i32, %c0_i32_0 : i32, i32
  }
  func.func @transform_2(%arg0: i32, %arg1: i32) -> (i32, i32) {
    %c0_i32 = arith.constant 0 : i32
    %c0_i32_0 = arith.constant 0 : i32
    %c0_i32_1 = arith.constant 0 : i32
    return %c0_i32, %c0_i32_0 : i32, i32
  }
  func.func @transform_3(%arg0: i32, %arg1: i32) -> (i32, i32, i32) {
    %c0_i32 = arith.constant 0 : i32
    %c0_i32_0 = arith.constant 0 : i32
    return %arg0, %c0_i32, %arg1 : i32, i32, i32
  }
}

module attributes {stable_mosaic.version = 11 : i64} {
  func.func @_block_fused_kernel(%arg0: i32, %arg1: i32, %arg2: memref<1x27x256xf32, #tpu.memory_space<vmem>>, %arg3: memref<1x8x8x256xbf16, #tpu.memory_space<vmem>>, %arg4: memref<1x8x256xf32, #tpu.memory_space<vmem>>, %arg5: memref<8x8xf32, #tpu.memory_space<vmem>>, %arg6: memref<8x17xf32, #tpu.memory_space<vmem>>, %arg7: memref<16x9xf32, #tpu.memory_space<vmem>>, %arg8: memref<16x9xf32, #tpu.memory_space<vmem>>, %arg9: memref<16x17xf32, #tpu.memory_space<vmem>>, %arg10: memref<8xf32, #tpu.memory_space<smem>>, %arg11: memref<1xf32, #tpu.memory_space<smem>>, %arg12: memref<1x16x256xbf16, #tpu.memory_space<vmem>>, %arg13: memref<1x16x256xbf16, #tpu.memory_space<vmem>>) attributes {dimension_semantics = [#tpu.dimension_semantics<parallel>, #tpu.dimension_semantics<parallel>], iteration_bounds = array<i64: 2, 1>, scalar_prefetch = 0 : i64, scratch_operands = 0 : i64, tpu.core_type = #tpu.core_type<tc>, window_params = [{transform_indices = @transform_0, window_bounds = array<i64: 1, 27, 256>}, {transform_indices = @transform_1, window_bounds = array<i64: 1, 8, 8, 256>}, {transform_indices = @transform_2, window_bounds = array<i64: 1, 8, 256>}, {pipeline_mode = #tpu.pipeline_mode<synchronous>, transform_indices = @transform_3, window_bounds = array<i64: 8, 8>}, {pipeline_mode = #tpu.pipeline_mode<synchronous>, transform_indices = @transform_4, window_bounds = array<i64: 8, 17>}, {pipeline_mode = #tpu.pipeline_mode<synchronous>, transform_indices = @transform_5, window_bounds = array<i64: 16, 9>}, {pipeline_mode = #tpu.pipeline_mode<synchronous>, transform_indices = @transform_6, window_bounds = array<i64: 16, 9>}, {pipeline_mode = #tpu.pipeline_mode<synchronous>, transform_indices = @transform_7, window_bounds = array<i64: 16, 17>}, {transform_indices = @transform_8, window_bounds = array<i64: 8>}, {transform_indices = @transform_9, window_bounds = array<i64: 1>}, {transform_indices = @transform_10, window_bounds = array<i64: 1, 16, 256>}, {transform_indices = @transform_11, window_bounds = array<i64: 1, 16, 256>}]} {
    %c0 = arith.constant 0 : index
    %c0_0 = arith.constant 0 : index
    %c0_1 = arith.constant 0 : index
    %0 = vector.load %arg2[%c0, %c0_0, %c0_1] : memref<1x27x256xf32, #tpu.memory_space<vmem>>, vector<1x1x256xf32>
    %1 = vector.shape_cast %0 : vector<1x1x256xf32> to vector<1x256xf32>
    %c0_2 = arith.constant 0 : index
    %c1 = arith.constant 1 : index
    %c0_3 = arith.constant 0 : index
    %2 = vector.load %arg2[%c0_2, %c1, %c0_3] : memref<1x27x256xf32, #tpu.memory_space<vmem>>, vector<1x1x256xf32>
    %3 = vector.shape_cast %2 : vector<1x1x256xf32> to vector<1x256xf32>
    %c0_4 = arith.constant 0 : index
    %c2 = arith.constant 2 : index
    %c0_5 = arith.constant 0 : index
    %4 = vector.load %arg2[%c0_4, %c2, %c0_5] : memref<1x27x256xf32, #tpu.memory_space<vmem>>, vector<1x1x256xf32>
    %5 = vector.shape_cast %4 : vector<1x1x256xf32> to vector<1x256xf32>
    %c0_6 = arith.constant 0 : index
    %c0_7 = arith.constant 0 : index
    %6 = vector.load %arg5[%c0_6, %c0_7] : memref<8x8xf32, #tpu.memory_space<vmem>>, vector<8x1xf32>
    %c0_8 = arith.constant 0 : index
    %c1_9 = arith.constant 1 : index
    %7 = vector.load %arg5[%c0_8, %c1_9] : memref<8x8xf32, #tpu.memory_space<vmem>>, vector<8x1xf32>
    %c0_10 = arith.constant 0 : index
    %c2_11 = arith.constant 2 : index
    %8 = vector.load %arg5[%c0_10, %c2_11] : memref<8x8xf32, #tpu.memory_space<vmem>>, vector<8x1xf32>
    %c0_12 = arith.constant 0 : index
    %c3 = arith.constant 3 : index
    %9 = vector.load %arg5[%c0_12, %c3] : memref<8x8xf32, #tpu.memory_space<vmem>>, vector<8x1xf32>
    %c0_13 = arith.constant 0 : index
    %c4 = arith.constant 4 : index
    %10 = vector.load %arg5[%c0_13, %c4] : memref<8x8xf32, #tpu.memory_space<vmem>>, vector<8x1xf32>
    %c0_14 = arith.constant 0 : index
    %c5 = arith.constant 5 : index
    %11 = vector.load %arg5[%c0_14, %c5] : memref<8x8xf32, #tpu.memory_space<vmem>>, vector<8x1xf32>
    %c0_15 = arith.constant 0 : index
    %c6 = arith.constant 6 : index
    %12 = vector.load %arg5[%c0_15, %c6] : memref<8x8xf32, #tpu.memory_space<vmem>>, vector<8x1xf32>
    %c0_16 = arith.constant 0 : index
    %c7 = arith.constant 7 : index
    %13 = vector.load %arg5[%c0_16, %c7] : memref<8x8xf32, #tpu.memory_space<vmem>>, vector<8x1xf32>
    %c0_17 = arith.constant 0 : index
    %c0_18 = arith.constant 0 : index
    %14 = vector.load %arg6[%c0_17, %c0_18] : memref<8x17xf32, #tpu.memory_space<vmem>>, vector<8x8xf32>
    %c0_19 = arith.constant 0 : index
    %c8 = arith.constant 8 : index
    %15 = vector.load %arg6[%c0_19, %c8] : memref<8x17xf32, #tpu.memory_space<vmem>>, vector<8x8xf32>
    %c0_20 = arith.constant 0 : index
    %c16 = arith.constant 16 : index
    %16 = vector.load %arg6[%c0_20, %c16] : memref<8x17xf32, #tpu.memory_space<vmem>>, vector<8x1xf32>
    %17 = vector.broadcast %7 : vector<8x1xf32> to vector<8x256xf32>
    %18 = vector.broadcast %1 : vector<1x256xf32> to vector<8x256xf32>
    %19 = arith.mulf %17, %18 : vector<8x256xf32>
    %20 = vector.broadcast %8 : vector<8x1xf32> to vector<8x256xf32>
    %21 = vector.broadcast %3 : vector<1x256xf32> to vector<8x256xf32>
    %22 = arith.mulf %20, %21 : vector<8x256xf32>
    %23 = arith.addf %19, %22 : vector<8x256xf32>
    %24 = vector.broadcast %9 : vector<8x1xf32> to vector<8x256xf32>
    %25 = vector.broadcast %5 : vector<1x256xf32> to vector<8x256xf32>
    %26 = arith.mulf %24, %25 : vector<8x256xf32>
    %27 = arith.addf %23, %26 : vector<8x256xf32>
    %28 = vector.broadcast %13 : vector<8x1xf32> to vector<8x256xf32>
    %29 = arith.addf %27, %28 : vector<8x256xf32>
    %c0_21 = arith.constant 0 : index
    %c3_22 = arith.constant 3 : index
    %c0_23 = arith.constant 0 : index
    %30 = vector.load %arg2[%c0_21, %c3_22, %c0_23] : memref<1x27x256xf32, #tpu.memory_space<vmem>>, vector<1x1x256xf32>
    %31 = vector.shape_cast %30 : vector<1x1x256xf32> to vector<1x256xf32>
    %c0_24 = arith.constant 0 : index
    %c4_25 = arith.constant 4 : index
    %c0_26 = arith.constant 0 : index
    %32 = vector.load %arg2[%c0_24, %c4_25, %c0_26] : memref<1x27x256xf32, #tpu.memory_space<vmem>>, vector<1x1x256xf32>
    %33 = vector.shape_cast %32 : vector<1x1x256xf32> to vector<1x256xf32>
    %c0_27 = arith.constant 0 : index
    %c5_28 = arith.constant 5 : index
    %c0_29 = arith.constant 0 : index
    %34 = vector.load %arg2[%c0_27, %c5_28, %c0_29] : memref<1x27x256xf32, #tpu.memory_space<vmem>>, vector<1x1x256xf32>
    %35 = vector.shape_cast %34 : vector<1x1x256xf32> to vector<1x256xf32>
    %36 = arith.subf %1, %31 : vector<1x256xf32>
    %37 = arith.subf %3, %33 : vector<1x256xf32>
    %38 = arith.subf %5, %35 : vector<1x256xf32>
    %39 = arith.mulf %36, %36 : vector<1x256xf32>
    %40 = arith.mulf %37, %37 : vector<1x256xf32>
    %41 = arith.addf %39, %40 : vector<1x256xf32>
    %42 = arith.mulf %38, %38 : vector<1x256xf32>
    %43 = arith.addf %41, %42 : vector<1x256xf32>
    %44 = math.sqrt %43 : vector<1x256xf32>
    %45 = vector.broadcast %6 : vector<8x1xf32> to vector<8x256xf32>
    %46 = vector.broadcast %44 : vector<1x256xf32> to vector<8x256xf32>
    %47 = arith.mulf %45, %46 : vector<8x256xf32>
    %48 = arith.addf %29, %47 : vector<8x256xf32>
    %49 = vector.broadcast %10 : vector<8x1xf32> to vector<8x256xf32>
    %50 = vector.broadcast %31 : vector<1x256xf32> to vector<8x256xf32>
    %51 = arith.mulf %49, %50 : vector<8x256xf32>
    %52 = arith.addf %48, %51 : vector<8x256xf32>
    %53 = vector.broadcast %11 : vector<8x1xf32> to vector<8x256xf32>
    %54 = vector.broadcast %33 : vector<1x256xf32> to vector<8x256xf32>
    %55 = arith.mulf %53, %54 : vector<8x256xf32>
    %56 = arith.addf %52, %55 : vector<8x256xf32>
    %57 = vector.broadcast %12 : vector<8x1xf32> to vector<8x256xf32>
    %58 = vector.broadcast %35 : vector<1x256xf32> to vector<8x256xf32>
    %59 = arith.mulf %57, %58 : vector<8x256xf32>
    %60 = arith.addf %56, %59 : vector<8x256xf32>
    %cst = arith.constant 0.000000e+00 : f32
    %61 = vector.broadcast %cst : f32 to vector<8x256xf32>
    %62 = arith.maximumf %60, %61 : vector<8x256xf32>
    %c0_30 = arith.constant 0 : index
    %c0_31 = arith.constant 0 : index
    %c0_32 = arith.constant 0 : index
    %c0_33 = arith.constant 0 : index
    %63 = vector.load %arg3[%c0_30, %c0_31, %c0_32, %c0_33] : memref<1x8x8x256xbf16, #tpu.memory_space<vmem>>, vector<1x1x8x256xbf16>
    %64 = vector.shape_cast %63 : vector<1x1x8x256xbf16> to vector<8x256xbf16>
    %65 = arith.extf %64 : vector<8x256xbf16> to vector<8x256xf32>
    %cst_34 = arith.constant dense<0.000000e+00> : vector<8x256xf32>
    %66 = tpu.matmul %14, %65, %cst_34 {dimension_numbers = #tpu.dot_dimension_numbers<[1], [0], [0], [1], [0, 0, 1, 1], [], []>} : vector<8x8xf32>, vector<8x256xf32>, vector<8x256xf32> -> vector<8x256xf32>
    %cst_35 = arith.constant dense<0.000000e+00> : vector<8x256xf32>
    %67 = tpu.matmul %15, %62, %cst_35 {dimension_numbers = #tpu.dot_dimension_numbers<[1], [0], [0], [1], [0, 0, 1, 1], [], []>} : vector<8x8xf32>, vector<8x256xf32>, vector<8x256xf32> -> vector<8x256xf32>
    %68 = arith.addf %66, %67 : vector<8x256xf32>
    %69 = vector.broadcast %16 : vector<8x1xf32> to vector<8x256xf32>
    %70 = arith.addf %68, %69 : vector<8x256xf32>
    %cst_36 = arith.constant 0.000000e+00 : f32
    %71 = vector.broadcast %cst_36 : f32 to vector<8x256xf32>
    %72 = arith.maximumf %70, %71 : vector<8x256xf32>
    %c0_37 = arith.constant 0 : index
    %73 = memref.load %arg10[%c0_37] : memref<8xf32, #tpu.memory_space<smem>>
    %74 = vector.broadcast %73 : f32 to vector<8x256xf32>
    %75 = arith.mulf %74, %72 : vector<8x256xf32>
    %c0_38 = arith.constant 0 : index
    %c6_39 = arith.constant 6 : index
    %c0_40 = arith.constant 0 : index
    %76 = vector.load %arg2[%c0_38, %c6_39, %c0_40] : memref<1x27x256xf32, #tpu.memory_space<vmem>>, vector<1x1x256xf32>
    %77 = vector.shape_cast %76 : vector<1x1x256xf32> to vector<1x256xf32>
    %c0_41 = arith.constant 0 : index
    %c7_42 = arith.constant 7 : index
    %c0_43 = arith.constant 0 : index
    %78 = vector.load %arg2[%c0_41, %c7_42, %c0_43] : memref<1x27x256xf32, #tpu.memory_space<vmem>>, vector<1x1x256xf32>
    %79 = vector.shape_cast %78 : vector<1x1x256xf32> to vector<1x256xf32>
    %c0_44 = arith.constant 0 : index
    %c8_45 = arith.constant 8 : index
    %c0_46 = arith.constant 0 : index
    %80 = vector.load %arg2[%c0_44, %c8_45, %c0_46] : memref<1x27x256xf32, #tpu.memory_space<vmem>>, vector<1x1x256xf32>
    %81 = vector.shape_cast %80 : vector<1x1x256xf32> to vector<1x256xf32>
    %82 = arith.subf %1, %77 : vector<1x256xf32>
    %83 = arith.subf %3, %79 : vector<1x256xf32>
    %84 = arith.subf %5, %81 : vector<1x256xf32>
    %85 = arith.mulf %82, %82 : vector<1x256xf32>
    %86 = arith.mulf %83, %83 : vector<1x256xf32>
    %87 = arith.addf %85, %86 : vector<1x256xf32>
    %88 = arith.mulf %84, %84 : vector<1x256xf32>
    %89 = arith.addf %87, %88 : vector<1x256xf32>
    %90 = math.sqrt %89 : vector<1x256xf32>
    %91 = vector.broadcast %6 : vector<8x1xf32> to vector<8x256xf32>
    %92 = vector.broadcast %90 : vector<1x256xf32> to vector<8x256xf32>
    %93 = arith.mulf %91, %92 : vector<8x256xf32>
    %94 = arith.addf %29, %93 : vector<8x256xf32>
    %95 = vector.broadcast %10 : vector<8x1xf32> to vector<8x256xf32>
    %96 = vector.broadcast %77 : vector<1x256xf32> to vector<8x256xf32>
    %97 = arith.mulf %95, %96 : vector<8x256xf32>
    %98 = arith.addf %94, %97 : vector<8x256xf32>
    %99 = vector.broadcast %11 : vector<8x1xf32> to vector<8x256xf32>
    %100 = vector.broadcast %79 : vector<1x256xf32> to vector<8x256xf32>
    %101 = arith.mulf %99, %100 : vector<8x256xf32>
    %102 = arith.addf %98, %101 : vector<8x256xf32>
    %103 = vector.broadcast %12 : vector<8x1xf32> to vector<8x256xf32>
    %104 = vector.broadcast %81 : vector<1x256xf32> to vector<8x256xf32>
    %105 = arith.mulf %103, %104 : vector<8x256xf32>
    %106 = arith.addf %102, %105 : vector<8x256xf32>
    %cst_47 = arith.constant 0.000000e+00 : f32
    %107 = vector.broadcast %cst_47 : f32 to vector<8x256xf32>
    %108 = arith.maximumf %106, %107 : vector<8x256xf32>
    %c0_48 = arith.constant 0 : index
    %c1_49 = arith.constant 1 : index
    %c0_50 = arith.constant 0 : index
    %c0_51 = arith.constant 0 : index
    %109 = vector.load %arg3[%c0_48, %c1_49, %c0_50, %c0_51] : memref<1x8x8x256xbf16, #tpu.memory_space<vmem>>, vector<1x1x8x256xbf16>
    %110 = vector.shape_cast %109 : vector<1x1x8x256xbf16> to vector<8x256xbf16>
    %111 = arith.extf %110 : vector<8x256xbf16> to vector<8x256xf32>
    %cst_52 = arith.constant dense<0.000000e+00> : vector<8x256xf32>
    %112 = tpu.matmul %14, %111, %cst_52 {dimension_numbers = #tpu.dot_dimension_numbers<[1], [0], [0], [1], [0, 0, 1, 1], [], []>} : vector<8x8xf32>, vector<8x256xf32>, vector<8x256xf32> -> vector<8x256xf32>
    %cst_53 = arith.constant dense<0.000000e+00> : vector<8x256xf32>
    %113 = tpu.matmul %15, %108, %cst_53 {dimension_numbers = #tpu.dot_dimension_numbers<[1], [0], [0], [1], [0, 0, 1, 1], [], []>} : vector<8x8xf32>, vector<8x256xf32>, vector<8x256xf32> -> vector<8x256xf32>
    %114 = arith.addf %112, %113 : vector<8x256xf32>
    %115 = vector.broadcast %16 : vector<8x1xf32> to vector<8x256xf32>
    %116 = arith.addf %114, %115 : vector<8x256xf32>
    %cst_54 = arith.constant 0.000000e+00 : f32
    %117 = vector.broadcast %cst_54 : f32 to vector<8x256xf32>
    %118 = arith.maximumf %116, %117 : vector<8x256xf32>
    %c1_55 = arith.constant 1 : index
    %119 = memref.load %arg10[%c1_55] : memref<8xf32, #tpu.memory_space<smem>>
    %120 = vector.broadcast %119 : f32 to vector<8x256xf32>
    %121 = arith.mulf %120, %118 : vector<8x256xf32>
    %122 = arith.maximumf %72, %118 : vector<8x256xf32>
    %123 = arith.addf %75, %121 : vector<8x256xf32>
    %c0_56 = arith.constant 0 : index
    %c9 = arith.constant 9 : index
    %c0_57 = arith.constant 0 : index
    %124 = vector.load %arg2[%c0_56, %c9, %c0_57] : memref<1x27x256xf32, #tpu.memory_space<vmem>>, vector<1x1x256xf32>
    %125 = vector.shape_cast %124 : vector<1x1x256xf32> to vector<1x256xf32>
    %c0_58 = arith.constant 0 : index
    %c10 = arith.constant 10 : index
    %c0_59 = arith.constant 0 : index
    %126 = vector.load %arg2[%c0_58, %c10, %c0_59] : memref<1x27x256xf32, #tpu.memory_space<vmem>>, vector<1x1x256xf32>
    %127 = vector.shape_cast %126 : vector<1x1x256xf32> to vector<1x256xf32>
    %c0_60 = arith.constant 0 : index
    %c11 = arith.constant 11 : index
    %c0_61 = arith.constant 0 : index
    %128 = vector.load %arg2[%c0_60, %c11, %c0_61] : memref<1x27x256xf32, #tpu.memory_space<vmem>>, vector<1x1x256xf32>
    %129 = vector.shape_cast %128 : vector<1x1x256xf32> to vector<1x256xf32>
    %130 = arith.subf %1, %125 : vector<1x256xf32>
    %131 = arith.subf %3, %127 : vector<1x256xf32>
    %132 = arith.subf %5, %129 : vector<1x256xf32>
    %133 = arith.mulf %130, %130 : vector<1x256xf32>
    %134 = arith.mulf %131, %131 : vector<1x256xf32>
    %135 = arith.addf %133, %134 : vector<1x256xf32>
    %136 = arith.mulf %132, %132 : vector<1x256xf32>
    %137 = arith.addf %135, %136 : vector<1x256xf32>
    %138 = math.sqrt %137 : vector<1x256xf32>
    %139 = vector.broadcast %6 : vector<8x1xf32> to vector<8x256xf32>
    %140 = vector.broadcast %138 : vector<1x256xf32> to vector<8x256xf32>
    %141 = arith.mulf %139, %140 : vector<8x256xf32>
    %142 = arith.addf %29, %141 : vector<8x256xf32>
    %143 = vector.broadcast %10 : vector<8x1xf32> to vector<8x256xf32>
    %144 = vector.broadcast %125 : vector<1x256xf32> to vector<8x256xf32>
    %145 = arith.mulf %143, %144 : vector<8x256xf32>
    %146 = arith.addf %142, %145 : vector<8x256xf32>
    %147 = vector.broadcast %11 : vector<8x1xf32> to vector<8x256xf32>
    %148 = vector.broadcast %127 : vector<1x256xf32> to vector<8x256xf32>
    %149 = arith.mulf %147, %148 : vector<8x256xf32>
    %150 = arith.addf %146, %149 : vector<8x256xf32>
    %151 = vector.broadcast %12 : vector<8x1xf32> to vector<8x256xf32>
    %152 = vector.broadcast %129 : vector<1x256xf32> to vector<8x256xf32>
    %153 = arith.mulf %151, %152 : vector<8x256xf32>
    %154 = arith.addf %150, %153 : vector<8x256xf32>
    %cst_62 = arith.constant 0.000000e+00 : f32
    %155 = vector.broadcast %cst_62 : f32 to vector<8x256xf32>
    %156 = arith.maximumf %154, %155 : vector<8x256xf32>
    %c0_63 = arith.constant 0 : index
    %c2_64 = arith.constant 2 : index
    %c0_65 = arith.constant 0 : index
    %c0_66 = arith.constant 0 : index
    %157 = vector.load %arg3[%c0_63, %c2_64, %c0_65, %c0_66] : memref<1x8x8x256xbf16, #tpu.memory_space<vmem>>, vector<1x1x8x256xbf16>
    %158 = vector.shape_cast %157 : vector<1x1x8x256xbf16> to vector<8x256xbf16>
    %159 = arith.extf %158 : vector<8x256xbf16> to vector<8x256xf32>
    %cst_67 = arith.constant dense<0.000000e+00> : vector<8x256xf32>
    %160 = tpu.matmul %14, %159, %cst_67 {dimension_numbers = #tpu.dot_dimension_numbers<[1], [0], [0], [1], [0, 0, 1, 1], [], []>} : vector<8x8xf32>, vector<8x256xf32>, vector<8x256xf32> -> vector<8x256xf32>
    %cst_68 = arith.constant dense<0.000000e+00> : vector<8x256xf32>
    %161 = tpu.matmul %15, %156, %cst_68 {dimension_numbers = #tpu.dot_dimension_numbers<[1], [0], [0], [1], [0, 0, 1, 1], [], []>} : vector<8x8xf32>, vector<8x256xf32>, vector<8x256xf32> -> vector<8x256xf32>
    %162 = arith.addf %160, %161 : vector<8x256xf32>
    %163 = vector.broadcast %16 : vector<8x1xf32> to vector<8x256xf32>
    %164 = arith.addf %162, %163 : vector<8x256xf32>
    %cst_69 = arith.constant 0.000000e+00 : f32
    %165 = vector.broadcast %cst_69 : f32 to vector<8x256xf32>
    %166 = arith.maximumf %164, %165 : vector<8x256xf32>
    %c2_70 = arith.constant 2 : index
    %167 = memref.load %arg10[%c2_70] : memref<8xf32, #tpu.memory_space<smem>>
    %168 = vector.broadcast %167 : f32 to vector<8x256xf32>
    %169 = arith.mulf %168, %166 : vector<8x256xf32>
    %170 = arith.maximumf %122, %166 : vector<8x256xf32>
    %171 = arith.addf %123, %169 : vector<8x256xf32>
    %c0_71 = arith.constant 0 : index
    %c12 = arith.constant 12 : index
    %c0_72 = arith.constant 0 : index
    %172 = vector.load %arg2[%c0_71, %c12, %c0_72] : memref<1x27x256xf32, #tpu.memory_space<vmem>>, vector<1x1x256xf32>
    %173 = vector.shape_cast %172 : vector<1x1x256xf32> to vector<1x256xf32>
    %c0_73 = arith.constant 0 : index
    %c13 = arith.constant 13 : index
    %c0_74 = arith.constant 0 : index
    %174 = vector.load %arg2[%c0_73, %c13, %c0_74] : memref<1x27x256xf32, #tpu.memory_space<vmem>>, vector<1x1x256xf32>
    %175 = vector.shape_cast %174 : vector<1x1x256xf32> to vector<1x256xf32>
    %c0_75 = arith.constant 0 : index
    %c14 = arith.constant 14 : index
    %c0_76 = arith.constant 0 : index
    %176 = vector.load %arg2[%c0_75, %c14, %c0_76] : memref<1x27x256xf32, #tpu.memory_space<vmem>>, vector<1x1x256xf32>
    %177 = vector.shape_cast %176 : vector<1x1x256xf32> to vector<1x256xf32>
    %178 = arith.subf %1, %173 : vector<1x256xf32>
    %179 = arith.subf %3, %175 : vector<1x256xf32>
    %180 = arith.subf %5, %177 : vector<1x256xf32>
    %181 = arith.mulf %178, %178 : vector<1x256xf32>
    %182 = arith.mulf %179, %179 : vector<1x256xf32>
    %183 = arith.addf %181, %182 : vector<1x256xf32>
    %184 = arith.mulf %180, %180 : vector<1x256xf32>
    %185 = arith.addf %183, %184 : vector<1x256xf32>
    %186 = math.sqrt %185 : vector<1x256xf32>
    %187 = vector.broadcast %6 : vector<8x1xf32> to vector<8x256xf32>
    %188 = vector.broadcast %186 : vector<1x256xf32> to vector<8x256xf32>
    %189 = arith.mulf %187, %188 : vector<8x256xf32>
    %190 = arith.addf %29, %189 : vector<8x256xf32>
    %191 = vector.broadcast %10 : vector<8x1xf32> to vector<8x256xf32>
    %192 = vector.broadcast %173 : vector<1x256xf32> to vector<8x256xf32>
    %193 = arith.mulf %191, %192 : vector<8x256xf32>
    %194 = arith.addf %190, %193 : vector<8x256xf32>
    %195 = vector.broadcast %11 : vector<8x1xf32> to vector<8x256xf32>
    %196 = vector.broadcast %175 : vector<1x256xf32> to vector<8x256xf32>
    %197 = arith.mulf %195, %196 : vector<8x256xf32>
    %198 = arith.addf %194, %197 : vector<8x256xf32>
    %199 = vector.broadcast %12 : vector<8x1xf32> to vector<8x256xf32>
    %200 = vector.broadcast %177 : vector<1x256xf32> to vector<8x256xf32>
    %201 = arith.mulf %199, %200 : vector<8x256xf32>
    %202 = arith.addf %198, %201 : vector<8x256xf32>
    %cst_77 = arith.constant 0.000000e+00 : f32
    %203 = vector.broadcast %cst_77 : f32 to vector<8x256xf32>
    %204 = arith.maximumf %202, %203 : vector<8x256xf32>
    %c0_78 = arith.constant 0 : index
    %c3_79 = arith.constant 3 : index
    %c0_80 = arith.constant 0 : index
    %c0_81 = arith.constant 0 : index
    %205 = vector.load %arg3[%c0_78, %c3_79, %c0_80, %c0_81] : memref<1x8x8x256xbf16, #tpu.memory_space<vmem>>, vector<1x1x8x256xbf16>
    %206 = vector.shape_cast %205 : vector<1x1x8x256xbf16> to vector<8x256xbf16>
    %207 = arith.extf %206 : vector<8x256xbf16> to vector<8x256xf32>
    %cst_82 = arith.constant dense<0.000000e+00> : vector<8x256xf32>
    %208 = tpu.matmul %14, %207, %cst_82 {dimension_numbers = #tpu.dot_dimension_numbers<[1], [0], [0], [1], [0, 0, 1, 1], [], []>} : vector<8x8xf32>, vector<8x256xf32>, vector<8x256xf32> -> vector<8x256xf32>
    %cst_83 = arith.constant dense<0.000000e+00> : vector<8x256xf32>
    %209 = tpu.matmul %15, %204, %cst_83 {dimension_numbers = #tpu.dot_dimension_numbers<[1], [0], [0], [1], [0, 0, 1, 1], [], []>} : vector<8x8xf32>, vector<8x256xf32>, vector<8x256xf32> -> vector<8x256xf32>
    %210 = arith.addf %208, %209 : vector<8x256xf32>
    %211 = vector.broadcast %16 : vector<8x1xf32> to vector<8x256xf32>
    %212 = arith.addf %210, %211 : vector<8x256xf32>
    %cst_84 = arith.constant 0.000000e+00 : f32
    %213 = vector.broadcast %cst_84 : f32 to vector<8x256xf32>
    %214 = arith.maximumf %212, %213 : vector<8x256xf32>
    %c3_85 = arith.constant 3 : index
    %215 = memref.load %arg10[%c3_85] : memref<8xf32, #tpu.memory_space<smem>>
    %216 = vector.broadcast %215 : f32 to vector<8x256xf32>
    %217 = arith.mulf %216, %214 : vector<8x256xf32>
    %218 = arith.maximumf %170, %214 : vector<8x256xf32>
    %219 = arith.addf %171, %217 : vector<8x256xf32>
    %c0_86 = arith.constant 0 : index
    %c15 = arith.constant 15 : index
    %c0_87 = arith.constant 0 : index
    %220 = vector.load %arg2[%c0_86, %c15, %c0_87] : memref<1x27x256xf32, #tpu.memory_space<vmem>>, vector<1x1x256xf32>
    %221 = vector.shape_cast %220 : vector<1x1x256xf32> to vector<1x256xf32>
    %c0_88 = arith.constant 0 : index
    %c16_89 = arith.constant 16 : index
    %c0_90 = arith.constant 0 : index
    %222 = vector.load %arg2[%c0_88, %c16_89, %c0_90] : memref<1x27x256xf32, #tpu.memory_space<vmem>>, vector<1x1x256xf32>
    %223 = vector.shape_cast %222 : vector<1x1x256xf32> to vector<1x256xf32>
    %c0_91 = arith.constant 0 : index
    %c17 = arith.constant 17 : index
    %c0_92 = arith.constant 0 : index
    %224 = vector.load %arg2[%c0_91, %c17, %c0_92] : memref<1x27x256xf32, #tpu.memory_space<vmem>>, vector<1x1x256xf32>
    %225 = vector.shape_cast %224 : vector<1x1x256xf32> to vector<1x256xf32>
    %226 = arith.subf %1, %221 : vector<1x256xf32>
    %227 = arith.subf %3, %223 : vector<1x256xf32>
    %228 = arith.subf %5, %225 : vector<1x256xf32>
    %229 = arith.mulf %226, %226 : vector<1x256xf32>
    %230 = arith.mulf %227, %227 : vector<1x256xf32>
    %231 = arith.addf %229, %230 : vector<1x256xf32>
    %232 = arith.mulf %228, %228 : vector<1x256xf32>
    %233 = arith.addf %231, %232 : vector<1x256xf32>
    %234 = math.sqrt %233 : vector<1x256xf32>
    %235 = vector.broadcast %6 : vector<8x1xf32> to vector<8x256xf32>
    %236 = vector.broadcast %234 : vector<1x256xf32> to vector<8x256xf32>
    %237 = arith.mulf %235, %236 : vector<8x256xf32>
    %238 = arith.addf %29, %237 : vector<8x256xf32>
    %239 = vector.broadcast %10 : vector<8x1xf32> to vector<8x256xf32>
    %240 = vector.broadcast %221 : vector<1x256xf32> to vector<8x256xf32>
    %241 = arith.mulf %239, %240 : vector<8x256xf32>
    %242 = arith.addf %238, %241 : vector<8x256xf32>
    %243 = vector.broadcast %11 : vector<8x1xf32> to vector<8x256xf32>
    %244 = vector.broadcast %223 : vector<1x256xf32> to vector<8x256xf32>
    %245 = arith.mulf %243, %244 : vector<8x256xf32>
    %246 = arith.addf %242, %245 : vector<8x256xf32>
    %247 = vector.broadcast %12 : vector<8x1xf32> to vector<8x256xf32>
    %248 = vector.broadcast %225 : vector<1x256xf32> to vector<8x256xf32>
    %249 = arith.mulf %247, %248 : vector<8x256xf32>
    %250 = arith.addf %246, %249 : vector<8x256xf32>
    %cst_93 = arith.constant 0.000000e+00 : f32
    %251 = vector.broadcast %cst_93 : f32 to vector<8x256xf32>
    %252 = arith.maximumf %250, %251 : vector<8x256xf32>
    %c0_94 = arith.constant 0 : index
    %c4_95 = arith.constant 4 : index
    %c0_96 = arith.constant 0 : index
    %c0_97 = arith.constant 0 : index
    %253 = vector.load %arg3[%c0_94, %c4_95, %c0_96, %c0_97] : memref<1x8x8x256xbf16, #tpu.memory_space<vmem>>, vector<1x1x8x256xbf16>
    %254 = vector.shape_cast %253 : vector<1x1x8x256xbf16> to vector<8x256xbf16>
    %255 = arith.extf %254 : vector<8x256xbf16> to vector<8x256xf32>
    %cst_98 = arith.constant dense<0.000000e+00> : vector<8x256xf32>
    %256 = tpu.matmul %14, %255, %cst_98 {dimension_numbers = #tpu.dot_dimension_numbers<[1], [0], [0], [1], [0, 0, 1, 1], [], []>} : vector<8x8xf32>, vector<8x256xf32>, vector<8x256xf32> -> vector<8x256xf32>
    %cst_99 = arith.constant dense<0.000000e+00> : vector<8x256xf32>
    %257 = tpu.matmul %15, %252, %cst_99 {dimension_numbers = #tpu.dot_dimension_numbers<[1], [0], [0], [1], [0, 0, 1, 1], [], []>} : vector<8x8xf32>, vector<8x256xf32>, vector<8x256xf32> -> vector<8x256xf32>
    %258 = arith.addf %256, %257 : vector<8x256xf32>
    %259 = vector.broadcast %16 : vector<8x1xf32> to vector<8x256xf32>
    %260 = arith.addf %258, %259 : vector<8x256xf32>
    %cst_100 = arith.constant 0.000000e+00 : f32
    %261 = vector.broadcast %cst_100 : f32 to vector<8x256xf32>
    %262 = arith.maximumf %260, %261 : vector<8x256xf32>
    %c4_101 = arith.constant 4 : index
    %263 = memref.load %arg10[%c4_101] : memref<8xf32, #tpu.memory_space<smem>>
    %264 = vector.broadcast %263 : f32 to vector<8x256xf32>
    %265 = arith.mulf %264, %262 : vector<8x256xf32>
    %266 = arith.maximumf %218, %262 : vector<8x256xf32>
    %267 = arith.addf %219, %265 : vector<8x256xf32>
    %c0_102 = arith.constant 0 : index
    %c18 = arith.constant 18 : index
    %c0_103 = arith.constant 0 : index
    %268 = vector.load %arg2[%c0_102, %c18, %c0_103] : memref<1x27x256xf32, #tpu.memory_space<vmem>>, vector<1x1x256xf32>
    %269 = vector.shape_cast %268 : vector<1x1x256xf32> to vector<1x256xf32>
    %c0_104 = arith.constant 0 : index
    %c19 = arith.constant 19 : index
    %c0_105 = arith.constant 0 : index
    %270 = vector.load %arg2[%c0_104, %c19, %c0_105] : memref<1x27x256xf32, #tpu.memory_space<vmem>>, vector<1x1x256xf32>
    %271 = vector.shape_cast %270 : vector<1x1x256xf32> to vector<1x256xf32>
    %c0_106 = arith.constant 0 : index
    %c20 = arith.constant 20 : index
    %c0_107 = arith.constant 0 : index
    %272 = vector.load %arg2[%c0_106, %c20, %c0_107] : memref<1x27x256xf32, #tpu.memory_space<vmem>>, vector<1x1x256xf32>
    %273 = vector.shape_cast %272 : vector<1x1x256xf32> to vector<1x256xf32>
    %274 = arith.subf %1, %269 : vector<1x256xf32>
    %275 = arith.subf %3, %271 : vector<1x256xf32>
    %276 = arith.subf %5, %273 : vector<1x256xf32>
    %277 = arith.mulf %274, %274 : vector<1x256xf32>
    %278 = arith.mulf %275, %275 : vector<1x256xf32>
    %279 = arith.addf %277, %278 : vector<1x256xf32>
    %280 = arith.mulf %276, %276 : vector<1x256xf32>
    %281 = arith.addf %279, %280 : vector<1x256xf32>
    %282 = math.sqrt %281 : vector<1x256xf32>
    %283 = vector.broadcast %6 : vector<8x1xf32> to vector<8x256xf32>
    %284 = vector.broadcast %282 : vector<1x256xf32> to vector<8x256xf32>
    %285 = arith.mulf %283, %284 : vector<8x256xf32>
    %286 = arith.addf %29, %285 : vector<8x256xf32>
    %287 = vector.broadcast %10 : vector<8x1xf32> to vector<8x256xf32>
    %288 = vector.broadcast %269 : vector<1x256xf32> to vector<8x256xf32>
    %289 = arith.mulf %287, %288 : vector<8x256xf32>
    %290 = arith.addf %286, %289 : vector<8x256xf32>
    %291 = vector.broadcast %11 : vector<8x1xf32> to vector<8x256xf32>
    %292 = vector.broadcast %271 : vector<1x256xf32> to vector<8x256xf32>
    %293 = arith.mulf %291, %292 : vector<8x256xf32>
    %294 = arith.addf %290, %293 : vector<8x256xf32>
    %295 = vector.broadcast %12 : vector<8x1xf32> to vector<8x256xf32>
    %296 = vector.broadcast %273 : vector<1x256xf32> to vector<8x256xf32>
    %297 = arith.mulf %295, %296 : vector<8x256xf32>
    %298 = arith.addf %294, %297 : vector<8x256xf32>
    %cst_108 = arith.constant 0.000000e+00 : f32
    %299 = vector.broadcast %cst_108 : f32 to vector<8x256xf32>
    %300 = arith.maximumf %298, %299 : vector<8x256xf32>
    %c0_109 = arith.constant 0 : index
    %c5_110 = arith.constant 5 : index
    %c0_111 = arith.constant 0 : index
    %c0_112 = arith.constant 0 : index
    %301 = vector.load %arg3[%c0_109, %c5_110, %c0_111, %c0_112] : memref<1x8x8x256xbf16, #tpu.memory_space<vmem>>, vector<1x1x8x256xbf16>
    %302 = vector.shape_cast %301 : vector<1x1x8x256xbf16> to vector<8x256xbf16>
    %303 = arith.extf %302 : vector<8x256xbf16> to vector<8x256xf32>
    %cst_113 = arith.constant dense<0.000000e+00> : vector<8x256xf32>
    %304 = tpu.matmul %14, %303, %cst_113 {dimension_numbers = #tpu.dot_dimension_numbers<[1], [0], [0], [1], [0, 0, 1, 1], [], []>} : vector<8x8xf32>, vector<8x256xf32>, vector<8x256xf32> -> vector<8x256xf32>
    %cst_114 = arith.constant dense<0.000000e+00> : vector<8x256xf32>
    %305 = tpu.matmul %15, %300, %cst_114 {dimension_numbers = #tpu.dot_dimension_numbers<[1], [0], [0], [1], [0, 0, 1, 1], [], []>} : vector<8x8xf32>, vector<8x256xf32>, vector<8x256xf32> -> vector<8x256xf32>
    %306 = arith.addf %304, %305 : vector<8x256xf32>
    %307 = vector.broadcast %16 : vector<8x1xf32> to vector<8x256xf32>
    %308 = arith.addf %306, %307 : vector<8x256xf32>
    %cst_115 = arith.constant 0.000000e+00 : f32
    %309 = vector.broadcast %cst_115 : f32 to vector<8x256xf32>
    %310 = arith.maximumf %308, %309 : vector<8x256xf32>
    %c5_116 = arith.constant 5 : index
    %311 = memref.load %arg10[%c5_116] : memref<8xf32, #tpu.memory_space<smem>>
    %312 = vector.broadcast %311 : f32 to vector<8x256xf32>
    %313 = arith.mulf %312, %310 : vector<8x256xf32>
    %314 = arith.maximumf %266, %310 : vector<8x256xf32>
    %315 = arith.addf %267, %313 : vector<8x256xf32>
    %c0_117 = arith.constant 0 : index
    %c21 = arith.constant 21 : index
    %c0_118 = arith.constant 0 : index
    %316 = vector.load %arg2[%c0_117, %c21, %c0_118] : memref<1x27x256xf32, #tpu.memory_space<vmem>>, vector<1x1x256xf32>
    %317 = vector.shape_cast %316 : vector<1x1x256xf32> to vector<1x256xf32>
    %c0_119 = arith.constant 0 : index
    %c22 = arith.constant 22 : index
    %c0_120 = arith.constant 0 : index
    %318 = vector.load %arg2[%c0_119, %c22, %c0_120] : memref<1x27x256xf32, #tpu.memory_space<vmem>>, vector<1x1x256xf32>
    %319 = vector.shape_cast %318 : vector<1x1x256xf32> to vector<1x256xf32>
    %c0_121 = arith.constant 0 : index
    %c23 = arith.constant 23 : index
    %c0_122 = arith.constant 0 : index
    %320 = vector.load %arg2[%c0_121, %c23, %c0_122] : memref<1x27x256xf32, #tpu.memory_space<vmem>>, vector<1x1x256xf32>
    %321 = vector.shape_cast %320 : vector<1x1x256xf32> to vector<1x256xf32>
    %322 = arith.subf %1, %317 : vector<1x256xf32>
    %323 = arith.subf %3, %319 : vector<1x256xf32>
    %324 = arith.subf %5, %321 : vector<1x256xf32>
    %325 = arith.mulf %322, %322 : vector<1x256xf32>
    %326 = arith.mulf %323, %323 : vector<1x256xf32>
    %327 = arith.addf %325, %326 : vector<1x256xf32>
    %328 = arith.mulf %324, %324 : vector<1x256xf32>
    %329 = arith.addf %327, %328 : vector<1x256xf32>
    %330 = math.sqrt %329 : vector<1x256xf32>
    %331 = vector.broadcast %6 : vector<8x1xf32> to vector<8x256xf32>
    %332 = vector.broadcast %330 : vector<1x256xf32> to vector<8x256xf32>
    %333 = arith.mulf %331, %332 : vector<8x256xf32>
    %334 = arith.addf %29, %333 : vector<8x256xf32>
    %335 = vector.broadcast %10 : vector<8x1xf32> to vector<8x256xf32>
    %336 = vector.broadcast %317 : vector<1x256xf32> to vector<8x256xf32>
    %337 = arith.mulf %335, %336 : vector<8x256xf32>
    %338 = arith.addf %334, %337 : vector<8x256xf32>
    %339 = vector.broadcast %11 : vector<8x1xf32> to vector<8x256xf32>
    %340 = vector.broadcast %319 : vector<1x256xf32> to vector<8x256xf32>
    %341 = arith.mulf %339, %340 : vector<8x256xf32>
    %342 = arith.addf %338, %341 : vector<8x256xf32>
    %343 = vector.broadcast %12 : vector<8x1xf32> to vector<8x256xf32>
    %344 = vector.broadcast %321 : vector<1x256xf32> to vector<8x256xf32>
    %345 = arith.mulf %343, %344 : vector<8x256xf32>
    %346 = arith.addf %342, %345 : vector<8x256xf32>
    %cst_123 = arith.constant 0.000000e+00 : f32
    %347 = vector.broadcast %cst_123 : f32 to vector<8x256xf32>
    %348 = arith.maximumf %346, %347 : vector<8x256xf32>
    %c0_124 = arith.constant 0 : index
    %c6_125 = arith.constant 6 : index
    %c0_126 = arith.constant 0 : index
    %c0_127 = arith.constant 0 : index
    %349 = vector.load %arg3[%c0_124, %c6_125, %c0_126, %c0_127] : memref<1x8x8x256xbf16, #tpu.memory_space<vmem>>, vector<1x1x8x256xbf16>
    %350 = vector.shape_cast %349 : vector<1x1x8x256xbf16> to vector<8x256xbf16>
    %351 = arith.extf %350 : vector<8x256xbf16> to vector<8x256xf32>
    %cst_128 = arith.constant dense<0.000000e+00> : vector<8x256xf32>
    %352 = tpu.matmul %14, %351, %cst_128 {dimension_numbers = #tpu.dot_dimension_numbers<[1], [0], [0], [1], [0, 0, 1, 1], [], []>} : vector<8x8xf32>, vector<8x256xf32>, vector<8x256xf32> -> vector<8x256xf32>
    %cst_129 = arith.constant dense<0.000000e+00> : vector<8x256xf32>
    %353 = tpu.matmul %15, %348, %cst_129 {dimension_numbers = #tpu.dot_dimension_numbers<[1], [0], [0], [1], [0, 0, 1, 1], [], []>} : vector<8x8xf32>, vector<8x256xf32>, vector<8x256xf32> -> vector<8x256xf32>
    %354 = arith.addf %352, %353 : vector<8x256xf32>
    %355 = vector.broadcast %16 : vector<8x1xf32> to vector<8x256xf32>
    %356 = arith.addf %354, %355 : vector<8x256xf32>
    %cst_130 = arith.constant 0.000000e+00 : f32
    %357 = vector.broadcast %cst_130 : f32 to vector<8x256xf32>
    %358 = arith.maximumf %356, %357 : vector<8x256xf32>
    %c6_131 = arith.constant 6 : index
    %359 = memref.load %arg10[%c6_131] : memref<8xf32, #tpu.memory_space<smem>>
    %360 = vector.broadcast %359 : f32 to vector<8x256xf32>
    %361 = arith.mulf %360, %358 : vector<8x256xf32>
    %362 = arith.maximumf %314, %358 : vector<8x256xf32>
    %363 = arith.addf %315, %361 : vector<8x256xf32>
    %c0_132 = arith.constant 0 : index
    %c24 = arith.constant 24 : index
    %c0_133 = arith.constant 0 : index
    %364 = vector.load %arg2[%c0_132, %c24, %c0_133] : memref<1x27x256xf32, #tpu.memory_space<vmem>>, vector<1x1x256xf32>
    %365 = vector.shape_cast %364 : vector<1x1x256xf32> to vector<1x256xf32>
    %c0_134 = arith.constant 0 : index
    %c25 = arith.constant 25 : index
    %c0_135 = arith.constant 0 : index
    %366 = vector.load %arg2[%c0_134, %c25, %c0_135] : memref<1x27x256xf32, #tpu.memory_space<vmem>>, vector<1x1x256xf32>
    %367 = vector.shape_cast %366 : vector<1x1x256xf32> to vector<1x256xf32>
    %c0_136 = arith.constant 0 : index
    %c26 = arith.constant 26 : index
    %c0_137 = arith.constant 0 : index
    %368 = vector.load %arg2[%c0_136, %c26, %c0_137] : memref<1x27x256xf32, #tpu.memory_space<vmem>>, vector<1x1x256xf32>
    %369 = vector.shape_cast %368 : vector<1x1x256xf32> to vector<1x256xf32>
    %370 = arith.subf %1, %365 : vector<1x256xf32>
    %371 = arith.subf %3, %367 : vector<1x256xf32>
    %372 = arith.subf %5, %369 : vector<1x256xf32>
    %373 = arith.mulf %370, %370 : vector<1x256xf32>
    %374 = arith.mulf %371, %371 : vector<1x256xf32>
    %375 = arith.addf %373, %374 : vector<1x256xf32>
    %376 = arith.mulf %372, %372 : vector<1x256xf32>
    %377 = arith.addf %375, %376 : vector<1x256xf32>
    %378 = math.sqrt %377 : vector<1x256xf32>
    %379 = vector.broadcast %6 : vector<8x1xf32> to vector<8x256xf32>
    %380 = vector.broadcast %378 : vector<1x256xf32> to vector<8x256xf32>
    %381 = arith.mulf %379, %380 : vector<8x256xf32>
    %382 = arith.addf %29, %381 : vector<8x256xf32>
    %383 = vector.broadcast %10 : vector<8x1xf32> to vector<8x256xf32>
    %384 = vector.broadcast %365 : vector<1x256xf32> to vector<8x256xf32>
    %385 = arith.mulf %383, %384 : vector<8x256xf32>
    %386 = arith.addf %382, %385 : vector<8x256xf32>
    %387 = vector.broadcast %11 : vector<8x1xf32> to vector<8x256xf32>
    %388 = vector.broadcast %367 : vector<1x256xf32> to vector<8x256xf32>
    %389 = arith.mulf %387, %388 : vector<8x256xf32>
    %390 = arith.addf %386, %389 : vector<8x256xf32>
    %391 = vector.broadcast %12 : vector<8x1xf32> to vector<8x256xf32>
    %392 = vector.broadcast %369 : vector<1x256xf32> to vector<8x256xf32>
    %393 = arith.mulf %391, %392 : vector<8x256xf32>
    %394 = arith.addf %390, %393 : vector<8x256xf32>
    %cst_138 = arith.constant 0.000000e+00 : f32
    %395 = vector.broadcast %cst_138 : f32 to vector<8x256xf32>
    %396 = arith.maximumf %394, %395 : vector<8x256xf32>
    %c0_139 = arith.constant 0 : index
    %c7_140 = arith.constant 7 : index
    %c0_141 = arith.constant 0 : index
    %c0_142 = arith.constant 0 : index
    %397 = vector.load %arg3[%c0_139, %c7_140, %c0_141, %c0_142] : memref<1x8x8x256xbf16, #tpu.memory_space<vmem>>, vector<1x1x8x256xbf16>
    %398 = vector.shape_cast %397 : vector<1x1x8x256xbf16> to vector<8x256xbf16>
    %399 = arith.extf %398 : vector<8x256xbf16> to vector<8x256xf32>
    %cst_143 = arith.constant dense<0.000000e+00> : vector<8x256xf32>
    %400 = tpu.matmul %14, %399, %cst_143 {dimension_numbers = #tpu.dot_dimension_numbers<[1], [0], [0], [1], [0, 0, 1, 1], [], []>} : vector<8x8xf32>, vector<8x256xf32>, vector<8x256xf32> -> vector<8x256xf32>
    %cst_144 = arith.constant dense<0.000000e+00> : vector<8x256xf32>
    %401 = tpu.matmul %15, %396, %cst_144 {dimension_numbers = #tpu.dot_dimension_numbers<[1], [0], [0], [1], [0, 0, 1, 1], [], []>} : vector<8x8xf32>, vector<8x256xf32>, vector<8x256xf32> -> vector<8x256xf32>
    %402 = arith.addf %400, %401 : vector<8x256xf32>
    %403 = vector.broadcast %16 : vector<8x1xf32> to vector<8x256xf32>
    %404 = arith.addf %402, %403 : vector<8x256xf32>
    %cst_145 = arith.constant 0.000000e+00 : f32
    %405 = vector.broadcast %cst_145 : f32 to vector<8x256xf32>
    %406 = arith.maximumf %404, %405 : vector<8x256xf32>
    %c7_146 = arith.constant 7 : index
    %407 = memref.load %arg10[%c7_146] : memref<8xf32, #tpu.memory_space<smem>>
    %408 = vector.broadcast %407 : f32 to vector<8x256xf32>
    %409 = arith.mulf %408, %406 : vector<8x256xf32>
    %410 = arith.maximumf %362, %406 : vector<8x256xf32>
    %411 = arith.addf %363, %409 : vector<8x256xf32>
    %c0_147 = arith.constant 0 : index
    %412 = memref.load %arg11[%c0_147] : memref<1xf32, #tpu.memory_space<smem>>
    %413 = vector.broadcast %412 : f32 to vector<8x256xf32>
    %414 = arith.addf %411, %413 : vector<8x256xf32>
    %cst_148 = arith.constant dense<0xFF800000> : vector<256xf32>
    %415 = vector.multi_reduction <maximumf>, %414, %cst_148 [0] : vector<8x256xf32> to vector<256xf32>
    %416 = vector.shape_cast %415 : vector<256xf32> to vector<1x256xf32>
    %417 = vector.broadcast %416 : vector<1x256xf32> to vector<8x256xf32>
    %418 = arith.subf %414, %417 : vector<8x256xf32>
    %419 = math.exp %418 : vector<8x256xf32>
    %cst_149 = arith.constant dense<0.000000e+00> : vector<256xf32>
    %420 = vector.multi_reduction <add>, %419, %cst_149 [0] : vector<8x256xf32> to vector<256xf32>
    %421 = vector.shape_cast %420 : vector<256xf32> to vector<1x256xf32>
    %cst_150 = arith.constant 1.000000e+00 : f32
    %422 = vector.broadcast %cst_150 : f32 to vector<1x256xf32>
    %423 = arith.divf %422, %421 : vector<1x256xf32>
    %424 = vector.broadcast %423 : vector<1x256xf32> to vector<8x256xf32>
    %425 = arith.mulf %419, %424 : vector<8x256xf32>
    %cst_151 = arith.constant 1.000000e+00 : f32
    %426 = vector.broadcast %cst_151 : f32 to vector<8x256xf32>
    %427 = arith.addf %426, %425 : vector<8x256xf32>
    %428 = arith.mulf %410, %427 : vector<8x256xf32>
    %c0_152 = arith.constant 0 : index
    %c0_153 = arith.constant 0 : index
    %c0_154 = arith.constant 0 : index
    %429 = vector.load %arg4[%c0_152, %c0_153, %c0_154] : memref<1x8x256xf32, #tpu.memory_space<vmem>>, vector<1x8x256xf32>
    %430 = vector.shape_cast %429 : vector<1x8x256xf32> to vector<8x256xf32>
    %c0_155 = arith.constant 0 : index
    %c0_156 = arith.constant 0 : index
    %431 = vector.load %arg7[%c0_155, %c0_156] : memref<16x9xf32, #tpu.memory_space<vmem>>, vector<16x8xf32>
    %c0_157 = arith.constant 0 : index
    %c8_158 = arith.constant 8 : index
    %432 = vector.load %arg7[%c0_157, %c8_158] : memref<16x9xf32, #tpu.memory_space<vmem>>, vector<16x1xf32>
    %c0_159 = arith.constant 0 : index
    %c0_160 = arith.constant 0 : index
    %433 = vector.load %arg8[%c0_159, %c0_160] : memref<16x9xf32, #tpu.memory_space<vmem>>, vector<16x8xf32>
    %c0_161 = arith.constant 0 : index
    %c8_162 = arith.constant 8 : index
    %434 = vector.load %arg8[%c0_161, %c8_162] : memref<16x9xf32, #tpu.memory_space<vmem>>, vector<16x1xf32>
    %cst_163 = arith.constant dense<0.000000e+00> : vector<16x256xf32>
    %435 = tpu.matmul %431, %428, %cst_163 {dimension_numbers = #tpu.dot_dimension_numbers<[1], [0], [0], [1], [0, 0, 1, 1], [], []>} : vector<16x8xf32>, vector<8x256xf32>, vector<16x256xf32> -> vector<16x256xf32>
    %436 = vector.broadcast %432 : vector<16x1xf32> to vector<16x256xf32>
    %437 = arith.addf %435, %436 : vector<16x256xf32>
    %cst_164 = arith.constant 0.000000e+00 : f32
    %438 = vector.broadcast %cst_164 : f32 to vector<16x256xf32>
    %439 = arith.maximumf %437, %438 : vector<16x256xf32>
    %cst_165 = arith.constant dense<0.000000e+00> : vector<16x256xf32>
    %440 = tpu.matmul %433, %430, %cst_165 {dimension_numbers = #tpu.dot_dimension_numbers<[1], [0], [0], [1], [0, 0, 1, 1], [], []>} : vector<16x8xf32>, vector<8x256xf32>, vector<16x256xf32> -> vector<16x256xf32>
    %441 = vector.broadcast %434 : vector<16x1xf32> to vector<16x256xf32>
    %442 = arith.addf %440, %441 : vector<16x256xf32>
    %cst_166 = arith.constant 0.000000e+00 : f32
    %443 = vector.broadcast %cst_166 : f32 to vector<16x256xf32>
    %444 = arith.maximumf %442, %443 : vector<16x256xf32>
    %445 = arith.addf %439, %444 : vector<16x256xf32>
    %446 = arith.truncf %445 : vector<16x256xf32> to vector<16x256xbf16>
    %c0_167 = arith.constant 0 : index
    %c0_168 = arith.constant 0 : index
    %c0_169 = arith.constant 0 : index
    %447 = vector.load %arg12[%c0_167, %c0_168, %c0_169] : memref<1x16x256xbf16, #tpu.memory_space<vmem>>, vector<1x16x256xbf16>
    %448 = vector.shape_cast %447 : vector<1x16x256xbf16> to vector<16x256xbf16>
    %449 = vector.shape_cast %446 : vector<16x256xbf16> to vector<1x16x256xbf16>
    tpu.vector_store %arg12[%c0_167, %c0_168, %c0_169], %449 {strides = array<i32>} : memref<1x16x256xbf16, #tpu.memory_space<vmem>>, vector<1x16x256xbf16>,
    %c0_170 = arith.constant 0 : index
    %c0_171 = arith.constant 0 : index
    %450 = vector.load %arg9[%c0_170, %c0_171] : memref<16x17xf32, #tpu.memory_space<vmem>>, vector<16x16xf32>
    %c0_172 = arith.constant 0 : index
    %c16_173 = arith.constant 16 : index
    %451 = vector.load %arg9[%c0_172, %c16_173] : memref<16x17xf32, #tpu.memory_space<vmem>>, vector<16x1xf32>
    %cst_174 = arith.constant dense<0.000000e+00> : vector<16x256xf32>
    %452 = tpu.matmul %450, %445, %cst_174 {dimension_numbers = #tpu.dot_dimension_numbers<[1], [0], [0], [1], [0, 0, 1, 1], [], []>} : vector<16x16xf32>, vector<16x256xf32>, vector<16x256xf32> -> vector<16x256xf32>
    %453 = vector.broadcast %451 : vector<16x1xf32> to vector<16x256xf32>
    %454 = arith.addf %452, %453 : vector<16x256xf32>
    %cst_175 = arith.constant 0.000000e+00 : f32
    %455 = vector.broadcast %cst_175 : f32 to vector<16x256xf32>
    %456 = arith.maximumf %454, %455 : vector<16x256xf32>
    %457 = arith.truncf %456 : vector<16x256xf32> to vector<16x256xbf16>
    %c0_176 = arith.constant 0 : index
    %c0_177 = arith.constant 0 : index
    %c0_178 = arith.constant 0 : index
    %458 = vector.load %arg13[%c0_176, %c0_177, %c0_178] : memref<1x16x256xbf16, #tpu.memory_space<vmem>>, vector<1x16x256xbf16>
    %459 = vector.shape_cast %458 : vector<1x16x256xbf16> to vector<16x256xbf16>
    %460 = vector.shape_cast %457 : vector<16x256xbf16> to vector<1x16x256xbf16>
    tpu.vector_store %arg13[%c0_176, %c0_177, %c0_178], %460 {strides = array<i32>} : memref<1x16x256xbf16, #tpu.memory_space<vmem>>, vector<1x16x256xbf16>,
    return
  }
  func.func @transform_0(%arg0: i32, %arg1: i32) -> (i32, i32, i32) {
    %c0_i32 = arith.constant 0 : i32
    %c0_i32_0 = arith.constant 0 : i32
    return %arg0, %c0_i32, %arg1 : i32, i32, i32
  }
  func.func @transform_1(%arg0: i32, %arg1: i32) -> (i32, i32, i32, i32) {
    %c0_i32 = arith.constant 0 : i32
    %c0_i32_0 = arith.constant 0 : i32
    %c0_i32_1 = arith.constant 0 : i32
    return %arg0, %c0_i32, %c0_i32_0, %arg1 : i32, i32, i32, i32
  }
  func.func @transform_2(%arg0: i32, %arg1: i32) -> (i32, i32, i32) {
    %c0_i32 = arith.constant 0 : i32
    %c0_i32_0 = arith.constant 0 : i32
    return %arg0, %c0_i32, %arg1 : i32, i32, i32
  }
  func.func @transform_3(%arg0: i32, %arg1: i32) -> (i32, i32) {
    %c0_i32 = arith.constant 0 : i32
    %c0_i32_0 = arith.constant 0 : i32
    %c0_i32_1 = arith.constant 0 : i32
    return %c0_i32, %c0_i32_0 : i32, i32
  }
  func.func @transform_4(%arg0: i32, %arg1: i32) -> (i32, i32) {
    %c0_i32 = arith.constant 0 : i32
    %c0_i32_0 = arith.constant 0 : i32
    %c0_i32_1 = arith.constant 0 : i32
    return %c0_i32, %c0_i32_0 : i32, i32
  }
  func.func @transform_5(%arg0: i32, %arg1: i32) -> (i32, i32) {
    %c0_i32 = arith.constant 0 : i32
    %c0_i32_0 = arith.constant 0 : i32
    %c0_i32_1 = arith.constant 0 : i32
    return %c0_i32, %c0_i32_0 : i32, i32
  }
  func.func @transform_6(%arg0: i32, %arg1: i32) -> (i32, i32) {
    %c0_i32 = arith.constant 0 : i32
    %c0_i32_0 = arith.constant 0 : i32
    %c0_i32_1 = arith.constant 0 : i32
    return %c0_i32, %c0_i32_0 : i32, i32
  }
  func.func @transform_7(%arg0: i32, %arg1: i32) -> (i32, i32) {
    %c0_i32 = arith.constant 0 : i32
    %c0_i32_0 = arith.constant 0 : i32
    %c0_i32_1 = arith.constant 0 : i32
    return %c0_i32, %c0_i32_0 : i32, i32
  }
  func.func @transform_8(%arg0: i32, %arg1: i32) -> i32 {
    %c0_i32 = arith.constant 0 : i32
    %c0_i32_0 = arith.constant 0 : i32
    return %c0_i32 : i32
  }
  func.func @transform_9(%arg0: i32, %arg1: i32) -> i32 {
    %c0_i32 = arith.constant 0 : i32
    %c0_i32_0 = arith.constant 0 : i32
    return %c0_i32 : i32
  }
  func.func @transform_10(%arg0: i32, %arg1: i32) -> (i32, i32, i32) {
    %c0_i32 = arith.constant 0 : i32
    %c0_i32_0 = arith.constant 0 : i32
    return %arg0, %c0_i32, %arg1 : i32, i32, i32
  }
  func.func @transform_11(%arg0: i32, %arg1: i32) -> (i32, i32, i32) {
    %c0_i32 = arith.constant 0 : i32
    %c0_i32_0 = arith.constant 0 : i32
    return %arg0, %c0_i32, %arg1 : i32, i32, i32
  }
}

module attributes {stable_mosaic.version = 11 : i64} {
  func.func @_block_fused_kernel(%arg0: i32, %arg1: i32, %arg2: memref<1x27x256xf32, #tpu.memory_space<vmem>>, %arg3: memref<1x8x16x256xbf16, #tpu.memory_space<vmem>>, %arg4: memref<1x16x256xbf16, #tpu.memory_space<vmem>>, %arg5: memref<16x8xf32, #tpu.memory_space<vmem>>, %arg6: memref<16x33xf32, #tpu.memory_space<vmem>>, %arg7: memref<32x17xf32, #tpu.memory_space<vmem>>, %arg8: memref<32x17xf32, #tpu.memory_space<vmem>>, %arg9: memref<8xf32, #tpu.memory_space<smem>>, %arg10: memref<1xf32, #tpu.memory_space<smem>>, %arg11: memref<1x32x256xf32, #tpu.memory_space<vmem>>) attributes {dimension_semantics = [#tpu.dimension_semantics<parallel>, #tpu.dimension_semantics<parallel>], iteration_bounds = array<i64: 2, 1>, scalar_prefetch = 0 : i64, scratch_operands = 0 : i64, tpu.core_type = #tpu.core_type<tc>, window_params = [{transform_indices = @transform_0, window_bounds = array<i64: 1, 27, 256>}, {transform_indices = @transform_1, window_bounds = array<i64: 1, 8, 16, 256>}, {transform_indices = @transform_2, window_bounds = array<i64: 1, 16, 256>}, {pipeline_mode = #tpu.pipeline_mode<synchronous>, transform_indices = @transform_3, window_bounds = array<i64: 16, 8>}, {pipeline_mode = #tpu.pipeline_mode<synchronous>, transform_indices = @transform_4, window_bounds = array<i64: 16, 33>}, {pipeline_mode = #tpu.pipeline_mode<synchronous>, transform_indices = @transform_5, window_bounds = array<i64: 32, 17>}, {pipeline_mode = #tpu.pipeline_mode<synchronous>, transform_indices = @transform_6, window_bounds = array<i64: 32, 17>}, {transform_indices = @transform_7, window_bounds = array<i64: 8>}, {transform_indices = @transform_8, window_bounds = array<i64: 1>}, {transform_indices = @transform_9, window_bounds = array<i64: 1, 32, 256>}]} {
    %c0 = arith.constant 0 : index
    %c0_0 = arith.constant 0 : index
    %c0_1 = arith.constant 0 : index
    %0 = vector.load %arg2[%c0, %c0_0, %c0_1] : memref<1x27x256xf32, #tpu.memory_space<vmem>>, vector<1x1x256xf32>
    %1 = vector.shape_cast %0 : vector<1x1x256xf32> to vector<1x256xf32>
    %c0_2 = arith.constant 0 : index
    %c1 = arith.constant 1 : index
    %c0_3 = arith.constant 0 : index
    %2 = vector.load %arg2[%c0_2, %c1, %c0_3] : memref<1x27x256xf32, #tpu.memory_space<vmem>>, vector<1x1x256xf32>
    %3 = vector.shape_cast %2 : vector<1x1x256xf32> to vector<1x256xf32>
    %c0_4 = arith.constant 0 : index
    %c2 = arith.constant 2 : index
    %c0_5 = arith.constant 0 : index
    %4 = vector.load %arg2[%c0_4, %c2, %c0_5] : memref<1x27x256xf32, #tpu.memory_space<vmem>>, vector<1x1x256xf32>
    %5 = vector.shape_cast %4 : vector<1x1x256xf32> to vector<1x256xf32>
    %c0_6 = arith.constant 0 : index
    %c0_7 = arith.constant 0 : index
    %6 = vector.load %arg5[%c0_6, %c0_7] : memref<16x8xf32, #tpu.memory_space<vmem>>, vector<16x1xf32>
    %c0_8 = arith.constant 0 : index
    %c1_9 = arith.constant 1 : index
    %7 = vector.load %arg5[%c0_8, %c1_9] : memref<16x8xf32, #tpu.memory_space<vmem>>, vector<16x1xf32>
    %c0_10 = arith.constant 0 : index
    %c2_11 = arith.constant 2 : index
    %8 = vector.load %arg5[%c0_10, %c2_11] : memref<16x8xf32, #tpu.memory_space<vmem>>, vector<16x1xf32>
    %c0_12 = arith.constant 0 : index
    %c3 = arith.constant 3 : index
    %9 = vector.load %arg5[%c0_12, %c3] : memref<16x8xf32, #tpu.memory_space<vmem>>, vector<16x1xf32>
    %c0_13 = arith.constant 0 : index
    %c4 = arith.constant 4 : index
    %10 = vector.load %arg5[%c0_13, %c4] : memref<16x8xf32, #tpu.memory_space<vmem>>, vector<16x1xf32>
    %c0_14 = arith.constant 0 : index
    %c5 = arith.constant 5 : index
    %11 = vector.load %arg5[%c0_14, %c5] : memref<16x8xf32, #tpu.memory_space<vmem>>, vector<16x1xf32>
    %c0_15 = arith.constant 0 : index
    %c6 = arith.constant 6 : index
    %12 = vector.load %arg5[%c0_15, %c6] : memref<16x8xf32, #tpu.memory_space<vmem>>, vector<16x1xf32>
    %c0_16 = arith.constant 0 : index
    %c7 = arith.constant 7 : index
    %13 = vector.load %arg5[%c0_16, %c7] : memref<16x8xf32, #tpu.memory_space<vmem>>, vector<16x1xf32>
    %c0_17 = arith.constant 0 : index
    %c0_18 = arith.constant 0 : index
    %14 = vector.load %arg6[%c0_17, %c0_18] : memref<16x33xf32, #tpu.memory_space<vmem>>, vector<16x16xf32>
    %c0_19 = arith.constant 0 : index
    %c16 = arith.constant 16 : index
    %15 = vector.load %arg6[%c0_19, %c16] : memref<16x33xf32, #tpu.memory_space<vmem>>, vector<16x16xf32>
    %c0_20 = arith.constant 0 : index
    %c32 = arith.constant 32 : index
    %16 = vector.load %arg6[%c0_20, %c32] : memref<16x33xf32, #tpu.memory_space<vmem>>, vector<16x1xf32>
    %17 = vector.broadcast %7 : vector<16x1xf32> to vector<16x256xf32>
    %18 = vector.broadcast %1 : vector<1x256xf32> to vector<16x256xf32>
    %19 = arith.mulf %17, %18 : vector<16x256xf32>
    %20 = vector.broadcast %8 : vector<16x1xf32> to vector<16x256xf32>
    %21 = vector.broadcast %3 : vector<1x256xf32> to vector<16x256xf32>
    %22 = arith.mulf %20, %21 : vector<16x256xf32>
    %23 = arith.addf %19, %22 : vector<16x256xf32>
    %24 = vector.broadcast %9 : vector<16x1xf32> to vector<16x256xf32>
    %25 = vector.broadcast %5 : vector<1x256xf32> to vector<16x256xf32>
    %26 = arith.mulf %24, %25 : vector<16x256xf32>
    %27 = arith.addf %23, %26 : vector<16x256xf32>
    %28 = vector.broadcast %13 : vector<16x1xf32> to vector<16x256xf32>
    %29 = arith.addf %27, %28 : vector<16x256xf32>
    %c0_21 = arith.constant 0 : index
    %c3_22 = arith.constant 3 : index
    %c0_23 = arith.constant 0 : index
    %30 = vector.load %arg2[%c0_21, %c3_22, %c0_23] : memref<1x27x256xf32, #tpu.memory_space<vmem>>, vector<1x1x256xf32>
    %31 = vector.shape_cast %30 : vector<1x1x256xf32> to vector<1x256xf32>
    %c0_24 = arith.constant 0 : index
    %c4_25 = arith.constant 4 : index
    %c0_26 = arith.constant 0 : index
    %32 = vector.load %arg2[%c0_24, %c4_25, %c0_26] : memref<1x27x256xf32, #tpu.memory_space<vmem>>, vector<1x1x256xf32>
    %33 = vector.shape_cast %32 : vector<1x1x256xf32> to vector<1x256xf32>
    %c0_27 = arith.constant 0 : index
    %c5_28 = arith.constant 5 : index
    %c0_29 = arith.constant 0 : index
    %34 = vector.load %arg2[%c0_27, %c5_28, %c0_29] : memref<1x27x256xf32, #tpu.memory_space<vmem>>, vector<1x1x256xf32>
    %35 = vector.shape_cast %34 : vector<1x1x256xf32> to vector<1x256xf32>
    %36 = arith.subf %1, %31 : vector<1x256xf32>
    %37 = arith.subf %3, %33 : vector<1x256xf32>
    %38 = arith.subf %5, %35 : vector<1x256xf32>
    %39 = arith.mulf %36, %36 : vector<1x256xf32>
    %40 = arith.mulf %37, %37 : vector<1x256xf32>
    %41 = arith.addf %39, %40 : vector<1x256xf32>
    %42 = arith.mulf %38, %38 : vector<1x256xf32>
    %43 = arith.addf %41, %42 : vector<1x256xf32>
    %44 = math.sqrt %43 : vector<1x256xf32>
    %45 = vector.broadcast %6 : vector<16x1xf32> to vector<16x256xf32>
    %46 = vector.broadcast %44 : vector<1x256xf32> to vector<16x256xf32>
    %47 = arith.mulf %45, %46 : vector<16x256xf32>
    %48 = arith.addf %29, %47 : vector<16x256xf32>
    %49 = vector.broadcast %10 : vector<16x1xf32> to vector<16x256xf32>
    %50 = vector.broadcast %31 : vector<1x256xf32> to vector<16x256xf32>
    %51 = arith.mulf %49, %50 : vector<16x256xf32>
    %52 = arith.addf %48, %51 : vector<16x256xf32>
    %53 = vector.broadcast %11 : vector<16x1xf32> to vector<16x256xf32>
    %54 = vector.broadcast %33 : vector<1x256xf32> to vector<16x256xf32>
    %55 = arith.mulf %53, %54 : vector<16x256xf32>
    %56 = arith.addf %52, %55 : vector<16x256xf32>
    %57 = vector.broadcast %12 : vector<16x1xf32> to vector<16x256xf32>
    %58 = vector.broadcast %35 : vector<1x256xf32> to vector<16x256xf32>
    %59 = arith.mulf %57, %58 : vector<16x256xf32>
    %60 = arith.addf %56, %59 : vector<16x256xf32>
    %cst = arith.constant 0.000000e+00 : f32
    %61 = vector.broadcast %cst : f32 to vector<16x256xf32>
    %62 = arith.maximumf %60, %61 : vector<16x256xf32>
    %c0_30 = arith.constant 0 : index
    %c0_31 = arith.constant 0 : index
    %c0_32 = arith.constant 0 : index
    %c0_33 = arith.constant 0 : index
    %63 = vector.load %arg3[%c0_30, %c0_31, %c0_32, %c0_33] : memref<1x8x16x256xbf16, #tpu.memory_space<vmem>>, vector<1x1x16x256xbf16>
    %64 = vector.shape_cast %63 : vector<1x1x16x256xbf16> to vector<16x256xbf16>
    %65 = arith.extf %64 : vector<16x256xbf16> to vector<16x256xf32>
    %cst_34 = arith.constant dense<0.000000e+00> : vector<16x256xf32>
    %66 = tpu.matmul %14, %65, %cst_34 {dimension_numbers = #tpu.dot_dimension_numbers<[1], [0], [0], [1], [0, 0, 1, 1], [], []>} : vector<16x16xf32>, vector<16x256xf32>, vector<16x256xf32> -> vector<16x256xf32>
    %cst_35 = arith.constant dense<0.000000e+00> : vector<16x256xf32>
    %67 = tpu.matmul %15, %62, %cst_35 {dimension_numbers = #tpu.dot_dimension_numbers<[1], [0], [0], [1], [0, 0, 1, 1], [], []>} : vector<16x16xf32>, vector<16x256xf32>, vector<16x256xf32> -> vector<16x256xf32>
    %68 = arith.addf %66, %67 : vector<16x256xf32>
    %69 = vector.broadcast %16 : vector<16x1xf32> to vector<16x256xf32>
    %70 = arith.addf %68, %69 : vector<16x256xf32>
    %cst_36 = arith.constant 0.000000e+00 : f32
    %71 = vector.broadcast %cst_36 : f32 to vector<16x256xf32>
    %72 = arith.maximumf %70, %71 : vector<16x256xf32>
    %c0_37 = arith.constant 0 : index
    %73 = memref.load %arg9[%c0_37] : memref<8xf32, #tpu.memory_space<smem>>
    %74 = vector.broadcast %73 : f32 to vector<16x256xf32>
    %75 = arith.mulf %74, %72 : vector<16x256xf32>
    %c0_38 = arith.constant 0 : index
    %c6_39 = arith.constant 6 : index
    %c0_40 = arith.constant 0 : index
    %76 = vector.load %arg2[%c0_38, %c6_39, %c0_40] : memref<1x27x256xf32, #tpu.memory_space<vmem>>, vector<1x1x256xf32>
    %77 = vector.shape_cast %76 : vector<1x1x256xf32> to vector<1x256xf32>
    %c0_41 = arith.constant 0 : index
    %c7_42 = arith.constant 7 : index
    %c0_43 = arith.constant 0 : index
    %78 = vector.load %arg2[%c0_41, %c7_42, %c0_43] : memref<1x27x256xf32, #tpu.memory_space<vmem>>, vector<1x1x256xf32>
    %79 = vector.shape_cast %78 : vector<1x1x256xf32> to vector<1x256xf32>
    %c0_44 = arith.constant 0 : index
    %c8 = arith.constant 8 : index
    %c0_45 = arith.constant 0 : index
    %80 = vector.load %arg2[%c0_44, %c8, %c0_45] : memref<1x27x256xf32, #tpu.memory_space<vmem>>, vector<1x1x256xf32>
    %81 = vector.shape_cast %80 : vector<1x1x256xf32> to vector<1x256xf32>
    %82 = arith.subf %1, %77 : vector<1x256xf32>
    %83 = arith.subf %3, %79 : vector<1x256xf32>
    %84 = arith.subf %5, %81 : vector<1x256xf32>
    %85 = arith.mulf %82, %82 : vector<1x256xf32>
    %86 = arith.mulf %83, %83 : vector<1x256xf32>
    %87 = arith.addf %85, %86 : vector<1x256xf32>
    %88 = arith.mulf %84, %84 : vector<1x256xf32>
    %89 = arith.addf %87, %88 : vector<1x256xf32>
    %90 = math.sqrt %89 : vector<1x256xf32>
    %91 = vector.broadcast %6 : vector<16x1xf32> to vector<16x256xf32>
    %92 = vector.broadcast %90 : vector<1x256xf32> to vector<16x256xf32>
    %93 = arith.mulf %91, %92 : vector<16x256xf32>
    %94 = arith.addf %29, %93 : vector<16x256xf32>
    %95 = vector.broadcast %10 : vector<16x1xf32> to vector<16x256xf32>
    %96 = vector.broadcast %77 : vector<1x256xf32> to vector<16x256xf32>
    %97 = arith.mulf %95, %96 : vector<16x256xf32>
    %98 = arith.addf %94, %97 : vector<16x256xf32>
    %99 = vector.broadcast %11 : vector<16x1xf32> to vector<16x256xf32>
    %100 = vector.broadcast %79 : vector<1x256xf32> to vector<16x256xf32>
    %101 = arith.mulf %99, %100 : vector<16x256xf32>
    %102 = arith.addf %98, %101 : vector<16x256xf32>
    %103 = vector.broadcast %12 : vector<16x1xf32> to vector<16x256xf32>
    %104 = vector.broadcast %81 : vector<1x256xf32> to vector<16x256xf32>
    %105 = arith.mulf %103, %104 : vector<16x256xf32>
    %106 = arith.addf %102, %105 : vector<16x256xf32>
    %cst_46 = arith.constant 0.000000e+00 : f32
    %107 = vector.broadcast %cst_46 : f32 to vector<16x256xf32>
    %108 = arith.maximumf %106, %107 : vector<16x256xf32>
    %c0_47 = arith.constant 0 : index
    %c1_48 = arith.constant 1 : index
    %c0_49 = arith.constant 0 : index
    %c0_50 = arith.constant 0 : index
    %109 = vector.load %arg3[%c0_47, %c1_48, %c0_49, %c0_50] : memref<1x8x16x256xbf16, #tpu.memory_space<vmem>>, vector<1x1x16x256xbf16>
    %110 = vector.shape_cast %109 : vector<1x1x16x256xbf16> to vector<16x256xbf16>
    %111 = arith.extf %110 : vector<16x256xbf16> to vector<16x256xf32>
    %cst_51 = arith.constant dense<0.000000e+00> : vector<16x256xf32>
    %112 = tpu.matmul %14, %111, %cst_51 {dimension_numbers = #tpu.dot_dimension_numbers<[1], [0], [0], [1], [0, 0, 1, 1], [], []>} : vector<16x16xf32>, vector<16x256xf32>, vector<16x256xf32> -> vector<16x256xf32>
    %cst_52 = arith.constant dense<0.000000e+00> : vector<16x256xf32>
    %113 = tpu.matmul %15, %108, %cst_52 {dimension_numbers = #tpu.dot_dimension_numbers<[1], [0], [0], [1], [0, 0, 1, 1], [], []>} : vector<16x16xf32>, vector<16x256xf32>, vector<16x256xf32> -> vector<16x256xf32>
    %114 = arith.addf %112, %113 : vector<16x256xf32>
    %115 = vector.broadcast %16 : vector<16x1xf32> to vector<16x256xf32>
    %116 = arith.addf %114, %115 : vector<16x256xf32>
    %cst_53 = arith.constant 0.000000e+00 : f32
    %117 = vector.broadcast %cst_53 : f32 to vector<16x256xf32>
    %118 = arith.maximumf %116, %117 : vector<16x256xf32>
    %c1_54 = arith.constant 1 : index
    %119 = memref.load %arg9[%c1_54] : memref<8xf32, #tpu.memory_space<smem>>
    %120 = vector.broadcast %119 : f32 to vector<16x256xf32>
    %121 = arith.mulf %120, %118 : vector<16x256xf32>
    %122 = arith.maximumf %72, %118 : vector<16x256xf32>
    %123 = arith.addf %75, %121 : vector<16x256xf32>
    %c0_55 = arith.constant 0 : index
    %c9 = arith.constant 9 : index
    %c0_56 = arith.constant 0 : index
    %124 = vector.load %arg2[%c0_55, %c9, %c0_56] : memref<1x27x256xf32, #tpu.memory_space<vmem>>, vector<1x1x256xf32>
    %125 = vector.shape_cast %124 : vector<1x1x256xf32> to vector<1x256xf32>
    %c0_57 = arith.constant 0 : index
    %c10 = arith.constant 10 : index
    %c0_58 = arith.constant 0 : index
    %126 = vector.load %arg2[%c0_57, %c10, %c0_58] : memref<1x27x256xf32, #tpu.memory_space<vmem>>, vector<1x1x256xf32>
    %127 = vector.shape_cast %126 : vector<1x1x256xf32> to vector<1x256xf32>
    %c0_59 = arith.constant 0 : index
    %c11 = arith.constant 11 : index
    %c0_60 = arith.constant 0 : index
    %128 = vector.load %arg2[%c0_59, %c11, %c0_60] : memref<1x27x256xf32, #tpu.memory_space<vmem>>, vector<1x1x256xf32>
    %129 = vector.shape_cast %128 : vector<1x1x256xf32> to vector<1x256xf32>
    %130 = arith.subf %1, %125 : vector<1x256xf32>
    %131 = arith.subf %3, %127 : vector<1x256xf32>
    %132 = arith.subf %5, %129 : vector<1x256xf32>
    %133 = arith.mulf %130, %130 : vector<1x256xf32>
    %134 = arith.mulf %131, %131 : vector<1x256xf32>
    %135 = arith.addf %133, %134 : vector<1x256xf32>
    %136 = arith.mulf %132, %132 : vector<1x256xf32>
    %137 = arith.addf %135, %136 : vector<1x256xf32>
    %138 = math.sqrt %137 : vector<1x256xf32>
    %139 = vector.broadcast %6 : vector<16x1xf32> to vector<16x256xf32>
    %140 = vector.broadcast %138 : vector<1x256xf32> to vector<16x256xf32>
    %141 = arith.mulf %139, %140 : vector<16x256xf32>
    %142 = arith.addf %29, %141 : vector<16x256xf32>
    %143 = vector.broadcast %10 : vector<16x1xf32> to vector<16x256xf32>
    %144 = vector.broadcast %125 : vector<1x256xf32> to vector<16x256xf32>
    %145 = arith.mulf %143, %144 : vector<16x256xf32>
    %146 = arith.addf %142, %145 : vector<16x256xf32>
    %147 = vector.broadcast %11 : vector<16x1xf32> to vector<16x256xf32>
    %148 = vector.broadcast %127 : vector<1x256xf32> to vector<16x256xf32>
    %149 = arith.mulf %147, %148 : vector<16x256xf32>
    %150 = arith.addf %146, %149 : vector<16x256xf32>
    %151 = vector.broadcast %12 : vector<16x1xf32> to vector<16x256xf32>
    %152 = vector.broadcast %129 : vector<1x256xf32> to vector<16x256xf32>
    %153 = arith.mulf %151, %152 : vector<16x256xf32>
    %154 = arith.addf %150, %153 : vector<16x256xf32>
    %cst_61 = arith.constant 0.000000e+00 : f32
    %155 = vector.broadcast %cst_61 : f32 to vector<16x256xf32>
    %156 = arith.maximumf %154, %155 : vector<16x256xf32>
    %c0_62 = arith.constant 0 : index
    %c2_63 = arith.constant 2 : index
    %c0_64 = arith.constant 0 : index
    %c0_65 = arith.constant 0 : index
    %157 = vector.load %arg3[%c0_62, %c2_63, %c0_64, %c0_65] : memref<1x8x16x256xbf16, #tpu.memory_space<vmem>>, vector<1x1x16x256xbf16>
    %158 = vector.shape_cast %157 : vector<1x1x16x256xbf16> to vector<16x256xbf16>
    %159 = arith.extf %158 : vector<16x256xbf16> to vector<16x256xf32>
    %cst_66 = arith.constant dense<0.000000e+00> : vector<16x256xf32>
    %160 = tpu.matmul %14, %159, %cst_66 {dimension_numbers = #tpu.dot_dimension_numbers<[1], [0], [0], [1], [0, 0, 1, 1], [], []>} : vector<16x16xf32>, vector<16x256xf32>, vector<16x256xf32> -> vector<16x256xf32>
    %cst_67 = arith.constant dense<0.000000e+00> : vector<16x256xf32>
    %161 = tpu.matmul %15, %156, %cst_67 {dimension_numbers = #tpu.dot_dimension_numbers<[1], [0], [0], [1], [0, 0, 1, 1], [], []>} : vector<16x16xf32>, vector<16x256xf32>, vector<16x256xf32> -> vector<16x256xf32>
    %162 = arith.addf %160, %161 : vector<16x256xf32>
    %163 = vector.broadcast %16 : vector<16x1xf32> to vector<16x256xf32>
    %164 = arith.addf %162, %163 : vector<16x256xf32>
    %cst_68 = arith.constant 0.000000e+00 : f32
    %165 = vector.broadcast %cst_68 : f32 to vector<16x256xf32>
    %166 = arith.maximumf %164, %165 : vector<16x256xf32>
    %c2_69 = arith.constant 2 : index
    %167 = memref.load %arg9[%c2_69] : memref<8xf32, #tpu.memory_space<smem>>
    %168 = vector.broadcast %167 : f32 to vector<16x256xf32>
    %169 = arith.mulf %168, %166 : vector<16x256xf32>
    %170 = arith.maximumf %122, %166 : vector<16x256xf32>
    %171 = arith.addf %123, %169 : vector<16x256xf32>
    %c0_70 = arith.constant 0 : index
    %c12 = arith.constant 12 : index
    %c0_71 = arith.constant 0 : index
    %172 = vector.load %arg2[%c0_70, %c12, %c0_71] : memref<1x27x256xf32, #tpu.memory_space<vmem>>, vector<1x1x256xf32>
    %173 = vector.shape_cast %172 : vector<1x1x256xf32> to vector<1x256xf32>
    %c0_72 = arith.constant 0 : index
    %c13 = arith.constant 13 : index
    %c0_73 = arith.constant 0 : index
    %174 = vector.load %arg2[%c0_72, %c13, %c0_73] : memref<1x27x256xf32, #tpu.memory_space<vmem>>, vector<1x1x256xf32>
    %175 = vector.shape_cast %174 : vector<1x1x256xf32> to vector<1x256xf32>
    %c0_74 = arith.constant 0 : index
    %c14 = arith.constant 14 : index
    %c0_75 = arith.constant 0 : index
    %176 = vector.load %arg2[%c0_74, %c14, %c0_75] : memref<1x27x256xf32, #tpu.memory_space<vmem>>, vector<1x1x256xf32>
    %177 = vector.shape_cast %176 : vector<1x1x256xf32> to vector<1x256xf32>
    %178 = arith.subf %1, %173 : vector<1x256xf32>
    %179 = arith.subf %3, %175 : vector<1x256xf32>
    %180 = arith.subf %5, %177 : vector<1x256xf32>
    %181 = arith.mulf %178, %178 : vector<1x256xf32>
    %182 = arith.mulf %179, %179 : vector<1x256xf32>
    %183 = arith.addf %181, %182 : vector<1x256xf32>
    %184 = arith.mulf %180, %180 : vector<1x256xf32>
    %185 = arith.addf %183, %184 : vector<1x256xf32>
    %186 = math.sqrt %185 : vector<1x256xf32>
    %187 = vector.broadcast %6 : vector<16x1xf32> to vector<16x256xf32>
    %188 = vector.broadcast %186 : vector<1x256xf32> to vector<16x256xf32>
    %189 = arith.mulf %187, %188 : vector<16x256xf32>
    %190 = arith.addf %29, %189 : vector<16x256xf32>
    %191 = vector.broadcast %10 : vector<16x1xf32> to vector<16x256xf32>
    %192 = vector.broadcast %173 : vector<1x256xf32> to vector<16x256xf32>
    %193 = arith.mulf %191, %192 : vector<16x256xf32>
    %194 = arith.addf %190, %193 : vector<16x256xf32>
    %195 = vector.broadcast %11 : vector<16x1xf32> to vector<16x256xf32>
    %196 = vector.broadcast %175 : vector<1x256xf32> to vector<16x256xf32>
    %197 = arith.mulf %195, %196 : vector<16x256xf32>
    %198 = arith.addf %194, %197 : vector<16x256xf32>
    %199 = vector.broadcast %12 : vector<16x1xf32> to vector<16x256xf32>
    %200 = vector.broadcast %177 : vector<1x256xf32> to vector<16x256xf32>
    %201 = arith.mulf %199, %200 : vector<16x256xf32>
    %202 = arith.addf %198, %201 : vector<16x256xf32>
    %cst_76 = arith.constant 0.000000e+00 : f32
    %203 = vector.broadcast %cst_76 : f32 to vector<16x256xf32>
    %204 = arith.maximumf %202, %203 : vector<16x256xf32>
    %c0_77 = arith.constant 0 : index
    %c3_78 = arith.constant 3 : index
    %c0_79 = arith.constant 0 : index
    %c0_80 = arith.constant 0 : index
    %205 = vector.load %arg3[%c0_77, %c3_78, %c0_79, %c0_80] : memref<1x8x16x256xbf16, #tpu.memory_space<vmem>>, vector<1x1x16x256xbf16>
    %206 = vector.shape_cast %205 : vector<1x1x16x256xbf16> to vector<16x256xbf16>
    %207 = arith.extf %206 : vector<16x256xbf16> to vector<16x256xf32>
    %cst_81 = arith.constant dense<0.000000e+00> : vector<16x256xf32>
    %208 = tpu.matmul %14, %207, %cst_81 {dimension_numbers = #tpu.dot_dimension_numbers<[1], [0], [0], [1], [0, 0, 1, 1], [], []>} : vector<16x16xf32>, vector<16x256xf32>, vector<16x256xf32> -> vector<16x256xf32>
    %cst_82 = arith.constant dense<0.000000e+00> : vector<16x256xf32>
    %209 = tpu.matmul %15, %204, %cst_82 {dimension_numbers = #tpu.dot_dimension_numbers<[1], [0], [0], [1], [0, 0, 1, 1], [], []>} : vector<16x16xf32>, vector<16x256xf32>, vector<16x256xf32> -> vector<16x256xf32>
    %210 = arith.addf %208, %209 : vector<16x256xf32>
    %211 = vector.broadcast %16 : vector<16x1xf32> to vector<16x256xf32>
    %212 = arith.addf %210, %211 : vector<16x256xf32>
    %cst_83 = arith.constant 0.000000e+00 : f32
    %213 = vector.broadcast %cst_83 : f32 to vector<16x256xf32>
    %214 = arith.maximumf %212, %213 : vector<16x256xf32>
    %c3_84 = arith.constant 3 : index
    %215 = memref.load %arg9[%c3_84] : memref<8xf32, #tpu.memory_space<smem>>
    %216 = vector.broadcast %215 : f32 to vector<16x256xf32>
    %217 = arith.mulf %216, %214 : vector<16x256xf32>
    %218 = arith.maximumf %170, %214 : vector<16x256xf32>
    %219 = arith.addf %171, %217 : vector<16x256xf32>
    %c0_85 = arith.constant 0 : index
    %c15 = arith.constant 15 : index
    %c0_86 = arith.constant 0 : index
    %220 = vector.load %arg2[%c0_85, %c15, %c0_86] : memref<1x27x256xf32, #tpu.memory_space<vmem>>, vector<1x1x256xf32>
    %221 = vector.shape_cast %220 : vector<1x1x256xf32> to vector<1x256xf32>
    %c0_87 = arith.constant 0 : index
    %c16_88 = arith.constant 16 : index
    %c0_89 = arith.constant 0 : index
    %222 = vector.load %arg2[%c0_87, %c16_88, %c0_89] : memref<1x27x256xf32, #tpu.memory_space<vmem>>, vector<1x1x256xf32>
    %223 = vector.shape_cast %222 : vector<1x1x256xf32> to vector<1x256xf32>
    %c0_90 = arith.constant 0 : index
    %c17 = arith.constant 17 : index
    %c0_91 = arith.constant 0 : index
    %224 = vector.load %arg2[%c0_90, %c17, %c0_91] : memref<1x27x256xf32, #tpu.memory_space<vmem>>, vector<1x1x256xf32>
    %225 = vector.shape_cast %224 : vector<1x1x256xf32> to vector<1x256xf32>
    %226 = arith.subf %1, %221 : vector<1x256xf32>
    %227 = arith.subf %3, %223 : vector<1x256xf32>
    %228 = arith.subf %5, %225 : vector<1x256xf32>
    %229 = arith.mulf %226, %226 : vector<1x256xf32>
    %230 = arith.mulf %227, %227 : vector<1x256xf32>
    %231 = arith.addf %229, %230 : vector<1x256xf32>
    %232 = arith.mulf %228, %228 : vector<1x256xf32>
    %233 = arith.addf %231, %232 : vector<1x256xf32>
    %234 = math.sqrt %233 : vector<1x256xf32>
    %235 = vector.broadcast %6 : vector<16x1xf32> to vector<16x256xf32>
    %236 = vector.broadcast %234 : vector<1x256xf32> to vector<16x256xf32>
    %237 = arith.mulf %235, %236 : vector<16x256xf32>
    %238 = arith.addf %29, %237 : vector<16x256xf32>
    %239 = vector.broadcast %10 : vector<16x1xf32> to vector<16x256xf32>
    %240 = vector.broadcast %221 : vector<1x256xf32> to vector<16x256xf32>
    %241 = arith.mulf %239, %240 : vector<16x256xf32>
    %242 = arith.addf %238, %241 : vector<16x256xf32>
    %243 = vector.broadcast %11 : vector<16x1xf32> to vector<16x256xf32>
    %244 = vector.broadcast %223 : vector<1x256xf32> to vector<16x256xf32>
    %245 = arith.mulf %243, %244 : vector<16x256xf32>
    %246 = arith.addf %242, %245 : vector<16x256xf32>
    %247 = vector.broadcast %12 : vector<16x1xf32> to vector<16x256xf32>
    %248 = vector.broadcast %225 : vector<1x256xf32> to vector<16x256xf32>
    %249 = arith.mulf %247, %248 : vector<16x256xf32>
    %250 = arith.addf %246, %249 : vector<16x256xf32>
    %cst_92 = arith.constant 0.000000e+00 : f32
    %251 = vector.broadcast %cst_92 : f32 to vector<16x256xf32>
    %252 = arith.maximumf %250, %251 : vector<16x256xf32>
    %c0_93 = arith.constant 0 : index
    %c4_94 = arith.constant 4 : index
    %c0_95 = arith.constant 0 : index
    %c0_96 = arith.constant 0 : index
    %253 = vector.load %arg3[%c0_93, %c4_94, %c0_95, %c0_96] : memref<1x8x16x256xbf16, #tpu.memory_space<vmem>>, vector<1x1x16x256xbf16>
    %254 = vector.shape_cast %253 : vector<1x1x16x256xbf16> to vector<16x256xbf16>
    %255 = arith.extf %254 : vector<16x256xbf16> to vector<16x256xf32>
    %cst_97 = arith.constant dense<0.000000e+00> : vector<16x256xf32>
    %256 = tpu.matmul %14, %255, %cst_97 {dimension_numbers = #tpu.dot_dimension_numbers<[1], [0], [0], [1], [0, 0, 1, 1], [], []>} : vector<16x16xf32>, vector<16x256xf32>, vector<16x256xf32> -> vector<16x256xf32>
    %cst_98 = arith.constant dense<0.000000e+00> : vector<16x256xf32>
    %257 = tpu.matmul %15, %252, %cst_98 {dimension_numbers = #tpu.dot_dimension_numbers<[1], [0], [0], [1], [0, 0, 1, 1], [], []>} : vector<16x16xf32>, vector<16x256xf32>, vector<16x256xf32> -> vector<16x256xf32>
    %258 = arith.addf %256, %257 : vector<16x256xf32>
    %259 = vector.broadcast %16 : vector<16x1xf32> to vector<16x256xf32>
    %260 = arith.addf %258, %259 : vector<16x256xf32>
    %cst_99 = arith.constant 0.000000e+00 : f32
    %261 = vector.broadcast %cst_99 : f32 to vector<16x256xf32>
    %262 = arith.maximumf %260, %261 : vector<16x256xf32>
    %c4_100 = arith.constant 4 : index
    %263 = memref.load %arg9[%c4_100] : memref<8xf32, #tpu.memory_space<smem>>
    %264 = vector.broadcast %263 : f32 to vector<16x256xf32>
    %265 = arith.mulf %264, %262 : vector<16x256xf32>
    %266 = arith.maximumf %218, %262 : vector<16x256xf32>
    %267 = arith.addf %219, %265 : vector<16x256xf32>
    %c0_101 = arith.constant 0 : index
    %c18 = arith.constant 18 : index
    %c0_102 = arith.constant 0 : index
    %268 = vector.load %arg2[%c0_101, %c18, %c0_102] : memref<1x27x256xf32, #tpu.memory_space<vmem>>, vector<1x1x256xf32>
    %269 = vector.shape_cast %268 : vector<1x1x256xf32> to vector<1x256xf32>
    %c0_103 = arith.constant 0 : index
    %c19 = arith.constant 19 : index
    %c0_104 = arith.constant 0 : index
    %270 = vector.load %arg2[%c0_103, %c19, %c0_104] : memref<1x27x256xf32, #tpu.memory_space<vmem>>, vector<1x1x256xf32>
    %271 = vector.shape_cast %270 : vector<1x1x256xf32> to vector<1x256xf32>
    %c0_105 = arith.constant 0 : index
    %c20 = arith.constant 20 : index
    %c0_106 = arith.constant 0 : index
    %272 = vector.load %arg2[%c0_105, %c20, %c0_106] : memref<1x27x256xf32, #tpu.memory_space<vmem>>, vector<1x1x256xf32>
    %273 = vector.shape_cast %272 : vector<1x1x256xf32> to vector<1x256xf32>
    %274 = arith.subf %1, %269 : vector<1x256xf32>
    %275 = arith.subf %3, %271 : vector<1x256xf32>
    %276 = arith.subf %5, %273 : vector<1x256xf32>
    %277 = arith.mulf %274, %274 : vector<1x256xf32>
    %278 = arith.mulf %275, %275 : vector<1x256xf32>
    %279 = arith.addf %277, %278 : vector<1x256xf32>
    %280 = arith.mulf %276, %276 : vector<1x256xf32>
    %281 = arith.addf %279, %280 : vector<1x256xf32>
    %282 = math.sqrt %281 : vector<1x256xf32>
    %283 = vector.broadcast %6 : vector<16x1xf32> to vector<16x256xf32>
    %284 = vector.broadcast %282 : vector<1x256xf32> to vector<16x256xf32>
    %285 = arith.mulf %283, %284 : vector<16x256xf32>
    %286 = arith.addf %29, %285 : vector<16x256xf32>
    %287 = vector.broadcast %10 : vector<16x1xf32> to vector<16x256xf32>
    %288 = vector.broadcast %269 : vector<1x256xf32> to vector<16x256xf32>
    %289 = arith.mulf %287, %288 : vector<16x256xf32>
    %290 = arith.addf %286, %289 : vector<16x256xf32>
    %291 = vector.broadcast %11 : vector<16x1xf32> to vector<16x256xf32>
    %292 = vector.broadcast %271 : vector<1x256xf32> to vector<16x256xf32>
    %293 = arith.mulf %291, %292 : vector<16x256xf32>
    %294 = arith.addf %290, %293 : vector<16x256xf32>
    %295 = vector.broadcast %12 : vector<16x1xf32> to vector<16x256xf32>
    %296 = vector.broadcast %273 : vector<1x256xf32> to vector<16x256xf32>
    %297 = arith.mulf %295, %296 : vector<16x256xf32>
    %298 = arith.addf %294, %297 : vector<16x256xf32>
    %cst_107 = arith.constant 0.000000e+00 : f32
    %299 = vector.broadcast %cst_107 : f32 to vector<16x256xf32>
    %300 = arith.maximumf %298, %299 : vector<16x256xf32>
    %c0_108 = arith.constant 0 : index
    %c5_109 = arith.constant 5 : index
    %c0_110 = arith.constant 0 : index
    %c0_111 = arith.constant 0 : index
    %301 = vector.load %arg3[%c0_108, %c5_109, %c0_110, %c0_111] : memref<1x8x16x256xbf16, #tpu.memory_space<vmem>>, vector<1x1x16x256xbf16>
    %302 = vector.shape_cast %301 : vector<1x1x16x256xbf16> to vector<16x256xbf16>
    %303 = arith.extf %302 : vector<16x256xbf16> to vector<16x256xf32>
    %cst_112 = arith.constant dense<0.000000e+00> : vector<16x256xf32>
    %304 = tpu.matmul %14, %303, %cst_112 {dimension_numbers = #tpu.dot_dimension_numbers<[1], [0], [0], [1], [0, 0, 1, 1], [], []>} : vector<16x16xf32>, vector<16x256xf32>, vector<16x256xf32> -> vector<16x256xf32>
    %cst_113 = arith.constant dense<0.000000e+00> : vector<16x256xf32>
    %305 = tpu.matmul %15, %300, %cst_113 {dimension_numbers = #tpu.dot_dimension_numbers<[1], [0], [0], [1], [0, 0, 1, 1], [], []>} : vector<16x16xf32>, vector<16x256xf32>, vector<16x256xf32> -> vector<16x256xf32>
    %306 = arith.addf %304, %305 : vector<16x256xf32>
    %307 = vector.broadcast %16 : vector<16x1xf32> to vector<16x256xf32>
    %308 = arith.addf %306, %307 : vector<16x256xf32>
    %cst_114 = arith.constant 0.000000e+00 : f32
    %309 = vector.broadcast %cst_114 : f32 to vector<16x256xf32>
    %310 = arith.maximumf %308, %309 : vector<16x256xf32>
    %c5_115 = arith.constant 5 : index
    %311 = memref.load %arg9[%c5_115] : memref<8xf32, #tpu.memory_space<smem>>
    %312 = vector.broadcast %311 : f32 to vector<16x256xf32>
    %313 = arith.mulf %312, %310 : vector<16x256xf32>
    %314 = arith.maximumf %266, %310 : vector<16x256xf32>
    %315 = arith.addf %267, %313 : vector<16x256xf32>
    %c0_116 = arith.constant 0 : index
    %c21 = arith.constant 21 : index
    %c0_117 = arith.constant 0 : index
    %316 = vector.load %arg2[%c0_116, %c21, %c0_117] : memref<1x27x256xf32, #tpu.memory_space<vmem>>, vector<1x1x256xf32>
    %317 = vector.shape_cast %316 : vector<1x1x256xf32> to vector<1x256xf32>
    %c0_118 = arith.constant 0 : index
    %c22 = arith.constant 22 : index
    %c0_119 = arith.constant 0 : index
    %318 = vector.load %arg2[%c0_118, %c22, %c0_119] : memref<1x27x256xf32, #tpu.memory_space<vmem>>, vector<1x1x256xf32>
    %319 = vector.shape_cast %318 : vector<1x1x256xf32> to vector<1x256xf32>
    %c0_120 = arith.constant 0 : index
    %c23 = arith.constant 23 : index
    %c0_121 = arith.constant 0 : index
    %320 = vector.load %arg2[%c0_120, %c23, %c0_121] : memref<1x27x256xf32, #tpu.memory_space<vmem>>, vector<1x1x256xf32>
    %321 = vector.shape_cast %320 : vector<1x1x256xf32> to vector<1x256xf32>
    %322 = arith.subf %1, %317 : vector<1x256xf32>
    %323 = arith.subf %3, %319 : vector<1x256xf32>
    %324 = arith.subf %5, %321 : vector<1x256xf32>
    %325 = arith.mulf %322, %322 : vector<1x256xf32>
    %326 = arith.mulf %323, %323 : vector<1x256xf32>
    %327 = arith.addf %325, %326 : vector<1x256xf32>
    %328 = arith.mulf %324, %324 : vector<1x256xf32>
    %329 = arith.addf %327, %328 : vector<1x256xf32>
    %330 = math.sqrt %329 : vector<1x256xf32>
    %331 = vector.broadcast %6 : vector<16x1xf32> to vector<16x256xf32>
    %332 = vector.broadcast %330 : vector<1x256xf32> to vector<16x256xf32>
    %333 = arith.mulf %331, %332 : vector<16x256xf32>
    %334 = arith.addf %29, %333 : vector<16x256xf32>
    %335 = vector.broadcast %10 : vector<16x1xf32> to vector<16x256xf32>
    %336 = vector.broadcast %317 : vector<1x256xf32> to vector<16x256xf32>
    %337 = arith.mulf %335, %336 : vector<16x256xf32>
    %338 = arith.addf %334, %337 : vector<16x256xf32>
    %339 = vector.broadcast %11 : vector<16x1xf32> to vector<16x256xf32>
    %340 = vector.broadcast %319 : vector<1x256xf32> to vector<16x256xf32>
    %341 = arith.mulf %339, %340 : vector<16x256xf32>
    %342 = arith.addf %338, %341 : vector<16x256xf32>
    %343 = vector.broadcast %12 : vector<16x1xf32> to vector<16x256xf32>
    %344 = vector.broadcast %321 : vector<1x256xf32> to vector<16x256xf32>
    %345 = arith.mulf %343, %344 : vector<16x256xf32>
    %346 = arith.addf %342, %345 : vector<16x256xf32>
    %cst_122 = arith.constant 0.000000e+00 : f32
    %347 = vector.broadcast %cst_122 : f32 to vector<16x256xf32>
    %348 = arith.maximumf %346, %347 : vector<16x256xf32>
    %c0_123 = arith.constant 0 : index
    %c6_124 = arith.constant 6 : index
    %c0_125 = arith.constant 0 : index
    %c0_126 = arith.constant 0 : index
    %349 = vector.load %arg3[%c0_123, %c6_124, %c0_125, %c0_126] : memref<1x8x16x256xbf16, #tpu.memory_space<vmem>>, vector<1x1x16x256xbf16>
    %350 = vector.shape_cast %349 : vector<1x1x16x256xbf16> to vector<16x256xbf16>
    %351 = arith.extf %350 : vector<16x256xbf16> to vector<16x256xf32>
    %cst_127 = arith.constant dense<0.000000e+00> : vector<16x256xf32>
    %352 = tpu.matmul %14, %351, %cst_127 {dimension_numbers = #tpu.dot_dimension_numbers<[1], [0], [0], [1], [0, 0, 1, 1], [], []>} : vector<16x16xf32>, vector<16x256xf32>, vector<16x256xf32> -> vector<16x256xf32>
    %cst_128 = arith.constant dense<0.000000e+00> : vector<16x256xf32>
    %353 = tpu.matmul %15, %348, %cst_128 {dimension_numbers = #tpu.dot_dimension_numbers<[1], [0], [0], [1], [0, 0, 1, 1], [], []>} : vector<16x16xf32>, vector<16x256xf32>, vector<16x256xf32> -> vector<16x256xf32>
    %354 = arith.addf %352, %353 : vector<16x256xf32>
    %355 = vector.broadcast %16 : vector<16x1xf32> to vector<16x256xf32>
    %356 = arith.addf %354, %355 : vector<16x256xf32>
    %cst_129 = arith.constant 0.000000e+00 : f32
    %357 = vector.broadcast %cst_129 : f32 to vector<16x256xf32>
    %358 = arith.maximumf %356, %357 : vector<16x256xf32>
    %c6_130 = arith.constant 6 : index
    %359 = memref.load %arg9[%c6_130] : memref<8xf32, #tpu.memory_space<smem>>
    %360 = vector.broadcast %359 : f32 to vector<16x256xf32>
    %361 = arith.mulf %360, %358 : vector<16x256xf32>
    %362 = arith.maximumf %314, %358 : vector<16x256xf32>
    %363 = arith.addf %315, %361 : vector<16x256xf32>
    %c0_131 = arith.constant 0 : index
    %c24 = arith.constant 24 : index
    %c0_132 = arith.constant 0 : index
    %364 = vector.load %arg2[%c0_131, %c24, %c0_132] : memref<1x27x256xf32, #tpu.memory_space<vmem>>, vector<1x1x256xf32>
    %365 = vector.shape_cast %364 : vector<1x1x256xf32> to vector<1x256xf32>
    %c0_133 = arith.constant 0 : index
    %c25 = arith.constant 25 : index
    %c0_134 = arith.constant 0 : index
    %366 = vector.load %arg2[%c0_133, %c25, %c0_134] : memref<1x27x256xf32, #tpu.memory_space<vmem>>, vector<1x1x256xf32>
    %367 = vector.shape_cast %366 : vector<1x1x256xf32> to vector<1x256xf32>
    %c0_135 = arith.constant 0 : index
    %c26 = arith.constant 26 : index
    %c0_136 = arith.constant 0 : index
    %368 = vector.load %arg2[%c0_135, %c26, %c0_136] : memref<1x27x256xf32, #tpu.memory_space<vmem>>, vector<1x1x256xf32>
    %369 = vector.shape_cast %368 : vector<1x1x256xf32> to vector<1x256xf32>
    %370 = arith.subf %1, %365 : vector<1x256xf32>
    %371 = arith.subf %3, %367 : vector<1x256xf32>
    %372 = arith.subf %5, %369 : vector<1x256xf32>
    %373 = arith.mulf %370, %370 : vector<1x256xf32>
    %374 = arith.mulf %371, %371 : vector<1x256xf32>
    %375 = arith.addf %373, %374 : vector<1x256xf32>
    %376 = arith.mulf %372, %372 : vector<1x256xf32>
    %377 = arith.addf %375, %376 : vector<1x256xf32>
    %378 = math.sqrt %377 : vector<1x256xf32>
    %379 = vector.broadcast %6 : vector<16x1xf32> to vector<16x256xf32>
    %380 = vector.broadcast %378 : vector<1x256xf32> to vector<16x256xf32>
    %381 = arith.mulf %379, %380 : vector<16x256xf32>
    %382 = arith.addf %29, %381 : vector<16x256xf32>
    %383 = vector.broadcast %10 : vector<16x1xf32> to vector<16x256xf32>
    %384 = vector.broadcast %365 : vector<1x256xf32> to vector<16x256xf32>
    %385 = arith.mulf %383, %384 : vector<16x256xf32>
    %386 = arith.addf %382, %385 : vector<16x256xf32>
    %387 = vector.broadcast %11 : vector<16x1xf32> to vector<16x256xf32>
    %388 = vector.broadcast %367 : vector<1x256xf32> to vector<16x256xf32>
    %389 = arith.mulf %387, %388 : vector<16x256xf32>
    %390 = arith.addf %386, %389 : vector<16x256xf32>
    %391 = vector.broadcast %12 : vector<16x1xf32> to vector<16x256xf32>
    %392 = vector.broadcast %369 : vector<1x256xf32> to vector<16x256xf32>
    %393 = arith.mulf %391, %392 : vector<16x256xf32>
    %394 = arith.addf %390, %393 : vector<16x256xf32>
    %cst_137 = arith.constant 0.000000e+00 : f32
    %395 = vector.broadcast %cst_137 : f32 to vector<16x256xf32>
    %396 = arith.maximumf %394, %395 : vector<16x256xf32>
    %c0_138 = arith.constant 0 : index
    %c7_139 = arith.constant 7 : index
    %c0_140 = arith.constant 0 : index
    %c0_141 = arith.constant 0 : index
    %397 = vector.load %arg3[%c0_138, %c7_139, %c0_140, %c0_141] : memref<1x8x16x256xbf16, #tpu.memory_space<vmem>>, vector<1x1x16x256xbf16>
    %398 = vector.shape_cast %397 : vector<1x1x16x256xbf16> to vector<16x256xbf16>
    %399 = arith.extf %398 : vector<16x256xbf16> to vector<16x256xf32>
    %cst_142 = arith.constant dense<0.000000e+00> : vector<16x256xf32>
    %400 = tpu.matmul %14, %399, %cst_142 {dimension_numbers = #tpu.dot_dimension_numbers<[1], [0], [0], [1], [0, 0, 1, 1], [], []>} : vector<16x16xf32>, vector<16x256xf32>, vector<16x256xf32> -> vector<16x256xf32>
    %cst_143 = arith.constant dense<0.000000e+00> : vector<16x256xf32>
    %401 = tpu.matmul %15, %396, %cst_143 {dimension_numbers = #tpu.dot_dimension_numbers<[1], [0], [0], [1], [0, 0, 1, 1], [], []>} : vector<16x16xf32>, vector<16x256xf32>, vector<16x256xf32> -> vector<16x256xf32>
    %402 = arith.addf %400, %401 : vector<16x256xf32>
    %403 = vector.broadcast %16 : vector<16x1xf32> to vector<16x256xf32>
    %404 = arith.addf %402, %403 : vector<16x256xf32>
    %cst_144 = arith.constant 0.000000e+00 : f32
    %405 = vector.broadcast %cst_144 : f32 to vector<16x256xf32>
    %406 = arith.maximumf %404, %405 : vector<16x256xf32>
    %c7_145 = arith.constant 7 : index
    %407 = memref.load %arg9[%c7_145] : memref<8xf32, #tpu.memory_space<smem>>
    %408 = vector.broadcast %407 : f32 to vector<16x256xf32>
    %409 = arith.mulf %408, %406 : vector<16x256xf32>
    %410 = arith.maximumf %362, %406 : vector<16x256xf32>
    %411 = arith.addf %363, %409 : vector<16x256xf32>
    %c0_146 = arith.constant 0 : index
    %412 = memref.load %arg10[%c0_146] : memref<1xf32, #tpu.memory_space<smem>>
    %413 = vector.broadcast %412 : f32 to vector<16x256xf32>
    %414 = arith.addf %411, %413 : vector<16x256xf32>
    %cst_147 = arith.constant dense<0xFF800000> : vector<256xf32>
    %415 = vector.multi_reduction <maximumf>, %414, %cst_147 [0] : vector<16x256xf32> to vector<256xf32>
    %416 = vector.shape_cast %415 : vector<256xf32> to vector<1x256xf32>
    %417 = vector.broadcast %416 : vector<1x256xf32> to vector<16x256xf32>
    %418 = arith.subf %414, %417 : vector<16x256xf32>
    %419 = math.exp %418 : vector<16x256xf32>
    %cst_148 = arith.constant dense<0.000000e+00> : vector<256xf32>
    %420 = vector.multi_reduction <add>, %419, %cst_148 [0] : vector<16x256xf32> to vector<256xf32>
    %421 = vector.shape_cast %420 : vector<256xf32> to vector<1x256xf32>
    %cst_149 = arith.constant 1.000000e+00 : f32
    %422 = vector.broadcast %cst_149 : f32 to vector<1x256xf32>
    %423 = arith.divf %422, %421 : vector<1x256xf32>
    %424 = vector.broadcast %423 : vector<1x256xf32> to vector<16x256xf32>
    %425 = arith.mulf %419, %424 : vector<16x256xf32>
    %cst_150 = arith.constant 1.000000e+00 : f32
    %426 = vector.broadcast %cst_150 : f32 to vector<16x256xf32>
    %427 = arith.addf %426, %425 : vector<16x256xf32>
    %428 = arith.mulf %410, %427 : vector<16x256xf32>
    %c0_151 = arith.constant 0 : index
    %c0_152 = arith.constant 0 : index
    %c0_153 = arith.constant 0 : index
    %429 = vector.load %arg4[%c0_151, %c0_152, %c0_153] : memref<1x16x256xbf16, #tpu.memory_space<vmem>>, vector<1x16x256xbf16>
    %430 = vector.shape_cast %429 : vector<1x16x256xbf16> to vector<16x256xbf16>
    %431 = arith.extf %430 : vector<16x256xbf16> to vector<16x256xf32>
    %c0_154 = arith.constant 0 : index
    %c0_155 = arith.constant 0 : index
    %432 = vector.load %arg7[%c0_154, %c0_155] : memref<32x17xf32, #tpu.memory_space<vmem>>, vector<32x16xf32>
    %c0_156 = arith.constant 0 : index
    %c16_157 = arith.constant 16 : index
    %433 = vector.load %arg7[%c0_156, %c16_157] : memref<32x17xf32, #tpu.memory_space<vmem>>, vector<32x1xf32>
    %c0_158 = arith.constant 0 : index
    %c0_159 = arith.constant 0 : index
    %434 = vector.load %arg8[%c0_158, %c0_159] : memref<32x17xf32, #tpu.memory_space<vmem>>, vector<32x16xf32>
    %c0_160 = arith.constant 0 : index
    %c16_161 = arith.constant 16 : index
    %435 = vector.load %arg8[%c0_160, %c16_161] : memref<32x17xf32, #tpu.memory_space<vmem>>, vector<32x1xf32>
    %cst_162 = arith.constant dense<0.000000e+00> : vector<32x256xf32>
    %436 = tpu.matmul %432, %428, %cst_162 {dimension_numbers = #tpu.dot_dimension_numbers<[1], [0], [0], [1], [0, 0, 1, 1], [], []>} : vector<32x16xf32>, vector<16x256xf32>, vector<32x256xf32> -> vector<32x256xf32>
    %437 = vector.broadcast %433 : vector<32x1xf32> to vector<32x256xf32>
    %438 = arith.addf %436, %437 : vector<32x256xf32>
    %cst_163 = arith.constant 0.000000e+00 : f32
    %439 = vector.broadcast %cst_163 : f32 to vector<32x256xf32>
    %440 = arith.maximumf %438, %439 : vector<32x256xf32>
    %cst_164 = arith.constant dense<0.000000e+00> : vector<32x256xf32>
    %441 = tpu.matmul %434, %431, %cst_164 {dimension_numbers = #tpu.dot_dimension_numbers<[1], [0], [0], [1], [0, 0, 1, 1], [], []>} : vector<32x16xf32>, vector<16x256xf32>, vector<32x256xf32> -> vector<32x256xf32>
    %442 = vector.broadcast %435 : vector<32x1xf32> to vector<32x256xf32>
    %443 = arith.addf %441, %442 : vector<32x256xf32>
    %cst_165 = arith.constant 0.000000e+00 : f32
    %444 = vector.broadcast %cst_165 : f32 to vector<32x256xf32>
    %445 = arith.maximumf %443, %444 : vector<32x256xf32>
    %446 = arith.addf %440, %445 : vector<32x256xf32>
    %c0_166 = arith.constant 0 : index
    %c0_167 = arith.constant 0 : index
    %c0_168 = arith.constant 0 : index
    %447 = vector.load %arg11[%c0_166, %c0_167, %c0_168] : memref<1x32x256xf32, #tpu.memory_space<vmem>>, vector<1x32x256xf32>
    %448 = vector.shape_cast %447 : vector<1x32x256xf32> to vector<32x256xf32>
    %449 = vector.shape_cast %446 : vector<32x256xf32> to vector<1x32x256xf32>
    tpu.vector_store %arg11[%c0_166, %c0_167, %c0_168], %449 {strides = array<i32>} : memref<1x32x256xf32, #tpu.memory_space<vmem>>, vector<1x32x256xf32>,
    return
  }
  func.func @transform_0(%arg0: i32, %arg1: i32) -> (i32, i32, i32) {
    %c0_i32 = arith.constant 0 : i32
    %c0_i32_0 = arith.constant 0 : i32
    return %arg0, %c0_i32, %arg1 : i32, i32, i32
  }
  func.func @transform_1(%arg0: i32, %arg1: i32) -> (i32, i32, i32, i32) {
    %c0_i32 = arith.constant 0 : i32
    %c0_i32_0 = arith.constant 0 : i32
    %c0_i32_1 = arith.constant 0 : i32
    return %arg0, %c0_i32, %c0_i32_0, %arg1 : i32, i32, i32, i32
  }
  func.func @transform_2(%arg0: i32, %arg1: i32) -> (i32, i32, i32) {
    %c0_i32 = arith.constant 0 : i32
    %c0_i32_0 = arith.constant 0 : i32
    return %arg0, %c0_i32, %arg1 : i32, i32, i32
  }
  func.func @transform_3(%arg0: i32, %arg1: i32) -> (i32, i32) {
    %c0_i32 = arith.constant 0 : i32
    %c0_i32_0 = arith.constant 0 : i32
    %c0_i32_1 = arith.constant 0 : i32
    return %c0_i32, %c0_i32_0 : i32, i32
  }
  func.func @transform_4(%arg0: i32, %arg1: i32) -> (i32, i32) {
    %c0_i32 = arith.constant 0 : i32
    %c0_i32_0 = arith.constant 0 : i32
    %c0_i32_1 = arith.constant 0 : i32
    return %c0_i32, %c0_i32_0 : i32, i32
  }
  func.func @transform_5(%arg0: i32, %arg1: i32) -> (i32, i32) {
    %c0_i32 = arith.constant 0 : i32
    %c0_i32_0 = arith.constant 0 : i32
    %c0_i32_1 = arith.constant 0 : i32
    return %c0_i32, %c0_i32_0 : i32, i32
  }
  func.func @transform_6(%arg0: i32, %arg1: i32) -> (i32, i32) {
    %c0_i32 = arith.constant 0 : i32
    %c0_i32_0 = arith.constant 0 : i32
    %c0_i32_1 = arith.constant 0 : i32
    return %c0_i32, %c0_i32_0 : i32, i32
  }
  func.func @transform_7(%arg0: i32, %arg1: i32) -> i32 {
    %c0_i32 = arith.constant 0 : i32
    %c0_i32_0 = arith.constant 0 : i32
    return %c0_i32 : i32
  }
  func.func @transform_8(%arg0: i32, %arg1: i32) -> i32 {
    %c0_i32 = arith.constant 0 : i32
    %c0_i32_0 = arith.constant 0 : i32
    return %c0_i32 : i32
  }
  func.func @transform_9(%arg0: i32, %arg1: i32) -> (i32, i32, i32) {
    %c0_i32 = arith.constant 0 : i32
    %c0_i32_0 = arith.constant 0 : i32
    return %arg0, %c0_i32, %arg1 : i32, i32, i32
  }
}

</mosaic_0001>

<llo_original>
// kernel: lfa_forward.3
$region0: #{lfa_forward.3}
  #allocation0 [shape = 'u32[]', space=smem, size = 0x4, offset = 0x4, fixed_abs, tag = 'smem constant byte address 0x4 - core index']
  #allocation1 [shape = 'u32[144,128]{1,0:T(1,128)}', space=vmem, size = 0x12000, scoped, tag = 'internal scratch']
  %s0 = inlined_call_operand.vmem [shape: f32[2,8,256], index: 0, kind: input, shape index: {}]
  %s1 = inlined_call_operand.vmem [shape: f32[8,8], index: 1, kind: input, shape index: {}]
  %s2 = inlined_call_operand.vmem [shape: f32[8,1], index: 2, kind: input, shape index: {}]
  %s3 = inlined_call_operand.vmem [shape: bf16[2,8,256], index: 3, kind: output, shape index: {}]
  %s4 = sld [smem:[#allocation0]]
  $region45: #{lfa_forward.3} parent=0
    _
  %s6 = ssub.s32 1, %s4
  %s7 = scalar_select 0, %s6, %s4
  loop: start=0, step=1, limit=4
  $region2: #{lfa_forward.3} parent=0 // loop_pre_header
    _
  $region3: #{lfa_forward.3} parent=0 // loop_header
    %s9 = sphi 0, %s13
    %p10 = scmp.ge.s32.totalorder %s9, 4
    %s16 = sphi 0, %s28
    %s17 = sphi 0, %s24
    %s18 = sphi 0, %s16
    %s19 = sphi 0, %s17
    %s20 = sphi 0, %s18
    %s21 = sphi 0, %s19
    %s33 = sphi 0, %s35
    %s36 = sphi 0, %s33
    %s37 = sphi 0, %s36
    %s53 = sphi 0, %s37
    %s57 = sphi 0, %s57
    %s59 = sphi 0, %s57
    %s60 = sphi 0, %s59
    %s74 = sphi 0, %s60
    %s78 = sphi 0, %s78
    %s80 = sphi 0, %s78
    %s81 = sphi 0, %s80
    %s95 = sphi 0, %s81
    %s103 = sphi 0, %s105
    %s106 = sphi 0, %s103
    %s107 = sphi 0, %s106
    %s123 = sphi 0, %s107
  $region4: #{lfa_forward.3} parent=0 // loop_header_branch
    %12 = sbr.rel (%p10) target = $region8
  $region5: #{lfa_forward.3} parent=0 // loop_body
    %s14 = ssub.s32 %s9, 1
    %s15 = ssub.s32 %s9, 2
    %s22 = sadd.s32 1, %s17
    %p23 = scmp.ge.s32.totalorder %s22, 1
    %s24 = scalar_select %p23, 0, %s22
    %s25 = sadd.s32 1, %s16
    %s26 = scalar_select %p23, %s25, %s16
    %p27 = scmp.ge.s32.totalorder %s26, 2
    %s28 = scalar_select %p27, 0, %s26
    %s29 = ssub.s32 %s16, %s28
    %s30 = ssub.s32 %s17, %s24
    %s31 = sor.u32 %s29, %s30
    %p32 = scmp.eq.s32.totalorder %s31, 0
    %s34 = sadd.s32 %s33, 1
    %s35 = scalar_select %p32, %s33, %s34
    %p38 = pneg %p32
    %p39 = scmp.eq.s32.totalorder %s9, 1
    %p40 = por %p38, %p39
    %p41 = scmp.ne.s32.totalorder %s33, %s36
    %p42 = scmp.eq.s32.totalorder %s9, 0
    %p43 = por %p41, %p42
    %p44 = scmp.ne.s32.totalorder %s33, %s36
    %p45 = scmp.eq.s32.totalorder %s14, 1
    %p46 = por %p44, %p45
    %p47 = scmp.ne.s32.totalorder %s36, %s37
    %p48 = scmp.eq.s32.totalorder %s14, 0
    %p49 = por %p47, %p48
    %p50 = scmp.ne.s32.totalorder %s36, %s37
    %p51 = scmp.eq.s32.totalorder %s15, 1
    %p52 = por %p50, %p51
    %p54 = scmp.ne.s32.totalorder %s37, %s53
    %p55 = scmp.eq.s32.totalorder %s15, 0
    %p56 = por %p54, %p55
    %s58 = sadd.s32 %s57, 1
    %p61 = scmp.eq.s32.totalorder %s9, 1
    %p62 = scmp.ne.s32.totalorder %s57, %s59
    %p63 = scmp.eq.s32.totalorder %s9, 0
    %p64 = por %p62, %p63
    %p65 = scmp.ne.s32.totalorder %s57, %s59
    %p66 = scmp.eq.s32.totalorder %s14, 1
    %p67 = por %p65, %p66
    %p68 = scmp.ne.s32.totalorder %s59, %s60
    %p69 = scmp.eq.s32.totalorder %s14, 0
    %p70 = por %p68, %p69
    %p71 = scmp.ne.s32.totalorder %s59, %s60
    %p72 = scmp.eq.s32.totalorder %s15, 1
    %p73 = por %p71, %p72
    %p75 = scmp.ne.s32.totalorder %s60, %s74
    %p76 = scmp.eq.s32.totalorder %s15, 0
    %p77 = por %p75, %p76
    %s79 = sadd.s32 %s78, 1
    %p82 = scmp.eq.s32.totalorder %s9, 1
    %p83 = scmp.ne.s32.totalorder %s78, %s80
    %p84 = scmp.eq.s32.totalorder %s9, 0
    %p85 = por %p83, %p84
    %p86 = scmp.ne.s32.totalorder %s78, %s80
    %p87 = scmp.eq.s32.totalorder %s14, 1
    %p88 = por %p86, %p87
    %p89 = scmp.ne.s32.totalorder %s80, %s81
    %p90 = scmp.eq.s32.totalorder %s14, 0
    %p91 = por %p89, %p90
    %p92 = scmp.ne.s32.totalorder %s80, %s81
    %p93 = scmp.eq.s32.totalorder %s15, 1
    %p94 = por %p92, %p93
    %p96 = scmp.ne.s32.totalorder %s81, %s95
    %p97 = scmp.eq.s32.totalorder %s15, 0
    %p98 = por %p96, %p97
    %s99 = ssub.s32 %s16, %s28
    %s100 = ssub.s32 %s17, %s24
    %s101 = sor.u32 %s99, %s100
    %p102 = scmp.eq.s32.totalorder %s101, 0
    %s104 = sadd.s32 %s103, 1
    %s105 = scalar_select %p102, %s103, %s104
    %p108 = pneg %p102
    %p109 = scmp.eq.s32.totalorder %s9, 1
    %p110 = por %p108, %p109
    %p111 = scmp.ne.s32.totalorder %s103, %s106
    %p112 = scmp.eq.s32.totalorder %s9, 0
    %p113 = por %p111, %p112
    %p114 = scmp.ne.s32.totalorder %s103, %s106
    %p115 = scmp.eq.s32.totalorder %s14, 1
    %p116 = por %p114, %p115
    %p117 = scmp.ne.s32.totalorder %s106, %s107
    %p118 = scmp.eq.s32.totalorder %s14, 0
    %p119 = por %p117, %p118
    %p120 = scmp.ne.s32.totalorder %s106, %s107
    %p121 = scmp.eq.s32.totalorder %s15, 1
    %p122 = por %p120, %p121
    %p124 = scmp.ne.s32.totalorder %s107, %s123
    %p125 = scmp.eq.s32.totalorder %s15, 0
    %p126 = por %p124, %p125
    %p127 = scmp.le.s32.totalorder 1, %s9
    %p128 = scmp.lt.s32.totalorder %s9, 3
    %p129 = pnand %p127, %p128
    %p130 = pneg %p129
    // Predicated region
    $region9: #{lfa_forward.3} parent=5 // pred_check
      _
    $region10: #{lfa_forward.3} parent=5 // pred_check_branch
      %132 = sbr.rel (%p129) target = $region12
    $region11: #{lfa_forward.3} parent=5 // pred_region
      %s133 = ssub.s32 %s9, 1
      // Predicated region
      $region13: #{lfa_forward.3} parent=11 // pred_check
        %p134 = pneg %p70
      $region14: #{lfa_forward.3} parent=11 // pred_check_branch
        %136 = sbr.rel (%p134) target = $region16
      $region15: #{lfa_forward.3} parent=11 // pred_region
        _
      $region16: #{lfa_forward.3} parent=11 // pred_fallthru
        _
      // Predicated region
      $region17: #{lfa_forward.3} parent=11 // pred_check
        %p137 = pneg %p91
      $region18: #{lfa_forward.3} parent=11 // pred_check_branch
        %139 = sbr.rel (%p137) target = $region20
      $region19: #{lfa_forward.3} parent=11 // pred_region
        _
      $region20: #{lfa_forward.3} parent=11 // pred_fallthru
        _
    $region12: #{lfa_forward.3} parent=5 // pred_fallthru
      _
    %p140 = scmp.lt.s32.totalorder %s9, 2
    // Predicated region
    $region21: #{lfa_forward.3} parent=5 // pred_check
      %p141 = pneg %p140
    $region22: #{lfa_forward.3} parent=5 // pred_check_branch
      %143 = sbr.rel (%p141) target = $region24
    $region23: #{lfa_forward.3} parent=5 // pred_region
      // Predicated region
      $region25: #{lfa_forward.3} parent=23 // pred_check
        %p144 = pneg %p43
      $region26: #{lfa_forward.3} parent=23 // pred_check_branch
        %146 = sbr.rel (%p144) target = $region28
      $region27: #{lfa_forward.3} parent=23 // pred_region
        %s147 = smul.u32 2, %s17
        %p148 = scmp.lt.s32.totalorder %s16, 1
        %s149 = scalar_select %p148, %s16, 1
        %p150 = scmp.lt.s32.totalorder %s147, 1
        %s151 = scalar_select %p150, %s147, 1
        %s152 = smul.addr %s149, 2
        %s153 = sadd.s32 %s151, %s152
        %s154 = smul.addr %s153, 8
        %s155 = scalar_lea.vmem %s0, %s154
        %s156 = smul.u32 2, %s17
      $region28: #{lfa_forward.3} parent=23 // pred_fallthru
        _
    $region24: #{lfa_forward.3} parent=5 // pred_fallthru
      _
    %p157 = scmp.le.s32.totalorder 1, %s9
    %p158 = scmp.lt.s32.totalorder %s9, 3
    %p159 = pnand %p157, %p158
    %p160 = pneg %p159
    // Predicated region
    $region29: #{lfa_forward.3} parent=5 // pred_check
      _
    $region30: #{lfa_forward.3} parent=5 // pred_check_branch
      %162 = sbr.rel (%p159) target = $region32
    $region31: #{lfa_forward.3} parent=5 // pred_region
      %s163 = ssub.s32 %s9, 1
      %s164 = smul.u32 2, %s19
      %p165 = scmp.lt.s32.totalorder %s18, 1
      %s166 = scalar_select %p165, %s18, 1
      %p167 = scmp.lt.s32.totalorder %s164, 1
      %s168 = scalar_select %p167, %s164, 1
      %s169 = smul.addr %s166, 2
      %s170 = sadd.s32 %s168, %s169
      %s171 = smul.addr %s170, 8
      %s172 = scalar_lea.vmem %s0, %s171
      %p173 = pneg %p49
      %p174 = pneg %p46
      %p175 = pneg %p70
      %p176 = pneg %p67
      %p177 = pneg %p91
      %p178 = pneg %p88
      %p179 = pneg %p119
      %p180 = pneg %p116
      %s181 = smul.u32 2, %s19
      %p182 = scmp.lt.s32.totalorder %s18, 1
      %s183 = scalar_select %p182, %s18, 1
      %p184 = scmp.lt.s32.totalorder %s181, 1
      %s185 = scalar_select %p184, %s181, 1
      %s186 = smul.addr %s183, 2
      %s187 = sadd.s32 %s185, %s186
      %s188 = smul.addr %s187, 4
      %s189 = scalar_lea.vmem %s3, %s188
      %s190 = smul.u32 2, %s19
      %p191 = scmp.lt.s32.totalorder %s18, 1
      %s192 = scalar_select %p191, %s18, 1
      %p193 = scmp.lt.s32.totalorder %s190, 1
      %s194 = scalar_select %p193, %s190, 1
      %s195 = smul.addr %s192, 2
      %s196 = sadd.s32 %s194, %s195
      %s197 = smul.addr %s196, 8
      %s198 = scalar_lea.vmem %s0, %s197
      %s199 = smul.u32 2, %s19
      %s200 = smul.u32 2, %s19
      %p201 = scmp.lt.s32.totalorder %s18, 1
      %s202 = scalar_select %p201, %s18, 1
      %p203 = scmp.lt.s32.totalorder %s200, 1
      %s204 = scalar_select %p203, %s200, 1
      %s205 = smul.addr %s202, 2
      %s206 = sadd.s32 %s204, %s205
      %s207 = smul.addr %s206, 4
      %s208 = scalar_lea.vmem %s3, %s207
      %s209 = smul.u32 2, %s19
      %v210 = vld [vmem:[%s198] sm:$0xff]
      %v211 = vld [vmem:[%s198 + $0x8] sm:$0xff]
      %v212 = vld [vmem:[%s1] sm:$0xff]
      %v213 = vld [vmem:[%s2] sm:$0xff]
      %215 = vset.pattern.permute.xlu0 0
      %216 = vperm.xlu0 %215, %v213
      %v217 = vpop.permute.xlu0 %216
      %vm219 = vcmask 64512
      %v221 = vsel %vm219, %v212, 0
      %223 = vmatprep.subr.mxu0 %v211
      %224 = vmatpush1.msra.mxu0 %v210
      %225 = vmatprep.subr.mxu0 0.0
      %226 = vmatpush1.msra.mxu0 0.0
      %227 = vmatprep.subr.mxu0 0.0
      %228 = vmatpush1.msra.mxu0 0.0
      %229 = vmatprep.subr.mxu0 0.0
      %230 = vmatpush1.msra.mxu0 0.0
      %231 = vmatprep.subr.mxu0 0.0
      %232 = vmatpush1.msra.mxu0 0.0
      %233 = vmatprep.subr.mxu0 0.0
      %234 = vmatpush1.msra.mxu0 0.0
      %235 = vmatprep.subr.mxu0 0.0
      %236 = vmatpush1.msra.mxu0 0.0
      %237 = vmatprep.subr.mxu0 0.0
      %238 = vmatpush1.msra.mxu0 0.0
      %239 = vmatprep.subr.mxu0 0.0
      %240 = vmatpush1.msra.mxu0 0.0
      %241 = vmatprep.subr.mxu0 0.0
      %242 = vmatpush1.msra.mxu0 0.0
      %243 = vmatprep.subr.mxu0 0.0
      %244 = vmatpush1.msra.mxu0 0.0
      %245 = vmatprep.subr.mxu0 0.0
      %246 = vmatpush1.msra.mxu0 0.0
      %247 = vmatprep.subr.mxu0 0.0
      %248 = vmatpush1.msra.mxu0 0.0
      %249 = vmatprep.subr.mxu0 0.0
      %250 = vmatpush1.msra.mxu0 0.0
      %251 = vmatprep.subr.mxu0 0.0
      %252 = vmatpush1.msra.mxu0 0.0
      %253 = vmatprep.subr.mxu0 0.0
      %254 = vmatpush1.msra.mxu0 0.0
      %255 = vmatprep.subr.mxu0 0.0
      %256 = vmatpush1.msra.mxu0 0.0
      %257 = vmatprep.subr.mxu0 0.0
      %258 = vmatpush1.msra.mxu0 0.0
      %259 = vmatprep.subr.mxu0 0.0
      %260 = vmatpush1.msra.mxu0 0.0
      %261 = vmatprep.subr.mxu0 0.0
      %262 = vmatpush1.msra.mxu0 0.0
      %263 = vmatprep.subr.mxu0 0.0
      %264 = vmatpush1.msra.mxu0 0.0
      %265 = vmatprep.subr.mxu0 0.0
      %266 = vmatpush1.msra.mxu0 0.0
      %267 = vmatprep.subr.mxu0 0.0
      %268 = vmatpush1.msra.mxu0 0.0
      %269 = vmatprep.subr.mxu0 0.0
      %270 = vmatpush1.msra.mxu0 0.0
      %271 = vmatprep.subr.mxu0 0.0
      %272 = vmatpush1.msra.mxu0 0.0
      %273 = vmatprep.subr.mxu0 0.0
      %274 = vmatpush1.msra.mxu0 0.0
      %275 = vmatprep.subr.mxu0 0.0
      %276 = vmatpush1.msra.mxu0 0.0
      %277 = vmatprep.subr.mxu0 0.0
      %278 = vmatpush1.msra.mxu0 0.0
      %279 = vmatprep.subr.mxu0 0.0
      %280 = vmatpush1.msra.mxu0 0.0
      %281 = vmatprep.subr.mxu0 0.0
      %282 = vmatpush1.msra.mxu0 0.0
      %283 = vmatprep.subr.mxu0 0.0
      %284 = vmatpush1.msra.mxu0 0.0
      %285 = vmatprep.subr.mxu0 0.0
      %286 = vmatpush1.msra.mxu0 0.0
      %287 = vmatprep.mubr.f32.mxu0 0.0
      %288 = vmatmul.mubr.f32.gmra.mrb[0].mxu0 %v221
      %v289 = vpop.f32.mrb[0].mxu0
      %v290 = vadd.f32 %v217, %v289
      %v291 = vpop.f32.mrb[0].mxu0
      %v292 = vadd.f32 %v217, %v291
      %293 = vdwg.mxu0
      %v294 = vmax.f32 %v290, 0.0
      %v295 = vmax.f32 %v292, 0.0
      %v296 = vpack.c.bf16 %v294, %v294
      %v297 = vpack.c.bf16 %v295, %v295
      %v300 = vunpack.c.l.b16 %v296
      %v301 = vunpack.c.l.b16 %v297
      %v302 = vpack.c.b16 %v301, %v300
      %304 = vst [vmem:[%s208] sm:$0xff] %v302
      %s305 = smul.u32 2, %s19
      %p306 = scmp.lt.s32.totalorder %s18, 1
      %s307 = scalar_select %p306, %s18, 1
      %p308 = scmp.lt.s32.totalorder %s305, 1
      %s309 = scalar_select %p308, %s305, 1
      %s310 = smul.addr %s307, 2
      %s311 = sadd.s32 %s309, %s310
      %s312 = smul.addr %s311, 4
      %s313 = scalar_lea.vmem %s3, %s312
      // Predicated region
      $region33: #{lfa_forward.3} parent=31 // pred_check
        %p314 = pneg %p116
      $region34: #{lfa_forward.3} parent=31 // pred_check_branch
        %316 = sbr.rel (%p314) target = $region36
      $region35: #{lfa_forward.3} parent=31 // pred_region
        %s317 = smul.u32 2, %s19
      $region36: #{lfa_forward.3} parent=31 // pred_fallthru
        _
    $region32: #{lfa_forward.3} parent=5 // pred_fallthru
      _
    %p318 = scmp.le.s32.totalorder 2, %s9
    // Predicated region
    $region37: #{lfa_forward.3} parent=5 // pred_check
      %p319 = pneg %p318
    $region38: #{lfa_forward.3} parent=5 // pred_check_branch
      %321 = sbr.rel (%p319) target = $region40
    $region39: #{lfa_forward.3} parent=5 // pred_region
      %s322 = ssub.s32 %s9, 2
      // Predicated region
      $region41: #{lfa_forward.3} parent=39 // pred_check
        %p323 = pneg %p122
      $region42: #{lfa_forward.3} parent=39 // pred_check_branch
        %325 = sbr.rel (%p323) target = $region44
      $region43: #{lfa_forward.3} parent=39 // pred_region
        %s326 = smul.u32 2, %s21
        %p327 = scmp.lt.s32.totalorder %s20, 1
        %s328 = scalar_select %p327, %s20, 1
        %p329 = scmp.lt.s32.totalorder %s326, 1
        %s330 = scalar_select %p329, %s326, 1
        %s331 = smul.addr %s328, 2
        %s332 = sadd.s32 %s330, %s331
        %s333 = smul.addr %s332, 4
        %s334 = scalar_lea.vmem %s3, %s333
      $region44: #{lfa_forward.3} parent=39 // pred_fallthru
        _
    $region40: #{lfa_forward.3} parent=5 // pred_fallthru
      _
  $region6: #{lfa_forward.3} parent=0 // loop_footer
    %s13 = sadd.s32 1, %s9
  $region7: #{lfa_forward.3} parent=0 // loop_footer_branch
    %8 = sbr.rel target = $region3
  $region8: #{lfa_forward.3} parent=0 // loop_exit
    _

// kernel: lfa_forward.4
$region0: #{lfa_forward.4}
  #allocation0 [shape = 'u32[]', space=smem, size = 0x4, offset = 0x4, fixed_abs, tag = 'smem constant byte address 0x4 - core index']
  #allocation1 [shape = 'u32[144,128]{1,0:T(1,128)}', space=vmem, size = 0x12000, scoped, tag = 'internal scratch']
  #allocation2 [shape = 'f32[1]{0:T(128)S(6)}', space=smem, size = 0x200, scoped, tag = 'scoped memory for lfa_forward.4']
  %s0 = inlined_call_operand.vmem [shape: f32[2,27,256], index: 0, kind: input, shape index: {}]
  %s1 = inlined_call_operand.vmem [shape: bf16[2,8,8,256], index: 1, kind: input, shape index: {}]
  %s2 = inlined_call_operand.vmem [shape: f32[2,8,256], index: 2, kind: input, shape index: {}]
  %s3 = inlined_call_operand.vmem [shape: f32[8,8], index: 3, kind: input, shape index: {}]
  %s4 = inlined_call_operand.vmem [shape: f32[8,17], index: 4, kind: input, shape index: {}]
  %s5 = inlined_call_operand.vmem [shape: f32[16,9], index: 5, kind: input, shape index: {}]
  %s6 = inlined_call_operand.vmem [shape: f32[16,9], index: 6, kind: input, shape index: {}]
  %s7 = inlined_call_operand.vmem [shape: f32[16,17], index: 7, kind: input, shape index: {}]
  %s8 = inlined_call_operand.vmem [shape: f32[8], index: 8, kind: input, shape index: {}]
  %s9 = inlined_call_operand.<no memory space> [shape: f32[1], index: 9, kind: input, shape index: {}]
  %s10 = inlined_call_operand.vmem [shape: bf16[2,16,256], index: 10, kind: output, shape index: {0}]
  %s11 = inlined_call_operand.vmem [shape: bf16[2,16,256], index: 11, kind: output, shape index: {1}]
  %12 = xla_tuple %s10, %s11
  %s13 = sld [smem:[#allocation0]]
  $region85: #{lfa_forward.4} parent=0
    _
  %s15 = ssub.s32 1, %s13
  %s16 = scalar_select 0, %s15, %s13
  %17 = sst [smem:[#allocation2]] %s9
  $region1: #{lfa_forward.4} parent=0
    #allocation3 [shape = 'u8[512]{0}', space=smem, size = 0x200, scoped, tag = 'input window, operand 8, single buffered']
    #allocation4 [shape = 's32[2]{0}', space=sflag, size = 0x8, scoped, tag = 'scoped memory for lfa_forward.4']
    %18 = vsyncpa [#allocation4], 0
    loop: start=0, step=1, limit=4
    $region2: #{lfa_forward.4} parent=1 // loop_pre_header
      _
    $region3: #{lfa_forward.4} parent=1 // loop_header
      %s20 = sphi 0, %s24
      %p21 = scmp.ge.s32.totalorder %s20, 4
      %s27 = sphi 0, %s39
      %s28 = sphi 0, %s35
      %s29 = sphi 0, %s27
      %s30 = sphi 0, %s28
      %s31 = sphi 0, %s29
      %s32 = sphi 0, %s30
      %s44 = sphi 0, %s46
      %s47 = sphi 0, %s44
      %s48 = sphi 0, %s47
      %s64 = sphi 0, %s48
      %s72 = sphi 0, %s74
      %s75 = sphi 0, %s72
      %s76 = sphi 0, %s75
      %s92 = sphi 0, %s76
      %s100 = sphi 0, %s102
      %s103 = sphi 0, %s100
      %s104 = sphi 0, %s103
      %s120 = sphi 0, %s104
      %s124 = sphi 0, %s124
      %s126 = sphi 0, %s124
      %s127 = sphi 0, %s126
      %s141 = sphi 0, %s127
      %s145 = sphi 0, %s145
      %s147 = sphi 0, %s145
      %s148 = sphi 0, %s147
      %s162 = sphi 0, %s148
      %s166 = sphi 0, %s166
      %s168 = sphi 0, %s166
      %s169 = sphi 0, %s168
      %s183 = sphi 0, %s169
      %s187 = sphi 0, %s187
      %s189 = sphi 0, %s187
      %s190 = sphi 0, %s189
      %s204 = sphi 0, %s190
      %s208 = sphi 0, %s208
      %s210 = sphi 0, %s208
      %s211 = sphi 0, %s210
      %s225 = sphi 0, %s211
      %s229 = sphi 0, %s229
      %s231 = sphi 0, %s229
      %s232 = sphi 0, %s231
      %s246 = sphi 0, %s232
      %s250 = sphi 0, %s250
      %s252 = sphi 0, %s250
      %s253 = sphi 0, %s252
      %s267 = sphi 0, %s253
      %s275 = sphi 0, %s277
      %s278 = sphi 0, %s275
      %s279 = sphi 0, %s278
      %s295 = sphi 0, %s279
      %s303 = sphi 0, %s305
      %s306 = sphi 0, %s303
      %s307 = sphi 0, %s306
      %s323 = sphi 0, %s307
    $region4: #{lfa_forward.4} parent=1 // loop_header_branch
      %23 = sbr.rel (%p21) target = $region8
    $region5: #{lfa_forward.4} parent=1 // loop_body
      %s25 = ssub.s32 %s20, 1
      %s26 = ssub.s32 %s20, 2
      %s33 = sadd.s32 1, %s28
      %p34 = scmp.ge.s32.totalorder %s33, 1
      %s35 = scalar_select %p34, 0, %s33
      %s36 = sadd.s32 1, %s27
      %s37 = scalar_select %p34, %s36, %s27
      %p38 = scmp.ge.s32.totalorder %s37, 2
      %s39 = scalar_select %p38, 0, %s37
      %s40 = ssub.s32 %s27, %s39
      %s41 = ssub.s32 %s28, %s35
      %s42 = sor.u32 %s40, %s41
      %p43 = scmp.eq.s32.totalorder %s42, 0
      %s45 = sadd.s32 %s44, 1
      %s46 = scalar_select %p43, %s44, %s45
      %p49 = pneg %p43
      %p50 = scmp.eq.s32.totalorder %s20, 1
      %p51 = por %p49, %p50
      %p52 = scmp.ne.s32.totalorder %s44, %s47
      %p53 = scmp.eq.s32.totalorder %s20, 0
      %p54 = por %p52, %p53
      %p55 = scmp.ne.s32.totalorder %s44, %s47
      %p56 = scmp.eq.s32.totalorder %s25, 1
      %p57 = por %p55, %p56
      %p58 = scmp.ne.s32.totalorder %s47, %s48
      %p59 = scmp.eq.s32.totalorder %s25, 0
      %p60 = por %p58, %p59
      %p61 = scmp.ne.s32.totalorder %s47, %s48
      %p62 = scmp.eq.s32.totalorder %s26, 1
      %p63 = por %p61, %p62
      %p65 = scmp.ne.s32.totalorder %s48, %s64
      %p66 = scmp.eq.s32.totalorder %s26, 0
      %p67 = por %p65, %p66
      %s68 = ssub.s32 %s27, %s39
      %s69 = ssub.s32 %s28, %s35
      %s70 = sor.u32 %s68, %s69
      %p71 = scmp.eq.s32.totalorder %s70, 0
      %s73 = sadd.s32 %s72, 1
      %s74 = scalar_select %p71, %s72, %s73
      %p77 = pneg %p71
      %p78 = scmp.eq.s32.totalorder %s20, 1
      %p79 = por %p77, %p78
      %p80 = scmp.ne.s32.totalorder %s72, %s75
      %p81 = scmp.eq.s32.totalorder %s20, 0
      %p82 = por %p80, %p81
      %p83 = scmp.ne.s32.totalorder %s72, %s75
      %p84 = scmp.eq.s32.totalorder %s25, 1
      %p85 = por %p83, %p84
      %p86 = scmp.ne.s32.totalorder %s75, %s76
      %p87 = scmp.eq.s32.totalorder %s25, 0
      %p88 = por %p86, %p87
      %p89 = scmp.ne.s32.totalorder %s75, %s76
      %p90 = scmp.eq.s32.totalorder %s26, 1
      %p91 = por %p89, %p90
      %p93 = scmp.ne.s32.totalorder %s76, %s92
      %p94 = scmp.eq.s32.totalorder %s26, 0
      %p95 = por %p93, %p94
      %s96 = ssub.s32 %s27, %s39
      %s97 = ssub.s32 %s28, %s35
      %s98 = sor.u32 %s96, %s97
      %p99 = scmp.eq.s32.totalorder %s98, 0
      %s101 = sadd.s32 %s100, 1
      %s102 = scalar_select %p99, %s100, %s101
      %p105 = pneg %p99
      %p106 = scmp.eq.s32.totalorder %s20, 1
      %p107 = por %p105, %p106
      %p108 = scmp.ne.s32.totalorder %s100, %s103
      %p109 = scmp.eq.s32.totalorder %s20, 0
      %p110 = por %p108, %p109
      %p111 = scmp.ne.s32.totalorder %s100, %s103
      %p112 = scmp.eq.s32.totalorder %s25, 1
      %p113 = por %p111, %p112
      %p114 = scmp.ne.s32.totalorder %s103, %s104
      %p115 = scmp.eq.s32.totalorder %s25, 0
      %p116 = por %p114, %p115
      %p117 = scmp.ne.s32.totalorder %s103, %s104
      %p118 = scmp.eq.s32.totalorder %s26, 1
      %p119 = por %p117, %p118
      %p121 = scmp.ne.s32.totalorder %s104, %s120
      %p122 = scmp.eq.s32.totalorder %s26, 0
      %p123 = por %p121, %p122
      %s125 = sadd.s32 %s124, 1
      %p128 = scmp.eq.s32.totalorder %s20, 1
      %p129 = scmp.ne.s32.totalorder %s124, %s126
      %p130 = scmp.eq.s32.totalorder %s20, 0
      %p131 = por %p129, %p130
      %p132 = scmp.ne.s32.totalorder %s124, %s126
      %p133 = scmp.eq.s32.totalorder %s25, 1
      %p134 = por %p132, %p133
      %p135 = scmp.ne.s32.totalorder %s126, %s127
      %p136 = scmp.eq.s32.totalorder %s25, 0
      %p137 = por %p135, %p136
      %p138 = scmp.ne.s32.totalorder %s126, %s127
      %p139 = scmp.eq.s32.totalorder %s26, 1
      %p140 = por %p138, %p139
      %p142 = scmp.ne.s32.totalorder %s127, %s141
      %p143 = scmp.eq.s32.totalorder %s26, 0
      %p144 = por %p142, %p143
      %s146 = sadd.s32 %s145, 1
      %p149 = scmp.eq.s32.totalorder %s20, 1
      %p150 = scmp.ne.s32.totalorder %s145, %s147
      %p151 = scmp.eq.s32.totalorder %s20, 0
      %p152 = por %p150, %p151
      %p153 = scmp.ne.s32.totalorder %s145, %s147
      %p154 = scmp.eq.s32.totalorder %s25, 1
      %p155 = por %p153, %p154
      %p156 = scmp.ne.s32.totalorder %s147, %s148
      %p157 = scmp.eq.s32.totalorder %s25, 0
      %p158 = por %p156, %p157
      %p159 = scmp.ne.s32.totalorder %s147, %s148
      %p160 = scmp.eq.s32.totalorder %s26, 1
      %p161 = por %p159, %p160
      %p163 = scmp.ne.s32.totalorder %s148, %s162
      %p164 = scmp.eq.s32.totalorder %s26, 0
      %p165 = por %p163, %p164
      %s167 = sadd.s32 %s166, 1
      %p170 = scmp.eq.s32.totalorder %s20, 1
      %p171 = scmp.ne.s32.totalorder %s166, %s168
      %p172 = scmp.eq.s32.totalorder %s20, 0
      %p173 = por %p171, %p172
      %p174 = scmp.ne.s32.totalorder %s166, %s168
      %p175 = scmp.eq.s32.totalorder %s25, 1
      %p176 = por %p174, %p175
      %p177 = scmp.ne.s32.totalorder %s168, %s169
      %p178 = scmp.eq.s32.totalorder %s25, 0
      %p179 = por %p177, %p178
      %p180 = scmp.ne.s32.totalorder %s168, %s169
      %p181 = scmp.eq.s32.totalorder %s26, 1
      %p182 = por %p180, %p181
      %p184 = scmp.ne.s32.totalorder %s169, %s183
      %p185 = scmp.eq.s32.totalorder %s26, 0
      %p186 = por %p184, %p185
      %s188 = sadd.s32 %s187, 1
      %p191 = scmp.eq.s32.totalorder %s20, 1
      %p192 = scmp.ne.s32.totalorder %s187, %s189
      %p193 = scmp.eq.s32.totalorder %s20, 0
      %p194 = por %p192, %p193
      %p195 = scmp.ne.s32.totalorder %s187, %s189
      %p196 = scmp.eq.s32.totalorder %s25, 1
      %p197 = por %p195, %p196
      %p198 = scmp.ne.s32.totalorder %s189, %s190
      %p199 = scmp.eq.s32.totalorder %s25, 0
      %p200 = por %p198, %p199
      %p201 = scmp.ne.s32.totalorder %s189, %s190
      %p202 = scmp.eq.s32.totalorder %s26, 1
      %p203 = por %p201, %p202
      %p205 = scmp.ne.s32.totalorder %s190, %s204
      %p206 = scmp.eq.s32.totalorder %s26, 0
      %p207 = por %p205, %p206
      %s209 = sadd.s32 %s208, 1
      %p212 = scmp.eq.s32.totalorder %s20, 1
      %p213 = scmp.ne.s32.totalorder %s208, %s210
      %p214 = scmp.eq.s32.totalorder %s20, 0
      %p215 = por %p213, %p214
      %p216 = scmp.ne.s32.totalorder %s208, %s210
      %p217 = scmp.eq.s32.totalorder %s25, 1
      %p218 = por %p216, %p217
      %p219 = scmp.ne.s32.totalorder %s210, %s211
      %p220 = scmp.eq.s32.totalorder %s25, 0
      %p221 = por %p219, %p220
      %p222 = scmp.ne.s32.totalorder %s210, %s211
      %p223 = scmp.eq.s32.totalorder %s26, 1
      %p224 = por %p222, %p223
      %p226 = scmp.ne.s32.totalorder %s211, %s225
      %p227 = scmp.eq.s32.totalorder %s26, 0
      %p228 = por %p226, %p227
      %s230 = sadd.s32 %s229, 1
      %p233 = scmp.eq.s32.totalorder %s20, 1
      %p234 = scmp.ne.s32.totalorder %s229, %s231
      %p235 = scmp.eq.s32.totalorder %s20, 0
      %p236 = por %p234, %p235
      %p237 = scmp.ne.s32.totalorder %s229, %s231
      %p238 = scmp.eq.s32.totalorder %s25, 1
      %p239 = por %p237, %p238
      %p240 = scmp.ne.s32.totalorder %s231, %s232
      %p241 = scmp.eq.s32.totalorder %s25, 0
      %p242 = por %p240, %p241
      %p243 = scmp.ne.s32.totalorder %s231, %s232
      %p244 = scmp.eq.s32.totalorder %s26, 1
      %p245 = por %p243, %p244
      %p247 = scmp.ne.s32.totalorder %s232, %s246
      %p248 = scmp.eq.s32.totalorder %s26, 0
      %p249 = por %p247, %p248
      %s251 = sadd.s32 %s250, 1
      %p254 = scmp.eq.s32.totalorder %s20, 1
      %p255 = scmp.ne.s32.totalorder %s250, %s252
      %p256 = scmp.eq.s32.totalorder %s20, 0
      %p257 = por %p255, %p256
      %p258 = scmp.ne.s32.totalorder %s250, %s252
      %p259 = scmp.eq.s32.totalorder %s25, 1
      %p260 = por %p258, %p259
      %p261 = scmp.ne.s32.totalorder %s252, %s253
      %p262 = scmp.eq.s32.totalorder %s25, 0
      %p263 = por %p261, %p262
      %p264 = scmp.ne.s32.totalorder %s252, %s253
      %p265 = scmp.eq.s32.totalorder %s26, 1
      %p266 = por %p264, %p265
      %p268 = scmp.ne.s32.totalorder %s253, %s267
      %p269 = scmp.eq.s32.totalorder %s26, 0
      %p270 = por %p268, %p269
      %s271 = ssub.s32 %s27, %s39
      %s272 = ssub.s32 %s28, %s35
      %s273 = sor.u32 %s271, %s272
      %p274 = scmp.eq.s32.totalorder %s273, 0
      %s276 = sadd.s32 %s275, 1
      %s277 = scalar_select %p274, %s275, %s276
      %p280 = pneg %p274
      %p281 = scmp.eq.s32.totalorder %s20, 1
      %p282 = por %p280, %p281
      %p283 = scmp.ne.s32.totalorder %s275, %s278
      %p284 = scmp.eq.s32.totalorder %s20, 0
      %p285 = por %p283, %p284
      %p286 = scmp.ne.s32.totalorder %s275, %s278
      %p287 = scmp.eq.s32.totalorder %s25, 1
      %p288 = por %p286, %p287
      %p289 = scmp.ne.s32.totalorder %s278, %s279
      %p290 = scmp.eq.s32.totalorder %s25, 0
      %p291 = por %p289, %p290
      %p292 = scmp.ne.s32.totalorder %s278, %s279
      %p293 = scmp.eq.s32.totalorder %s26, 1
      %p294 = por %p292, %p293
      %p296 = scmp.ne.s32.totalorder %s279, %s295
      %p297 = scmp.eq.s32.totalorder %s26, 0
      %p298 = por %p296, %p297
      %s299 = ssub.s32 %s27, %s39
      %s300 = ssub.s32 %s28, %s35
      %s301 = sor.u32 %s299, %s300
      %p302 = scmp.eq.s32.totalorder %s301, 0
      %s304 = sadd.s32 %s303, 1
      %s305 = scalar_select %p302, %s303, %s304
      %p308 = pneg %p302
      %p309 = scmp.eq.s32.totalorder %s20, 1
      %p310 = por %p308, %p309
      %p311 = scmp.ne.s32.totalorder %s303, %s306
      %p312 = scmp.eq.s32.totalorder %s20, 0
      %p313 = por %p311, %p312
      %p314 = scmp.ne.s32.totalorder %s303, %s306
      %p315 = scmp.eq.s32.totalorder %s25, 1
      %p316 = por %p314, %p315
      %p317 = scmp.ne.s32.totalorder %s306, %s307
      %p318 = scmp.eq.s32.totalorder %s25, 0
      %p319 = por %p317, %p318
      %p320 = scmp.ne.s32.totalorder %s306, %s307
      %p321 = scmp.eq.s32.totalorder %s26, 1
      %p322 = por %p320, %p321
      %p324 = scmp.ne.s32.totalorder %s307, %s323
      %p325 = scmp.eq.s32.totalorder %s26, 0
      %p326 = por %p324, %p325
      %p327 = scmp.le.s32.totalorder 1, %s20
      %p328 = scmp.lt.s32.totalorder %s20, 3
      %p329 = pnand %p327, %p328
      %p330 = pneg %p329
      // Predicated region
      $region9: #{lfa_forward.4} parent=5 // pred_check
        _
      $region10: #{lfa_forward.4} parent=5 // pred_check_branch
        %332 = sbr.rel (%p329) target = $region12
      $region11: #{lfa_forward.4} parent=5 // pred_region
        %s333 = ssub.s32 %s20, 1
        // Predicated region
        $region13: #{lfa_forward.4} parent=11 // pred_check
          %p334 = pneg %p137
        $region14: #{lfa_forward.4} parent=11 // pred_check_branch
          %336 = sbr.rel (%p334) target = $region16
        $region15: #{lfa_forward.4} parent=11 // pred_region
          _
        $region16: #{lfa_forward.4} parent=11 // pred_fallthru
          _
        // Predicated region
        $region17: #{lfa_forward.4} parent=11 // pred_check
          %p337 = pneg %p158
        $region18: #{lfa_forward.4} parent=11 // pred_check_branch
          %339 = sbr.rel (%p337) target = $region20
        $region19: #{lfa_forward.4} parent=11 // pred_region
          _
        $region20: #{lfa_forward.4} parent=11 // pred_fallthru
          _
        // Predicated region
        $region21: #{lfa_forward.4} parent=11 // pred_check
          %p340 = pneg %p179
        $region22: #{lfa_forward.4} parent=11 // pred_check_branch
          %342 = sbr.rel (%p340) target = $region24
        $region23: #{lfa_forward.4} parent=11 // pred_region
          _
        $region24: #{lfa_forward.4} parent=11 // pred_fallthru
          _
        // Predicated region
        $region25: #{lfa_forward.4} parent=11 // pred_check
          %p343 = pneg %p200
        $region26: #{lfa_forward.4} parent=11 // pred_check_branch
          %345 = sbr.rel (%p343) target = $region28
        $region27: #{lfa_forward.4} parent=11 // pred_region
          _
        $region28: #{lfa_forward.4} parent=11 // pred_fallthru
          _
        // Predicated region
        $region29: #{lfa_forward.4} parent=11 // pred_check
          %p346 = pneg %p221
        $region30: #{lfa_forward.4} parent=11 // pred_check_branch
          %348 = sbr.rel (%p346) target = $region32
        $region31: #{lfa_forward.4} parent=11 // pred_region
          _
        $region32: #{lfa_forward.4} parent=11 // pred_fallthru
          _
        // Predicated region
        $region33: #{lfa_forward.4} parent=11 // pred_check
          %p349 = pneg %p242
        $region34: #{lfa_forward.4} parent=11 // pred_check_branch
          %351 = sbr.rel (%p349) target = $region36
        $region35: #{lfa_forward.4} parent=11 // pred_region
          %s353 = ssub.s32 16, 16
          %354 = vsyncadd [#allocation4], %s353
          %s356 = sshll.u32 %s8, 4
          %s357 = int_to_ptr.vmem [resolvable:$true] %s356
          %359 = dma.vmem_to_smem %s357, 16, [#allocation3], [#allocation4]
        $region36: #{lfa_forward.4} parent=11 // pred_fallthru
          _
        // Predicated region
        $region37: #{lfa_forward.4} parent=11 // pred_check
          %p360 = pneg %p263
        $region38: #{lfa_forward.4} parent=11 // pred_check_branch
          %362 = sbr.rel (%p360) target = $region40
        $region39: #{lfa_forward.4} parent=11 // pred_region
          _
        $region40: #{lfa_forward.4} parent=11 // pred_fallthru
          _
      $region12: #{lfa_forward.4} parent=5 // pred_fallthru
        _
      %p363 = scmp.lt.s32.totalorder %s20, 2
      // Predicated region
      $region41: #{lfa_forward.4} parent=5 // pred_check
        %p364 = pneg %p363
      $region42: #{lfa_forward.4} parent=5 // pred_check_branch
        %366 = sbr.rel (%p364) target = $region44
      $region43: #{lfa_forward.4} parent=5 // pred_region
        // Predicated region
        $region45: #{lfa_forward.4} parent=43 // pred_check
          %p367 = pneg %p54
        $region46: #{lfa_forward.4} parent=43 // pred_check_branch
          %369 = sbr.rel (%p367) target = $region48
        $region47: #{lfa_forward.4} parent=43 // pred_region
          %s370 = smul.u32 2, %s28
          %p371 = scmp.lt.s32.totalorder %s27, 1
          %s372 = scalar_select %p371, %s27, 1
          %p373 = scmp.lt.s32.totalorder %s370, 1
          %s374 = scalar_select %p373, %s370, 1
          %s375 = smul.addr %s372, 8
          %s376 = sadd.s32 %s374, %s375
          %s377 = smul.addr %s376, 8
          %s378 = scalar_lea.vmem %s0, %s377
          %s379 = smul.u32 2, %s28
        $region48: #{lfa_forward.4} parent=43 // pred_fallthru
          _
        // Predicated region
        $region49: #{lfa_forward.4} parent=43 // pred_check
          %p380 = pneg %p82
        $region50: #{lfa_forward.4} parent=43 // pred_check_branch
          %382 = sbr.rel (%p380) target = $region52
        $region51: #{lfa_forward.4} parent=43 // pred_region
          %s383 = smul.u32 2, %s28
          %p384 = scmp.lt.s32.totalorder %s27, 1
          %s385 = scalar_select %p384, %s27, 1
          %p386 = scmp.lt.s32.totalorder %s383, 1
          %s387 = scalar_select %p386, %s383, 1
          %s388 = smul.addr %s385, 16
          %s389 = sadd.s32 %s387, %s388
          %s390 = smul.addr %s389, 4
          %s391 = scalar_lea.vmem %s1, %s390
          %s392 = smul.u32 2, %s28
        $region52: #{lfa_forward.4} parent=43 // pred_fallthru
          _
        // Predicated region
        $region53: #{lfa_forward.4} parent=43 // pred_check
          %p393 = pneg %p110
        $region54: #{lfa_forward.4} parent=43 // pred_check_branch
          %395 = sbr.rel (%p393) target = $region56
        $region55: #{lfa_forward.4} parent=43 // pred_region
          %s396 = smul.u32 2, %s28
          %p397 = scmp.lt.s32.totalorder %s27, 1
          %s398 = scalar_select %p397, %s27, 1
          %p399 = scmp.lt.s32.totalorder %s396, 1
          %s400 = scalar_select %p399, %s396, 1
          %s401 = smul.addr %s398, 2
          %s402 = sadd.s32 %s400, %s401
          %s403 = smul.addr %s402, 8
          %s404 = scalar_lea.vmem %s2, %s403
          %s405 = smul.u32 2, %s28
        $region56: #{lfa_forward.4} parent=43 // pred_fallthru
          _
      $region44: #{lfa_forward.4} parent=5 // pred_fallthru
        _
      %p406 = scmp.le.s32.totalorder 1, %s20
      %p407 = scmp.lt.s32.totalorder %s20, 3
      %p408 = pnand %p406, %p407
      %p409 = pneg %p408
      // Predicated region
      $region57: #{lfa_forward.4} parent=5 // pred_check
        _
      $region58: #{lfa_forward.4} parent=5 // pred_check_branch
        %411 = sbr.rel (%p408) target = $region60
      $region59: #{lfa_forward.4} parent=5 // pred_region
        %s412 = ssub.s32 %s20, 1
        // Predicated region
        $region61: #{lfa_forward.4} parent=59 // pred_check
          %p413 = pneg %p242
        $region62: #{lfa_forward.4} parent=59 // pred_check_branch
          %415 = sbr.rel (%p413) target = $region64
        $region63: #{lfa_forward.4} parent=59 // pred_region
          %416 = dma.done [#allocation4], 16
        $region64: #{lfa_forward.4} parent=59 // pred_fallthru
          _
        %417 = sfence
        %s418 = smul.u32 2, %s30
        %p419 = scmp.lt.s32.totalorder %s29, 1
        %s420 = scalar_select %p419, %s29, 1
        %p421 = scmp.lt.s32.totalorder %s418, 1
        %s422 = scalar_select %p421, %s418, 1
        %s423 = smul.addr %s420, 8
        %s424 = sadd.s32 %s422, %s423
        %s425 = smul.addr %s424, 8
        %s426 = scalar_lea.vmem %s0, %s425
        %p427 = pneg %p60
        %p428 = pneg %p57
        %s429 = smul.u32 2, %s30
        %p430 = scmp.lt.s32.totalorder %s29, 1
        %s431 = scalar_select %p430, %s29, 1
        %p432 = scmp.lt.s32.totalorder %s429, 1
        %s433 = scalar_select %p432, %s429, 1
        %s434 = smul.addr %s431, 16
        %s435 = sadd.s32 %s433, %s434
        %s436 = smul.addr %s435, 4
        %s437 = scalar_lea.vmem %s1, %s436
        %p438 = pneg %p88
        %p439 = pneg %p85
        %s440 = smul.u32 2, %s30
        %p441 = scmp.lt.s32.totalorder %s29, 1
        %s442 = scalar_select %p441, %s29, 1
        %p443 = scmp.lt.s32.totalorder %s440, 1
        %s444 = scalar_select %p443, %s440, 1
        %s445 = smul.addr %s442, 2
        %s446 = sadd.s32 %s444, %s445
        %s447 = smul.addr %s446, 8
        %s448 = scalar_lea.vmem %s2, %s447
        %p449 = pneg %p116
        %p450 = pneg %p113
        %p451 = pneg %p137
        %p452 = pneg %p134
        %p453 = pneg %p158
        %p454 = pneg %p155
        %p455 = pneg %p179
        %p456 = pneg %p176
        %p457 = pneg %p200
        %p458 = pneg %p197
        %p459 = pneg %p221
        %p460 = pneg %p218
        %p461 = pneg %p242
        %p462 = pneg %p239
        %p463 = pneg %p263
        %p464 = pneg %p260
        %p465 = pneg %p291
        %p466 = pneg %p288
        %s467 = smul.u32 2, %s30
        %p468 = scmp.lt.s32.totalorder %s29, 1
        %s469 = scalar_select %p468, %s29, 1
        %p470 = scmp.lt.s32.totalorder %s467, 1
        %s471 = scalar_select %p470, %s467, 1
        %s472 = smul.addr %s469, 4
        %s473 = sadd.s32 %s471, %s472
        %s474 = smul.addr %s473, 4
        %s475 = scalar_lea.vmem %s10, %s474
        %p476 = pneg %p319
        %p477 = pneg %p316
        %s478 = smul.u32 2, %s30
        %p479 = scmp.lt.s32.totalorder %s29, 1
        %s480 = scalar_select %p479, %s29, 1
        %p481 = scmp.lt.s32.totalorder %s478, 1
        %s482 = scalar_select %p481, %s478, 1
        %s483 = smul.addr %s480, 4
        %s484 = sadd.s32 %s482, %s483
        %s485 = smul.addr %s484, 4
        %s486 = scalar_lea.vmem %s11, %s485
        %s487 = smul.u32 2, %s30
        %p488 = scmp.lt.s32.totalorder %s29, 1
        %s489 = scalar_select %p488, %s29, 1
        %p490 = scmp.lt.s32.totalorder %s487, 1
        %s491 = scalar_select %p490, %s487, 1
        %s492 = smul.addr %s489, 8
        %s493 = sadd.s32 %s491, %s492
        %s494 = smul.addr %s493, 8
        %s495 = scalar_lea.vmem %s0, %s494
        %s496 = smul.u32 2, %s30
        %s497 = smul.u32 2, %s30
        %p498 = scmp.lt.s32.totalorder %s29, 1
        %s499 = scalar_select %p498, %s29, 1
        %p500 = scmp.lt.s32.totalorder %s497, 1
        %s501 = scalar_select %p500, %s497, 1
        %s502 = smul.addr %s499, 16
        %s503 = sadd.s32 %s501, %s502
        %s504 = smul.addr %s503, 4
        %s505 = scalar_lea.vmem %s1, %s504
        %s506 = smul.u32 2, %s30
        %s507 = smul.u32 2, %s30
        %p508 = scmp.lt.s32.totalorder %s29, 1
        %s509 = scalar_select %p508, %s29, 1
        %p510 = scmp.lt.s32.totalorder %s507, 1
        %s511 = scalar_select %p510, %s507, 1
        %s512 = smul.addr %s509, 2
        %s513 = sadd.s32 %s511, %s512
        %s514 = smul.addr %s513, 8
        %s515 = scalar_lea.vmem %s2, %s514
        %s516 = smul.u32 2, %s30
        %s517 = smul.u32 2, %s30
        %p518 = scmp.lt.s32.totalorder %s29, 1
        %s519 = scalar_select %p518, %s29, 1
        %p520 = scmp.lt.s32.totalorder %s517, 1
        %s521 = scalar_select %p520, %s517, 1
        %s522 = smul.addr %s519, 4
        %s523 = sadd.s32 %s521, %s522
        %s524 = smul.addr %s523, 4
        %s525 = scalar_lea.vmem %s10, %s524
        %s526 = smul.u32 2, %s30
        %s527 = smul.u32 2, %s30
        %p528 = scmp.lt.s32.totalorder %s29, 1
        %s529 = scalar_select %p528, %s29, 1
        %p530 = scmp.lt.s32.totalorder %s527, 1
        %s531 = scalar_select %p530, %s527, 1
        %s532 = smul.addr %s529, 4
        %s533 = sadd.s32 %s531, %s532
        %s534 = smul.addr %s533, 4
        %s535 = scalar_lea.vmem %s11, %s534
        %s536 = smul.u32 2, %s30
        %v537 = vld [vmem:[%s495] ss:$8 sm:$0x3]
        %s538 = scalar_lea.vmem %s495, 1
        %v539 = vld [vmem:[%s538] ss:$8 sm:$0x3]
        %s540 = scalar_lea.vmem %s495, 2
        %v541 = vld [vmem:[%s540] ss:$8 sm:$0x3]
        %v542 = vld [vmem:[%s3] sm:$0xff]
        %v543 = vld [vmem:[%s4] sm:$0xff]
        %545 = vset.pattern.permute.xlu0 1
        %546 = vperm.xlu0 %545, %v542
        %v547 = vpop.permute.xlu0 %546
        %v550 = vlaneseq
        %v551 = vshrl.u32 %v550, 7
        %v552 = vsub.s32 0, %v551
        %v553 = vrot.slane %v537, %v552
        %v554 = vlaneseq
        %v555 = vshrl.u32 %v554, 7
        %v556 = vsub.s32 1, %v555
        %v557 = vrot.slane %v537, %v556
        %v560 = vmul.f32 %v547, %v553
        %v561 = vmul.f32 %v547, %v557
        %562 = vset.pattern.permute.xlu0 2
        %563 = vperm.xlu0 %562, %v542
        %v564 = vpop.permute.xlu0 %563
        %v567 = vlaneseq
        %v568 = vshrl.u32 %v567, 7
        %v569 = vsub.s32 0, %v568
        %v570 = vrot.slane %v539, %v569
        %v571 = vlaneseq
        %v572 = vshrl.u32 %v571, 7
        %v573 = vsub.s32 1, %v572
        %v574 = vrot.slane %v539, %v573
        %v577 = vmul.f32 %v564, %v570
        %v578 = vmul.f32 %v564, %v574
        %v579 = vadd.f32 %v560, %v577
        %v580 = vadd.f32 %v561, %v578
        %581 = vset.pattern.permute.xlu0 3
        %582 = vperm.xlu0 %581, %v542
        %v583 = vpop.permute.xlu0 %582
        %v586 = vlaneseq
        %v587 = vshrl.u32 %v586, 7
        %v588 = vsub.s32 0, %v587
        %v589 = vrot.slane %v541, %v588
        %v590 = vlaneseq
        %v591 = vshrl.u32 %v590, 7
        %v592 = vsub.s32 1, %v591
        %v593 = vrot.slane %v541, %v592
        %v596 = vmul.f32 %v583, %v589
        %v597 = vmul.f32 %v583, %v593
        %v598 = vadd.f32 %v579, %v596
        %v599 = vadd.f32 %v580, %v597
        %600 = vset.pattern.permute.xlu0 7
        %601 = vperm.xlu0 %600, %v542
        %v602 = vpop.permute.xlu0 %601
        %v604 = vadd.f32 %v598, %v602
        %v605 = vadd.f32 %v599, %v602
        %s606 = scalar_lea.vmem %s495, 3
        %v607 = vld [vmem:[%s606] ss:$8 sm:$0x3]
        %s608 = scalar_lea.vmem %s495, 4
        %v609 = vld [vmem:[%s608] ss:$8 sm:$0x3]
        %s610 = scalar_lea.vmem %s495, 5
        %v611 = vld [vmem:[%s610] ss:$8 sm:$0x3]
        %v612 = vsub.f32 %v537, %v607
        %v613 = vsub.f32 %v539, %v609
        %v614 = vsub.f32 %v541, %v611
        %v615 = vmul.f32 %v612, %v612
        %v616 = vmul.f32 %v613, %v613
        %v617 = vadd.f32 %v615, %v616
        %v618 = vmul.f32 %v614, %v614
        %v619 = vadd.f32 %v617, %v618
        %v620 = vrsqrt.pop %v619
        %v621 = vmul.f32 %v619, %v620
        %vm622 = vcmp.eq.f32.partialorder %v619, inf
        %v623 = vsel %vm622, %v619, %v621
        %vm624 = vcmp.eq.f32.partialorder %v619, 0.0
        %v625 = vand.u32 %v619, 2147483648
        %v626 = vsel %vm624, %v625, %v623
        %627 = vset.pattern.permute.xlu0 0
        %628 = vperm.xlu0 %627, %v542
        %v629 = vpop.permute.xlu0 %628
        %v632 = vlaneseq
        %v633 = vshrl.u32 %v632, 7
        %v634 = vsub.s32 0, %v633
        %v635 = vrot.slane %v626, %v634
        %v636 = vlaneseq
        %v637 = vshrl.u32 %v636, 7
        %v638 = vsub.s32 1, %v637
        %v639 = vrot.slane %v626, %v638
        %v642 = vmul.f32 %v629, %v635
        %v643 = vmul.f32 %v629, %v639
        %v644 = vadd.f32 %v604, %v642
        %v645 = vadd.f32 %v605, %v643
        %646 = vset.pattern.permute.xlu0 4
        %647 = vperm.xlu0 %646, %v542
        %v648 = vpop.permute.xlu0 %647
        %v651 = vlaneseq
        %v652 = vshrl.u32 %v651, 7
        %v653 = vsub.s32 0, %v652
        %v654 = vrot.slane %v607, %v653
        %v655 = vlaneseq
        %v656 = vshrl.u32 %v655, 7
        %v657 = vsub.s32 1, %v656
        %v658 = vrot.slane %v607, %v657
        %v661 = vmul.f32 %v648, %v654
        %v662 = vmul.f32 %v648, %v658
        %v663 = vadd.f32 %v644, %v661
        %v664 = vadd.f32 %v645, %v662
        %665 = vset.pattern.permute.xlu0 5
        %666 = vperm.xlu0 %665, %v542
        %v667 = vpop.permute.xlu0 %666
        %v670 = vlaneseq
        %v671 = vshrl.u32 %v670, 7
        %v672 = vsub.s32 0, %v671
        %v673 = vrot.slane %v609, %v672
        %v674 = vlaneseq
        %v675 = vshrl.u32 %v674, 7
        %v676 = vsub.s32 1, %v675
        %v677 = vrot.slane %v609, %v676
        %v680 = vmul.f32 %v667, %v673
        %v681 = vmul.f32 %v667, %v677
        %v682 = vadd.f32 %v663, %v680
        %v683 = vadd.f32 %v664, %v681
        %684 = vset.pattern.permute.xlu0 6
        %685 = vperm.xlu0 %684, %v542
        %v686 = vpop.permute.xlu0 %685
        %v689 = vlaneseq
        %v690 = vshrl.u32 %v689, 7
        %v691 = vsub.s32 0, %v690
        %v692 = vrot.slane %v611, %v691
        %v693 = vlaneseq
        %v694 = vshrl.u32 %v693, 7
        %v695 = vsub.s32 1, %v694
        %v696 = vrot.slane %v611, %v695
        %v699 = vmul.f32 %v686, %v692
        %v700 = vmul.f32 %v686, %v696
        %v701 = vadd.f32 %v682, %v699
        %v702 = vadd.f32 %v683, %v700
        %v703 = vmax.f32 %v701, 0.0
        %v704 = vmax.f32 %v702, 0.0
        %v705 = vld [vmem:[%s505] sm:$0xff]
        %v706 = vunpack.c.l.bf16 %v705
        %v707 = vunpack.c.h.bf16 %v705
        %709 = vrot.lane.b32.xlu0 %v543, 120
        %v710 = vpop.permute.xlu0 %709
        %vm711 = vcmask 64512
        %v712 = vsel %vm711, %v710, 0
        %714 = vmatprep.subr.mxu0 %v704
        %715 = vmatpush1.msra.mxu0 %v703
        %716 = vmatprep.subr.mxu0 0.0
        %717 = vmatpush1.msra.mxu0 0.0
        %718 = vmatprep.subr.mxu0 0.0
        %719 = vmatpush1.msra.mxu0 0.0
        %720 = vmatprep.subr.mxu0 0.0
        %721 = vmatpush1.msra.mxu0 0.0
        %722 = vmatprep.subr.mxu0 0.0
        %723 = vmatpush1.msra.mxu0 0.0
        %724 = vmatprep.subr.mxu0 0.0
        %725 = vmatpush1.msra.mxu0 0.0
        %726 = vmatprep.subr.mxu0 0.0
        %727 = vmatpush1.msra.mxu0 0.0
        %728 = vmatprep.subr.mxu0 0.0
        %729 = vmatpush1.msra.mxu0 0.0
        %730 = vmatprep.subr.mxu0 0.0
        %731 = vmatpush1.msra.mxu0 0.0
        %732 = vmatprep.subr.mxu0 0.0
        %733 = vmatpush1.msra.mxu0 0.0
        %734 = vmatprep.subr.mxu0 0.0
        %735 = vmatpush1.msra.mxu0 0.0
        %736 = vmatprep.subr.mxu0 0.0
        %737 = vmatpush1.msra.mxu0 0.0
        %738 = vmatprep.subr.mxu0 0.0
        %739 = vmatpush1.msra.mxu0 0.0
        %740 = vmatprep.subr.mxu0 0.0
        %741 = vmatpush1.msra.mxu0 0.0
        %742 = vmatprep.subr.mxu0 0.0
        %743 = vmatpush1.msra.mxu0 0.0
        %744 = vmatprep.subr.mxu0 0.0
        %745 = vmatpush1.msra.mxu0 0.0
        %746 = vmatprep.subr.mxu0 0.0
        %747 = vmatpush1.msra.mxu0 0.0
        %748 = vmatprep.subr.mxu0 0.0
        %749 = vmatpush1.msra.mxu0 0.0
        %750 = vmatprep.subr.mxu0 0.0
        %751 = vmatpush1.msra.mxu0 0.0
        %752 = vmatprep.subr.mxu0 0.0
        %753 = vmatpush1.msra.mxu0 0.0
        %754 = vmatprep.subr.mxu0 0.0
        %755 = vmatpush1.msra.mxu0 0.0
        %756 = vmatprep.subr.mxu0 0.0
        %757 = vmatpush1.msra.mxu0 0.0
        %758 = vmatprep.subr.mxu0 0.0
        %759 = vmatpush1.msra.mxu0 0.0
        %760 = vmatprep.subr.mxu0 0.0
        %761 = vmatpush1.msra.mxu0 0.0
        %762 = vmatprep.subr.mxu0 0.0
        %763 = vmatpush1.msra.mxu0 0.0
        %764 = vmatprep.subr.mxu0 0.0
        %765 = vmatpush1.msra.mxu0 0.0
        %766 = vmatprep.subr.mxu0 0.0
        %767 = vmatpush1.msra.mxu0 0.0
        %768 = vmatprep.subr.mxu0 0.0
        %769 = vmatpush1.msra.mxu0 0.0
        %770 = vmatprep.subr.mxu0 0.0
        %771 = vmatpush1.msra.mxu0 0.0
        %772 = vmatprep.subr.mxu0 0.0
        %773 = vmatpush1.msra.mxu0 0.0
        %774 = vmatprep.subr.mxu0 0.0
        %775 = vmatpush1.msra.mxu0 0.0
        %776 = vmatprep.subr.mxu0 0.0
        %777 = vmatpush1.msra.mxu0 0.0
        %778 = vmatprep.mubr.f32.mxu0 0.0
        %779 = vmatmul.mubr.f32.gmra.mrb[0].mxu0 %v712
        %v780 = vpop.f32.mrb[0].mxu0
        %v781 = vadd.f32 0.0, %v780
        %v782 = vpop.f32.mrb[0].mxu0
        %v783 = vadd.f32 0.0, %v782
        %784 = vdwg.mxu0
        %v785 = vsel %vm711, %v543, 0
        %787 = vmatprep.subr.mxu0 %v707
        %788 = vmatpush1.msra.mxu0 %v706
        %789 = vmatprep.subr.mxu0 0.0
        %790 = vmatpush1.msra.mxu0 0.0
        %791 = vmatprep.subr.mxu0 0.0
        %792 = vmatpush1.msra.mxu0 0.0
        %793 = vmatprep.subr.mxu0 0.0
        %794 = vmatpush1.msra.mxu0 0.0
        %795 = vmatprep.subr.mxu0 0.0
        %796 = vmatpush1.msra.mxu0 0.0
        %797 = vmatprep.subr.mxu0 0.0
        %798 = vmatpush1.msra.mxu0 0.0
        %799 = vmatprep.subr.mxu0 0.0
        %800 = vmatpush1.msra.mxu0 0.0
        %801 = vmatprep.subr.mxu0 0.0
        %802 = vmatpush1.msra.mxu0 0.0
        %803 = vmatprep.subr.mxu0 0.0
        %804 = vmatpush1.msra.mxu0 0.0
        %805 = vmatprep.subr.mxu0 0.0
        %806 = vmatpush1.msra.mxu0 0.0
        %807 = vmatprep.subr.mxu0 0.0
        %808 = vmatpush1.msra.mxu0 0.0
        %809 = vmatprep.subr.mxu0 0.0
        %810 = vmatpush1.msra.mxu0 0.0
        %811 = vmatprep.subr.mxu0 0.0
        %812 = vmatpush1.msra.mxu0 0.0
        %813 = vmatprep.subr.mxu0 0.0
        %814 = vmatpush1.msra.mxu0 0.0
        %815 = vmatprep.subr.mxu0 0.0
        %816 = vmatpush1.msra.mxu0 0.0
        %817 = vmatprep.subr.mxu0 0.0
        %818 = vmatpush1.msra.mxu0 0.0
        %819 = vmatprep.subr.mxu0 0.0
        %820 = vmatpush1.msra.mxu0 0.0
        %821 = vmatprep.subr.mxu0 0.0
        %822 = vmatpush1.msra.mxu0 0.0
        %823 = vmatprep.subr.mxu0 0.0
        %824 = vmatpush1.msra.mxu0 0.0
        %825 = vmatprep.subr.mxu0 0.0
        %826 = vmatpush1.msra.mxu0 0.0
        %827 = vmatprep.subr.mxu0 0.0
        %828 = vmatpush1.msra.mxu0 0.0
        %829 = vmatprep.subr.mxu0 0.0
        %830 = vmatpush1.msra.mxu0 0.0
        %831 = vmatprep.subr.mxu0 0.0
        %832 = vmatpush1.msra.mxu0 0.0
        %833 = vmatprep.subr.mxu0 0.0
        %834 = vmatpush1.msra.mxu0 0.0
        %835 = vmatprep.subr.mxu0 0.0
        %836 = vmatpush1.msra.mxu0 0.0
        %837 = vmatprep.subr.mxu0 0.0
        %838 = vmatpush1.msra.mxu0 0.0
        %839 = vmatprep.subr.mxu0 0.0
        %840 = vmatpush1.msra.mxu0 0.0
        %841 = vmatprep.subr.mxu0 0.0
        %842 = vmatpush1.msra.mxu0 0.0
        %843 = vmatprep.subr.mxu0 0.0
        %844 = vmatpush1.msra.mxu0 0.0
        %845 = vmatprep.subr.mxu0 0.0
        %846 = vmatpush1.msra.mxu0 0.0
        %847 = vmatprep.subr.mxu0 0.0
        %848 = vmatpush1.msra.mxu0 0.0
        %849 = vmatprep.subr.mxu0 0.0
        %850 = vmatpush1.msra.mxu0 0.0
        %851 = vmatprep.mubr.f32.mxu0 0.0
        %852 = vmatmul.mubr.f32.gmra.mrb[0].mxu0 %v785
        %v853 = vpop.f32.mrb[0].mxu0
        %v854 = vadd.f32 %v781, %v853
        %v855 = vpop.f32.mrb[0].mxu0
        %v856 = vadd.f32 %v783, %v855
        %857 = vdwg.mxu0
        %858 = vset.pattern.permute.xlu0 16
        %859 = vperm.xlu0 %858, %v543
        %v860 = vpop.permute.xlu0 %859
        %v862 = vadd.f32 %v854, %v860
        %v863 = vadd.f32 %v856, %v860
        %v864 = vmax.f32 %v862, 0.0
        %v865 = vmax.f32 %v863, 0.0
        %s866 = sld [smem:[#allocation3]]
        %v867 = vstv %s866
        %v868 = vmul.f32 %v867, %v864
        %v869 = vmul.f32 %v867, %v865
        %s870 = scalar_lea.vmem %s495, 6
        %v871 = vld [vmem:[%s870] ss:$8 sm:$0x3]
        %s872 = scalar_lea.vmem %s495, 7
        %v873 = vld [vmem:[%s872] ss:$8 sm:$0x3]
        %s874 = scalar_lea.vmem %s495, 16
        %v875 = vld [vmem:[%s874] ss:$8 sm:$0x3]
        %v876 = vsub.f32 %v537, %v871
        %v877 = vsub.f32 %v539, %v873
        %v878 = vsub.f32 %v541, %v875
        %v879 = vmul.f32 %v876, %v876
        %v880 = vmul.f32 %v877, %v877
        %v881 = vadd.f32 %v879, %v880
        %v882 = vmul.f32 %v878, %v878
        %v883 = vadd.f32 %v881, %v882
        %v884 = vrsqrt.pop %v883
        %v885 = vmul.f32 %v883, %v884
        %vm886 = vcmp.eq.f32.partialorder %v883, inf
        %v887 = vsel %vm886, %v883, %v885
        %vm888 = vcmp.eq.f32.partialorder %v883, 0.0
        %v889 = vand.u32 %v883, 2147483648
        %v890 = vsel %vm888, %v889, %v887
        %v892 = vlaneseq
        %v893 = vshrl.u32 %v892, 7
        %v894 = vsub.s32 0, %v893
        %v895 = vrot.slane %v890, %v894
        %v896 = vlaneseq
        %v897 = vshrl.u32 %v896, 7
        %v898 = vsub.s32 1, %v897
        %v899 = vrot.slane %v890, %v898
        %v902 = vmul.f32 %v629, %v895
        %v903 = vmul.f32 %v629, %v899
        %v904 = vadd.f32 %v604, %v902
        %v905 = vadd.f32 %v605, %v903
        %v907 = vlaneseq
        %v908 = vshrl.u32 %v907, 7
        %v909 = vsub.s32 0, %v908
        %v910 = vrot.slane %v871, %v909
        %v911 = vlaneseq
        %v912 = vshrl.u32 %v911, 7
        %v913 = vsub.s32 1, %v912
        %v914 = vrot.slane %v871, %v913
        %v917 = vmul.f32 %v648, %v910
        %v918 = vmul.f32 %v648, %v914
        %v919 = vadd.f32 %v904, %v917
        %v920 = vadd.f32 %v905, %v918
        %v922 = vlaneseq
        %v923 = vshrl.u32 %v922, 7
        %v924 = vsub.s32 0, %v923
        %v925 = vrot.slane %v873, %v924
        %v926 = vlaneseq
        %v927 = vshrl.u32 %v926, 7
        %v928 = vsub.s32 1, %v927
        %v929 = vrot.slane %v873, %v928
        %v932 = vmul.f32 %v667, %v925
        %v933 = vmul.f32 %v667, %v929
        %v934 = vadd.f32 %v919, %v932
        %v935 = vadd.f32 %v920, %v933
        %v937 = vlaneseq
        %v938 = vshrl.u32 %v937, 7
        %v939 = vsub.s32 0, %v938
        %v940 = vrot.slane %v875, %v939
        %v941 = vlaneseq
        %v942 = vshrl.u32 %v941, 7
        %v943 = vsub.s32 1, %v942
        %v944 = vrot.slane %v875, %v943
        %v947 = vmul.f32 %v686, %v940
        %v948 = vmul.f32 %v686, %v944
        %v949 = vadd.f32 %v934, %v947
        %v950 = vadd.f32 %v935, %v948
        %v951 = vmax.f32 %v949, 0.0
        %v952 = vmax.f32 %v950, 0.0
        %s953 = scalar_lea.vmem %s505, 8
        %v954 = vld [vmem:[%s953] sm:$0xff]
        %v955 = vunpack.c.l.bf16 %v954
        %v956 = vunpack.c.h.bf16 %v954
        %957 = vmatprep.subr.mxu0 %v952
        %958 = vmatpush1.msra.mxu0 %v951
        %959 = vmatprep.subr.mxu0 0.0
        %960 = vmatpush1.msra.mxu0 0.0
        %961 = vmatprep.subr.mxu0 0.0
        %962 = vmatpush1.msra.mxu0 0.0
        %963 = vmatprep.subr.mxu0 0.0
        %964 = vmatpush1.msra.mxu0 0.0
        %965 = vmatprep.subr.mxu0 0.0
        %966 = vmatpush1.msra.mxu0 0.0
        %967 = vmatprep.subr.mxu0 0.0
        %968 = vmatpush1.msra.mxu0 0.0
        %969 = vmatprep.subr.mxu0 0.0
        %970 = vmatpush1.msra.mxu0 0.0
        %971 = vmatprep.subr.mxu0 0.0
        %972 = vmatpush1.msra.mxu0 0.0
        %973 = vmatprep.subr.mxu0 0.0
        %974 = vmatpush1.msra.mxu0 0.0
        %975 = vmatprep.subr.mxu0 0.0
        %976 = vmatpush1.msra.mxu0 0.0
        %977 = vmatprep.subr.mxu0 0.0
        %978 = vmatpush1.msra.mxu0 0.0
        %979 = vmatprep.subr.mxu0 0.0
        %980 = vmatpush1.msra.mxu0 0.0
        %981 = vmatprep.subr.mxu0 0.0
        %982 = vmatpush1.msra.mxu0 0.0
        %983 = vmatprep.subr.mxu0 0.0
        %984 = vmatpush1.msra.mxu0 0.0
        %985 = vmatprep.subr.mxu0 0.0
        %986 = vmatpush1.msra.mxu0 0.0
        %987 = vmatprep.subr.mxu0 0.0
        %988 = vmatpush1.msra.mxu0 0.0
        %989 = vmatprep.subr.mxu0 0.0
        %990 = vmatpush1.msra.mxu0 0.0
        %991 = vmatprep.subr.mxu0 0.0
        %992 = vmatpush1.msra.mxu0 0.0
        %993 = vmatprep.subr.mxu0 0.0
        %994 = vmatpush1.msra.mxu0 0.0
        %995 = vmatprep.subr.mxu0 0.0
        %996 = vmatpush1.msra.mxu0 0.0
        %997 = vmatprep.subr.mxu0 0.0
        %998 = vmatpush1.msra.mxu0 0.0
        %999 = vmatprep.subr.mxu0 0.0
        %1000 = vmatpush1.msra.mxu0 0.0
        %1001 = vmatprep.subr.mxu0 0.0
        %1002 = vmatpush1.msra.mxu0 0.0
        %1003 = vmatprep.subr.mxu0 0.0
        %1004 = vmatpush1.msra.mxu0 0.0
        %1005 = vmatprep.subr.mxu0 0.0
        %1006 = vmatpush1.msra.mxu0 0.0
        %1007 = vmatprep.subr.mxu0 0.0
        %1008 = vmatpush1.msra.mxu0 0.0
        %1009 = vmatprep.subr.mxu0 0.0
        %1010 = vmatpush1.msra.mxu0 0.0
        %1011 = vmatprep.subr.mxu0 0.0
        %1012 = vmatpush1.msra.mxu0 0.0
        %1013 = vmatprep.subr.mxu0 0.0
        %1014 = vmatpush1.msra.mxu0 0.0
        %1015 = vmatprep.subr.mxu0 0.0
        %1016 = vmatpush1.msra.mxu0 0.0
        %1017 = vmatprep.subr.mxu0 0.0
        %1018 = vmatpush1.msra.mxu0 0.0
        %1019 = vmatprep.subr.mxu0 0.0
        %1020 = vmatpush1.msra.mxu0 0.0
        %1021 = vmatprep.mubr.f32.mxu0 0.0
        %1022 = vmatmul.mubr.f32.gmra.mrb[0].mxu0 %v712
        %v1023 = vpop.f32.mrb[0].mxu0
        %v1024 = vadd.f32 0.0, %v1023
        %v1025 = vpop.f32.mrb[0].mxu0
        %v1026 = vadd.f32 0.0, %v1025
        %1027 = vdwg.mxu0
        %1028 = vmatprep.subr.mxu0 %v956
        %1029 = vmatpush1.msra.mxu0 %v955
        %1030 = vmatprep.subr.mxu0 0.0
        %1031 = vmatpush1.msra.mxu0 0.0
        %1032 = vmatprep.subr.mxu0 0.0
        %1033 = vmatpush1.msra.mxu0 0.0
        %1034 = vmatprep.subr.mxu0 0.0
        %1035 = vmatpush1.msra.mxu0 0.0
        %1036 = vmatprep.subr.mxu0 0.0
        %1037 = vmatpush1.msra.mxu0 0.0
        %1038 = vmatprep.subr.mxu0 0.0
        %1039 = vmatpush1.msra.mxu0 0.0
        %1040 = vmatprep.subr.mxu0 0.0
        %1041 = vmatpush1.msra.mxu0 0.0
        %1042 = vmatprep.subr.mxu0 0.0
        %1043 = vmatpush1.msra.mxu0 0.0
        %1044 = vmatprep.subr.mxu0 0.0
        %1045 = vmatpush1.msra.mxu0 0.0
        %1046 = vmatprep.subr.mxu0 0.0
        %1047 = vmatpush1.msra.mxu0 0.0
        %1048 = vmatprep.subr.mxu0 0.0
        %1049 = vmatpush1.msra.mxu0 0.0
        %1050 = vmatprep.subr.mxu0 0.0
        %1051 = vmatpush1.msra.mxu0 0.0
        %1052 = vmatprep.subr.mxu0 0.0
        %1053 = vmatpush1.msra.mxu0 0.0
        %1054 = vmatprep.subr.mxu0 0.0
        %1055 = vmatpush1.msra.mxu0 0.0
        %1056 = vmatprep.subr.mxu0 0.0
        %1057 = vmatpush1.msra.mxu0 0.0
        %1058 = vmatprep.subr.mxu0 0.0
        %1059 = vmatpush1.msra.mxu0 0.0
        %1060 = vmatprep.subr.mxu0 0.0
        %1061 = vmatpush1.msra.mxu0 0.0
        %1062 = vmatprep.subr.mxu0 0.0
        %1063 = vmatpush1.msra.mxu0 0.0
        %1064 = vmatprep.subr.mxu0 0.0
        %1065 = vmatpush1.msra.mxu0 0.0
        %1066 = vmatprep.subr.mxu0 0.0
        %1067 = vmatpush1.msra.mxu0 0.0
        %1068 = vmatprep.subr.mxu0 0.0
        %1069 = vmatpush1.msra.mxu0 0.0
        %1070 = vmatprep.subr.mxu0 0.0
        %1071 = vmatpush1.msra.mxu0 0.0
        %1072 = vmatprep.subr.mxu0 0.0
        %1073 = vmatpush1.msra.mxu0 0.0
        %1074 = vmatprep.subr.mxu0 0.0
        %1075 = vmatpush1.msra.mxu0 0.0
        %1076 = vmatprep.subr.mxu0 0.0
        %1077 = vmatpush1.msra.mxu0 0.0
        %1078 = vmatprep.subr.mxu0 0.0
        %1079 = vmatpush1.msra.mxu0 0.0
        %1080 = vmatprep.subr.mxu0 0.0
        %1081 = vmatpush1.msra.mxu0 0.0
        %1082 = vmatprep.subr.mxu0 0.0
        %1083 = vmatpush1.msra.mxu0 0.0
        %1084 = vmatprep.subr.mxu0 0.0
        %1085 = vmatpush1.msra.mxu0 0.0
        %1086 = vmatprep.subr.mxu0 0.0
        %1087 = vmatpush1.msra.mxu0 0.0
        %1088 = vmatprep.subr.mxu0 0.0
        %1089 = vmatpush1.msra.mxu0 0.0
        %1090 = vmatprep.subr.mxu0 0.0
        %1091 = vmatpush1.msra.mxu0 0.0
        %1092 = vmatprep.mubr.f32.mxu0 0.0
        %1093 = vmatmul.mubr.f32.gmra.mrb[0].mxu0 %v785
        %v1094 = vpop.f32.mrb[0].mxu0
        %v1095 = vadd.f32 %v1024, %v1094
        %v1096 = vpop.f32.mrb[0].mxu0
        %v1097 = vadd.f32 %v1026, %v1096
        %1098 = vdwg.mxu0
        %v1099 = vadd.f32 %v1095, %v860
        %v1100 = vadd.f32 %v1097, %v860
        %v1101 = vmax.f32 %v1099, 0.0
        %v1102 = vmax.f32 %v1100, 0.0
        %s1103 = sld [smem:[#allocation3 + $0x1]]
        %v1104 = vstv %s1103
        %v1105 = vmul.f32 %v1104, %v1101
        %v1106 = vmul.f32 %v1104, %v1102
        %v1107 = vmax.f32 %v864, %v1101
        %v1108 = vmax.f32 %v865, %v1102
        %v1109 = vadd.f32 %v868, %v1105
        %v1110 = vadd.f32 %v869, %v1106
        %s1111 = scalar_lea.vmem %s495, 17
        %v1112 = vld [vmem:[%s1111] ss:$8 sm:$0x3]
        %s1113 = scalar_lea.vmem %s495, 18
        %v1114 = vld [vmem:[%s1113] ss:$8 sm:$0x3]
        %s1115 = scalar_lea.vmem %s495, 19
        %v1116 = vld [vmem:[%s1115] ss:$8 sm:$0x3]
        %v1117 = vsub.f32 %v537, %v1112
        %v1118 = vsub.f32 %v539, %v1114
        %v1119 = vsub.f32 %v541, %v1116
        %v1120 = vmul.f32 %v1117, %v1117
        %v1121 = vmul.f32 %v1118, %v1118
        %v1122 = vadd.f32 %v1120, %v1121
        %v1123 = vmul.f32 %v1119, %v1119
        %v1124 = vadd.f32 %v1122, %v1123
        %v1125 = vrsqrt.pop %v1124
        %v1126 = vmul.f32 %v1124, %v1125
        %vm1127 = vcmp.eq.f32.partialorder %v1124, inf
        %v1128 = vsel %vm1127, %v1124, %v1126
        %vm1129 = vcmp.eq.f32.partialorder %v1124, 0.0
        %v1130 = vand.u32 %v1124, 2147483648
        %v1131 = vsel %vm1129, %v1130, %v1128
        %v1133 = vlaneseq
        %v1134 = vshrl.u32 %v1133, 7
        %v1135 = vsub.s32 0, %v1134
        %v1136 = vrot.slane %v1131, %v1135
        %v1137 = vlaneseq
        %v1138 = vshrl.u32 %v1137, 7
        %v1139 = vsub.s32 1, %v1138
        %v1140 = vrot.slane %v1131, %v1139
        %v1143 = vmul.f32 %v629, %v1136
        %v1144 = vmul.f32 %v629, %v1140
        %v1145 = vadd.f32 %v604, %v1143
        %v1146 = vadd.f32 %v605, %v1144
        %v1148 = vlaneseq
        %v1149 = vshrl.u32 %v1148, 7
        %v1150 = vsub.s32 0, %v1149
        %v1151 = vrot.slane %v1112, %v1150
        %v1152 = vlaneseq
        %v1153 = vshrl.u32 %v1152, 7
        %v1154 = vsub.s32 1, %v1153
        %v1155 = vrot.slane %v1112, %v1154
        %v1158 = vmul.f32 %v648, %v1151
        %v1159 = vmul.f32 %v648, %v1155
        %v1160 = vadd.f32 %v1145, %v1158
        %v1161 = vadd.f32 %v1146, %v1159
        %v1163 = vlaneseq
        %v1164 = vshrl.u32 %v1163, 7
        %v1165 = vsub.s32 0, %v1164
        %v1166 = vrot.slane %v1114, %v1165
        %v1167 = vlaneseq
        %v1168 = vshrl.u32 %v1167, 7
        %v1169 = vsub.s32 1, %v1168
        %v1170 = vrot.slane %v1114, %v1169
        %v1173 = vmul.f32 %v667, %v1166
        %v1174 = vmul.f32 %v667, %v1170
        %v1175 = vadd.f32 %v1160, %v1173
        %v1176 = vadd.f32 %v1161, %v1174
        %v1178 = vlaneseq
        %v1179 = vshrl.u32 %v1178, 7
        %v1180 = vsub.s32 0, %v1179
        %v1181 = vrot.slane %v1116, %v1180
        %v1182 = vlaneseq
        %v1183 = vshrl.u32 %v1182, 7
        %v1184 = vsub.s32 1, %v1183
        %v1185 = vrot.slane %v1116, %v1184
        %v1188 = vmul.f32 %v686, %v1181
        %v1189 = vmul.f32 %v686, %v1185
        %v1190 = vadd.f32 %v1175, %v1188
        %v1191 = vadd.f32 %v1176, %v1189
        %v1192 = vmax.f32 %v1190, 0.0
        %v1193 = vmax.f32 %v1191, 0.0
        %s1194 = scalar_lea.vmem %s505, 16
        %v1195 = vld [vmem:[%s1194] sm:$0xff]
        %v1196 = vunpack.c.l.bf16 %v1195
        %v1197 = vunpack.c.h.bf16 %v1195
        %1198 = vmatprep.subr.mxu0 %v1193
        %1199 = vmatpush1.msra.mxu0 %v1192
        %1200 = vmatprep.subr.mxu0 0.0
        %1201 = vmatpush1.msra.mxu0 0.0
        %1202 = vmatprep.subr.mxu0 0.0
        %1203 = vmatpush1.msra.mxu0 0.0
        %1204 = vmatprep.subr.mxu0 0.0
        %1205 = vmatpush1.msra.mxu0 0.0
        %1206 = vmatprep.subr.mxu0 0.0
        %1207 = vmatpush1.msra.mxu0 0.0
        %1208 = vmatprep.subr.mxu0 0.0
        %1209 = vmatpush1.msra.mxu0 0.0
        %1210 = vmatprep.subr.mxu0 0.0
        %1211 = vmatpush1.msra.mxu0 0.0
        %1212 = vmatprep.subr.mxu0 0.0
        %1213 = vmatpush1.msra.mxu0 0.0
        %1214 = vmatprep.subr.mxu0 0.0
        %1215 = vmatpush1.msra.mxu0 0.0
        %1216 = vmatprep.subr.mxu0 0.0
        %1217 = vmatpush1.msra.mxu0 0.0
        %1218 = vmatprep.subr.mxu0 0.0
        %1219 = vmatpush1.msra.mxu0 0.0
        %1220 = vmatprep.subr.mxu0 0.0
        %1221 = vmatpush1.msra.mxu0 0.0
        %1222 = vmatprep.subr.mxu0 0.0
        %1223 = vmatpush1.msra.mxu0 0.0
        %1224 = vmatprep.subr.mxu0 0.0
        %1225 = vmatpush1.msra.mxu0 0.0
        %1226 = vmatprep.subr.mxu0 0.0
        %1227 = vmatpush1.msra.mxu0 0.0
        %1228 = vmatprep.subr.mxu0 0.0
        %1229 = vmatpush1.msra.mxu0 0.0
        %1230 = vmatprep.subr.mxu0 0.0
        %1231 = vmatpush1.msra.mxu0 0.0
        %1232 = vmatprep.subr.mxu0 0.0
        %1233 = vmatpush1.msra.mxu0 0.0
        %1234 = vmatprep.subr.mxu0 0.0
        %1235 = vmatpush1.msra.mxu0 0.0
        %1236 = vmatprep.subr.mxu0 0.0
        %1237 = vmatpush1.msra.mxu0 0.0
        %1238 = vmatprep.subr.mxu0 0.0
        %1239 = vmatpush1.msra.mxu0 0.0
        %1240 = vmatprep.subr.mxu0 0.0
        %1241 = vmatpush1.msra.mxu0 0.0
        %1242 = vmatprep.subr.mxu0 0.0
        %1243 = vmatpush1.msra.mxu0 0.0
        %1244 = vmatprep.subr.mxu0 0.0
        %1245 = vmatpush1.msra.mxu0 0.0
        %1246 = vmatprep.subr.mxu0 0.0
        %1247 = vmatpush1.msra.mxu0 0.0
        %1248 = vmatprep.subr.mxu0 0.0
        %1249 = vmatpush1.msra.mxu0 0.0
        %1250 = vmatprep.subr.mxu0 0.0
        %1251 = vmatpush1.msra.mxu0 0.0
        %1252 = vmatprep.subr.mxu0 0.0
        %1253 = vmatpush1.msra.mxu0 0.0
        %1254 = vmatprep.subr.mxu0 0.0
        %1255 = vmatpush1.msra.mxu0 0.0
        %1256 = vmatprep.subr.mxu0 0.0
        %1257 = vmatpush1.msra.mxu0 0.0
        %1258 = vmatprep.subr.mxu0 0.0
        %1259 = vmatpush1.msra.mxu0 0.0
        %1260 = vmatprep.subr.mxu0 0.0
        %1261 = vmatpush1.msra.mxu0 0.0
        %1262 = vmatprep.mubr.f32.mxu0 0.0
        %1263 = vmatmul.mubr.f32.gmra.mrb[0].mxu0 %v712
        %v1264 = vpop.f32.mrb[0].mxu0
        %v1265 = vadd.f32 0.0, %v1264
        %v1266 = vpop.f32.mrb[0].mxu0
        %v1267 = vadd.f32 0.0, %v1266
        %1268 = vdwg.mxu0
        %1269 = vmatprep.subr.mxu0 %v1197
        %1270 = vmatpush1.msra.mxu0 %v1196
        %1271 = vmatprep.subr.mxu0 0.0
        %1272 = vmatpush1.msra.mxu0 0.0
        %1273 = vmatprep.subr.mxu0 0.0
        %1274 = vmatpush1.msra.mxu0 0.0
        %1275 = vmatprep.subr.mxu0 0.0
        %1276 = vmatpush1.msra.mxu0 0.0
        %1277 = vmatprep.subr.mxu0 0.0
        %1278 = vmatpush1.msra.mxu0 0.0
        %1279 = vmatprep.subr.mxu0 0.0
        %1280 = vmatpush1.msra.mxu0 0.0
        %1281 = vmatprep.subr.mxu0 0.0
        %1282 = vmatpush1.msra.mxu0 0.0
        %1283 = vmatprep.subr.mxu0 0.0
        %1284 = vmatpush1.msra.mxu0 0.0
        %1285 = vmatprep.subr.mxu0 0.0
        %1286 = vmatpush1.msra.mxu0 0.0
        %1287 = vmatprep.subr.mxu0 0.0
        %1288 = vmatpush1.msra.mxu0 0.0
        %1289 = vmatprep.subr.mxu0 0.0
        %1290 = vmatpush1.msra.mxu0 0.0
        %1291 = vmatprep.subr.mxu0 0.0
        %1292 = vmatpush1.msra.mxu0 0.0
        %1293 = vmatprep.subr.mxu0 0.0
        %1294 = vmatpush1.msra.mxu0 0.0
        %1295 = vmatprep.subr.mxu0 0.0
        %1296 = vmatpush1.msra.mxu0 0.0
        %1297 = vmatprep.subr.mxu0 0.0
        %1298 = vmatpush1.msra.mxu0 0.0
        %1299 = vmatprep.subr.mxu0 0.0
        %1300 = vmatpush1.msra.mxu0 0.0
        %1301 = vmatprep.subr.mxu0 0.0
        %1302 = vmatpush1.msra.mxu0 0.0
        %1303 = vmatprep.subr.mxu0 0.0
        %1304 = vmatpush1.msra.mxu0 0.0
        %1305 = vmatprep.subr.mxu0 0.0
        %1306 = vmatpush1.msra.mxu0 0.0
        %1307 = vmatprep.subr.mxu0 0.0
        %1308 = vmatpush1.msra.mxu0 0.0
        %1309 = vmatprep.subr.mxu0 0.0
        %1310 = vmatpush1.msra.mxu0 0.0
        %1311 = vmatprep.subr.mxu0 0.0
        %1312 = vmatpush1.msra.mxu0 0.0
        %1313 = vmatprep.subr.mxu0 0.0
        %1314 = vmatpush1.msra.mxu0 0.0
        %1315 = vmatprep.subr.mxu0 0.0
        %1316 = vmatpush1.msra.mxu0 0.0
        %1317 = vmatprep.subr.mxu0 0.0
        %1318 = vmatpush1.msra.mxu0 0.0
        %1319 = vmatprep.subr.mxu0 0.0
        %1320 = vmatpush1.msra.mxu0 0.0
        %1321 = vmatprep.subr.mxu0 0.0
        %1322 = vmatpush1.msra.mxu0 0.0
        %1323 = vmatprep.subr.mxu0 0.0
        %1324 = vmatpush1.msra.mxu0 0.0
        %1325 = vmatprep.subr.mxu0 0.0
        %1326 = vmatpush1.msra.mxu0 0.0
        %1327 = vmatprep.subr.mxu0 0.0
        %1328 = vmatpush1.msra.mxu0 0.0
        %1329 = vmatprep.subr.mxu0 0.0
        %1330 = vmatpush1.msra.mxu0 0.0
        %1331 = vmatprep.subr.mxu0 0.0
        %1332 = vmatpush1.msra.mxu0 0.0
        %1333 = vmatprep.mubr.f32.mxu0 0.0
        %1334 = vmatmul.mubr.f32.gmra.mrb[0].mxu0 %v785
        %v1335 = vpop.f32.mrb[0].mxu0
        %v1336 = vadd.f32 %v1265, %v1335
        %v1337 = vpop.f32.mrb[0].mxu0
        %v1338 = vadd.f32 %v1267, %v1337
        %1339 = vdwg.mxu0
        %v1340 = vadd.f32 %v1336, %v860
        %v1341 = vadd.f32 %v1338, %v860
        %v1342 = vmax.f32 %v1340, 0.0
        %v1343 = vmax.f32 %v1341, 0.0
        %s1344 = sld [smem:[#allocation3 + $0x2]]
        %v1345 = vstv %s1344
        %v1346 = vmul.f32 %v1345, %v1342
        %v1347 = vmul.f32 %v1345, %v1343
        %v1348 = vmax.f32 %v1107, %v1342
        %v1349 = vmax.f32 %v1108, %v1343
        %v1350 = vadd.f32 %v1109, %v1346
        %v1351 = vadd.f32 %v1110, %v1347
        %s1352 = scalar_lea.vmem %s495, 20
        %v1353 = vld [vmem:[%s1352] ss:$8 sm:$0x3]
        %s1354 = scalar_lea.vmem %s495, 21
        %v1355 = vld [vmem:[%s1354] ss:$8 sm:$0x3]
        %s1356 = scalar_lea.vmem %s495, 22
        %v1357 = vld [vmem:[%s1356] ss:$8 sm:$0x3]
        %v1358 = vsub.f32 %v537, %v1353
        %v1359 = vsub.f32 %v539, %v1355
        %v1360 = vsub.f32 %v541, %v1357
        %v1361 = vmul.f32 %v1358, %v1358
        %v1362 = vmul.f32 %v1359, %v1359
        %v1363 = vadd.f32 %v1361, %v1362
        %v1364 = vmul.f32 %v1360, %v1360
        %v1365 = vadd.f32 %v1363, %v1364
        %v1366 = vrsqrt.pop %v1365
        %v1367 = vmul.f32 %v1365, %v1366
        %vm1368 = vcmp.eq.f32.partialorder %v1365, inf
        %v1369 = vsel %vm1368, %v1365, %v1367
        %vm1370 = vcmp.eq.f32.partialorder %v1365, 0.0
        %v1371 = vand.u32 %v1365, 2147483648
        %v1372 = vsel %vm1370, %v1371, %v1369
        %v1374 = vlaneseq
        %v1375 = vshrl.u32 %v1374, 7
        %v1376 = vsub.s32 0, %v1375
        %v1377 = vrot.slane %v1372, %v1376
        %v1378 = vlaneseq
        %v1379 = vshrl.u32 %v1378, 7
        %v1380 = vsub.s32 1, %v1379
        %v1381 = vrot.slane %v1372, %v1380
        %v1384 = vmul.f32 %v629, %v1377
        %v1385 = vmul.f32 %v629, %v1381
        %v1386 = vadd.f32 %v604, %v1384
        %v1387 = vadd.f32 %v605, %v1385
        %v1389 = vlaneseq
        %v1390 = vshrl.u32 %v1389, 7
        %v1391 = vsub.s32 0, %v1390
        %v1392 = vrot.slane %v1353, %v1391
        %v1393 = vlaneseq
        %v1394 = vshrl.u32 %v1393, 7
        %v1395 = vsub.s32 1, %v1394
        %v1396 = vrot.slane %v1353, %v1395
        %v1399 = vmul.f32 %v648, %v1392
        %v1400 = vmul.f32 %v648, %v1396
        %v1401 = vadd.f32 %v1386, %v1399
        %v1402 = vadd.f32 %v1387, %v1400
        %v1404 = vlaneseq
        %v1405 = vshrl.u32 %v1404, 7
        %v1406 = vsub.s32 0, %v1405
        %v1407 = vrot.slane %v1355, %v1406
        %v1408 = vlaneseq
        %v1409 = vshrl.u32 %v1408, 7
        %v1410 = vsub.s32 1, %v1409
        %v1411 = vrot.slane %v1355, %v1410
        %v1414 = vmul.f32 %v667, %v1407
        %v1415 = vmul.f32 %v667, %v1411
        %v1416 = vadd.f32 %v1401, %v1414
        %v1417 = vadd.f32 %v1402, %v1415
        %v1419 = vlaneseq
        %v1420 = vshrl.u32 %v1419, 7
        %v1421 = vsub.s32 0, %v1420
        %v1422 = vrot.slane %v1357, %v1421
        %v1423 = vlaneseq
        %v1424 = vshrl.u32 %v1423, 7
        %v1425 = vsub.s32 1, %v1424
        %v1426 = vrot.slane %v1357, %v1425
        %v1429 = vmul.f32 %v686, %v1422
        %v1430 = vmul.f32 %v686, %v1426
        %v1431 = vadd.f32 %v1416, %v1429
        %v1432 = vadd.f32 %v1417, %v1430
        %v1433 = vmax.f32 %v1431, 0.0
        %v1434 = vmax.f32 %v1432, 0.0
        %s1435 = scalar_lea.vmem %s505, 24
        %v1436 = vld [vmem:[%s1435] sm:$0xff]
        %v1437 = vunpack.c.l.bf16 %v1436
        %v1438 = vunpack.c.h.bf16 %v1436
        %1439 = vmatprep.subr.mxu0 %v1434
        %1440 = vmatpush1.msra.mxu0 %v1433
        %1441 = vmatprep.subr.mxu0 0.0
        %1442 = vmatpush1.msra.mxu0 0.0
        %1443 = vmatprep.subr.mxu0 0.0
        %1444 = vmatpush1.msra.mxu0 0.0
        %1445 = vmatprep.subr.mxu0 0.0
        %1446 = vmatpush1.msra.mxu0 0.0
        %1447 = vmatprep.subr.mxu0 0.0
        %1448 = vmatpush1.msra.mxu0 0.0
        %1449 = vmatprep.subr.mxu0 0.0
        %1450 = vmatpush1.msra.mxu0 0.0
        %1451 = vmatprep.subr.mxu0 0.0
        %1452 = vmatpush1.msra.mxu0 0.0
        %1453 = vmatprep.subr.mxu0 0.0
        %1454 = vmatpush1.msra.mxu0 0.0
        %1455 = vmatprep.subr.mxu0 0.0
        %1456 = vmatpush1.msra.mxu0 0.0
        %1457 = vmatprep.subr.mxu0 0.0
        %1458 = vmatpush1.msra.mxu0 0.0
        %1459 = vmatprep.subr.mxu0 0.0
        %1460 = vmatpush1.msra.mxu0 0.0
        %1461 = vmatprep.subr.mxu0 0.0
        %1462 = vmatpush1.msra.mxu0 0.0
        %1463 = vmatprep.subr.mxu0 0.0
        %1464 = vmatpush1.msra.mxu0 0.0
        %1465 = vmatprep.subr.mxu0 0.0
        %1466 = vmatpush1.msra.mxu0 0.0
        %1467 = vmatprep.subr.mxu0 0.0
        %1468 = vmatpush1.msra.mxu0 0.0
        %1469 = vmatprep.subr.mxu0 0.0
        %1470 = vmatpush1.msra.mxu0 0.0
        %1471 = vmatprep.subr.mxu0 0.0
        %1472 = vmatpush1.msra.mxu0 0.0
        %1473 = vmatprep.subr.mxu0 0.0
        %1474 = vmatpush1.msra.mxu0 0.0
        %1475 = vmatprep.subr.mxu0 0.0
        %1476 = vmatpush1.msra.mxu0 0.0
        %1477 = vmatprep.subr.mxu0 0.0
        %1478 = vmatpush1.msra.mxu0 0.0
        %1479 = vmatprep.subr.mxu0 0.0
        %1480 = vmatpush1.msra.mxu0 0.0
        %1481 = vmatprep.subr.mxu0 0.0
        %1482 = vmatpush1.msra.mxu0 0.0
        %1483 = vmatprep.subr.mxu0 0.0
        %1484 = vmatpush1.msra.mxu0 0.0
        %1485 = vmatprep.subr.mxu0 0.0
        %1486 = vmatpush1.msra.mxu0 0.0
        %1487 = vmatprep.subr.mxu0 0.0
        %1488 = vmatpush1.msra.mxu0 0.0
        %1489 = vmatprep.subr.mxu0 0.0
        %1490 = vmatpush1.msra.mxu0 0.0
        %1491 = vmatprep.subr.mxu0 0.0
        %1492 = vmatpush1.msra.mxu0 0.0
        %1493 = vmatprep.subr.mxu0 0.0
        %1494 = vmatpush1.msra.mxu0 0.0
        %1495 = vmatprep.subr.mxu0 0.0
        %1496 = vmatpush1.msra.mxu0 0.0
        %1497 = vmatprep.subr.mxu0 0.0
        %1498 = vmatpush1.msra.mxu0 0.0
        %1499 = vmatprep.subr.mxu0 0.0
        %1500 = vmatpush1.msra.mxu0 0.0
        %1501 = vmatprep.subr.mxu0 0.0
        %1502 = vmatpush1.msra.mxu0 0.0
        %1503 = vmatprep.mubr.f32.mxu0 0.0
        %1504 = vmatmul.mubr.f32.gmra.mrb[0].mxu0 %v712
        %v1505 = vpop.f32.mrb[0].mxu0
        %v1506 = vadd.f32 0.0, %v1505
        %v1507 = vpop.f32.mrb[0].mxu0
        %v1508 = vadd.f32 0.0, %v1507
        %1509 = vdwg.mxu0
        %1510 = vmatprep.subr.mxu0 %v1438
        %1511 = vmatpush1.msra.mxu0 %v1437
        %1512 = vmatprep.subr.mxu0 0.0
        %1513 = vmatpush1.msra.mxu0 0.0
        %1514 = vmatprep.subr.mxu0 0.0
        %1515 = vmatpush1.msra.mxu0 0.0
        %1516 = vmatprep.subr.mxu0 0.0
        %1517 = vmatpush1.msra.mxu0 0.0
        %1518 = vmatprep.subr.mxu0 0.0
        %1519 = vmatpush1.msra.mxu0 0.0
        %1520 = vmatprep.subr.mxu0 0.0
        %1521 = vmatpush1.msra.mxu0 0.0
        %1522 = vmatprep.subr.mxu0 0.0
        %1523 = vmatpush1.msra.mxu0 0.0
        %1524 = vmatprep.subr.mxu0 0.0
        %1525 = vmatpush1.msra.mxu0 0.0
        %1526 = vmatprep.subr.mxu0 0.0
        %1527 = vmatpush1.msra.mxu0 0.0
        %1528 = vmatprep.subr.mxu0 0.0
        %1529 = vmatpush1.msra.mxu0 0.0
        %1530 = vmatprep.subr.mxu0 0.0
        %1531 = vmatpush1.msra.mxu0 0.0
        %1532 = vmatprep.subr.mxu0 0.0
        %1533 = vmatpush1.msra.mxu0 0.0
        %1534 = vmatprep.subr.mxu0 0.0
        %1535 = vmatpush1.msra.mxu0 0.0
        %1536 = vmatprep.subr.mxu0 0.0
        %1537 = vmatpush1.msra.mxu0 0.0
        %1538 = vmatprep.subr.mxu0 0.0
        %1539 = vmatpush1.msra.mxu0 0.0
        %1540 = vmatprep.subr.mxu0 0.0
        %1541 = vmatpush1.msra.mxu0 0.0
        %1542 = vmatprep.subr.mxu0 0.0
        %1543 = vmatpush1.msra.mxu0 0.0
        %1544 = vmatprep.subr.mxu0 0.0
        %1545 = vmatpush1.msra.mxu0 0.0
        %1546 = vmatprep.subr.mxu0 0.0
        %1547 = vmatpush1.msra.mxu0 0.0
        %1548 = vmatprep.subr.mxu0 0.0
        %1549 = vmatpush1.msra.mxu0 0.0
        %1550 = vmatprep.subr.mxu0 0.0
        %1551 = vmatpush1.msra.mxu0 0.0
        %1552 = vmatprep.subr.mxu0 0.0
        %1553 = vmatpush1.msra.mxu0 0.0
        %1554 = vmatprep.subr.mxu0 0.0
        %1555 = vmatpush1.msra.mxu0 0.0
        %1556 = vmatprep.subr.mxu0 0.0
        %1557 = vmatpush1.msra.mxu0 0.0
        %1558 = vmatprep.subr.mxu0 0.0
        %1559 = vmatpush1.msra.mxu0 0.0
        %1560 = vmatprep.subr.mxu0 0.0
        %1561 = vmatpush1.msra.mxu0 0.0
        %1562 = vmatprep.subr.mxu0 0.0
        %1563 = vmatpush1.msra.mxu0 0.0
        %1564 = vmatprep.subr.mxu0 0.0
        %1565 = vmatpush1.msra.mxu0 0.0
        %1566 = vmatprep.subr.mxu0 0.0
        %1567 = vmatpush1.msra.mxu0 0.0
        %1568 = vmatprep.subr.mxu0 0.0
        %1569 = vmatpush1.msra.mxu0 0.0
        %1570 = vmatprep.subr.mxu0 0.0
        %1571 = vmatpush1.msra.mxu0 0.0
        %1572 = vmatprep.subr.mxu0 0.0
        %1573 = vmatpush1.msra.mxu0 0.0
        %1574 = vmatprep.mubr.f32.mxu0 0.0
        %1575 = vmatmul.mubr.f32.gmra.mrb[0].mxu0 %v785
        %v1576 = vpop.f32.mrb[0].mxu0
        %v1577 = vadd.f32 %v1506, %v1576
        %v1578 = vpop.f32.mrb[0].mxu0
        %v1579 = vadd.f32 %v1508, %v1578
        %1580 = vdwg.mxu0
        %v1581 = vadd.f32 %v1577, %v860
        %v1582 = vadd.f32 %v1579, %v860
        %v1583 = vmax.f32 %v1581, 0.0
        %v1584 = vmax.f32 %v1582, 0.0
        %s1585 = sld [smem:[#allocation3 + $0x3]]
        %v1586 = vstv %s1585
        %v1587 = vmul.f32 %v1586, %v1583
        %v1588 = vmul.f32 %v1586, %v1584
        %v1589 = vmax.f32 %v1348, %v1583
        %v1590 = vmax.f32 %v1349, %v1584
        %v1591 = vadd.f32 %v1350, %v1587
        %v1592 = vadd.f32 %v1351, %v1588
        %s1593 = scalar_lea.vmem %s495, 23
        %v1594 = vld [vmem:[%s1593] ss:$8 sm:$0x3]
        %s1595 = scalar_lea.vmem %s495, 32
        %v1596 = vld [vmem:[%s1595] ss:$8 sm:$0x3]
        %s1597 = scalar_lea.vmem %s495, 33
        %v1598 = vld [vmem:[%s1597] ss:$8 sm:$0x3]
        %v1599 = vsub.f32 %v537, %v1594
        %v1600 = vsub.f32 %v539, %v1596
        %v1601 = vsub.f32 %v541, %v1598
        %v1602 = vmul.f32 %v1599, %v1599
        %v1603 = vmul.f32 %v1600, %v1600
        %v1604 = vadd.f32 %v1602, %v1603
        %v1605 = vmul.f32 %v1601, %v1601
        %v1606 = vadd.f32 %v1604, %v1605
        %v1607 = vrsqrt.pop %v1606
        %v1608 = vmul.f32 %v1606, %v1607
        %vm1609 = vcmp.eq.f32.partialorder %v1606, inf
        %v1610 = vsel %vm1609, %v1606, %v1608
        %vm1611 = vcmp.eq.f32.partialorder %v1606, 0.0
        %v1612 = vand.u32 %v1606, 2147483648
        %v1613 = vsel %vm1611, %v1612, %v1610
        %v1615 = vlaneseq
        %v1616 = vshrl.u32 %v1615, 7
        %v1617 = vsub.s32 0, %v1616
        %v1618 = vrot.slane %v1613, %v1617
        %v1619 = vlaneseq
        %v1620 = vshrl.u32 %v1619, 7
        %v1621 = vsub.s32 1, %v1620
        %v1622 = vrot.slane %v1613, %v1621
        %v1625 = vmul.f32 %v629, %v1618
        %v1626 = vmul.f32 %v629, %v1622
        %v1627 = vadd.f32 %v604, %v1625
        %v1628 = vadd.f32 %v605, %v1626
        %v1630 = vlaneseq
        %v1631 = vshrl.u32 %v1630, 7
        %v1632 = vsub.s32 0, %v1631
        %v1633 = vrot.slane %v1594, %v1632
        %v1634 = vlaneseq
        %v1635 = vshrl.u32 %v1634, 7
        %v1636 = vsub.s32 1, %v1635
        %v1637 = vrot.slane %v1594, %v1636
        %v1640 = vmul.f32 %v648, %v1633
        %v1641 = vmul.f32 %v648, %v1637
        %v1642 = vadd.f32 %v1627, %v1640
        %v1643 = vadd.f32 %v1628, %v1641
        %v1645 = vlaneseq
        %v1646 = vshrl.u32 %v1645, 7
        %v1647 = vsub.s32 0, %v1646
        %v1648 = vrot.slane %v1596, %v1647
        %v1649 = vlaneseq
        %v1650 = vshrl.u32 %v1649, 7
        %v1651 = vsub.s32 1, %v1650
        %v1652 = vrot.slane %v1596, %v1651
        %v1655 = vmul.f32 %v667, %v1648
        %v1656 = vmul.f32 %v667, %v1652
        %v1657 = vadd.f32 %v1642, %v1655
        %v1658 = vadd.f32 %v1643, %v1656
        %v1660 = vlaneseq
        %v1661 = vshrl.u32 %v1660, 7
        %v1662 = vsub.s32 0, %v1661
        %v1663 = vrot.slane %v1598, %v1662
        %v1664 = vlaneseq
        %v1665 = vshrl.u32 %v1664, 7
        %v1666 = vsub.s32 1, %v1665
        %v1667 = vrot.slane %v1598, %v1666
        %v1670 = vmul.f32 %v686, %v1663
        %v1671 = vmul.f32 %v686, %v1667
        %v1672 = vadd.f32 %v1657, %v1670
        %v1673 = vadd.f32 %v1658, %v1671
        %v1674 = vmax.f32 %v1672, 0.0
        %v1675 = vmax.f32 %v1673, 0.0
        %s1676 = scalar_lea.vmem %s505, 32
        %v1677 = vld [vmem:[%s1676] sm:$0xff]
        %v1678 = vunpack.c.l.bf16 %v1677
        %v1679 = vunpack.c.h.bf16 %v1677
        %1680 = vmatprep.subr.mxu0 %v1675
        %1681 = vmatpush1.msra.mxu0 %v1674
        %1682 = vmatprep.subr.mxu0 0.0
        %1683 = vmatpush1.msra.mxu0 0.0
        %1684 = vmatprep.subr.mxu0 0.0
        %1685 = vmatpush1.msra.mxu0 0.0
        %1686 = vmatprep.subr.mxu0 0.0
        %1687 = vmatpush1.msra.mxu0 0.0
        %1688 = vmatprep.subr.mxu0 0.0
        %1689 = vmatpush1.msra.mxu0 0.0
        %1690 = vmatprep.subr.mxu0 0.0
        %1691 = vmatpush1.msra.mxu0 0.0
        %1692 = vmatprep.subr.mxu0 0.0
        %1693 = vmatpush1.msra.mxu0 0.0
        %1694 = vmatprep.subr.mxu0 0.0
        %1695 = vmatpush1.msra.mxu0 0.0
        %1696 = vmatprep.subr.mxu0 0.0
        %1697 = vmatpush1.msra.mxu0 0.0
        %1698 = vmatprep.subr.mxu0 0.0
        %1699 = vmatpush1.msra.mxu0 0.0
        %1700 = vmatprep.subr.mxu0 0.0
        %1701 = vmatpush1.msra.mxu0 0.0
        %1702 = vmatprep.subr.mxu0 0.0
        %1703 = vmatpush1.msra.mxu0 0.0
        %1704 = vmatprep.subr.mxu0 0.0
        %1705 = vmatpush1.msra.mxu0 0.0
        %1706 = vmatprep.subr.mxu0 0.0
        %1707 = vmatpush1.msra.mxu0 0.0
        %1708 = vmatprep.subr.mxu0 0.0
        %1709 = vmatpush1.msra.mxu0 0.0
        %1710 = vmatprep.subr.mxu0 0.0
        %1711 = vmatpush1.msra.mxu0 0.0
        %1712 = vmatprep.subr.mxu0 0.0
        %1713 = vmatpush1.msra.mxu0 0.0
        %1714 = vmatprep.subr.mxu0 0.0
        %1715 = vmatpush1.msra.mxu0 0.0
        %1716 = vmatprep.subr.mxu0 0.0
        %1717 = vmatpush1.msra.mxu0 0.0
        %1718 = vmatprep.subr.mxu0 0.0
        %1719 = vmatpush1.msra.mxu0 0.0
        %1720 = vmatprep.subr.mxu0 0.0
        %1721 = vmatpush1.msra.mxu0 0.0
        %1722 = vmatprep.subr.mxu0 0.0
        %1723 = vmatpush1.msra.mxu0 0.0
        %1724 = vmatprep.subr.mxu0 0.0
        %1725 = vmatpush1.msra.mxu0 0.0
        %1726 = vmatprep.subr.mxu0 0.0
        %1727 = vmatpush1.msra.mxu0 0.0
        %1728 = vmatprep.subr.mxu0 0.0
        %1729 = vmatpush1.msra.mxu0 0.0
        %1730 = vmatprep.subr.mxu0 0.0
        %1731 = vmatpush1.msra.mxu0 0.0
        %1732 = vmatprep.subr.mxu0 0.0
        %1733 = vmatpush1.msra.mxu0 0.0
        %1734 = vmatprep.subr.mxu0 0.0
        %1735 = vmatpush1.msra.mxu0 0.0
        %1736 = vmatprep.subr.mxu0 0.0
        %1737 = vmatpush1.msra.mxu0 0.0
        %1738 = vmatprep.subr.mxu0 0.0
        %1739 = vmatpush1.msra.mxu0 0.0
        %1740 = vmatprep.subr.mxu0 0.0
        %1741 = vmatpush1.msra.mxu0 0.0
        %1742 = vmatprep.subr.mxu0 0.0
        %1743 = vmatpush1.msra.mxu0 0.0
        %1744 = vmatprep.mubr.f32.mxu0 0.0
        %1745 = vmatmul.mubr.f32.gmra.mrb[0].mxu0 %v712
        %v1746 = vpop.f32.mrb[0].mxu0
        %v1747 = vadd.f32 0.0, %v1746
        %v1748 = vpop.f32.mrb[0].mxu0
        %v1749 = vadd.f32 0.0, %v1748
        %1750 = vdwg.mxu0
        %1751 = vmatprep.subr.mxu0 %v1679
        %1752 = vmatpush1.msra.mxu0 %v1678
        %1753 = vmatprep.subr.mxu0 0.0
        %1754 = vmatpush1.msra.mxu0 0.0
        %1755 = vmatprep.subr.mxu0 0.0
        %1756 = vmatpush1.msra.mxu0 0.0
        %1757 = vmatprep.subr.mxu0 0.0
        %1758 = vmatpush1.msra.mxu0 0.0
        %1759 = vmatprep.subr.mxu0 0.0
        %1760 = vmatpush1.msra.mxu0 0.0
        %1761 = vmatprep.subr.mxu0 0.0
        %1762 = vmatpush1.msra.mxu0 0.0
        %1763 = vmatprep.subr.mxu0 0.0
        %1764 = vmatpush1.msra.mxu0 0.0
        %1765 = vmatprep.subr.mxu0 0.0
        %1766 = vmatpush1.msra.mxu0 0.0
        %1767 = vmatprep.subr.mxu0 0.0
        %1768 = vmatpush1.msra.mxu0 0.0
        %1769 = vmatprep.subr.mxu0 0.0
        %1770 = vmatpush1.msra.mxu0 0.0
        %1771 = vmatprep.subr.mxu0 0.0
        %1772 = vmatpush1.msra.mxu0 0.0
        %1773 = vmatprep.subr.mxu0 0.0
        %1774 = vmatpush1.msra.mxu0 0.0
        %1775 = vmatprep.subr.mxu0 0.0
        %1776 = vmatpush1.msra.mxu0 0.0
        %1777 = vmatprep.subr.mxu0 0.0
        %1778 = vmatpush1.msra.mxu0 0.0
        %1779 = vmatprep.subr.mxu0 0.0
        %1780 = vmatpush1.msra.mxu0 0.0
        %1781 = vmatprep.subr.mxu0 0.0
        %1782 = vmatpush1.msra.mxu0 0.0
        %1783 = vmatprep.subr.mxu0 0.0
        %1784 = vmatpush1.msra.mxu0 0.0
        %1785 = vmatprep.subr.mxu0 0.0
        %1786 = vmatpush1.msra.mxu0 0.0
        %1787 = vmatprep.subr.mxu0 0.0
        %1788 = vmatpush1.msra.mxu0 0.0
        %1789 = vmatprep.subr.mxu0 0.0
        %1790 = vmatpush1.msra.mxu0 0.0
        %1791 = vmatprep.subr.mxu0 0.0
        %1792 = vmatpush1.msra.mxu0 0.0
        %1793 = vmatprep.subr.mxu0 0.0
        %1794 = vmatpush1.msra.mxu0 0.0
        %1795 = vmatprep.subr.mxu0 0.0
        %1796 = vmatpush1.msra.mxu0 0.0
        %1797 = vmatprep.subr.mxu0 0.0
        %1798 = vmatpush1.msra.mxu0 0.0
        %1799 = vmatprep.subr.mxu0 0.0
        %1800 = vmatpush1.msra.mxu0 0.0
        %1801 = vmatprep.subr.mxu0 0.0
        %1802 = vmatpush1.msra.mxu0 0.0
        %1803 = vmatprep.subr.mxu0 0.0
        %1804 = vmatpush1.msra.mxu0 0.0
        %1805 = vmatprep.subr.mxu0 0.0
        %1806 = vmatpush1.msra.mxu0 0.0
        %1807 = vmatprep.subr.mxu0 0.0
        %1808 = vmatpush1.msra.mxu0 0.0
        %1809 = vmatprep.subr.mxu0 0.0
        %1810 = vmatpush1.msra.mxu0 0.0
        %1811 = vmatprep.subr.mxu0 0.0
        %1812 = vmatpush1.msra.mxu0 0.0
        %1813 = vmatprep.subr.mxu0 0.0
        %1814 = vmatpush1.msra.mxu0 0.0
        %1815 = vmatprep.mubr.f32.mxu0 0.0
        %1816 = vmatmul.mubr.f32.gmra.mrb[0].mxu0 %v785
        %v1817 = vpop.f32.mrb[0].mxu0
        %v1818 = vadd.f32 %v1747, %v1817
        %v1819 = vpop.f32.mrb[0].mxu0
        %v1820 = vadd.f32 %v1749, %v1819
        %1821 = vdwg.mxu0
        %v1822 = vadd.f32 %v1818, %v860
        %v1823 = vadd.f32 %v1820, %v860
        %v1824 = vmax.f32 %v1822, 0.0
        %v1825 = vmax.f32 %v1823, 0.0
        %s1826 = sld [smem:[#allocation3 + $0x4]]
        %v1827 = vstv %s1826
        %v1828 = vmul.f32 %v1827, %v1824
        %v1829 = vmul.f32 %v1827, %v1825
        %v1830 = vmax.f32 %v1589, %v1824
        %v1831 = vmax.f32 %v1590, %v1825
        %v1832 = vadd.f32 %v1591, %v1828
        %v1833 = vadd.f32 %v1592, %v1829
        %s1834 = scalar_lea.vmem %s495, 34
        %v1835 = vld [vmem:[%s1834] ss:$8 sm:$0x3]
        %s1836 = scalar_lea.vmem %s495, 35
        %v1837 = vld [vmem:[%s1836] ss:$8 sm:$0x3]
        %s1838 = scalar_lea.vmem %s495, 36
        %v1839 = vld [vmem:[%s1838] ss:$8 sm:$0x3]
        %v1840 = vsub.f32 %v537, %v1835
        %v1841 = vsub.f32 %v539, %v1837
        %v1842 = vsub.f32 %v541, %v1839
        %v1843 = vmul.f32 %v1840, %v1840
        %v1844 = vmul.f32 %v1841, %v1841
        %v1845 = vadd.f32 %v1843, %v1844
        %v1846 = vmul.f32 %v1842, %v1842
        %v1847 = vadd.f32 %v1845, %v1846
        %v1848 = vrsqrt.pop %v1847
        %v1849 = vmul.f32 %v1847, %v1848
        %vm1850 = vcmp.eq.f32.partialorder %v1847, inf
        %v1851 = vsel %vm1850, %v1847, %v1849
        %vm1852 = vcmp.eq.f32.partialorder %v1847, 0.0
        %v1853 = vand.u32 %v1847, 2147483648
        %v1854 = vsel %vm1852, %v1853, %v1851
        %v1856 = vlaneseq
        %v1857 = vshrl.u32 %v1856, 7
        %v1858 = vsub.s32 0, %v1857
        %v1859 = vrot.slane %v1854, %v1858
        %v1860 = vlaneseq
        %v1861 = vshrl.u32 %v1860, 7
        %v1862 = vsub.s32 1, %v1861
        %v1863 = vrot.slane %v1854, %v1862
        %v1866 = vmul.f32 %v629, %v1859
        %v1867 = vmul.f32 %v629, %v1863
        %v1868 = vadd.f32 %v604, %v1866
        %v1869 = vadd.f32 %v605, %v1867
        %v1871 = vlaneseq
        %v1872 = vshrl.u32 %v1871, 7
        %v1873 = vsub.s32 0, %v1872
        %v1874 = vrot.slane %v1835, %v1873
        %v1875 = vlaneseq
        %v1876 = vshrl.u32 %v1875, 7
        %v1877 = vsub.s32 1, %v1876
        %v1878 = vrot.slane %v1835, %v1877
        %v1881 = vmul.f32 %v648, %v1874
        %v1882 = vmul.f32 %v648, %v1878
        %v1883 = vadd.f32 %v1868, %v1881
        %v1884 = vadd.f32 %v1869, %v1882
        %v1886 = vlaneseq
        %v1887 = vshrl.u32 %v1886, 7
        %v1888 = vsub.s32 0, %v1887
        %v1889 = vrot.slane %v1837, %v1888
        %v1890 = vlaneseq
        %v1891 = vshrl.u32 %v1890, 7
        %v1892 = vsub.s32 1, %v1891
        %v1893 = vrot.slane %v1837, %v1892
        %v1896 = vmul.f32 %v667, %v1889
        %v1897 = vmul.f32 %v667, %v1893
        %v1898 = vadd.f32 %v1883, %v1896
        %v1899 = vadd.f32 %v1884, %v1897
        %v1901 = vlaneseq
        %v1902 = vshrl.u32 %v1901, 7
        %v1903 = vsub.s32 0, %v1902
        %v1904 = vrot.slane %v1839, %v1903
        %v1905 = vlaneseq
        %v1906 = vshrl.u32 %v1905, 7
        %v1907 = vsub.s32 1, %v1906
        %v1908 = vrot.slane %v1839, %v1907
        %v1911 = vmul.f32 %v686, %v1904
        %v1912 = vmul.f32 %v686, %v1908
        %v1913 = vadd.f32 %v1898, %v1911
        %v1914 = vadd.f32 %v1899, %v1912
        %v1915 = vmax.f32 %v1913, 0.0
        %v1916 = vmax.f32 %v1914, 0.0
        %s1917 = scalar_lea.vmem %s505, 40
        %v1918 = vld [vmem:[%s1917] sm:$0xff]
        %v1919 = vunpack.c.l.bf16 %v1918
        %v1920 = vunpack.c.h.bf16 %v1918
        %1921 = vmatprep.subr.mxu0 %v1916
        %1922 = vmatpush1.msra.mxu0 %v1915
        %1923 = vmatprep.subr.mxu0 0.0
        %1924 = vmatpush1.msra.mxu0 0.0
        %1925 = vmatprep.subr.mxu0 0.0
        %1926 = vmatpush1.msra.mxu0 0.0
        %1927 = vmatprep.subr.mxu0 0.0
        %1928 = vmatpush1.msra.mxu0 0.0
        %1929 = vmatprep.subr.mxu0 0.0
        %1930 = vmatpush1.msra.mxu0 0.0
        %1931 = vmatprep.subr.mxu0 0.0
        %1932 = vmatpush1.msra.mxu0 0.0
        %1933 = vmatprep.subr.mxu0 0.0
        %1934 = vmatpush1.msra.mxu0 0.0
        %1935 = vmatprep.subr.mxu0 0.0
        %1936 = vmatpush1.msra.mxu0 0.0
        %1937 = vmatprep.subr.mxu0 0.0
        %1938 = vmatpush1.msra.mxu0 0.0
        %1939 = vmatprep.subr.mxu0 0.0
        %1940 = vmatpush1.msra.mxu0 0.0
        %1941 = vmatprep.subr.mxu0 0.0
        %1942 = vmatpush1.msra.mxu0 0.0
        %1943 = vmatprep.subr.mxu0 0.0
        %1944 = vmatpush1.msra.mxu0 0.0
        %1945 = vmatprep.subr.mxu0 0.0
        %1946 = vmatpush1.msra.mxu0 0.0
        %1947 = vmatprep.subr.mxu0 0.0
        %1948 = vmatpush1.msra.mxu0 0.0
        %1949 = vmatprep.subr.mxu0 0.0
        %1950 = vmatpush1.msra.mxu0 0.0
        %1951 = vmatprep.subr.mxu0 0.0
        %1952 = vmatpush1.msra.mxu0 0.0
        %1953 = vmatprep.subr.mxu0 0.0
        %1954 = vmatpush1.msra.mxu0 0.0
        %1955 = vmatprep.subr.mxu0 0.0
        %1956 = vmatpush1.msra.mxu0 0.0
        %1957 = vmatprep.subr.mxu0 0.0
        %1958 = vmatpush1.msra.mxu0 0.0
        %1959 = vmatprep.subr.mxu0 0.0
        %1960 = vmatpush1.msra.mxu0 0.0
        %1961 = vmatprep.subr.mxu0 0.0
        %1962 = vmatpush1.msra.mxu0 0.0
        %1963 = vmatprep.subr.mxu0 0.0
        %1964 = vmatpush1.msra.mxu0 0.0
        %1965 = vmatprep.subr.mxu0 0.0
        %1966 = vmatpush1.msra.mxu0 0.0
        %1967 = vmatprep.subr.mxu0 0.0
        %1968 = vmatpush1.msra.mxu0 0.0
        %1969 = vmatprep.subr.mxu0 0.0
        %1970 = vmatpush1.msra.mxu0 0.0
        %1971 = vmatprep.subr.mxu0 0.0
        %1972 = vmatpush1.msra.mxu0 0.0
        %1973 = vmatprep.subr.mxu0 0.0
        %1974 = vmatpush1.msra.mxu0 0.0
        %1975 = vmatprep.subr.mxu0 0.0
        %1976 = vmatpush1.msra.mxu0 0.0
        %1977 = vmatprep.subr.mxu0 0.0
        %1978 = vmatpush1.msra.mxu0 0.0
        %1979 = vmatprep.subr.mxu0 0.0
        %1980 = vmatpush1.msra.mxu0 0.0
        %1981 = vmatprep.subr.mxu0 0.0
        %1982 = vmatpush1.msra.mxu0 0.0
        %1983 = vmatprep.subr.mxu0 0.0
        %1984 = vmatpush1.msra.mxu0 0.0
        %1985 = vmatprep.mubr.f32.mxu0 0.0
        %1986 = vmatmul.mubr.f32.gmra.mrb[0].mxu0 %v712
        %v1987 = vpop.f32.mrb[0].mxu0
        %v1988 = vadd.f32 0.0, %v1987
        %v1989 = vpop.f32.mrb[0].mxu0
        %v1990 = vadd.f32 0.0, %v1989
        %1991 = vdwg.mxu0
        %1992 = vmatprep.subr.mxu0 %v1920
        %1993 = vmatpush1.msra.mxu0 %v1919
        %1994 = vmatprep.subr.mxu0 0.0
        %1995 = vmatpush1.msra.mxu0 0.0
        %1996 = vmatprep.subr.mxu0 0.0
        %1997 = vmatpush1.msra.mxu0 0.0
        %1998 = vmatprep.subr.mxu0 0.0
        %1999 = vmatpush1.msra.mxu0 0.0
        %2000 = vmatprep.subr.mxu0 0.0
        %2001 = vmatpush1.msra.mxu0 0.0
        %2002 = vmatprep.subr.mxu0 0.0
        %2003 = vmatpush1.msra.mxu0 0.0
        %2004 = vmatprep.subr.mxu0 0.0
        %2005 = vmatpush1.msra.mxu0 0.0
        %2006 = vmatprep.subr.mxu0 0.0
        %2007 = vmatpush1.msra.mxu0 0.0
        %2008 = vmatprep.subr.mxu0 0.0
        %2009 = vmatpush1.msra.mxu0 0.0
        %2010 = vmatprep.subr.mxu0 0.0
        %2011 = vmatpush1.msra.mxu0 0.0
        %2012 = vmatprep.subr.mxu0 0.0
        %2013 = vmatpush1.msra.mxu0 0.0
        %2014 = vmatprep.subr.mxu0 0.0
        %2015 = vmatpush1.msra.mxu0 0.0
        %2016 = vmatprep.subr.mxu0 0.0
        %2017 = vmatpush1.msra.mxu0 0.0
        %2018 = vmatprep.subr.mxu0 0.0
        %2019 = vmatpush1.msra.mxu0 0.0
        %2020 = vmatprep.subr.mxu0 0.0
        %2021 = vmatpush1.msra.mxu0 0.0
        %2022 = vmatprep.subr.mxu0 0.0
        %2023 = vmatpush1.msra.mxu0 0.0
        %2024 = vmatprep.subr.mxu0 0.0
        %2025 = vmatpush1.msra.mxu0 0.0
        %2026 = vmatprep.subr.mxu0 0.0
        %2027 = vmatpush1.msra.mxu0 0.0
        %2028 = vmatprep.subr.mxu0 0.0
        %2029 = vmatpush1.msra.mxu0 0.0
        %2030 = vmatprep.subr.mxu0 0.0
        %2031 = vmatpush1.msra.mxu0 0.0
        %2032 = vmatprep.subr.mxu0 0.0
        %2033 = vmatpush1.msra.mxu0 0.0
        %2034 = vmatprep.subr.mxu0 0.0
        %2035 = vmatpush1.msra.mxu0 0.0
        %2036 = vmatprep.subr.mxu0 0.0
        %2037 = vmatpush1.msra.mxu0 0.0
        %2038 = vmatprep.subr.mxu0 0.0
        %2039 = vmatpush1.msra.mxu0 0.0
        %2040 = vmatprep.subr.mxu0 0.0
        %2041 = vmatpush1.msra.mxu0 0.0
        %2042 = vmatprep.subr.mxu0 0.0
        %2043 = vmatpush1.msra.mxu0 0.0
        %2044 = vmatprep.subr.mxu0 0.0
        %2045 = vmatpush1.msra.mxu0 0.0
        %2046 = vmatprep.subr.mxu0 0.0
        %2047 = vmatpush1.msra.mxu0 0.0
        %2048 = vmatprep.subr.mxu0 0.0
        %2049 = vmatpush1.msra.mxu0 0.0
        %2050 = vmatprep.subr.mxu0 0.0
        %2051 = vmatpush1.msra.mxu0 0.0
        %2052 = vmatprep.subr.mxu0 0.0
        %2053 = vmatpush1.msra.mxu0 0.0
        %2054 = vmatprep.subr.mxu0 0.0
        %2055 = vmatpush1.msra.mxu0 0.0
        %2056 = vmatprep.mubr.f32.mxu0 0.0
        %2057 = vmatmul.mubr.f32.gmra.mrb[0].mxu0 %v785
        %v2058 = vpop.f32.mrb[0].mxu0
        %v2059 = vadd.f32 %v1988, %v2058
        %v2060 = vpop.f32.mrb[0].mxu0
        %v2061 = vadd.f32 %v1990, %v2060
        %2062 = vdwg.mxu0
        %v2063 = vadd.f32 %v2059, %v860
        %v2064 = vadd.f32 %v2061, %v860
        %v2065 = vmax.f32 %v2063, 0.0
        %v2066 = vmax.f32 %v2064, 0.0
        %s2067 = sld [smem:[#allocation3 + $0x5]]
        %v2068 = vstv %s2067
        %v2069 = vmul.f32 %v2068, %v2065
        %v2070 = vmul.f32 %v2068, %v2066
        %v2071 = vmax.f32 %v1830, %v2065
        %v2072 = vmax.f32 %v1831, %v2066
        %v2073 = vadd.f32 %v1832, %v2069
        %v2074 = vadd.f32 %v1833, %v2070
        %s2075 = scalar_lea.vmem %s495, 37
        %v2076 = vld [vmem:[%s2075] ss:$8 sm:$0x3]
        %s2077 = scalar_lea.vmem %s495, 38
        %v2078 = vld [vmem:[%s2077] ss:$8 sm:$0x3]
        %s2079 = scalar_lea.vmem %s495, 39
        %v2080 = vld [vmem:[%s2079] ss:$8 sm:$0x3]
        %v2081 = vsub.f32 %v537, %v2076
        %v2082 = vsub.f32 %v539, %v2078
        %v2083 = vsub.f32 %v541, %v2080
        %v2084 = vmul.f32 %v2081, %v2081
        %v2085 = vmul.f32 %v2082, %v2082
        %v2086 = vadd.f32 %v2084, %v2085
        %v2087 = vmul.f32 %v2083, %v2083
        %v2088 = vadd.f32 %v2086, %v2087
        %v2089 = vrsqrt.pop %v2088
        %v2090 = vmul.f32 %v2088, %v2089
        %vm2091 = vcmp.eq.f32.partialorder %v2088, inf
        %v2092 = vsel %vm2091, %v2088, %v2090
        %vm2093 = vcmp.eq.f32.partialorder %v2088, 0.0
        %v2094 = vand.u32 %v2088, 2147483648
        %v2095 = vsel %vm2093, %v2094, %v2092
        %v2097 = vlaneseq
        %v2098 = vshrl.u32 %v2097, 7
        %v2099 = vsub.s32 0, %v2098
        %v2100 = vrot.slane %v2095, %v2099
        %v2101 = vlaneseq
        %v2102 = vshrl.u32 %v2101, 7
        %v2103 = vsub.s32 1, %v2102
        %v2104 = vrot.slane %v2095, %v2103
        %v2107 = vmul.f32 %v629, %v2100
        %v2108 = vmul.f32 %v629, %v2104
        %v2109 = vadd.f32 %v604, %v2107
        %v2110 = vadd.f32 %v605, %v2108
        %v2112 = vlaneseq
        %v2113 = vshrl.u32 %v2112, 7
        %v2114 = vsub.s32 0, %v2113
        %v2115 = vrot.slane %v2076, %v2114
        %v2116 = vlaneseq
        %v2117 = vshrl.u32 %v2116, 7
        %v2118 = vsub.s32 1, %v2117
        %v2119 = vrot.slane %v2076, %v2118
        %v2122 = vmul.f32 %v648, %v2115
        %v2123 = vmul.f32 %v648, %v2119
        %v2124 = vadd.f32 %v2109, %v2122
        %v2125 = vadd.f32 %v2110, %v2123
        %v2127 = vlaneseq
        %v2128 = vshrl.u32 %v2127, 7
        %v2129 = vsub.s32 0, %v2128
        %v2130 = vrot.slane %v2078, %v2129
        %v2131 = vlaneseq
        %v2132 = vshrl.u32 %v2131, 7
        %v2133 = vsub.s32 1, %v2132
        %v2134 = vrot.slane %v2078, %v2133
        %v2137 = vmul.f32 %v667, %v2130
        %v2138 = vmul.f32 %v667, %v2134
        %v2139 = vadd.f32 %v2124, %v2137
        %v2140 = vadd.f32 %v2125, %v2138
        %v2142 = vlaneseq
        %v2143 = vshrl.u32 %v2142, 7
        %v2144 = vsub.s32 0, %v2143
        %v2145 = vrot.slane %v2080, %v2144
        %v2146 = vlaneseq
        %v2147 = vshrl.u32 %v2146, 7
        %v2148 = vsub.s32 1, %v2147
        %v2149 = vrot.slane %v2080, %v2148
        %v2152 = vmul.f32 %v686, %v2145
        %v2153 = vmul.f32 %v686, %v2149
        %v2154 = vadd.f32 %v2139, %v2152
        %v2155 = vadd.f32 %v2140, %v2153
        %v2156 = vmax.f32 %v2154, 0.0
        %v2157 = vmax.f32 %v2155, 0.0
        %s2158 = scalar_lea.vmem %s505, 48
        %v2159 = vld [vmem:[%s2158] sm:$0xff]
        %v2160 = vunpack.c.l.bf16 %v2159
        %v2161 = vunpack.c.h.bf16 %v2159
        %2162 = vmatprep.subr.mxu0 %v2157
        %2163 = vmatpush1.msra.mxu0 %v2156
        %2164 = vmatprep.subr.mxu0 0.0
        %2165 = vmatpush1.msra.mxu0 0.0
        %2166 = vmatprep.subr.mxu0 0.0
        %2167 = vmatpush1.msra.mxu0 0.0
        %2168 = vmatprep.subr.mxu0 0.0
        %2169 = vmatpush1.msra.mxu0 0.0
        %2170 = vmatprep.subr.mxu0 0.0
        %2171 = vmatpush1.msra.mxu0 0.0
        %2172 = vmatprep.subr.mxu0 0.0
        %2173 = vmatpush1.msra.mxu0 0.0
        %2174 = vmatprep.subr.mxu0 0.0
        %2175 = vmatpush1.msra.mxu0 0.0
        %2176 = vmatprep.subr.mxu0 0.0
        %2177 = vmatpush1.msra.mxu0 0.0
        %2178 = vmatprep.subr.mxu0 0.0
        %2179 = vmatpush1.msra.mxu0 0.0
        %2180 = vmatprep.subr.mxu0 0.0
        %2181 = vmatpush1.msra.mxu0 0.0
        %2182 = vmatprep.subr.mxu0 0.0
        %2183 = vmatpush1.msra.mxu0 0.0
        %2184 = vmatprep.subr.mxu0 0.0
        %2185 = vmatpush1.msra.mxu0 0.0
        %2186 = vmatprep.subr.mxu0 0.0
        %2187 = vmatpush1.msra.mxu0 0.0
        %2188 = vmatprep.subr.mxu0 0.0
        %2189 = vmatpush1.msra.mxu0 0.0
        %2190 = vmatprep.subr.mxu0 0.0
        %2191 = vmatpush1.msra.mxu0 0.0
        %2192 = vmatprep.subr.mxu0 0.0
        %2193 = vmatpush1.msra.mxu0 0.0
        %2194 = vmatprep.subr.mxu0 0.0
        %2195 = vmatpush1.msra.mxu0 0.0
        %2196 = vmatprep.subr.mxu0 0.0
        %2197 = vmatpush1.msra.mxu0 0.0
        %2198 = vmatprep.subr.mxu0 0.0
        %2199 = vmatpush1.msra.mxu0 0.0
        %2200 = vmatprep.subr.mxu0 0.0
        %2201 = vmatpush1.msra.mxu0 0.0
        %2202 = vmatprep.subr.mxu0 0.0
        %2203 = vmatpush1.msra.mxu0 0.0
        %2204 = vmatprep.subr.mxu0 0.0
        %2205 = vmatpush1.msra.mxu0 0.0
        %2206 = vmatprep.subr.mxu0 0.0
        %2207 = vmatpush1.msra.mxu0 0.0
        %2208 = vmatprep.subr.mxu0 0.0
        %2209 = vmatpush1.msra.mxu0 0.0
        %2210 = vmatprep.subr.mxu0 0.0
        %2211 = vmatpush1.msra.mxu0 0.0
        %2212 = vmatprep.subr.mxu0 0.0
        %2213 = vmatpush1.msra.mxu0 0.0
        %2214 = vmatprep.subr.mxu0 0.0
        %2215 = vmatpush1.msra.mxu0 0.0
        %2216 = vmatprep.subr.mxu0 0.0
        %2217 = vmatpush1.msra.mxu0 0.0
        %2218 = vmatprep.subr.mxu0 0.0
        %2219 = vmatpush1.msra.mxu0 0.0
        %2220 = vmatprep.subr.mxu0 0.0
        %2221 = vmatpush1.msra.mxu0 0.0
        %2222 = vmatprep.subr.mxu0 0.0
        %2223 = vmatpush1.msra.mxu0 0.0
        %2224 = vmatprep.subr.mxu0 0.0
        %2225 = vmatpush1.msra.mxu0 0.0
        %2226 = vmatprep.mubr.f32.mxu0 0.0
        %2227 = vmatmul.mubr.f32.gmra.mrb[0].mxu0 %v712
        %v2228 = vpop.f32.mrb[0].mxu0
        %v2229 = vadd.f32 0.0, %v2228
        %v2230 = vpop.f32.mrb[0].mxu0
        %v2231 = vadd.f32 0.0, %v2230
        %2232 = vdwg.mxu0
        %2233 = vmatprep.subr.mxu0 %v2161
        %2234 = vmatpush1.msra.mxu0 %v2160
        %2235 = vmatprep.subr.mxu0 0.0
        %2236 = vmatpush1.msra.mxu0 0.0
        %2237 = vmatprep.subr.mxu0 0.0
        %2238 = vmatpush1.msra.mxu0 0.0
        %2239 = vmatprep.subr.mxu0 0.0
        %2240 = vmatpush1.msra.mxu0 0.0
        %2241 = vmatprep.subr.mxu0 0.0
        %2242 = vmatpush1.msra.mxu0 0.0
        %2243 = vmatprep.subr.mxu0 0.0
        %2244 = vmatpush1.msra.mxu0 0.0
        %2245 = vmatprep.subr.mxu0 0.0
        %2246 = vmatpush1.msra.mxu0 0.0
        %2247 = vmatprep.subr.mxu0 0.0
        %2248 = vmatpush1.msra.mxu0 0.0
        %2249 = vmatprep.subr.mxu0 0.0
        %2250 = vmatpush1.msra.mxu0 0.0
        %2251 = vmatprep.subr.mxu0 0.0
        %2252 = vmatpush1.msra.mxu0 0.0
        %2253 = vmatprep.subr.mxu0 0.0
        %2254 = vmatpush1.msra.mxu0 0.0
        %2255 = vmatprep.subr.mxu0 0.0
        %2256 = vmatpush1.msra.mxu0 0.0
        %2257 = vmatprep.subr.mxu0 0.0
        %2258 = vmatpush1.msra.mxu0 0.0
        %2259 = vmatprep.subr.mxu0 0.0
        %2260 = vmatpush1.msra.mxu0 0.0
        %2261 = vmatprep.subr.mxu0 0.0
        %2262 = vmatpush1.msra.mxu0 0.0
        %2263 = vmatprep.subr.mxu0 0.0
        %2264 = vmatpush1.msra.mxu0 0.0
        %2265 = vmatprep.subr.mxu0 0.0
        %2266 = vmatpush1.msra.mxu0 0.0
        %2267 = vmatprep.subr.mxu0 0.0
        %2268 = vmatpush1.msra.mxu0 0.0
        %2269 = vmatprep.subr.mxu0 0.0
        %2270 = vmatpush1.msra.mxu0 0.0
        %2271 = vmatprep.subr.mxu0 0.0
        %2272 = vmatpush1.msra.mxu0 0.0
        %2273 = vmatprep.subr.mxu0 0.0
        %2274 = vmatpush1.msra.mxu0 0.0
        %2275 = vmatprep.subr.mxu0 0.0
        %2276 = vmatpush1.msra.mxu0 0.0
        %2277 = vmatprep.subr.mxu0 0.0
        %2278 = vmatpush1.msra.mxu0 0.0
        %2279 = vmatprep.subr.mxu0 0.0
        %2280 = vmatpush1.msra.mxu0 0.0
        %2281 = vmatprep.subr.mxu0 0.0
        %2282 = vmatpush1.msra.mxu0 0.0
        %2283 = vmatprep.subr.mxu0 0.0
        %2284 = vmatpush1.msra.mxu0 0.0
        %2285 = vmatprep.subr.mxu0 0.0
        %2286 = vmatpush1.msra.mxu0 0.0
        %2287 = vmatprep.subr.mxu0 0.0
        %2288 = vmatpush1.msra.mxu0 0.0
        %2289 = vmatprep.subr.mxu0 0.0
        %2290 = vmatpush1.msra.mxu0 0.0
        %2291 = vmatprep.subr.mxu0 0.0
        %2292 = vmatpush1.msra.mxu0 0.0
        %2293 = vmatprep.subr.mxu0 0.0
        %2294 = vmatpush1.msra.mxu0 0.0
        %2295 = vmatprep.subr.mxu0 0.0
        %2296 = vmatpush1.msra.mxu0 0.0
        %2297 = vmatprep.mubr.f32.mxu0 0.0
        %2298 = vmatmul.mubr.f32.gmra.mrb[0].mxu0 %v785
        %v2299 = vpop.f32.mrb[0].mxu0
        %v2300 = vadd.f32 %v2229, %v2299
        %v2301 = vpop.f32.mrb[0].mxu0
        %v2302 = vadd.f32 %v2231, %v2301
        %2303 = vdwg.mxu0
        %v2304 = vadd.f32 %v2300, %v860
        %v2305 = vadd.f32 %v2302, %v860
        %v2306 = vmax.f32 %v2304, 0.0
        %v2307 = vmax.f32 %v2305, 0.0
        %s2308 = sld [smem:[#allocation3 + $0x6]]
        %v2309 = vstv %s2308
        %v2310 = vmul.f32 %v2309, %v2306
        %v2311 = vmul.f32 %v2309, %v2307
        %v2312 = vmax.f32 %v2071, %v2306
        %v2313 = vmax.f32 %v2072, %v2307
        %v2314 = vadd.f32 %v2073, %v2310
        %v2315 = vadd.f32 %v2074, %v2311
        %s2316 = scalar_lea.vmem %s495, 48
        %v2317 = vld [vmem:[%s2316] ss:$8 sm:$0x3]
        %s2318 = scalar_lea.vmem %s495, 49
        %v2319 = vld [vmem:[%s2318] ss:$8 sm:$0x3]
        %s2320 = scalar_lea.vmem %s495, 50
        %v2321 = vld [vmem:[%s2320] ss:$8 sm:$0x3]
        %v2322 = vsub.f32 %v537, %v2317
        %v2323 = vsub.f32 %v539, %v2319
        %v2324 = vsub.f32 %v541, %v2321
        %v2325 = vmul.f32 %v2322, %v2322
        %v2326 = vmul.f32 %v2323, %v2323
        %v2327 = vadd.f32 %v2325, %v2326
        %v2328 = vmul.f32 %v2324, %v2324
        %v2329 = vadd.f32 %v2327, %v2328
        %v2330 = vrsqrt.pop %v2329
        %v2331 = vmul.f32 %v2329, %v2330
        %vm2332 = vcmp.eq.f32.partialorder %v2329, inf
        %v2333 = vsel %vm2332, %v2329, %v2331
        %vm2334 = vcmp.eq.f32.partialorder %v2329, 0.0
        %v2335 = vand.u32 %v2329, 2147483648
        %v2336 = vsel %vm2334, %v2335, %v2333
        %v2338 = vlaneseq
        %v2339 = vshrl.u32 %v2338, 7
        %v2340 = vsub.s32 0, %v2339
        %v2341 = vrot.slane %v2336, %v2340
        %v2342 = vlaneseq
        %v2343 = vshrl.u32 %v2342, 7
        %v2344 = vsub.s32 1, %v2343
        %v2345 = vrot.slane %v2336, %v2344
        %v2348 = vmul.f32 %v629, %v2341
        %v2349 = vmul.f32 %v629, %v2345
        %v2350 = vadd.f32 %v604, %v2348
        %v2351 = vadd.f32 %v605, %v2349
        %v2353 = vlaneseq
        %v2354 = vshrl.u32 %v2353, 7
        %v2355 = vsub.s32 0, %v2354
        %v2356 = vrot.slane %v2317, %v2355
        %v2357 = vlaneseq
        %v2358 = vshrl.u32 %v2357, 7
        %v2359 = vsub.s32 1, %v2358
        %v2360 = vrot.slane %v2317, %v2359
        %v2363 = vmul.f32 %v648, %v2356
        %v2364 = vmul.f32 %v648, %v2360
        %v2365 = vadd.f32 %v2350, %v2363
        %v2366 = vadd.f32 %v2351, %v2364
        %v2368 = vlaneseq
        %v2369 = vshrl.u32 %v2368, 7
        %v2370 = vsub.s32 0, %v2369
        %v2371 = vrot.slane %v2319, %v2370
        %v2372 = vlaneseq
        %v2373 = vshrl.u32 %v2372, 7
        %v2374 = vsub.s32 1, %v2373
        %v2375 = vrot.slane %v2319, %v2374
        %v2378 = vmul.f32 %v667, %v2371
        %v2379 = vmul.f32 %v667, %v2375
        %v2380 = vadd.f32 %v2365, %v2378
        %v2381 = vadd.f32 %v2366, %v2379
        %v2383 = vlaneseq
        %v2384 = vshrl.u32 %v2383, 7
        %v2385 = vsub.s32 0, %v2384
        %v2386 = vrot.slane %v2321, %v2385
        %v2387 = vlaneseq
        %v2388 = vshrl.u32 %v2387, 7
        %v2389 = vsub.s32 1, %v2388
        %v2390 = vrot.slane %v2321, %v2389
        %v2393 = vmul.f32 %v686, %v2386
        %v2394 = vmul.f32 %v686, %v2390
        %v2395 = vadd.f32 %v2380, %v2393
        %v2396 = vadd.f32 %v2381, %v2394
        %v2397 = vmax.f32 %v2395, 0.0
        %v2398 = vmax.f32 %v2396, 0.0
        %s2399 = scalar_lea.vmem %s505, 56
        %v2400 = vld [vmem:[%s2399] sm:$0xff]
        %v2401 = vunpack.c.l.bf16 %v2400
        %v2402 = vunpack.c.h.bf16 %v2400
        %2403 = vmatprep.subr.mxu0 %v2398
        %2404 = vmatpush1.msra.mxu0 %v2397
        %2405 = vmatprep.subr.mxu0 0.0
        %2406 = vmatpush1.msra.mxu0 0.0
        %2407 = vmatprep.subr.mxu0 0.0
        %2408 = vmatpush1.msra.mxu0 0.0
        %2409 = vmatprep.subr.mxu0 0.0
        %2410 = vmatpush1.msra.mxu0 0.0
        %2411 = vmatprep.subr.mxu0 0.0
        %2412 = vmatpush1.msra.mxu0 0.0
        %2413 = vmatprep.subr.mxu0 0.0
        %2414 = vmatpush1.msra.mxu0 0.0
        %2415 = vmatprep.subr.mxu0 0.0
        %2416 = vmatpush1.msra.mxu0 0.0
        %2417 = vmatprep.subr.mxu0 0.0
        %2418 = vmatpush1.msra.mxu0 0.0
        %2419 = vmatprep.subr.mxu0 0.0
        %2420 = vmatpush1.msra.mxu0 0.0
        %2421 = vmatprep.subr.mxu0 0.0
        %2422 = vmatpush1.msra.mxu0 0.0
        %2423 = vmatprep.subr.mxu0 0.0
        %2424 = vmatpush1.msra.mxu0 0.0
        %2425 = vmatprep.subr.mxu0 0.0
        %2426 = vmatpush1.msra.mxu0 0.0
        %2427 = vmatprep.subr.mxu0 0.0
        %2428 = vmatpush1.msra.mxu0 0.0
        %2429 = vmatprep.subr.mxu0 0.0
        %2430 = vmatpush1.msra.mxu0 0.0
        %2431 = vmatprep.subr.mxu0 0.0
        %2432 = vmatpush1.msra.mxu0 0.0
        %2433 = vmatprep.subr.mxu0 0.0
        %2434 = vmatpush1.msra.mxu0 0.0
        %2435 = vmatprep.subr.mxu0 0.0
        %2436 = vmatpush1.msra.mxu0 0.0
        %2437 = vmatprep.subr.mxu0 0.0
        %2438 = vmatpush1.msra.mxu0 0.0
        %2439 = vmatprep.subr.mxu0 0.0
        %2440 = vmatpush1.msra.mxu0 0.0
        %2441 = vmatprep.subr.mxu0 0.0
        %2442 = vmatpush1.msra.mxu0 0.0
        %2443 = vmatprep.subr.mxu0 0.0
        %2444 = vmatpush1.msra.mxu0 0.0
        %2445 = vmatprep.subr.mxu0 0.0
        %2446 = vmatpush1.msra.mxu0 0.0
        %2447 = vmatprep.subr.mxu0 0.0
        %2448 = vmatpush1.msra.mxu0 0.0
        %2449 = vmatprep.subr.mxu0 0.0
        %2450 = vmatpush1.msra.mxu0 0.0
        %2451 = vmatprep.subr.mxu0 0.0
        %2452 = vmatpush1.msra.mxu0 0.0
        %2453 = vmatprep.subr.mxu0 0.0
        %2454 = vmatpush1.msra.mxu0 0.0
        %2455 = vmatprep.subr.mxu0 0.0
        %2456 = vmatpush1.msra.mxu0 0.0
        %2457 = vmatprep.subr.mxu0 0.0
        %2458 = vmatpush1.msra.mxu0 0.0
        %2459 = vmatprep.subr.mxu0 0.0
        %2460 = vmatpush1.msra.mxu0 0.0
        %2461 = vmatprep.subr.mxu0 0.0
        %2462 = vmatpush1.msra.mxu0 0.0
        %2463 = vmatprep.subr.mxu0 0.0
        %2464 = vmatpush1.msra.mxu0 0.0
        %2465 = vmatprep.subr.mxu0 0.0
        %2466 = vmatpush1.msra.mxu0 0.0
        %2467 = vmatprep.mubr.f32.mxu0 0.0
        %2468 = vmatmul.mubr.f32.gmra.mrb[0].mxu0 %v712
        %v2469 = vpop.f32.mrb[0].mxu0
        %v2470 = vadd.f32 0.0, %v2469
        %v2471 = vpop.f32.mrb[0].mxu0
        %v2472 = vadd.f32 0.0, %v2471
        %2473 = vdwg.mxu0
        %2474 = vmatprep.subr.mxu0 %v2402
        %2475 = vmatpush1.msra.mxu0 %v2401
        %2476 = vmatprep.subr.mxu0 0.0
        %2477 = vmatpush1.msra.mxu0 0.0
        %2478 = vmatprep.subr.mxu0 0.0
        %2479 = vmatpush1.msra.mxu0 0.0
        %2480 = vmatprep.subr.mxu0 0.0
        %2481 = vmatpush1.msra.mxu0 0.0
        %2482 = vmatprep.subr.mxu0 0.0
        %2483 = vmatpush1.msra.mxu0 0.0
        %2484 = vmatprep.subr.mxu0 0.0
        %2485 = vmatpush1.msra.mxu0 0.0
        %2486 = vmatprep.subr.mxu0 0.0
        %2487 = vmatpush1.msra.mxu0 0.0
        %2488 = vmatprep.subr.mxu0 0.0
        %2489 = vmatpush1.msra.mxu0 0.0
        %2490 = vmatprep.subr.mxu0 0.0
        %2491 = vmatpush1.msra.mxu0 0.0
        %2492 = vmatprep.subr.mxu0 0.0
        %2493 = vmatpush1.msra.mxu0 0.0
        %2494 = vmatprep.subr.mxu0 0.0
        %2495 = vmatpush1.msra.mxu0 0.0
        %2496 = vmatprep.subr.mxu0 0.0
        %2497 = vmatpush1.msra.mxu0 0.0
        %2498 = vmatprep.subr.mxu0 0.0
        %2499 = vmatpush1.msra.mxu0 0.0
        %2500 = vmatprep.subr.mxu0 0.0
        %2501 = vmatpush1.msra.mxu0 0.0
        %2502 = vmatprep.subr.mxu0 0.0
        %2503 = vmatpush1.msra.mxu0 0.0
        %2504 = vmatprep.subr.mxu0 0.0
        %2505 = vmatpush1.msra.mxu0 0.0
        %2506 = vmatprep.subr.mxu0 0.0
        %2507 = vmatpush1.msra.mxu0 0.0
        %2508 = vmatprep.subr.mxu0 0.0
        %2509 = vmatpush1.msra.mxu0 0.0
        %2510 = vmatprep.subr.mxu0 0.0
        %2511 = vmatpush1.msra.mxu0 0.0
        %2512 = vmatprep.subr.mxu0 0.0
        %2513 = vmatpush1.msra.mxu0 0.0
        %2514 = vmatprep.subr.mxu0 0.0
        %2515 = vmatpush1.msra.mxu0 0.0
        %2516 = vmatprep.subr.mxu0 0.0
        %2517 = vmatpush1.msra.mxu0 0.0
        %2518 = vmatprep.subr.mxu0 0.0
        %2519 = vmatpush1.msra.mxu0 0.0
        %2520 = vmatprep.subr.mxu0 0.0
        %2521 = vmatpush1.msra.mxu0 0.0
        %2522 = vmatprep.subr.mxu0 0.0
        %2523 = vmatpush1.msra.mxu0 0.0
        %2524 = vmatprep.subr.mxu0 0.0
        %2525 = vmatpush1.msra.mxu0 0.0
        %2526 = vmatprep.subr.mxu0 0.0
        %2527 = vmatpush1.msra.mxu0 0.0
        %2528 = vmatprep.subr.mxu0 0.0
        %2529 = vmatpush1.msra.mxu0 0.0
        %2530 = vmatprep.subr.mxu0 0.0
        %2531 = vmatpush1.msra.mxu0 0.0
        %2532 = vmatprep.subr.mxu0 0.0
        %2533 = vmatpush1.msra.mxu0 0.0
        %2534 = vmatprep.subr.mxu0 0.0
        %2535 = vmatpush1.msra.mxu0 0.0
        %2536 = vmatprep.subr.mxu0 0.0
        %2537 = vmatpush1.msra.mxu0 0.0
        %2538 = vmatprep.mubr.f32.mxu0 0.0
        %2539 = vmatmul.mubr.f32.gmra.mrb[0].mxu0 %v785
        %v2540 = vpop.f32.mrb[0].mxu0
        %v2541 = vadd.f32 %v2470, %v2540
        %v2542 = vpop.f32.mrb[0].mxu0
        %v2543 = vadd.f32 %v2472, %v2542
        %2544 = vdwg.mxu0
        %v2545 = vadd.f32 %v2541, %v860
        %v2546 = vadd.f32 %v2543, %v860
        %v2547 = vmax.f32 %v2545, 0.0
        %v2548 = vmax.f32 %v2546, 0.0
        %s2549 = sld [smem:[#allocation3 + $0x7]]
        %v2550 = vstv %s2549
        %v2551 = vmul.f32 %v2550, %v2547
        %v2552 = vmul.f32 %v2550, %v2548
        %v2553 = vmax.f32 %v2312, %v2547
        %v2554 = vmax.f32 %v2313, %v2548
        %v2555 = vadd.f32 %v2314, %v2551
        %v2556 = vadd.f32 %v2315, %v2552
        %s2557 = sld [smem:[#allocation2]]
        %v2558 = vstv %s2557
        %v2559 = vadd.f32 %v2555, %v2558
        %v2560 = vadd.f32 %v2556, %v2558
        %v2561 = vrot.slane %v2559, 4
        %v2562 = vmax.f32 %v2559, %v2561
        %v2563 = vrot.slane %v2562, 2
        %v2564 = vmax.f32 %v2562, %v2563
        %v2565 = vrot.slane %v2564, 1
        %v2566 = vmax.f32 %v2564, %v2565
        %v2567 = vrot.slane %v2560, 4
        %v2568 = vmax.f32 %v2560, %v2567
        %v2569 = vrot.slane %v2568, 2
        %v2570 = vmax.f32 %v2568, %v2569
        %v2571 = vrot.slane %v2570, 1
        %v2572 = vmax.f32 %v2570, %v2571
        %v2573 = vsub.f32 %v2559, %v2566
        %v2574 = vsub.f32 %v2560, %v2572
        %v2575 = vmul.f32 %v2573, 1.442695
        %v2576 = vpow.pop %v2575
        %v2577 = vmul.f32 %v2574, 1.442695
        %v2578 = vpow.pop %v2577
        %v2579 = vrot.slane %v2576, 4
        %v2580 = vadd.f32 %v2576, %v2579
        %v2581 = vrot.slane %v2580, 2
        %v2582 = vadd.f32 %v2580, %v2581
        %v2583 = vrot.slane %v2582, 1
        %v2584 = vadd.f32 %v2582, %v2583
        %v2585 = vrot.slane %v2578, 4
        %v2586 = vadd.f32 %v2578, %v2585
        %v2587 = vrot.slane %v2586, 2
        %v2588 = vadd.f32 %v2586, %v2587
        %v2589 = vrot.slane %v2588, 1
        %v2590 = vadd.f32 %v2588, %v2589
        %v2591 = vrcp.pop %v2584
        %v2592 = vmul.f32 1.0, %v2591
        %v2593 = vrcp.pop %v2590
        %v2594 = vmul.f32 1.0, %v2593
        %v2595 = vmul.f32 %v2576, %v2592
        %v2596 = vmul.f32 %v2578, %v2594
        %v2597 = vadd.f32 %v2595, 1.0
        %v2598 = vadd.f32 %v2596, 1.0
        %v2599 = vmul.f32 %v2553, %v2597
        %v2600 = vmul.f32 %v2554, %v2598
        %v2601 = vld [vmem:[%s515] sm:$0xff]
        %v2602 = vld [vmem:[%s515 + $0x8] sm:$0xff]
        %v2603 = vld [vmem:[%s5] sm:$0xff]
        %v2604 = vld [vmem:[%s5 + $0x8] sm:$0xff]
        %v2605 = vld [vmem:[%s6] sm:$0xff]
        %v2606 = vld [vmem:[%s6 + $0x8] sm:$0xff]
        %2608 = vset.pattern.permute.xlu0 8
        %2609 = vperm.xlu0 %2608, %v2603
        %v2610 = vpop.permute.xlu0 %2609
        %2613 = vset.pattern.permute.xlu0 8
        %2614 = vperm.xlu0 %2613, %v2604
        %v2615 = vpop.permute.xlu0 %2614
        %v2617 = vsel %vm711, %v2603, 0
        %v2619 = vsel %vm711, %v2604, 0
        %2621 = vmatprep.subr.mxu0 %v2600
        %2622 = vmatpush1.msra.mxu0 %v2599
        %2623 = vmatprep.subr.mxu0 0.0
        %2624 = vmatpush1.msra.mxu0 0.0
        %2625 = vmatprep.subr.mxu0 0.0
        %2626 = vmatpush1.msra.mxu0 0.0
        %2627 = vmatprep.subr.mxu0 0.0
        %2628 = vmatpush1.msra.mxu0 0.0
        %2629 = vmatprep.subr.mxu0 0.0
        %2630 = vmatpush1.msra.mxu0 0.0
        %2631 = vmatprep.subr.mxu0 0.0
        %2632 = vmatpush1.msra.mxu0 0.0
        %2633 = vmatprep.subr.mxu0 0.0
        %2634 = vmatpush1.msra.mxu0 0.0
        %2635 = vmatprep.subr.mxu0 0.0
        %2636 = vmatpush1.msra.mxu0 0.0
        %2637 = vmatprep.subr.mxu0 0.0
        %2638 = vmatpush1.msra.mxu0 0.0
        %2639 = vmatprep.subr.mxu0 0.0
        %2640 = vmatpush1.msra.mxu0 0.0
        %2641 = vmatprep.subr.mxu0 0.0
        %2642 = vmatpush1.msra.mxu0 0.0
        %2643 = vmatprep.subr.mxu0 0.0
        %2644 = vmatpush1.msra.mxu0 0.0
        %2645 = vmatprep.subr.mxu0 0.0
        %2646 = vmatpush1.msra.mxu0 0.0
        %2647 = vmatprep.subr.mxu0 0.0
        %2648 = vmatpush1.msra.mxu0 0.0
        %2649 = vmatprep.subr.mxu0 0.0
        %2650 = vmatpush1.msra.mxu0 0.0
        %2651 = vmatprep.subr.mxu0 0.0
        %2652 = vmatpush1.msra.mxu0 0.0
        %2653 = vmatprep.subr.mxu0 0.0
        %2654 = vmatpush1.msra.mxu0 0.0
        %2655 = vmatprep.subr.mxu0 0.0
        %2656 = vmatpush1.msra.mxu0 0.0
        %2657 = vmatprep.subr.mxu0 0.0
        %2658 = vmatpush1.msra.mxu0 0.0
        %2659 = vmatprep.subr.mxu0 0.0
        %2660 = vmatpush1.msra.mxu0 0.0
        %2661 = vmatprep.subr.mxu0 0.0
        %2662 = vmatpush1.msra.mxu0 0.0
        %2663 = vmatprep.subr.mxu0 0.0
        %2664 = vmatpush1.msra.mxu0 0.0
        %2665 = vmatprep.subr.mxu0 0.0
        %2666 = vmatpush1.msra.mxu0 0.0
        %2667 = vmatprep.subr.mxu0 0.0
        %2668 = vmatpush1.msra.mxu0 0.0
        %2669 = vmatprep.subr.mxu0 0.0
        %2670 = vmatpush1.msra.mxu0 0.0
        %2671 = vmatprep.subr.mxu0 0.0
        %2672 = vmatpush1.msra.mxu0 0.0
        %2673 = vmatprep.subr.mxu0 0.0
        %2674 = vmatpush1.msra.mxu0 0.0
        %2675 = vmatprep.subr.mxu0 0.0
        %2676 = vmatpush1.msra.mxu0 0.0
        %2677 = vmatprep.subr.mxu0 0.0
        %2678 = vmatpush1.msra.mxu0 0.0
        %2679 = vmatprep.subr.mxu0 0.0
        %2680 = vmatpush1.msra.mxu0 0.0
        %2681 = vmatprep.subr.mxu0 0.0
        %2682 = vmatpush1.msra.mxu0 0.0
        %2683 = vmatprep.subr.mxu0 0.0
        %2684 = vmatpush1.msra.mxu0 0.0
        %2685 = vmatprep.mubr.f32.mxu0 0.0
        %2686 = vmatmul.mubr.f32.gmra.mrb[0].mxu0 %v2617
        %v2687 = vpop.f32.mrb[0].mxu0
        %v2688 = vadd.f32 %v2610, %v2687
        %v2689 = vpop.f32.mrb[0].mxu0
        %v2690 = vadd.f32 %v2610, %v2689
        %2691 = vmatprep.mubr.f32.mxu0 0.0
        %2692 = vmatmul.mubr.f32.gmra.mrb[0].mxu0 %v2619
        %v2693 = vpop.f32.mrb[0].mxu0
        %v2694 = vadd.f32 %v2615, %v2693
        %v2695 = vpop.f32.mrb[0].mxu0
        %v2696 = vadd.f32 %v2615, %v2695
        %2697 = vdwg.mxu0
        %v2698 = vmax.f32 %v2688, 0.0
        %v2699 = vmax.f32 %v2690, 0.0
        %v2700 = vmax.f32 %v2694, 0.0
        %v2701 = vmax.f32 %v2696, 0.0
        %2703 = vset.pattern.permute.xlu0 8
        %2704 = vperm.xlu0 %2703, %v2605
        %v2705 = vpop.permute.xlu0 %2704
        %2708 = vset.pattern.permute.xlu0 8
        %2709 = vperm.xlu0 %2708, %v2606
        %v2710 = vpop.permute.xlu0 %2709
        %v2712 = vsel %vm711, %v2605, 0
        %v2714 = vsel %vm711, %v2606, 0
        %2716 = vmatprep.subr.mxu0 %v2602
        %2717 = vmatpush1.msra.mxu0 %v2601
        %2718 = vmatprep.subr.mxu0 0.0
        %2719 = vmatpush1.msra.mxu0 0.0
        %2720 = vmatprep.subr.mxu0 0.0
        %2721 = vmatpush1.msra.mxu0 0.0
        %2722 = vmatprep.subr.mxu0 0.0
        %2723 = vmatpush1.msra.mxu0 0.0
        %2724 = vmatprep.subr.mxu0 0.0
        %2725 = vmatpush1.msra.mxu0 0.0
        %2726 = vmatprep.subr.mxu0 0.0
        %2727 = vmatpush1.msra.mxu0 0.0
        %2728 = vmatprep.subr.mxu0 0.0
        %2729 = vmatpush1.msra.mxu0 0.0
        %2730 = vmatprep.subr.mxu0 0.0
        %2731 = vmatpush1.msra.mxu0 0.0
        %2732 = vmatprep.subr.mxu0 0.0
        %2733 = vmatpush1.msra.mxu0 0.0
        %2734 = vmatprep.subr.mxu0 0.0
        %2735 = vmatpush1.msra.mxu0 0.0
        %2736 = vmatprep.subr.mxu0 0.0
        %2737 = vmatpush1.msra.mxu0 0.0
        %2738 = vmatprep.subr.mxu0 0.0
        %2739 = vmatpush1.msra.mxu0 0.0
        %2740 = vmatprep.subr.mxu0 0.0
        %2741 = vmatpush1.msra.mxu0 0.0
        %2742 = vmatprep.subr.mxu0 0.0
        %2743 = vmatpush1.msra.mxu0 0.0
        %2744 = vmatprep.subr.mxu0 0.0
        %2745 = vmatpush1.msra.mxu0 0.0
        %2746 = vmatprep.subr.mxu0 0.0
        %2747 = vmatpush1.msra.mxu0 0.0
        %2748 = vmatprep.subr.mxu0 0.0
        %2749 = vmatpush1.msra.mxu0 0.0
        %2750 = vmatprep.subr.mxu0 0.0
        %2751 = vmatpush1.msra.mxu0 0.0
        %2752 = vmatprep.subr.mxu0 0.0
        %2753 = vmatpush1.msra.mxu0 0.0
        %2754 = vmatprep.subr.mxu0 0.0
        %2755 = vmatpush1.msra.mxu0 0.0
        %2756 = vmatprep.subr.mxu0 0.0
        %2757 = vmatpush1.msra.mxu0 0.0
        %2758 = vmatprep.subr.mxu0 0.0
        %2759 = vmatpush1.msra.mxu0 0.0
        %2760 = vmatprep.subr.mxu0 0.0
        %2761 = vmatpush1.msra.mxu0 0.0
        %2762 = vmatprep.subr.mxu0 0.0
        %2763 = vmatpush1.msra.mxu0 0.0
        %2764 = vmatprep.subr.mxu0 0.0
        %2765 = vmatpush1.msra.mxu0 0.0
        %2766 = vmatprep.subr.mxu0 0.0
        %2767 = vmatpush1.msra.mxu0 0.0
        %2768 = vmatprep.subr.mxu0 0.0
        %2769 = vmatpush1.msra.mxu0 0.0
        %2770 = vmatprep.subr.mxu0 0.0
        %2771 = vmatpush1.msra.mxu0 0.0
        %2772 = vmatprep.subr.mxu0 0.0
        %2773 = vmatpush1.msra.mxu0 0.0
        %2774 = vmatprep.subr.mxu0 0.0
        %2775 = vmatpush1.msra.mxu0 0.0
        %2776 = vmatprep.subr.mxu0 0.0
        %2777 = vmatpush1.msra.mxu0 0.0
        %2778 = vmatprep.subr.mxu0 0.0
        %2779 = vmatpush1.msra.mxu0 0.0
        %2780 = vmatprep.mubr.f32.mxu0 0.0
        %2781 = vmatmul.mubr.f32.gmra.mrb[0].mxu0 %v2712
        %v2782 = vpop.f32.mrb[0].mxu0
        %v2783 = vadd.f32 %v2705, %v2782
        %v2784 = vpop.f32.mrb[0].mxu0
        %v2785 = vadd.f32 %v2705, %v2784
        %2786 = vmatprep.mubr.f32.mxu0 0.0
        %2787 = vmatmul.mubr.f32.gmra.mrb[0].mxu0 %v2714
        %v2788 = vpop.f32.mrb[0].mxu0
        %v2789 = vadd.f32 %v2710, %v2788
        %v2790 = vpop.f32.mrb[0].mxu0
        %v2791 = vadd.f32 %v2710, %v2790
        %2792 = vdwg.mxu0
        %v2793 = vmax.f32 %v2783, 0.0
        %v2794 = vmax.f32 %v2785, 0.0
        %v2795 = vmax.f32 %v2789, 0.0
        %v2796 = vmax.f32 %v2791, 0.0
        %v2797 = vadd.f32 %v2698, %v2793
        %v2798 = vadd.f32 %v2699, %v2794
        %v2799 = vadd.f32 %v2700, %v2795
        %v2800 = vadd.f32 %v2701, %v2796
        %v2801 = vpack.c.bf16 %v2799, %v2797
        %v2802 = vpack.c.bf16 %v2800, %v2798
        %v2805 = vunpack.c.l.b16 %v2801
        %v2806 = vunpack.c.l.b16 %v2802
        %v2807 = vunpack.c.h.b16 %v2801
        %v2808 = vunpack.c.h.b16 %v2802
        %v2809 = vpack.c.b16 %v2806, %v2805
        %v2810 = vpack.c.b16 %v2808, %v2807
        %2813 = vst [vmem:[%s525] sm:$0xff] %v2809
        %2814 = vst [vmem:[%s525 + $0x8] sm:$0xff] %v2810
        %v2815 = vld [vmem:[%s7] sm:$0xff]
        %v2816 = vld [vmem:[%s7 + $0x8] sm:$0xff]
        %2818 = vset.pattern.permute.xlu0 16
        %2819 = vperm.xlu0 %2818, %v2815
        %v2820 = vpop.permute.xlu0 %2819
        %2823 = vset.pattern.permute.xlu0 16
        %2824 = vperm.xlu0 %2823, %v2816
        %v2825 = vpop.permute.xlu0 %2824
        %vm2827 = vcmask 130048
        %v2828 = vsel %vm2827, %v2815, 0
        %v2830 = vsel %vm2827, %v2816, 0
        %2832 = vmatprep.subr.mxu0 %v2798
        %2833 = vmatpush1.msra.mxu0 %v2797
        %2834 = vmatprep.subr.mxu0 %v2800
        %2835 = vmatpush1.msra.mxu0 %v2799
        %2836 = vmatprep.subr.mxu0 0.0
        %2837 = vmatpush1.msra.mxu0 0.0
        %2838 = vmatprep.subr.mxu0 0.0
        %2839 = vmatpush1.msra.mxu0 0.0
        %2840 = vmatprep.subr.mxu0 0.0
        %2841 = vmatpush1.msra.mxu0 0.0
        %2842 = vmatprep.subr.mxu0 0.0
        %2843 = vmatpush1.msra.mxu0 0.0
        %2844 = vmatprep.subr.mxu0 0.0
        %2845 = vmatpush1.msra.mxu0 0.0
        %2846 = vmatprep.subr.mxu0 0.0
        %2847 = vmatpush1.msra.mxu0 0.0
        %2848 = vmatprep.subr.mxu0 0.0
        %2849 = vmatpush1.msra.mxu0 0.0
        %2850 = vmatprep.subr.mxu0 0.0
        %2851 = vmatpush1.msra.mxu0 0.0
        %2852 = vmatprep.subr.mxu0 0.0
        %2853 = vmatpush1.msra.mxu0 0.0
        %2854 = vmatprep.subr.mxu0 0.0
        %2855 = vmatpush1.msra.mxu0 0.0
        %2856 = vmatprep.subr.mxu0 0.0
        %2857 = vmatpush1.msra.mxu0 0.0
        %2858 = vmatprep.subr.mxu0 0.0
        %2859 = vmatpush1.msra.mxu0 0.0
        %2860 = vmatprep.subr.mxu0 0.0
        %2861 = vmatpush1.msra.mxu0 0.0
        %2862 = vmatprep.subr.mxu0 0.0
        %2863 = vmatpush1.msra.mxu0 0.0
        %2864 = vmatprep.subr.mxu0 0.0
        %2865 = vmatpush1.msra.mxu0 0.0
        %2866 = vmatprep.subr.mxu0 0.0
        %2867 = vmatpush1.msra.mxu0 0.0
        %2868 = vmatprep.subr.mxu0 0.0
        %2869 = vmatpush1.msra.mxu0 0.0
        %2870 = vmatprep.subr.mxu0 0.0
        %2871 = vmatpush1.msra.mxu0 0.0
        %2872 = vmatprep.subr.mxu0 0.0
        %2873 = vmatpush1.msra.mxu0 0.0
        %2874 = vmatprep.subr.mxu0 0.0
        %2875 = vmatpush1.msra.mxu0 0.0
        %2876 = vmatprep.subr.mxu0 0.0
        %2877 = vmatpush1.msra.mxu0 0.0
        %2878 = vmatprep.subr.mxu0 0.0
        %2879 = vmatpush1.msra.mxu0 0.0
        %2880 = vmatprep.subr.mxu0 0.0
        %2881 = vmatpush1.msra.mxu0 0.0
        %2882 = vmatprep.subr.mxu0 0.0
        %2883 = vmatpush1.msra.mxu0 0.0
        %2884 = vmatprep.subr.mxu0 0.0
        %2885 = vmatpush1.msra.mxu0 0.0
        %2886 = vmatprep.subr.mxu0 0.0
        %2887 = vmatpush1.msra.mxu0 0.0
        %2888 = vmatprep.subr.mxu0 0.0
        %2889 = vmatpush1.msra.mxu0 0.0
        %2890 = vmatprep.subr.mxu0 0.0
        %2891 = vmatpush1.msra.mxu0 0.0
        %2892 = vmatprep.subr.mxu0 0.0
        %2893 = vmatpush1.msra.mxu0 0.0
        %2894 = vmatprep.subr.mxu0 0.0
        %2895 = vmatpush1.msra.mxu0 0.0
        %2896 = vmatprep.mubr.f32.mxu0 0.0
        %2897 = vmatmul.mubr.f32.gmra.mrb[0].mxu0 %v2828
        %v2898 = vpop.f32.mrb[0].mxu0
        %v2899 = vadd.f32 %v2820, %v2898
        %v2900 = vpop.f32.mrb[0].mxu0
        %v2901 = vadd.f32 %v2820, %v2900
        %2902 = vmatprep.mubr.f32.mxu0 0.0
        %2903 = vmatmul.mubr.f32.gmra.mrb[0].mxu0 %v2830
        %v2904 = vpop.f32.mrb[0].mxu0
        %v2905 = vadd.f32 %v2825, %v2904
        %v2906 = vpop.f32.mrb[0].mxu0
        %v2907 = vadd.f32 %v2825, %v2906
        %2908 = vdwg.mxu0
        %v2909 = vmax.f32 %v2899, 0.0
        %v2910 = vmax.f32 %v2901, 0.0
        %v2911 = vmax.f32 %v2905, 0.0
        %v2912 = vmax.f32 %v2907, 0.0
        %v2913 = vpack.c.bf16 %v2911, %v2909
        %v2914 = vpack.c.bf16 %v2912, %v2910
        %v2917 = vunpack.c.l.b16 %v2913
        %v2918 = vunpack.c.l.b16 %v2914
        %v2919 = vunpack.c.h.b16 %v2913
        %v2920 = vunpack.c.h.b16 %v2914
        %v2921 = vpack.c.b16 %v2918, %v2917
        %v2922 = vpack.c.b16 %v2920, %v2919
        %2925 = vst [vmem:[%s535] sm:$0xff] %v2921
        %2926 = vst [vmem:[%s535 + $0x8] sm:$0xff] %v2922
        %s2927 = smul.u32 2, %s30
        %p2928 = scmp.lt.s32.totalorder %s29, 1
        %s2929 = scalar_select %p2928, %s29, 1
        %p2930 = scmp.lt.s32.totalorder %s2927, 1
        %s2931 = scalar_select %p2930, %s2927, 1
        %s2932 = smul.addr %s2929, 4
        %s2933 = sadd.s32 %s2931, %s2932
        %s2934 = smul.addr %s2933, 4
        %s2935 = scalar_lea.vmem %s10, %s2934
        %s2936 = smul.u32 2, %s30
        %p2937 = scmp.lt.s32.totalorder %s29, 1
        %s2938 = scalar_select %p2937, %s29, 1
        %p2939 = scmp.lt.s32.totalorder %s2936, 1
        %s2940 = scalar_select %p2939, %s2936, 1
        %s2941 = smul.addr %s2938, 4
        %s2942 = sadd.s32 %s2940, %s2941
        %s2943 = smul.addr %s2942, 4
        %s2944 = scalar_lea.vmem %s11, %s2943
        // Predicated region
        $region65: #{lfa_forward.4} parent=59 // pred_check
          %p2945 = pneg %p288
        $region66: #{lfa_forward.4} parent=59 // pred_check_branch
          %2947 = sbr.rel (%p2945) target = $region68
        $region67: #{lfa_forward.4} parent=59 // pred_region
          %s2948 = smul.u32 2, %s30
        $region68: #{lfa_forward.4} parent=59 // pred_fallthru
          _
        // Predicated region
        $region69: #{lfa_forward.4} parent=59 // pred_check
          %p2949 = pneg %p316
        $region70: #{lfa_forward.4} parent=59 // pred_check_branch
          %2951 = sbr.rel (%p2949) target = $region72
        $region71: #{lfa_forward.4} parent=59 // pred_region
          %s2952 = smul.u32 2, %s30
        $region72: #{lfa_forward.4} parent=59 // pred_fallthru
          _
      $region60: #{lfa_forward.4} parent=5 // pred_fallthru
        _
      %p2953 = scmp.le.s32.totalorder 2, %s20
      // Predicated region
      $region73: #{lfa_forward.4} parent=5 // pred_check
        %p2954 = pneg %p2953
      $region74: #{lfa_forward.4} parent=5 // pred_check_branch
        %2956 = sbr.rel (%p2954) target = $region76
      $region75: #{lfa_forward.4} parent=5 // pred_region
        %s2957 = ssub.s32 %s20, 2
        // Predicated region
        $region77: #{lfa_forward.4} parent=75 // pred_check
          %p2958 = pneg %p294
        $region78: #{lfa_forward.4} parent=75 // pred_check_branch
          %2960 = sbr.rel (%p2958) target = $region80
        $region79: #{lfa_forward.4} parent=75 // pred_region
          %s2961 = smul.u32 2, %s32
          %p2962 = scmp.lt.s32.totalorder %s31, 1
          %s2963 = scalar_select %p2962, %s31, 1
          %p2964 = scmp.lt.s32.totalorder %s2961, 1
          %s2965 = scalar_select %p2964, %s2961, 1
          %s2966 = smul.addr %s2963, 4
          %s2967 = sadd.s32 %s2965, %s2966
          %s2968 = smul.addr %s2967, 4
          %s2969 = scalar_lea.vmem %s10, %s2968
        $region80: #{lfa_forward.4} parent=75 // pred_fallthru
          _
        // Predicated region
        $region81: #{lfa_forward.4} parent=75 // pred_check
          %p2970 = pneg %p322
        $region82: #{lfa_forward.4} parent=75 // pred_check_branch
          %2972 = sbr.rel (%p2970) target = $region84
        $region83: #{lfa_forward.4} parent=75 // pred_region
          %s2973 = smul.u32 2, %s32
          %p2974 = scmp.lt.s32.totalorder %s31, 1
          %s2975 = scalar_select %p2974, %s31, 1
          %p2976 = scmp.lt.s32.totalorder %s2973, 1
          %s2977 = scalar_select %p2976, %s2973, 1
          %s2978 = smul.addr %s2975, 4
          %s2979 = sadd.s32 %s2977, %s2978
          %s2980 = smul.addr %s2979, 4
          %s2981 = scalar_lea.vmem %s11, %s2980
        $region84: #{lfa_forward.4} parent=75 // pred_fallthru
          _
      $region76: #{lfa_forward.4} parent=5 // pred_fallthru
        _
    $region6: #{lfa_forward.4} parent=1 // loop_footer
      %s24 = sadd.s32 1, %s20
    $region7: #{lfa_forward.4} parent=1 // loop_footer_branch
      %19 = sbr.rel target = $region3
    $region8: #{lfa_forward.4} parent=1 // loop_exit
      _
    %2982 = vsyncpa [#allocation4], 1
    %s2983 = scalar_lea.sflag [#allocation4], 1
    %2984 = vsyncpa %s2983, 1

// kernel: lfa_forward.5
$region0: #{lfa_forward.5}
  #allocation0 [shape = 'u32[]', space=smem, size = 0x4, offset = 0x4, fixed_abs, tag = 'smem constant byte address 0x4 - core index']
  #allocation1 [shape = 'u32[144,128]{1,0:T(1,128)}', space=vmem, size = 0x12000, scoped, tag = 'internal scratch']
  #allocation2 [shape = 'f32[1]{0:T(128)S(6)}', space=smem, size = 0x200, scoped, tag = 'scoped memory for lfa_forward.5']
  %s0 = inlined_call_operand.vmem [shape: f32[2,27,256], index: 0, kind: input, shape index: {}]
  %s1 = inlined_call_operand.vmem [shape: bf16[2,8,16,256], index: 1, kind: input, shape index: {}]
  %s2 = inlined_call_operand.vmem [shape: bf16[2,16,256], index: 2, kind: input, shape index: {}]
  %s3 = inlined_call_operand.vmem [shape: f32[16,8], index: 3, kind: input, shape index: {}]
  %s4 = inlined_call_operand.vmem [shape: f32[16,33], index: 4, kind: input, shape index: {}]
  %s5 = inlined_call_operand.vmem [shape: f32[32,17], index: 5, kind: input, shape index: {}]
  %s6 = inlined_call_operand.vmem [shape: f32[32,17], index: 6, kind: input, shape index: {}]
  %s7 = inlined_call_operand.vmem [shape: f32[8], index: 7, kind: input, shape index: {}]
  %s8 = inlined_call_operand.<no memory space> [shape: f32[1], index: 8, kind: input, shape index: {}]
  %s9 = inlined_call_operand.vmem [shape: f32[2,32,256], index: 9, kind: output, shape index: {}]
  %s10 = sld [smem:[#allocation0]]
  $region73: #{lfa_forward.5} parent=0
    _
  %s12 = ssub.s32 1, %s10
  %s13 = scalar_select 0, %s12, %s10
  %14 = sst [smem:[#allocation2]] %s8
  $region1: #{lfa_forward.5} parent=0
    #allocation3 [shape = 'u8[512]{0}', space=smem, size = 0x200, scoped, tag = 'input window, operand 7, single buffered']
    #allocation4 [shape = 's32[2]{0}', space=sflag, size = 0x8, scoped, tag = 'scoped memory for lfa_forward.5']
    %15 = vsyncpa [#allocation4], 0
    loop: start=0, step=1, limit=4
    $region2: #{lfa_forward.5} parent=1 // loop_pre_header
      _
    $region3: #{lfa_forward.5} parent=1 // loop_header
      %s17 = sphi 0, %s21
      %p18 = scmp.ge.s32.totalorder %s17, 4
      %s24 = sphi 0, %s36
      %s25 = sphi 0, %s32
      %s26 = sphi 0, %s24
      %s27 = sphi 0, %s25
      %s28 = sphi 0, %s26
      %s29 = sphi 0, %s27
      %s41 = sphi 0, %s43
      %s44 = sphi 0, %s41
      %s45 = sphi 0, %s44
      %s61 = sphi 0, %s45
      %s69 = sphi 0, %s71
      %s72 = sphi 0, %s69
      %s73 = sphi 0, %s72
      %s89 = sphi 0, %s73
      %s97 = sphi 0, %s99
      %s100 = sphi 0, %s97
      %s101 = sphi 0, %s100
      %s117 = sphi 0, %s101
      %s121 = sphi 0, %s121
      %s123 = sphi 0, %s121
      %s124 = sphi 0, %s123
      %s138 = sphi 0, %s124
      %s142 = sphi 0, %s142
      %s144 = sphi 0, %s142
      %s145 = sphi 0, %s144
      %s159 = sphi 0, %s145
      %s163 = sphi 0, %s163
      %s165 = sphi 0, %s163
      %s166 = sphi 0, %s165
      %s180 = sphi 0, %s166
      %s184 = sphi 0, %s184
      %s186 = sphi 0, %s184
      %s187 = sphi 0, %s186
      %s201 = sphi 0, %s187
      %s205 = sphi 0, %s205
      %s207 = sphi 0, %s205
      %s208 = sphi 0, %s207
      %s222 = sphi 0, %s208
      %s226 = sphi 0, %s226
      %s228 = sphi 0, %s226
      %s229 = sphi 0, %s228
      %s243 = sphi 0, %s229
      %s251 = sphi 0, %s253
      %s254 = sphi 0, %s251
      %s255 = sphi 0, %s254
      %s271 = sphi 0, %s255
    $region4: #{lfa_forward.5} parent=1 // loop_header_branch
      %20 = sbr.rel (%p18) target = $region8
    $region5: #{lfa_forward.5} parent=1 // loop_body
      %s22 = ssub.s32 %s17, 1
      %s23 = ssub.s32 %s17, 2
      %s30 = sadd.s32 1, %s25
      %p31 = scmp.ge.s32.totalorder %s30, 1
      %s32 = scalar_select %p31, 0, %s30
      %s33 = sadd.s32 1, %s24
      %s34 = scalar_select %p31, %s33, %s24
      %p35 = scmp.ge.s32.totalorder %s34, 2
      %s36 = scalar_select %p35, 0, %s34
      %s37 = ssub.s32 %s24, %s36
      %s38 = ssub.s32 %s25, %s32
      %s39 = sor.u32 %s37, %s38
      %p40 = scmp.eq.s32.totalorder %s39, 0
      %s42 = sadd.s32 %s41, 1
      %s43 = scalar_select %p40, %s41, %s42
      %p46 = pneg %p40
      %p47 = scmp.eq.s32.totalorder %s17, 1
      %p48 = por %p46, %p47
      %p49 = scmp.ne.s32.totalorder %s41, %s44
      %p50 = scmp.eq.s32.totalorder %s17, 0
      %p51 = por %p49, %p50
      %p52 = scmp.ne.s32.totalorder %s41, %s44
      %p53 = scmp.eq.s32.totalorder %s22, 1
      %p54 = por %p52, %p53
      %p55 = scmp.ne.s32.totalorder %s44, %s45
      %p56 = scmp.eq.s32.totalorder %s22, 0
      %p57 = por %p55, %p56
      %p58 = scmp.ne.s32.totalorder %s44, %s45
      %p59 = scmp.eq.s32.totalorder %s23, 1
      %p60 = por %p58, %p59
      %p62 = scmp.ne.s32.totalorder %s45, %s61
      %p63 = scmp.eq.s32.totalorder %s23, 0
      %p64 = por %p62, %p63
      %s65 = ssub.s32 %s24, %s36
      %s66 = ssub.s32 %s25, %s32
      %s67 = sor.u32 %s65, %s66
      %p68 = scmp.eq.s32.totalorder %s67, 0
      %s70 = sadd.s32 %s69, 1
      %s71 = scalar_select %p68, %s69, %s70
      %p74 = pneg %p68
      %p75 = scmp.eq.s32.totalorder %s17, 1
      %p76 = por %p74, %p75
      %p77 = scmp.ne.s32.totalorder %s69, %s72
      %p78 = scmp.eq.s32.totalorder %s17, 0
      %p79 = por %p77, %p78
      %p80 = scmp.ne.s32.totalorder %s69, %s72
      %p81 = scmp.eq.s32.totalorder %s22, 1
      %p82 = por %p80, %p81
      %p83 = scmp.ne.s32.totalorder %s72, %s73
      %p84 = scmp.eq.s32.totalorder %s22, 0
      %p85 = por %p83, %p84
      %p86 = scmp.ne.s32.totalorder %s72, %s73
      %p87 = scmp.eq.s32.totalorder %s23, 1
      %p88 = por %p86, %p87
      %p90 = scmp.ne.s32.totalorder %s73, %s89
      %p91 = scmp.eq.s32.totalorder %s23, 0
      %p92 = por %p90, %p91
      %s93 = ssub.s32 %s24, %s36
      %s94 = ssub.s32 %s25, %s32
      %s95 = sor.u32 %s93, %s94
      %p96 = scmp.eq.s32.totalorder %s95, 0
      %s98 = sadd.s32 %s97, 1
      %s99 = scalar_select %p96, %s97, %s98
      %p102 = pneg %p96
      %p103 = scmp.eq.s32.totalorder %s17, 1
      %p104 = por %p102, %p103
      %p105 = scmp.ne.s32.totalorder %s97, %s100
      %p106 = scmp.eq.s32.totalorder %s17, 0
      %p107 = por %p105, %p106
      %p108 = scmp.ne.s32.totalorder %s97, %s100
      %p109 = scmp.eq.s32.totalorder %s22, 1
      %p110 = por %p108, %p109
      %p111 = scmp.ne.s32.totalorder %s100, %s101
      %p112 = scmp.eq.s32.totalorder %s22, 0
      %p113 = por %p111, %p112
      %p114 = scmp.ne.s32.totalorder %s100, %s101
      %p115 = scmp.eq.s32.totalorder %s23, 1
      %p116 = por %p114, %p115
      %p118 = scmp.ne.s32.totalorder %s101, %s117
      %p119 = scmp.eq.s32.totalorder %s23, 0
      %p120 = por %p118, %p119
      %s122 = sadd.s32 %s121, 1
      %p125 = scmp.eq.s32.totalorder %s17, 1
      %p126 = scmp.ne.s32.totalorder %s121, %s123
      %p127 = scmp.eq.s32.totalorder %s17, 0
      %p128 = por %p126, %p127
      %p129 = scmp.ne.s32.totalorder %s121, %s123
      %p130 = scmp.eq.s32.totalorder %s22, 1
      %p131 = por %p129, %p130
      %p132 = scmp.ne.s32.totalorder %s123, %s124
      %p133 = scmp.eq.s32.totalorder %s22, 0
      %p134 = por %p132, %p133
      %p135 = scmp.ne.s32.totalorder %s123, %s124
      %p136 = scmp.eq.s32.totalorder %s23, 1
      %p137 = por %p135, %p136
      %p139 = scmp.ne.s32.totalorder %s124, %s138
      %p140 = scmp.eq.s32.totalorder %s23, 0
      %p141 = por %p139, %p140
      %s143 = sadd.s32 %s142, 1
      %p146 = scmp.eq.s32.totalorder %s17, 1
      %p147 = scmp.ne.s32.totalorder %s142, %s144
      %p148 = scmp.eq.s32.totalorder %s17, 0
      %p149 = por %p147, %p148
      %p150 = scmp.ne.s32.totalorder %s142, %s144
      %p151 = scmp.eq.s32.totalorder %s22, 1
      %p152 = por %p150, %p151
      %p153 = scmp.ne.s32.totalorder %s144, %s145
      %p154 = scmp.eq.s32.totalorder %s22, 0
      %p155 = por %p153, %p154
      %p156 = scmp.ne.s32.totalorder %s144, %s145
      %p157 = scmp.eq.s32.totalorder %s23, 1
      %p158 = por %p156, %p157
      %p160 = scmp.ne.s32.totalorder %s145, %s159
      %p161 = scmp.eq.s32.totalorder %s23, 0
      %p162 = por %p160, %p161
      %s164 = sadd.s32 %s163, 1
      %p167 = scmp.eq.s32.totalorder %s17, 1
      %p168 = scmp.ne.s32.totalorder %s163, %s165
      %p169 = scmp.eq.s32.totalorder %s17, 0
      %p170 = por %p168, %p169
      %p171 = scmp.ne.s32.totalorder %s163, %s165
      %p172 = scmp.eq.s32.totalorder %s22, 1
      %p173 = por %p171, %p172
      %p174 = scmp.ne.s32.totalorder %s165, %s166
      %p175 = scmp.eq.s32.totalorder %s22, 0
      %p176 = por %p174, %p175
      %p177 = scmp.ne.s32.totalorder %s165, %s166
      %p178 = scmp.eq.s32.totalorder %s23, 1
      %p179 = por %p177, %p178
      %p181 = scmp.ne.s32.totalorder %s166, %s180
      %p182 = scmp.eq.s32.totalorder %s23, 0
      %p183 = por %p181, %p182
      %s185 = sadd.s32 %s184, 1
      %p188 = scmp.eq.s32.totalorder %s17, 1
      %p189 = scmp.ne.s32.totalorder %s184, %s186
      %p190 = scmp.eq.s32.totalorder %s17, 0
      %p191 = por %p189, %p190
      %p192 = scmp.ne.s32.totalorder %s184, %s186
      %p193 = scmp.eq.s32.totalorder %s22, 1
      %p194 = por %p192, %p193
      %p195 = scmp.ne.s32.totalorder %s186, %s187
      %p196 = scmp.eq.s32.totalorder %s22, 0
      %p197 = por %p195, %p196
      %p198 = scmp.ne.s32.totalorder %s186, %s187
      %p199 = scmp.eq.s32.totalorder %s23, 1
      %p200 = por %p198, %p199
      %p202 = scmp.ne.s32.totalorder %s187, %s201
      %p203 = scmp.eq.s32.totalorder %s23, 0
      %p204 = por %p202, %p203
      %s206 = sadd.s32 %s205, 1
      %p209 = scmp.eq.s32.totalorder %s17, 1
      %p210 = scmp.ne.s32.totalorder %s205, %s207
      %p211 = scmp.eq.s32.totalorder %s17, 0
      %p212 = por %p210, %p211
      %p213 = scmp.ne.s32.totalorder %s205, %s207
      %p214 = scmp.eq.s32.totalorder %s22, 1
      %p215 = por %p213, %p214
      %p216 = scmp.ne.s32.totalorder %s207, %s208
      %p217 = scmp.eq.s32.totalorder %s22, 0
      %p218 = por %p216, %p217
      %p219 = scmp.ne.s32.totalorder %s207, %s208
      %p220 = scmp.eq.s32.totalorder %s23, 1
      %p221 = por %p219, %p220
      %p223 = scmp.ne.s32.totalorder %s208, %s222
      %p224 = scmp.eq.s32.totalorder %s23, 0
      %p225 = por %p223, %p224
      %s227 = sadd.s32 %s226, 1
      %p230 = scmp.eq.s32.totalorder %s17, 1
      %p231 = scmp.ne.s32.totalorder %s226, %s228
      %p232 = scmp.eq.s32.totalorder %s17, 0
      %p233 = por %p231, %p232
      %p234 = scmp.ne.s32.totalorder %s226, %s228
      %p235 = scmp.eq.s32.totalorder %s22, 1
      %p236 = por %p234, %p235
      %p237 = scmp.ne.s32.totalorder %s228, %s229
      %p238 = scmp.eq.s32.totalorder %s22, 0
      %p239 = por %p237, %p238
      %p240 = scmp.ne.s32.totalorder %s228, %s229
      %p241 = scmp.eq.s32.totalorder %s23, 1
      %p242 = por %p240, %p241
      %p244 = scmp.ne.s32.totalorder %s229, %s243
      %p245 = scmp.eq.s32.totalorder %s23, 0
      %p246 = por %p244, %p245
      %s247 = ssub.s32 %s24, %s36
      %s248 = ssub.s32 %s25, %s32
      %s249 = sor.u32 %s247, %s248
      %p250 = scmp.eq.s32.totalorder %s249, 0
      %s252 = sadd.s32 %s251, 1
      %s253 = scalar_select %p250, %s251, %s252
      %p256 = pneg %p250
      %p257 = scmp.eq.s32.totalorder %s17, 1
      %p258 = por %p256, %p257
      %p259 = scmp.ne.s32.totalorder %s251, %s254
      %p260 = scmp.eq.s32.totalorder %s17, 0
      %p261 = por %p259, %p260
      %p262 = scmp.ne.s32.totalorder %s251, %s254
      %p263 = scmp.eq.s32.totalorder %s22, 1
      %p264 = por %p262, %p263
      %p265 = scmp.ne.s32.totalorder %s254, %s255
      %p266 = scmp.eq.s32.totalorder %s22, 0
      %p267 = por %p265, %p266
      %p268 = scmp.ne.s32.totalorder %s254, %s255
      %p269 = scmp.eq.s32.totalorder %s23, 1
      %p270 = por %p268, %p269
      %p272 = scmp.ne.s32.totalorder %s255, %s271
      %p273 = scmp.eq.s32.totalorder %s23, 0
      %p274 = por %p272, %p273
      %p275 = scmp.le.s32.totalorder 1, %s17
      %p276 = scmp.lt.s32.totalorder %s17, 3
      %p277 = pnand %p275, %p276
      %p278 = pneg %p277
      // Predicated region
      $region9: #{lfa_forward.5} parent=5 // pred_check
        _
      $region10: #{lfa_forward.5} parent=5 // pred_check_branch
        %280 = sbr.rel (%p277) target = $region12
      $region11: #{lfa_forward.5} parent=5 // pred_region
        %s281 = ssub.s32 %s17, 1
        // Predicated region
        $region13: #{lfa_forward.5} parent=11 // pred_check
          %p282 = pneg %p134
        $region14: #{lfa_forward.5} parent=11 // pred_check_branch
          %284 = sbr.rel (%p282) target = $region16
        $region15: #{lfa_forward.5} parent=11 // pred_region
          _
        $region16: #{lfa_forward.5} parent=11 // pred_fallthru
          _
        // Predicated region
        $region17: #{lfa_forward.5} parent=11 // pred_check
          %p285 = pneg %p155
        $region18: #{lfa_forward.5} parent=11 // pred_check_branch
          %287 = sbr.rel (%p285) target = $region20
        $region19: #{lfa_forward.5} parent=11 // pred_region
          _
        $region20: #{lfa_forward.5} parent=11 // pred_fallthru
          _
        // Predicated region
        $region21: #{lfa_forward.5} parent=11 // pred_check
          %p288 = pneg %p176
        $region22: #{lfa_forward.5} parent=11 // pred_check_branch
          %290 = sbr.rel (%p288) target = $region24
        $region23: #{lfa_forward.5} parent=11 // pred_region
          _
        $region24: #{lfa_forward.5} parent=11 // pred_fallthru
          _
        // Predicated region
        $region25: #{lfa_forward.5} parent=11 // pred_check
          %p291 = pneg %p197
        $region26: #{lfa_forward.5} parent=11 // pred_check_branch
          %293 = sbr.rel (%p291) target = $region28
        $region27: #{lfa_forward.5} parent=11 // pred_region
          _
        $region28: #{lfa_forward.5} parent=11 // pred_fallthru
          _
        // Predicated region
        $region29: #{lfa_forward.5} parent=11 // pred_check
          %p294 = pneg %p218
        $region30: #{lfa_forward.5} parent=11 // pred_check_branch
          %296 = sbr.rel (%p294) target = $region32
        $region31: #{lfa_forward.5} parent=11 // pred_region
          %s298 = ssub.s32 16, 16
          %299 = vsyncadd [#allocation4], %s298
          %s301 = sshll.u32 %s7, 4
          %s302 = int_to_ptr.vmem [resolvable:$true] %s301
          %304 = dma.vmem_to_smem %s302, 16, [#allocation3], [#allocation4]
        $region32: #{lfa_forward.5} parent=11 // pred_fallthru
          _
        // Predicated region
        $region33: #{lfa_forward.5} parent=11 // pred_check
          %p305 = pneg %p239
        $region34: #{lfa_forward.5} parent=11 // pred_check_branch
          %307 = sbr.rel (%p305) target = $region36
        $region35: #{lfa_forward.5} parent=11 // pred_region
          _
        $region36: #{lfa_forward.5} parent=11 // pred_fallthru
          _
      $region12: #{lfa_forward.5} parent=5 // pred_fallthru
        _
      %p308 = scmp.lt.s32.totalorder %s17, 2
      // Predicated region
      $region37: #{lfa_forward.5} parent=5 // pred_check
        %p309 = pneg %p308
      $region38: #{lfa_forward.5} parent=5 // pred_check_branch
        %311 = sbr.rel (%p309) target = $region40
      $region39: #{lfa_forward.5} parent=5 // pred_region
        // Predicated region
        $region41: #{lfa_forward.5} parent=39 // pred_check
          %p312 = pneg %p51
        $region42: #{lfa_forward.5} parent=39 // pred_check_branch
          %314 = sbr.rel (%p312) target = $region44
        $region43: #{lfa_forward.5} parent=39 // pred_region
          %s315 = smul.u32 2, %s25
          %p316 = scmp.lt.s32.totalorder %s24, 1
          %s317 = scalar_select %p316, %s24, 1
          %p318 = scmp.lt.s32.totalorder %s315, 1
          %s319 = scalar_select %p318, %s315, 1
          %s320 = smul.addr %s317, 8
          %s321 = sadd.s32 %s319, %s320
          %s322 = smul.addr %s321, 8
          %s323 = scalar_lea.vmem %s0, %s322
          %s324 = smul.u32 2, %s25
        $region44: #{lfa_forward.5} parent=39 // pred_fallthru
          _
        // Predicated region
        $region45: #{lfa_forward.5} parent=39 // pred_check
          %p325 = pneg %p79
        $region46: #{lfa_forward.5} parent=39 // pred_check_branch
          %327 = sbr.rel (%p325) target = $region48
        $region47: #{lfa_forward.5} parent=39 // pred_region
          %s328 = smul.u32 2, %s25
          %p329 = scmp.lt.s32.totalorder %s24, 1
          %s330 = scalar_select %p329, %s24, 1
          %p331 = scmp.lt.s32.totalorder %s328, 1
          %s332 = scalar_select %p331, %s328, 1
          %s333 = smul.addr %s330, 32
          %s334 = sadd.s32 %s332, %s333
          %s335 = smul.addr %s334, 4
          %s336 = scalar_lea.vmem %s1, %s335
          %s337 = smul.u32 2, %s25
        $region48: #{lfa_forward.5} parent=39 // pred_fallthru
          _
        // Predicated region
        $region49: #{lfa_forward.5} parent=39 // pred_check
          %p338 = pneg %p107
        $region50: #{lfa_forward.5} parent=39 // pred_check_branch
          %340 = sbr.rel (%p338) target = $region52
        $region51: #{lfa_forward.5} parent=39 // pred_region
          %s341 = smul.u32 2, %s25
          %p342 = scmp.lt.s32.totalorder %s24, 1
          %s343 = scalar_select %p342, %s24, 1
          %p344 = scmp.lt.s32.totalorder %s341, 1
          %s345 = scalar_select %p344, %s341, 1
          %s346 = smul.addr %s343, 4
          %s347 = sadd.s32 %s345, %s346
          %s348 = smul.addr %s347, 4
          %s349 = scalar_lea.vmem %s2, %s348
          %s350 = smul.u32 2, %s25
        $region52: #{lfa_forward.5} parent=39 // pred_fallthru
          _
      $region40: #{lfa_forward.5} parent=5 // pred_fallthru
        _
      %p351 = scmp.le.s32.totalorder 1, %s17
      %p352 = scmp.lt.s32.totalorder %s17, 3
      %p353 = pnand %p351, %p352
      %p354 = pneg %p353
      // Predicated region
      $region53: #{lfa_forward.5} parent=5 // pred_check
        _
      $region54: #{lfa_forward.5} parent=5 // pred_check_branch
        %356 = sbr.rel (%p353) target = $region56
      $region55: #{lfa_forward.5} parent=5 // pred_region
        %s357 = ssub.s32 %s17, 1
        // Predicated region
        $region57: #{lfa_forward.5} parent=55 // pred_check
          %p358 = pneg %p218
        $region58: #{lfa_forward.5} parent=55 // pred_check_branch
          %360 = sbr.rel (%p358) target = $region60
        $region59: #{lfa_forward.5} parent=55 // pred_region
          %361 = dma.done [#allocation4], 16
        $region60: #{lfa_forward.5} parent=55 // pred_fallthru
          _
        %362 = sfence
        %s363 = smul.u32 2, %s27
        %p364 = scmp.lt.s32.totalorder %s26, 1
        %s365 = scalar_select %p364, %s26, 1
        %p366 = scmp.lt.s32.totalorder %s363, 1
        %s367 = scalar_select %p366, %s363, 1
        %s368 = smul.addr %s365, 8
        %s369 = sadd.s32 %s367, %s368
        %s370 = smul.addr %s369, 8
        %s371 = scalar_lea.vmem %s0, %s370
        %p372 = pneg %p57
        %p373 = pneg %p54
        %s374 = smul.u32 2, %s27
        %p375 = scmp.lt.s32.totalorder %s26, 1
        %s376 = scalar_select %p375, %s26, 1
        %p377 = scmp.lt.s32.totalorder %s374, 1
        %s378 = scalar_select %p377, %s374, 1
        %s379 = smul.addr %s376, 32
        %s380 = sadd.s32 %s378, %s379
        %s381 = smul.addr %s380, 4
        %s382 = scalar_lea.vmem %s1, %s381
        %p383 = pneg %p85
        %p384 = pneg %p82
        %s385 = smul.u32 2, %s27
        %p386 = scmp.lt.s32.totalorder %s26, 1
        %s387 = scalar_select %p386, %s26, 1
        %p388 = scmp.lt.s32.totalorder %s385, 1
        %s389 = scalar_select %p388, %s385, 1
        %s390 = smul.addr %s387, 4
        %s391 = sadd.s32 %s389, %s390
        %s392 = smul.addr %s391, 4
        %s393 = scalar_lea.vmem %s2, %s392
        %p394 = pneg %p113
        %p395 = pneg %p110
        %p396 = pneg %p134
        %p397 = pneg %p131
        %p398 = pneg %p155
        %p399 = pneg %p152
        %p400 = pneg %p176
        %p401 = pneg %p173
        %p402 = pneg %p197
        %p403 = pneg %p194
        %p404 = pneg %p218
        %p405 = pneg %p215
        %p406 = pneg %p239
        %p407 = pneg %p236
        %p408 = pneg %p267
        %p409 = pneg %p264
        %s410 = smul.u32 2, %s27
        %p411 = scmp.lt.s32.totalorder %s26, 1
        %s412 = scalar_select %p411, %s26, 1
        %p413 = scmp.lt.s32.totalorder %s410, 1
        %s414 = scalar_select %p413, %s410, 1
        %s415 = smul.addr %s412, 8
        %s416 = sadd.s32 %s414, %s415
        %s417 = smul.addr %s416, 8
        %s418 = scalar_lea.vmem %s9, %s417
        %s419 = smul.u32 2, %s27
        %p420 = scmp.lt.s32.totalorder %s26, 1
        %s421 = scalar_select %p420, %s26, 1
        %p422 = scmp.lt.s32.totalorder %s419, 1
        %s423 = scalar_select %p422, %s419, 1
        %s424 = smul.addr %s421, 8
        %s425 = sadd.s32 %s423, %s424
        %s426 = smul.addr %s425, 8
        %s427 = scalar_lea.vmem %s0, %s426
        %s428 = smul.u32 2, %s27
        %s429 = smul.u32 2, %s27
        %p430 = scmp.lt.s32.totalorder %s26, 1
        %s431 = scalar_select %p430, %s26, 1
        %p432 = scmp.lt.s32.totalorder %s429, 1
        %s433 = scalar_select %p432, %s429, 1
        %s434 = smul.addr %s431, 32
        %s435 = sadd.s32 %s433, %s434
        %s436 = smul.addr %s435, 4
        %s437 = scalar_lea.vmem %s1, %s436
        %s438 = smul.u32 2, %s27
        %s439 = smul.u32 2, %s27
        %p440 = scmp.lt.s32.totalorder %s26, 1
        %s441 = scalar_select %p440, %s26, 1
        %p442 = scmp.lt.s32.totalorder %s439, 1
        %s443 = scalar_select %p442, %s439, 1
        %s444 = smul.addr %s441, 4
        %s445 = sadd.s32 %s443, %s444
        %s446 = smul.addr %s445, 4
        %s447 = scalar_lea.vmem %s2, %s446
        %s448 = smul.u32 2, %s27
        %s449 = smul.u32 2, %s27
        %p450 = scmp.lt.s32.totalorder %s26, 1
        %s451 = scalar_select %p450, %s26, 1
        %p452 = scmp.lt.s32.totalorder %s449, 1
        %s453 = scalar_select %p452, %s449, 1
        %s454 = smul.addr %s451, 8
        %s455 = sadd.s32 %s453, %s454
        %s456 = smul.addr %s455, 8
        %s457 = scalar_lea.vmem %s9, %s456
        %s458 = smul.u32 2, %s27
        %v459 = vld [vmem:[%s427] ss:$8 sm:$0x3]
        %s460 = scalar_lea.vmem %s427, 1
        %v461 = vld [vmem:[%s460] ss:$8 sm:$0x3]
        %s462 = scalar_lea.vmem %s427, 2
        %v463 = vld [vmem:[%s462] ss:$8 sm:$0x3]
        %v464 = vld [vmem:[%s3] sm:$0xff]
        %v465 = vld [vmem:[%s3 + $0x8] sm:$0xff]
        %v466 = vld [vmem:[%s4] sm:$0xff]
        %v467 = vld [vmem:[%s4 + $0x8] sm:$0xff]
        %469 = vset.pattern.permute.xlu0 1
        %470 = vperm.xlu0 %469, %v464
        %v471 = vpop.permute.xlu0 %470
        %474 = vset.pattern.permute.xlu0 1
        %475 = vperm.xlu0 %474, %v465
        %v476 = vpop.permute.xlu0 %475
        %v479 = vlaneseq
        %v480 = vshrl.u32 %v479, 7
        %v481 = vsub.s32 0, %v480
        %v482 = vrot.slane %v459, %v481
        %v483 = vlaneseq
        %v484 = vshrl.u32 %v483, 7
        %v485 = vsub.s32 1, %v484
        %v486 = vrot.slane %v459, %v485
        %v489 = vmul.f32 %v471, %v482
        %v490 = vmul.f32 %v471, %v486
        %v491 = vmul.f32 %v476, %v482
        %v492 = vmul.f32 %v476, %v486
        %493 = vset.pattern.permute.xlu0 2
        %494 = vperm.xlu0 %493, %v464
        %v495 = vpop.permute.xlu0 %494
        %497 = vset.pattern.permute.xlu0 2
        %498 = vperm.xlu0 %497, %v465
        %v499 = vpop.permute.xlu0 %498
        %v502 = vlaneseq
        %v503 = vshrl.u32 %v502, 7
        %v504 = vsub.s32 0, %v503
        %v505 = vrot.slane %v461, %v504
        %v506 = vlaneseq
        %v507 = vshrl.u32 %v506, 7
        %v508 = vsub.s32 1, %v507
        %v509 = vrot.slane %v461, %v508
        %v512 = vmul.f32 %v495, %v505
        %v513 = vmul.f32 %v495, %v509
        %v514 = vmul.f32 %v499, %v505
        %v515 = vmul.f32 %v499, %v509
        %v516 = vadd.f32 %v489, %v512
        %v517 = vadd.f32 %v490, %v513
        %v518 = vadd.f32 %v491, %v514
        %v519 = vadd.f32 %v492, %v515
        %520 = vset.pattern.permute.xlu0 3
        %521 = vperm.xlu0 %520, %v464
        %v522 = vpop.permute.xlu0 %521
        %524 = vset.pattern.permute.xlu0 3
        %525 = vperm.xlu0 %524, %v465
        %v526 = vpop.permute.xlu0 %525
        %v529 = vlaneseq
        %v530 = vshrl.u32 %v529, 7
        %v531 = vsub.s32 0, %v530
        %v532 = vrot.slane %v463, %v531
        %v533 = vlaneseq
        %v534 = vshrl.u32 %v533, 7
        %v535 = vsub.s32 1, %v534
        %v536 = vrot.slane %v463, %v535
        %v539 = vmul.f32 %v522, %v532
        %v540 = vmul.f32 %v522, %v536
        %v541 = vmul.f32 %v526, %v532
        %v542 = vmul.f32 %v526, %v536
        %v543 = vadd.f32 %v516, %v539
        %v544 = vadd.f32 %v517, %v540
        %v545 = vadd.f32 %v518, %v541
        %v546 = vadd.f32 %v519, %v542
        %547 = vset.pattern.permute.xlu0 7
        %548 = vperm.xlu0 %547, %v464
        %v549 = vpop.permute.xlu0 %548
        %551 = vset.pattern.permute.xlu0 7
        %552 = vperm.xlu0 %551, %v465
        %v553 = vpop.permute.xlu0 %552
        %v555 = vadd.f32 %v543, %v549
        %v556 = vadd.f32 %v544, %v549
        %v557 = vadd.f32 %v545, %v553
        %v558 = vadd.f32 %v546, %v553
        %s559 = scalar_lea.vmem %s427, 3
        %v560 = vld [vmem:[%s559] ss:$8 sm:$0x3]
        %s561 = scalar_lea.vmem %s427, 4
        %v562 = vld [vmem:[%s561] ss:$8 sm:$0x3]
        %s563 = scalar_lea.vmem %s427, 5
        %v564 = vld [vmem:[%s563] ss:$8 sm:$0x3]
        %v565 = vsub.f32 %v459, %v560
        %v566 = vsub.f32 %v461, %v562
        %v567 = vsub.f32 %v463, %v564
        %v568 = vmul.f32 %v565, %v565
        %v569 = vmul.f32 %v566, %v566
        %v570 = vadd.f32 %v568, %v569
        %v571 = vmul.f32 %v567, %v567
        %v572 = vadd.f32 %v570, %v571
        %v573 = vrsqrt.pop %v572
        %v574 = vmul.f32 %v572, %v573
        %vm575 = vcmp.eq.f32.partialorder %v572, inf
        %v576 = vsel %vm575, %v572, %v574
        %vm577 = vcmp.eq.f32.partialorder %v572, 0.0
        %v578 = vand.u32 %v572, 2147483648
        %v579 = vsel %vm577, %v578, %v576
        %580 = vset.pattern.permute.xlu0 0
        %581 = vperm.xlu0 %580, %v464
        %v582 = vpop.permute.xlu0 %581
        %584 = vset.pattern.permute.xlu0 0
        %585 = vperm.xlu0 %584, %v465
        %v586 = vpop.permute.xlu0 %585
        %v589 = vlaneseq
        %v590 = vshrl.u32 %v589, 7
        %v591 = vsub.s32 0, %v590
        %v592 = vrot.slane %v579, %v591
        %v593 = vlaneseq
        %v594 = vshrl.u32 %v593, 7
        %v595 = vsub.s32 1, %v594
        %v596 = vrot.slane %v579, %v595
        %v599 = vmul.f32 %v582, %v592
        %v600 = vmul.f32 %v582, %v596
        %v601 = vmul.f32 %v586, %v592
        %v602 = vmul.f32 %v586, %v596
        %v603 = vadd.f32 %v555, %v599
        %v604 = vadd.f32 %v556, %v600
        %v605 = vadd.f32 %v557, %v601
        %v606 = vadd.f32 %v558, %v602
        %607 = vset.pattern.permute.xlu0 4
        %608 = vperm.xlu0 %607, %v464
        %v609 = vpop.permute.xlu0 %608
        %611 = vset.pattern.permute.xlu0 4
        %612 = vperm.xlu0 %611, %v465
        %v613 = vpop.permute.xlu0 %612
        %v616 = vlaneseq
        %v617 = vshrl.u32 %v616, 7
        %v618 = vsub.s32 0, %v617
        %v619 = vrot.slane %v560, %v618
        %v620 = vlaneseq
        %v621 = vshrl.u32 %v620, 7
        %v622 = vsub.s32 1, %v621
        %v623 = vrot.slane %v560, %v622
        %v626 = vmul.f32 %v609, %v619
        %v627 = vmul.f32 %v609, %v623
        %v628 = vmul.f32 %v613, %v619
        %v629 = vmul.f32 %v613, %v623
        %v630 = vadd.f32 %v603, %v626
        %v631 = vadd.f32 %v604, %v627
        %v632 = vadd.f32 %v605, %v628
        %v633 = vadd.f32 %v606, %v629
        %634 = vset.pattern.permute.xlu0 5
        %635 = vperm.xlu0 %634, %v464
        %v636 = vpop.permute.xlu0 %635
        %638 = vset.pattern.permute.xlu0 5
        %639 = vperm.xlu0 %638, %v465
        %v640 = vpop.permute.xlu0 %639
        %v643 = vlaneseq
        %v644 = vshrl.u32 %v643, 7
        %v645 = vsub.s32 0, %v644
        %v646 = vrot.slane %v562, %v645
        %v647 = vlaneseq
        %v648 = vshrl.u32 %v647, 7
        %v649 = vsub.s32 1, %v648
        %v650 = vrot.slane %v562, %v649
        %v653 = vmul.f32 %v636, %v646
        %v654 = vmul.f32 %v636, %v650
        %v655 = vmul.f32 %v640, %v646
        %v656 = vmul.f32 %v640, %v650
        %v657 = vadd.f32 %v630, %v653
        %v658 = vadd.f32 %v631, %v654
        %v659 = vadd.f32 %v632, %v655
        %v660 = vadd.f32 %v633, %v656
        %661 = vset.pattern.permute.xlu0 6
        %662 = vperm.xlu0 %661, %v464
        %v663 = vpop.permute.xlu0 %662
        %665 = vset.pattern.permute.xlu0 6
        %666 = vperm.xlu0 %665, %v465
        %v667 = vpop.permute.xlu0 %666
        %v670 = vlaneseq
        %v671 = vshrl.u32 %v670, 7
        %v672 = vsub.s32 0, %v671
        %v673 = vrot.slane %v564, %v672
        %v674 = vlaneseq
        %v675 = vshrl.u32 %v674, 7
        %v676 = vsub.s32 1, %v675
        %v677 = vrot.slane %v564, %v676
        %v680 = vmul.f32 %v663, %v673
        %v681 = vmul.f32 %v663, %v677
        %v682 = vmul.f32 %v667, %v673
        %v683 = vmul.f32 %v667, %v677
        %v684 = vadd.f32 %v657, %v680
        %v685 = vadd.f32 %v658, %v681
        %v686 = vadd.f32 %v659, %v682
        %v687 = vadd.f32 %v660, %v683
        %v688 = vmax.f32 %v684, 0.0
        %v689 = vmax.f32 %v685, 0.0
        %v690 = vmax.f32 %v686, 0.0
        %v691 = vmax.f32 %v687, 0.0
        %v692 = vld [vmem:[%s437] sm:$0xff]
        %v693 = vld [vmem:[%s437 + $0x8] sm:$0xff]
        %v694 = vunpack.c.l.bf16 %v692
        %v695 = vunpack.c.h.bf16 %v692
        %v696 = vunpack.c.l.bf16 %v693
        %v697 = vunpack.c.h.bf16 %v693
        %700 = vrot.lane.b32.xlu0 %v466, 112
        %v701 = vpop.permute.xlu0 %700
        %702 = vrot.lane.b32.xlu0 %v467, 112
        %v703 = vpop.permute.xlu0 %702
        %vm704 = vcmask 130048
        %v705 = vsel %vm704, %v701, 0
        %v707 = vsel %vm704, %v703, 0
        %709 = vmatprep.subr.mxu0 %v689
        %710 = vmatpush1.msra.mxu0 %v688
        %711 = vmatprep.subr.mxu0 %v691
        %712 = vmatpush1.msra.mxu0 %v690
        %713 = vmatprep.subr.mxu0 0.0
        %714 = vmatpush1.msra.mxu0 0.0
        %715 = vmatprep.subr.mxu0 0.0
        %716 = vmatpush1.msra.mxu0 0.0
        %717 = vmatprep.subr.mxu0 0.0
        %718 = vmatpush1.msra.mxu0 0.0
        %719 = vmatprep.subr.mxu0 0.0
        %720 = vmatpush1.msra.mxu0 0.0
        %721 = vmatprep.subr.mxu0 0.0
        %722 = vmatpush1.msra.mxu0 0.0
        %723 = vmatprep.subr.mxu0 0.0
        %724 = vmatpush1.msra.mxu0 0.0
        %725 = vmatprep.subr.mxu0 0.0
        %726 = vmatpush1.msra.mxu0 0.0
        %727 = vmatprep.subr.mxu0 0.0
        %728 = vmatpush1.msra.mxu0 0.0
        %729 = vmatprep.subr.mxu0 0.0
        %730 = vmatpush1.msra.mxu0 0.0
        %731 = vmatprep.subr.mxu0 0.0
        %732 = vmatpush1.msra.mxu0 0.0
        %733 = vmatprep.subr.mxu0 0.0
        %734 = vmatpush1.msra.mxu0 0.0
        %735 = vmatprep.subr.mxu0 0.0
        %736 = vmatpush1.msra.mxu0 0.0
        %737 = vmatprep.subr.mxu0 0.0
        %738 = vmatpush1.msra.mxu0 0.0
        %739 = vmatprep.subr.mxu0 0.0
        %740 = vmatpush1.msra.mxu0 0.0
        %741 = vmatprep.subr.mxu0 0.0
        %742 = vmatpush1.msra.mxu0 0.0
        %743 = vmatprep.subr.mxu0 0.0
        %744 = vmatpush1.msra.mxu0 0.0
        %745 = vmatprep.subr.mxu0 0.0
        %746 = vmatpush1.msra.mxu0 0.0
        %747 = vmatprep.subr.mxu0 0.0
        %748 = vmatpush1.msra.mxu0 0.0
        %749 = vmatprep.subr.mxu0 0.0
        %750 = vmatpush1.msra.mxu0 0.0
        %751 = vmatprep.subr.mxu0 0.0
        %752 = vmatpush1.msra.mxu0 0.0
        %753 = vmatprep.subr.mxu0 0.0
        %754 = vmatpush1.msra.mxu0 0.0
        %755 = vmatprep.subr.mxu0 0.0
        %756 = vmatpush1.msra.mxu0 0.0
        %757 = vmatprep.subr.mxu0 0.0
        %758 = vmatpush1.msra.mxu0 0.0
        %759 = vmatprep.subr.mxu0 0.0
        %760 = vmatpush1.msra.mxu0 0.0
        %761 = vmatprep.subr.mxu0 0.0
        %762 = vmatpush1.msra.mxu0 0.0
        %763 = vmatprep.subr.mxu0 0.0
        %764 = vmatpush1.msra.mxu0 0.0
        %765 = vmatprep.subr.mxu0 0.0
        %766 = vmatpush1.msra.mxu0 0.0
        %767 = vmatprep.subr.mxu0 0.0
        %768 = vmatpush1.msra.mxu0 0.0
        %769 = vmatprep.subr.mxu0 0.0
        %770 = vmatpush1.msra.mxu0 0.0
        %771 = vmatprep.subr.mxu0 0.0
        %772 = vmatpush1.msra.mxu0 0.0
        %773 = vmatprep.mubr.f32.mxu0 0.0
        %774 = vmatmul.mubr.f32.gmra.mrb[0].mxu0 %v705
        %v775 = vpop.f32.mrb[0].mxu0
        %v776 = vadd.f32 0.0, %v775
        %v777 = vpop.f32.mrb[0].mxu0
        %v778 = vadd.f32 0.0, %v777
        %779 = vmatprep.mubr.f32.mxu0 0.0
        %780 = vmatmul.mubr.f32.gmra.mrb[0].mxu0 %v707
        %v781 = vpop.f32.mrb[0].mxu0
        %v782 = vadd.f32 0.0, %v781
        %v783 = vpop.f32.mrb[0].mxu0
        %v784 = vadd.f32 0.0, %v783
        %785 = vdwg.mxu0
        %v786 = vsel %vm704, %v466, 0
        %v788 = vsel %vm704, %v467, 0
        %790 = vmatprep.subr.mxu0 %v695
        %791 = vmatpush1.msra.mxu0 %v694
        %792 = vmatprep.subr.mxu0 %v697
        %793 = vmatpush1.msra.mxu0 %v696
        %794 = vmatprep.subr.mxu0 0.0
        %795 = vmatpush1.msra.mxu0 0.0
        %796 = vmatprep.subr.mxu0 0.0
        %797 = vmatpush1.msra.mxu0 0.0
        %798 = vmatprep.subr.mxu0 0.0
        %799 = vmatpush1.msra.mxu0 0.0
        %800 = vmatprep.subr.mxu0 0.0
        %801 = vmatpush1.msra.mxu0 0.0
        %802 = vmatprep.subr.mxu0 0.0
        %803 = vmatpush1.msra.mxu0 0.0
        %804 = vmatprep.subr.mxu0 0.0
        %805 = vmatpush1.msra.mxu0 0.0
        %806 = vmatprep.subr.mxu0 0.0
        %807 = vmatpush1.msra.mxu0 0.0
        %808 = vmatprep.subr.mxu0 0.0
        %809 = vmatpush1.msra.mxu0 0.0
        %810 = vmatprep.subr.mxu0 0.0
        %811 = vmatpush1.msra.mxu0 0.0
        %812 = vmatprep.subr.mxu0 0.0
        %813 = vmatpush1.msra.mxu0 0.0
        %814 = vmatprep.subr.mxu0 0.0
        %815 = vmatpush1.msra.mxu0 0.0
        %816 = vmatprep.subr.mxu0 0.0
        %817 = vmatpush1.msra.mxu0 0.0
        %818 = vmatprep.subr.mxu0 0.0
        %819 = vmatpush1.msra.mxu0 0.0
        %820 = vmatprep.subr.mxu0 0.0
        %821 = vmatpush1.msra.mxu0 0.0
        %822 = vmatprep.subr.mxu0 0.0
        %823 = vmatpush1.msra.mxu0 0.0
        %824 = vmatprep.subr.mxu0 0.0
        %825 = vmatpush1.msra.mxu0 0.0
        %826 = vmatprep.subr.mxu0 0.0
        %827 = vmatpush1.msra.mxu0 0.0
        %828 = vmatprep.subr.mxu0 0.0
        %829 = vmatpush1.msra.mxu0 0.0
        %830 = vmatprep.subr.mxu0 0.0
        %831 = vmatpush1.msra.mxu0 0.0
        %832 = vmatprep.subr.mxu0 0.0
        %833 = vmatpush1.msra.mxu0 0.0
        %834 = vmatprep.subr.mxu0 0.0
        %835 = vmatpush1.msra.mxu0 0.0
        %836 = vmatprep.subr.mxu0 0.0
        %837 = vmatpush1.msra.mxu0 0.0
        %838 = vmatprep.subr.mxu0 0.0
        %839 = vmatpush1.msra.mxu0 0.0
        %840 = vmatprep.subr.mxu0 0.0
        %841 = vmatpush1.msra.mxu0 0.0
        %842 = vmatprep.subr.mxu0 0.0
        %843 = vmatpush1.msra.mxu0 0.0
        %844 = vmatprep.subr.mxu0 0.0
        %845 = vmatpush1.msra.mxu0 0.0
        %846 = vmatprep.subr.mxu0 0.0
        %847 = vmatpush1.msra.mxu0 0.0
        %848 = vmatprep.subr.mxu0 0.0
        %849 = vmatpush1.msra.mxu0 0.0
        %850 = vmatprep.subr.mxu0 0.0
        %851 = vmatpush1.msra.mxu0 0.0
        %852 = vmatprep.subr.mxu0 0.0
        %853 = vmatpush1.msra.mxu0 0.0
        %854 = vmatprep.mubr.f32.mxu0 0.0
        %855 = vmatmul.mubr.f32.gmra.mrb[0].mxu0 %v786
        %v856 = vpop.f32.mrb[0].mxu0
        %v857 = vadd.f32 %v776, %v856
        %v858 = vpop.f32.mrb[0].mxu0
        %v859 = vadd.f32 %v778, %v858
        %860 = vmatprep.mubr.f32.mxu0 0.0
        %861 = vmatmul.mubr.f32.gmra.mrb[0].mxu0 %v788
        %v862 = vpop.f32.mrb[0].mxu0
        %v863 = vadd.f32 %v782, %v862
        %v864 = vpop.f32.mrb[0].mxu0
        %v865 = vadd.f32 %v784, %v864
        %866 = vdwg.mxu0
        %867 = vset.pattern.permute.xlu0 32
        %868 = vperm.xlu0 %867, %v466
        %v869 = vpop.permute.xlu0 %868
        %871 = vset.pattern.permute.xlu0 32
        %872 = vperm.xlu0 %871, %v467
        %v873 = vpop.permute.xlu0 %872
        %v875 = vadd.f32 %v857, %v869
        %v876 = vadd.f32 %v859, %v869
        %v877 = vadd.f32 %v863, %v873
        %v878 = vadd.f32 %v865, %v873
        %v879 = vmax.f32 %v875, 0.0
        %v880 = vmax.f32 %v876, 0.0
        %v881 = vmax.f32 %v877, 0.0
        %v882 = vmax.f32 %v878, 0.0
        %s883 = sld [smem:[#allocation3]]
        %v884 = vstv %s883
        %v885 = vmul.f32 %v884, %v879
        %v886 = vmul.f32 %v884, %v880
        %v887 = vmul.f32 %v884, %v881
        %v888 = vmul.f32 %v884, %v882
        %s889 = scalar_lea.vmem %s427, 6
        %v890 = vld [vmem:[%s889] ss:$8 sm:$0x3]
        %s891 = scalar_lea.vmem %s427, 7
        %v892 = vld [vmem:[%s891] ss:$8 sm:$0x3]
        %s893 = scalar_lea.vmem %s427, 16
        %v894 = vld [vmem:[%s893] ss:$8 sm:$0x3]
        %v895 = vsub.f32 %v459, %v890
        %v896 = vsub.f32 %v461, %v892
        %v897 = vsub.f32 %v463, %v894
        %v898 = vmul.f32 %v895, %v895
        %v899 = vmul.f32 %v896, %v896
        %v900 = vadd.f32 %v898, %v899
        %v901 = vmul.f32 %v897, %v897
        %v902 = vadd.f32 %v900, %v901
        %v903 = vrsqrt.pop %v902
        %v904 = vmul.f32 %v902, %v903
        %vm905 = vcmp.eq.f32.partialorder %v902, inf
        %v906 = vsel %vm905, %v902, %v904
        %vm907 = vcmp.eq.f32.partialorder %v902, 0.0
        %v908 = vand.u32 %v902, 2147483648
        %v909 = vsel %vm907, %v908, %v906
        %v911 = vlaneseq
        %v912 = vshrl.u32 %v911, 7
        %v913 = vsub.s32 0, %v912
        %v914 = vrot.slane %v909, %v913
        %v915 = vlaneseq
        %v916 = vshrl.u32 %v915, 7
        %v917 = vsub.s32 1, %v916
        %v918 = vrot.slane %v909, %v917
        %v921 = vmul.f32 %v582, %v914
        %v922 = vmul.f32 %v582, %v918
        %v923 = vmul.f32 %v586, %v914
        %v924 = vmul.f32 %v586, %v918
        %v925 = vadd.f32 %v555, %v921
        %v926 = vadd.f32 %v556, %v922
        %v927 = vadd.f32 %v557, %v923
        %v928 = vadd.f32 %v558, %v924
        %v930 = vlaneseq
        %v931 = vshrl.u32 %v930, 7
        %v932 = vsub.s32 0, %v931
        %v933 = vrot.slane %v890, %v932
        %v934 = vlaneseq
        %v935 = vshrl.u32 %v934, 7
        %v936 = vsub.s32 1, %v935
        %v937 = vrot.slane %v890, %v936
        %v940 = vmul.f32 %v609, %v933
        %v941 = vmul.f32 %v609, %v937
        %v942 = vmul.f32 %v613, %v933
        %v943 = vmul.f32 %v613, %v937
        %v944 = vadd.f32 %v925, %v940
        %v945 = vadd.f32 %v926, %v941
        %v946 = vadd.f32 %v927, %v942
        %v947 = vadd.f32 %v928, %v943
        %v949 = vlaneseq
        %v950 = vshrl.u32 %v949, 7
        %v951 = vsub.s32 0, %v950
        %v952 = vrot.slane %v892, %v951
        %v953 = vlaneseq
        %v954 = vshrl.u32 %v953, 7
        %v955 = vsub.s32 1, %v954
        %v956 = vrot.slane %v892, %v955
        %v959 = vmul.f32 %v636, %v952
        %v960 = vmul.f32 %v636, %v956
        %v961 = vmul.f32 %v640, %v952
        %v962 = vmul.f32 %v640, %v956
        %v963 = vadd.f32 %v944, %v959
        %v964 = vadd.f32 %v945, %v960
        %v965 = vadd.f32 %v946, %v961
        %v966 = vadd.f32 %v947, %v962
        %v968 = vlaneseq
        %v969 = vshrl.u32 %v968, 7
        %v970 = vsub.s32 0, %v969
        %v971 = vrot.slane %v894, %v970
        %v972 = vlaneseq
        %v973 = vshrl.u32 %v972, 7
        %v974 = vsub.s32 1, %v973
        %v975 = vrot.slane %v894, %v974
        %v978 = vmul.f32 %v663, %v971
        %v979 = vmul.f32 %v663, %v975
        %v980 = vmul.f32 %v667, %v971
        %v981 = vmul.f32 %v667, %v975
        %v982 = vadd.f32 %v963, %v978
        %v983 = vadd.f32 %v964, %v979
        %v984 = vadd.f32 %v965, %v980
        %v985 = vadd.f32 %v966, %v981
        %v986 = vmax.f32 %v982, 0.0
        %v987 = vmax.f32 %v983, 0.0
        %v988 = vmax.f32 %v984, 0.0
        %v989 = vmax.f32 %v985, 0.0
        %s990 = scalar_lea.vmem %s437, 16
        %v991 = vld [vmem:[%s990] sm:$0xff]
        %v992 = vld [vmem:[%s990 + $0x8] sm:$0xff]
        %v993 = vunpack.c.l.bf16 %v991
        %v994 = vunpack.c.h.bf16 %v991
        %v995 = vunpack.c.l.bf16 %v992
        %v996 = vunpack.c.h.bf16 %v992
        %997 = vmatprep.subr.mxu0 %v987
        %998 = vmatpush1.msra.mxu0 %v986
        %999 = vmatprep.subr.mxu0 %v989
        %1000 = vmatpush1.msra.mxu0 %v988
        %1001 = vmatprep.subr.mxu0 0.0
        %1002 = vmatpush1.msra.mxu0 0.0
        %1003 = vmatprep.subr.mxu0 0.0
        %1004 = vmatpush1.msra.mxu0 0.0
        %1005 = vmatprep.subr.mxu0 0.0
        %1006 = vmatpush1.msra.mxu0 0.0
        %1007 = vmatprep.subr.mxu0 0.0
        %1008 = vmatpush1.msra.mxu0 0.0
        %1009 = vmatprep.subr.mxu0 0.0
        %1010 = vmatpush1.msra.mxu0 0.0
        %1011 = vmatprep.subr.mxu0 0.0
        %1012 = vmatpush1.msra.mxu0 0.0
        %1013 = vmatprep.subr.mxu0 0.0
        %1014 = vmatpush1.msra.mxu0 0.0
        %1015 = vmatprep.subr.mxu0 0.0
        %1016 = vmatpush1.msra.mxu0 0.0
        %1017 = vmatprep.subr.mxu0 0.0
        %1018 = vmatpush1.msra.mxu0 0.0
        %1019 = vmatprep.subr.mxu0 0.0
        %1020 = vmatpush1.msra.mxu0 0.0
        %1021 = vmatprep.subr.mxu0 0.0
        %1022 = vmatpush1.msra.mxu0 0.0
        %1023 = vmatprep.subr.mxu0 0.0
        %1024 = vmatpush1.msra.mxu0 0.0
        %1025 = vmatprep.subr.mxu0 0.0
        %1026 = vmatpush1.msra.mxu0 0.0
        %1027 = vmatprep.subr.mxu0 0.0
        %1028 = vmatpush1.msra.mxu0 0.0
        %1029 = vmatprep.subr.mxu0 0.0
        %1030 = vmatpush1.msra.mxu0 0.0
        %1031 = vmatprep.subr.mxu0 0.0
        %1032 = vmatpush1.msra.mxu0 0.0
        %1033 = vmatprep.subr.mxu0 0.0
        %1034 = vmatpush1.msra.mxu0 0.0
        %1035 = vmatprep.subr.mxu0 0.0
        %1036 = vmatpush1.msra.mxu0 0.0
        %1037 = vmatprep.subr.mxu0 0.0
        %1038 = vmatpush1.msra.mxu0 0.0
        %1039 = vmatprep.subr.mxu0 0.0
        %1040 = vmatpush1.msra.mxu0 0.0
        %1041 = vmatprep.subr.mxu0 0.0
        %1042 = vmatpush1.msra.mxu0 0.0
        %1043 = vmatprep.subr.mxu0 0.0
        %1044 = vmatpush1.msra.mxu0 0.0
        %1045 = vmatprep.subr.mxu0 0.0
        %1046 = vmatpush1.msra.mxu0 0.0
        %1047 = vmatprep.subr.mxu0 0.0
        %1048 = vmatpush1.msra.mxu0 0.0
        %1049 = vmatprep.subr.mxu0 0.0
        %1050 = vmatpush1.msra.mxu0 0.0
        %1051 = vmatprep.subr.mxu0 0.0
        %1052 = vmatpush1.msra.mxu0 0.0
        %1053 = vmatprep.subr.mxu0 0.0
        %1054 = vmatpush1.msra.mxu0 0.0
        %1055 = vmatprep.subr.mxu0 0.0
        %1056 = vmatpush1.msra.mxu0 0.0
        %1057 = vmatprep.subr.mxu0 0.0
        %1058 = vmatpush1.msra.mxu0 0.0
        %1059 = vmatprep.subr.mxu0 0.0
        %1060 = vmatpush1.msra.mxu0 0.0
        %1061 = vmatprep.mubr.f32.mxu0 0.0
        %1062 = vmatmul.mubr.f32.gmra.mrb[0].mxu0 %v705
        %v1063 = vpop.f32.mrb[0].mxu0
        %v1064 = vadd.f32 0.0, %v1063
        %v1065 = vpop.f32.mrb[0].mxu0
        %v1066 = vadd.f32 0.0, %v1065
        %1067 = vmatprep.mubr.f32.mxu0 0.0
        %1068 = vmatmul.mubr.f32.gmra.mrb[0].mxu0 %v707
        %v1069 = vpop.f32.mrb[0].mxu0
        %v1070 = vadd.f32 0.0, %v1069
        %v1071 = vpop.f32.mrb[0].mxu0
        %v1072 = vadd.f32 0.0, %v1071
        %1073 = vdwg.mxu0
        %1074 = vmatprep.subr.mxu0 %v994
        %1075 = vmatpush1.msra.mxu0 %v993
        %1076 = vmatprep.subr.mxu0 %v996
        %1077 = vmatpush1.msra.mxu0 %v995
        %1078 = vmatprep.subr.mxu0 0.0
        %1079 = vmatpush1.msra.mxu0 0.0
        %1080 = vmatprep.subr.mxu0 0.0
        %1081 = vmatpush1.msra.mxu0 0.0
        %1082 = vmatprep.subr.mxu0 0.0
        %1083 = vmatpush1.msra.mxu0 0.0
        %1084 = vmatprep.subr.mxu0 0.0
        %1085 = vmatpush1.msra.mxu0 0.0
        %1086 = vmatprep.subr.mxu0 0.0
        %1087 = vmatpush1.msra.mxu0 0.0
        %1088 = vmatprep.subr.mxu0 0.0
        %1089 = vmatpush1.msra.mxu0 0.0
        %1090 = vmatprep.subr.mxu0 0.0
        %1091 = vmatpush1.msra.mxu0 0.0
        %1092 = vmatprep.subr.mxu0 0.0
        %1093 = vmatpush1.msra.mxu0 0.0
        %1094 = vmatprep.subr.mxu0 0.0
        %1095 = vmatpush1.msra.mxu0 0.0
        %1096 = vmatprep.subr.mxu0 0.0
        %1097 = vmatpush1.msra.mxu0 0.0
        %1098 = vmatprep.subr.mxu0 0.0
        %1099 = vmatpush1.msra.mxu0 0.0
        %1100 = vmatprep.subr.mxu0 0.0
        %1101 = vmatpush1.msra.mxu0 0.0
        %1102 = vmatprep.subr.mxu0 0.0
        %1103 = vmatpush1.msra.mxu0 0.0
        %1104 = vmatprep.subr.mxu0 0.0
        %1105 = vmatpush1.msra.mxu0 0.0
        %1106 = vmatprep.subr.mxu0 0.0
        %1107 = vmatpush1.msra.mxu0 0.0
        %1108 = vmatprep.subr.mxu0 0.0
        %1109 = vmatpush1.msra.mxu0 0.0
        %1110 = vmatprep.subr.mxu0 0.0
        %1111 = vmatpush1.msra.mxu0 0.0
        %1112 = vmatprep.subr.mxu0 0.0
        %1113 = vmatpush1.msra.mxu0 0.0
        %1114 = vmatprep.subr.mxu0 0.0
        %1115 = vmatpush1.msra.mxu0 0.0
        %1116 = vmatprep.subr.mxu0 0.0
        %1117 = vmatpush1.msra.mxu0 0.0
        %1118 = vmatprep.subr.mxu0 0.0
        %1119 = vmatpush1.msra.mxu0 0.0
        %1120 = vmatprep.subr.mxu0 0.0
        %1121 = vmatpush1.msra.mxu0 0.0
        %1122 = vmatprep.subr.mxu0 0.0
        %1123 = vmatpush1.msra.mxu0 0.0
        %1124 = vmatprep.subr.mxu0 0.0
        %1125 = vmatpush1.msra.mxu0 0.0
        %1126 = vmatprep.subr.mxu0 0.0
        %1127 = vmatpush1.msra.mxu0 0.0
        %1128 = vmatprep.subr.mxu0 0.0
        %1129 = vmatpush1.msra.mxu0 0.0
        %1130 = vmatprep.subr.mxu0 0.0
        %1131 = vmatpush1.msra.mxu0 0.0
        %1132 = vmatprep.subr.mxu0 0.0
        %1133 = vmatpush1.msra.mxu0 0.0
        %1134 = vmatprep.subr.mxu0 0.0
        %1135 = vmatpush1.msra.mxu0 0.0
        %1136 = vmatprep.subr.mxu0 0.0
        %1137 = vmatpush1.msra.mxu0 0.0
        %1138 = vmatprep.mubr.f32.mxu0 0.0
        %1139 = vmatmul.mubr.f32.gmra.mrb[0].mxu0 %v786
        %v1140 = vpop.f32.mrb[0].mxu0
        %v1141 = vadd.f32 %v1064, %v1140
        %v1142 = vpop.f32.mrb[0].mxu0
        %v1143 = vadd.f32 %v1066, %v1142
        %1144 = vmatprep.mubr.f32.mxu0 0.0
        %1145 = vmatmul.mubr.f32.gmra.mrb[0].mxu0 %v788
        %v1146 = vpop.f32.mrb[0].mxu0
        %v1147 = vadd.f32 %v1070, %v1146
        %v1148 = vpop.f32.mrb[0].mxu0
        %v1149 = vadd.f32 %v1072, %v1148
        %1150 = vdwg.mxu0
        %v1151 = vadd.f32 %v1141, %v869
        %v1152 = vadd.f32 %v1143, %v869
        %v1153 = vadd.f32 %v1147, %v873
        %v1154 = vadd.f32 %v1149, %v873
        %v1155 = vmax.f32 %v1151, 0.0
        %v1156 = vmax.f32 %v1152, 0.0
        %v1157 = vmax.f32 %v1153, 0.0
        %v1158 = vmax.f32 %v1154, 0.0
        %s1159 = sld [smem:[#allocation3 + $0x1]]
        %v1160 = vstv %s1159
        %v1161 = vmul.f32 %v1160, %v1155
        %v1162 = vmul.f32 %v1160, %v1156
        %v1163 = vmul.f32 %v1160, %v1157
        %v1164 = vmul.f32 %v1160, %v1158
        %v1165 = vmax.f32 %v879, %v1155
        %v1166 = vmax.f32 %v880, %v1156
        %v1167 = vmax.f32 %v881, %v1157
        %v1168 = vmax.f32 %v882, %v1158
        %v1169 = vadd.f32 %v885, %v1161
        %v1170 = vadd.f32 %v886, %v1162
        %v1171 = vadd.f32 %v887, %v1163
        %v1172 = vadd.f32 %v888, %v1164
        %s1173 = scalar_lea.vmem %s427, 17
        %v1174 = vld [vmem:[%s1173] ss:$8 sm:$0x3]
        %s1175 = scalar_lea.vmem %s427, 18
        %v1176 = vld [vmem:[%s1175] ss:$8 sm:$0x3]
        %s1177 = scalar_lea.vmem %s427, 19
        %v1178 = vld [vmem:[%s1177] ss:$8 sm:$0x3]
        %v1179 = vsub.f32 %v459, %v1174
        %v1180 = vsub.f32 %v461, %v1176
        %v1181 = vsub.f32 %v463, %v1178
        %v1182 = vmul.f32 %v1179, %v1179
        %v1183 = vmul.f32 %v1180, %v1180
        %v1184 = vadd.f32 %v1182, %v1183
        %v1185 = vmul.f32 %v1181, %v1181
        %v1186 = vadd.f32 %v1184, %v1185
        %v1187 = vrsqrt.pop %v1186
        %v1188 = vmul.f32 %v1186, %v1187
        %vm1189 = vcmp.eq.f32.partialorder %v1186, inf
        %v1190 = vsel %vm1189, %v1186, %v1188
        %vm1191 = vcmp.eq.f32.partialorder %v1186, 0.0
        %v1192 = vand.u32 %v1186, 2147483648
        %v1193 = vsel %vm1191, %v1192, %v1190
        %v1195 = vlaneseq
        %v1196 = vshrl.u32 %v1195, 7
        %v1197 = vsub.s32 0, %v1196
        %v1198 = vrot.slane %v1193, %v1197
        %v1199 = vlaneseq
        %v1200 = vshrl.u32 %v1199, 7
        %v1201 = vsub.s32 1, %v1200
        %v1202 = vrot.slane %v1193, %v1201
        %v1205 = vmul.f32 %v582, %v1198
        %v1206 = vmul.f32 %v582, %v1202
        %v1207 = vmul.f32 %v586, %v1198
        %v1208 = vmul.f32 %v586, %v1202
        %v1209 = vadd.f32 %v555, %v1205
        %v1210 = vadd.f32 %v556, %v1206
        %v1211 = vadd.f32 %v557, %v1207
        %v1212 = vadd.f32 %v558, %v1208
        %v1214 = vlaneseq
        %v1215 = vshrl.u32 %v1214, 7
        %v1216 = vsub.s32 0, %v1215
        %v1217 = vrot.slane %v1174, %v1216
        %v1218 = vlaneseq
        %v1219 = vshrl.u32 %v1218, 7
        %v1220 = vsub.s32 1, %v1219
        %v1221 = vrot.slane %v1174, %v1220
        %v1224 = vmul.f32 %v609, %v1217
        %v1225 = vmul.f32 %v609, %v1221
        %v1226 = vmul.f32 %v613, %v1217
        %v1227 = vmul.f32 %v613, %v1221
        %v1228 = vadd.f32 %v1209, %v1224
        %v1229 = vadd.f32 %v1210, %v1225
        %v1230 = vadd.f32 %v1211, %v1226
        %v1231 = vadd.f32 %v1212, %v1227
        %v1233 = vlaneseq
        %v1234 = vshrl.u32 %v1233, 7
        %v1235 = vsub.s32 0, %v1234
        %v1236 = vrot.slane %v1176, %v1235
        %v1237 = vlaneseq
        %v1238 = vshrl.u32 %v1237, 7
        %v1239 = vsub.s32 1, %v1238
        %v1240 = vrot.slane %v1176, %v1239
        %v1243 = vmul.f32 %v636, %v1236
        %v1244 = vmul.f32 %v636, %v1240
        %v1245 = vmul.f32 %v640, %v1236
        %v1246 = vmul.f32 %v640, %v1240
        %v1247 = vadd.f32 %v1228, %v1243
        %v1248 = vadd.f32 %v1229, %v1244
        %v1249 = vadd.f32 %v1230, %v1245
        %v1250 = vadd.f32 %v1231, %v1246
        %v1252 = vlaneseq
        %v1253 = vshrl.u32 %v1252, 7
        %v1254 = vsub.s32 0, %v1253
        %v1255 = vrot.slane %v1178, %v1254
        %v1256 = vlaneseq
        %v1257 = vshrl.u32 %v1256, 7
        %v1258 = vsub.s32 1, %v1257
        %v1259 = vrot.slane %v1178, %v1258
        %v1262 = vmul.f32 %v663, %v1255
        %v1263 = vmul.f32 %v663, %v1259
        %v1264 = vmul.f32 %v667, %v1255
        %v1265 = vmul.f32 %v667, %v1259
        %v1266 = vadd.f32 %v1247, %v1262
        %v1267 = vadd.f32 %v1248, %v1263
        %v1268 = vadd.f32 %v1249, %v1264
        %v1269 = vadd.f32 %v1250, %v1265
        %v1270 = vmax.f32 %v1266, 0.0
        %v1271 = vmax.f32 %v1267, 0.0
        %v1272 = vmax.f32 %v1268, 0.0
        %v1273 = vmax.f32 %v1269, 0.0
        %s1274 = scalar_lea.vmem %s437, 32
        %v1275 = vld [vmem:[%s1274] sm:$0xff]
        %v1276 = vld [vmem:[%s1274 + $0x8] sm:$0xff]
        %v1277 = vunpack.c.l.bf16 %v1275
        %v1278 = vunpack.c.h.bf16 %v1275
        %v1279 = vunpack.c.l.bf16 %v1276
        %v1280 = vunpack.c.h.bf16 %v1276
        %1281 = vmatprep.subr.mxu0 %v1271
        %1282 = vmatpush1.msra.mxu0 %v1270
        %1283 = vmatprep.subr.mxu0 %v1273
        %1284 = vmatpush1.msra.mxu0 %v1272
        %1285 = vmatprep.subr.mxu0 0.0
        %1286 = vmatpush1.msra.mxu0 0.0
        %1287 = vmatprep.subr.mxu0 0.0
        %1288 = vmatpush1.msra.mxu0 0.0
        %1289 = vmatprep.subr.mxu0 0.0
        %1290 = vmatpush1.msra.mxu0 0.0
        %1291 = vmatprep.subr.mxu0 0.0
        %1292 = vmatpush1.msra.mxu0 0.0
        %1293 = vmatprep.subr.mxu0 0.0
        %1294 = vmatpush1.msra.mxu0 0.0
        %1295 = vmatprep.subr.mxu0 0.0
        %1296 = vmatpush1.msra.mxu0 0.0
        %1297 = vmatprep.subr.mxu0 0.0
        %1298 = vmatpush1.msra.mxu0 0.0
        %1299 = vmatprep.subr.mxu0 0.0
        %1300 = vmatpush1.msra.mxu0 0.0
        %1301 = vmatprep.subr.mxu0 0.0
        %1302 = vmatpush1.msra.mxu0 0.0
        %1303 = vmatprep.subr.mxu0 0.0
        %1304 = vmatpush1.msra.mxu0 0.0
        %1305 = vmatprep.subr.mxu0 0.0
        %1306 = vmatpush1.msra.mxu0 0.0
        %1307 = vmatprep.subr.mxu0 0.0
        %1308 = vmatpush1.msra.mxu0 0.0
        %1309 = vmatprep.subr.mxu0 0.0
        %1310 = vmatpush1.msra.mxu0 0.0
        %1311 = vmatprep.subr.mxu0 0.0
        %1312 = vmatpush1.msra.mxu0 0.0
        %1313 = vmatprep.subr.mxu0 0.0
        %1314 = vmatpush1.msra.mxu0 0.0
        %1315 = vmatprep.subr.mxu0 0.0
        %1316 = vmatpush1.msra.mxu0 0.0
        %1317 = vmatprep.subr.mxu0 0.0
        %1318 = vmatpush1.msra.mxu0 0.0
        %1319 = vmatprep.subr.mxu0 0.0
        %1320 = vmatpush1.msra.mxu0 0.0
        %1321 = vmatprep.subr.mxu0 0.0
        %1322 = vmatpush1.msra.mxu0 0.0
        %1323 = vmatprep.subr.mxu0 0.0
        %1324 = vmatpush1.msra.mxu0 0.0
        %1325 = vmatprep.subr.mxu0 0.0
        %1326 = vmatpush1.msra.mxu0 0.0
        %1327 = vmatprep.subr.mxu0 0.0
        %1328 = vmatpush1.msra.mxu0 0.0
        %1329 = vmatprep.subr.mxu0 0.0
        %1330 = vmatpush1.msra.mxu0 0.0
        %1331 = vmatprep.subr.mxu0 0.0
        %1332 = vmatpush1.msra.mxu0 0.0
        %1333 = vmatprep.subr.mxu0 0.0
        %1334 = vmatpush1.msra.mxu0 0.0
        %1335 = vmatprep.subr.mxu0 0.0
        %1336 = vmatpush1.msra.mxu0 0.0
        %1337 = vmatprep.subr.mxu0 0.0
        %1338 = vmatpush1.msra.mxu0 0.0
        %1339 = vmatprep.subr.mxu0 0.0
        %1340 = vmatpush1.msra.mxu0 0.0
        %1341 = vmatprep.subr.mxu0 0.0
        %1342 = vmatpush1.msra.mxu0 0.0
        %1343 = vmatprep.subr.mxu0 0.0
        %1344 = vmatpush1.msra.mxu0 0.0
        %1345 = vmatprep.mubr.f32.mxu0 0.0
        %1346 = vmatmul.mubr.f32.gmra.mrb[0].mxu0 %v705
        %v1347 = vpop.f32.mrb[0].mxu0
        %v1348 = vadd.f32 0.0, %v1347
        %v1349 = vpop.f32.mrb[0].mxu0
        %v1350 = vadd.f32 0.0, %v1349
        %1351 = vmatprep.mubr.f32.mxu0 0.0
        %1352 = vmatmul.mubr.f32.gmra.mrb[0].mxu0 %v707
        %v1353 = vpop.f32.mrb[0].mxu0
        %v1354 = vadd.f32 0.0, %v1353
        %v1355 = vpop.f32.mrb[0].mxu0
        %v1356 = vadd.f32 0.0, %v1355
        %1357 = vdwg.mxu0
        %1358 = vmatprep.subr.mxu0 %v1278
        %1359 = vmatpush1.msra.mxu0 %v1277
        %1360 = vmatprep.subr.mxu0 %v1280
        %1361 = vmatpush1.msra.mxu0 %v1279
        %1362 = vmatprep.subr.mxu0 0.0
        %1363 = vmatpush1.msra.mxu0 0.0
        %1364 = vmatprep.subr.mxu0 0.0
        %1365 = vmatpush1.msra.mxu0 0.0
        %1366 = vmatprep.subr.mxu0 0.0
        %1367 = vmatpush1.msra.mxu0 0.0
        %1368 = vmatprep.subr.mxu0 0.0
        %1369 = vmatpush1.msra.mxu0 0.0
        %1370 = vmatprep.subr.mxu0 0.0
        %1371 = vmatpush1.msra.mxu0 0.0
        %1372 = vmatprep.subr.mxu0 0.0
        %1373 = vmatpush1.msra.mxu0 0.0
        %1374 = vmatprep.subr.mxu0 0.0
        %1375 = vmatpush1.msra.mxu0 0.0
        %1376 = vmatprep.subr.mxu0 0.0
        %1377 = vmatpush1.msra.mxu0 0.0
        %1378 = vmatprep.subr.mxu0 0.0
        %1379 = vmatpush1.msra.mxu0 0.0
        %1380 = vmatprep.subr.mxu0 0.0
        %1381 = vmatpush1.msra.mxu0 0.0
        %1382 = vmatprep.subr.mxu0 0.0
        %1383 = vmatpush1.msra.mxu0 0.0
        %1384 = vmatprep.subr.mxu0 0.0
        %1385 = vmatpush1.msra.mxu0 0.0
        %1386 = vmatprep.subr.mxu0 0.0
        %1387 = vmatpush1.msra.mxu0 0.0
        %1388 = vmatprep.subr.mxu0 0.0
        %1389 = vmatpush1.msra.mxu0 0.0
        %1390 = vmatprep.subr.mxu0 0.0
        %1391 = vmatpush1.msra.mxu0 0.0
        %1392 = vmatprep.subr.mxu0 0.0
        %1393 = vmatpush1.msra.mxu0 0.0
        %1394 = vmatprep.subr.mxu0 0.0
        %1395 = vmatpush1.msra.mxu0 0.0
        %1396 = vmatprep.subr.mxu0 0.0
        %1397 = vmatpush1.msra.mxu0 0.0
        %1398 = vmatprep.subr.mxu0 0.0
        %1399 = vmatpush1.msra.mxu0 0.0
        %1400 = vmatprep.subr.mxu0 0.0
        %1401 = vmatpush1.msra.mxu0 0.0
        %1402 = vmatprep.subr.mxu0 0.0
        %1403 = vmatpush1.msra.mxu0 0.0
        %1404 = vmatprep.subr.mxu0 0.0
        %1405 = vmatpush1.msra.mxu0 0.0
        %1406 = vmatprep.subr.mxu0 0.0
        %1407 = vmatpush1.msra.mxu0 0.0
        %1408 = vmatprep.subr.mxu0 0.0
        %1409 = vmatpush1.msra.mxu0 0.0
        %1410 = vmatprep.subr.mxu0 0.0
        %1411 = vmatpush1.msra.mxu0 0.0
        %1412 = vmatprep.subr.mxu0 0.0
        %1413 = vmatpush1.msra.mxu0 0.0
        %1414 = vmatprep.subr.mxu0 0.0
        %1415 = vmatpush1.msra.mxu0 0.0
        %1416 = vmatprep.subr.mxu0 0.0
        %1417 = vmatpush1.msra.mxu0 0.0
        %1418 = vmatprep.subr.mxu0 0.0
        %1419 = vmatpush1.msra.mxu0 0.0
        %1420 = vmatprep.subr.mxu0 0.0
        %1421 = vmatpush1.msra.mxu0 0.0
        %1422 = vmatprep.mubr.f32.mxu0 0.0
        %1423 = vmatmul.mubr.f32.gmra.mrb[0].mxu0 %v786
        %v1424 = vpop.f32.mrb[0].mxu0
        %v1425 = vadd.f32 %v1348, %v1424
        %v1426 = vpop.f32.mrb[0].mxu0
        %v1427 = vadd.f32 %v1350, %v1426
        %1428 = vmatprep.mubr.f32.mxu0 0.0
        %1429 = vmatmul.mubr.f32.gmra.mrb[0].mxu0 %v788
        %v1430 = vpop.f32.mrb[0].mxu0
        %v1431 = vadd.f32 %v1354, %v1430
        %v1432 = vpop.f32.mrb[0].mxu0
        %v1433 = vadd.f32 %v1356, %v1432
        %1434 = vdwg.mxu0
        %v1435 = vadd.f32 %v1425, %v869
        %v1436 = vadd.f32 %v1427, %v869
        %v1437 = vadd.f32 %v1431, %v873
        %v1438 = vadd.f32 %v1433, %v873
        %v1439 = vmax.f32 %v1435, 0.0
        %v1440 = vmax.f32 %v1436, 0.0
        %v1441 = vmax.f32 %v1437, 0.0
        %v1442 = vmax.f32 %v1438, 0.0
        %s1443 = sld [smem:[#allocation3 + $0x2]]
        %v1444 = vstv %s1443
        %v1445 = vmul.f32 %v1444, %v1439
        %v1446 = vmul.f32 %v1444, %v1440
        %v1447 = vmul.f32 %v1444, %v1441
        %v1448 = vmul.f32 %v1444, %v1442
        %v1449 = vmax.f32 %v1165, %v1439
        %v1450 = vmax.f32 %v1166, %v1440
        %v1451 = vmax.f32 %v1167, %v1441
        %v1452 = vmax.f32 %v1168, %v1442
        %v1453 = vadd.f32 %v1169, %v1445
        %v1454 = vadd.f32 %v1170, %v1446
        %v1455 = vadd.f32 %v1171, %v1447
        %v1456 = vadd.f32 %v1172, %v1448
        %s1457 = scalar_lea.vmem %s427, 20
        %v1458 = vld [vmem:[%s1457] ss:$8 sm:$0x3]
        %s1459 = scalar_lea.vmem %s427, 21
        %v1460 = vld [vmem:[%s1459] ss:$8 sm:$0x3]
        %s1461 = scalar_lea.vmem %s427, 22
        %v1462 = vld [vmem:[%s1461] ss:$8 sm:$0x3]
        %v1463 = vsub.f32 %v459, %v1458
        %v1464 = vsub.f32 %v461, %v1460
        %v1465 = vsub.f32 %v463, %v1462
        %v1466 = vmul.f32 %v1463, %v1463
        %v1467 = vmul.f32 %v1464, %v1464
        %v1468 = vadd.f32 %v1466, %v1467
        %v1469 = vmul.f32 %v1465, %v1465
        %v1470 = vadd.f32 %v1468, %v1469
        %v1471 = vrsqrt.pop %v1470
        %v1472 = vmul.f32 %v1470, %v1471
        %vm1473 = vcmp.eq.f32.partialorder %v1470, inf
        %v1474 = vsel %vm1473, %v1470, %v1472
        %vm1475 = vcmp.eq.f32.partialorder %v1470, 0.0
        %v1476 = vand.u32 %v1470, 2147483648
        %v1477 = vsel %vm1475, %v1476, %v1474
        %v1479 = vlaneseq
        %v1480 = vshrl.u32 %v1479, 7
        %v1481 = vsub.s32 0, %v1480
        %v1482 = vrot.slane %v1477, %v1481
        %v1483 = vlaneseq
        %v1484 = vshrl.u32 %v1483, 7
        %v1485 = vsub.s32 1, %v1484
        %v1486 = vrot.slane %v1477, %v1485
        %v1489 = vmul.f32 %v582, %v1482
        %v1490 = vmul.f32 %v582, %v1486
        %v1491 = vmul.f32 %v586, %v1482
        %v1492 = vmul.f32 %v586, %v1486
        %v1493 = vadd.f32 %v555, %v1489
        %v1494 = vadd.f32 %v556, %v1490
        %v1495 = vadd.f32 %v557, %v1491
        %v1496 = vadd.f32 %v558, %v1492
        %v1498 = vlaneseq
        %v1499 = vshrl.u32 %v1498, 7
        %v1500 = vsub.s32 0, %v1499
        %v1501 = vrot.slane %v1458, %v1500
        %v1502 = vlaneseq
        %v1503 = vshrl.u32 %v1502, 7
        %v1504 = vsub.s32 1, %v1503
        %v1505 = vrot.slane %v1458, %v1504
        %v1508 = vmul.f32 %v609, %v1501
        %v1509 = vmul.f32 %v609, %v1505
        %v1510 = vmul.f32 %v613, %v1501
        %v1511 = vmul.f32 %v613, %v1505
        %v1512 = vadd.f32 %v1493, %v1508
        %v1513 = vadd.f32 %v1494, %v1509
        %v1514 = vadd.f32 %v1495, %v1510
        %v1515 = vadd.f32 %v1496, %v1511
        %v1517 = vlaneseq
        %v1518 = vshrl.u32 %v1517, 7
        %v1519 = vsub.s32 0, %v1518
        %v1520 = vrot.slane %v1460, %v1519
        %v1521 = vlaneseq
        %v1522 = vshrl.u32 %v1521, 7
        %v1523 = vsub.s32 1, %v1522
        %v1524 = vrot.slane %v1460, %v1523
        %v1527 = vmul.f32 %v636, %v1520
        %v1528 = vmul.f32 %v636, %v1524
        %v1529 = vmul.f32 %v640, %v1520
        %v1530 = vmul.f32 %v640, %v1524
        %v1531 = vadd.f32 %v1512, %v1527
        %v1532 = vadd.f32 %v1513, %v1528
        %v1533 = vadd.f32 %v1514, %v1529
        %v1534 = vadd.f32 %v1515, %v1530
        %v1536 = vlaneseq
        %v1537 = vshrl.u32 %v1536, 7
        %v1538 = vsub.s32 0, %v1537
        %v1539 = vrot.slane %v1462, %v1538
        %v1540 = vlaneseq
        %v1541 = vshrl.u32 %v1540, 7
        %v1542 = vsub.s32 1, %v1541
        %v1543 = vrot.slane %v1462, %v1542
        %v1546 = vmul.f32 %v663, %v1539
        %v1547 = vmul.f32 %v663, %v1543
        %v1548 = vmul.f32 %v667, %v1539
        %v1549 = vmul.f32 %v667, %v1543
        %v1550 = vadd.f32 %v1531, %v1546
        %v1551 = vadd.f32 %v1532, %v1547
        %v1552 = vadd.f32 %v1533, %v1548
        %v1553 = vadd.f32 %v1534, %v1549
        %v1554 = vmax.f32 %v1550, 0.0
        %v1555 = vmax.f32 %v1551, 0.0
        %v1556 = vmax.f32 %v1552, 0.0
        %v1557 = vmax.f32 %v1553, 0.0
        %s1558 = scalar_lea.vmem %s437, 48
        %v1559 = vld [vmem:[%s1558] sm:$0xff]
        %v1560 = vld [vmem:[%s1558 + $0x8] sm:$0xff]
        %v1561 = vunpack.c.l.bf16 %v1559
        %v1562 = vunpack.c.h.bf16 %v1559
        %v1563 = vunpack.c.l.bf16 %v1560
        %v1564 = vunpack.c.h.bf16 %v1560
        %1565 = vmatprep.subr.mxu0 %v1555
        %1566 = vmatpush1.msra.mxu0 %v1554
        %1567 = vmatprep.subr.mxu0 %v1557
        %1568 = vmatpush1.msra.mxu0 %v1556
        %1569 = vmatprep.subr.mxu0 0.0
        %1570 = vmatpush1.msra.mxu0 0.0
        %1571 = vmatprep.subr.mxu0 0.0
        %1572 = vmatpush1.msra.mxu0 0.0
        %1573 = vmatprep.subr.mxu0 0.0
        %1574 = vmatpush1.msra.mxu0 0.0
        %1575 = vmatprep.subr.mxu0 0.0
        %1576 = vmatpush1.msra.mxu0 0.0
        %1577 = vmatprep.subr.mxu0 0.0
        %1578 = vmatpush1.msra.mxu0 0.0
        %1579 = vmatprep.subr.mxu0 0.0
        %1580 = vmatpush1.msra.mxu0 0.0
        %1581 = vmatprep.subr.mxu0 0.0
        %1582 = vmatpush1.msra.mxu0 0.0
        %1583 = vmatprep.subr.mxu0 0.0
        %1584 = vmatpush1.msra.mxu0 0.0
        %1585 = vmatprep.subr.mxu0 0.0
        %1586 = vmatpush1.msra.mxu0 0.0
        %1587 = vmatprep.subr.mxu0 0.0
        %1588 = vmatpush1.msra.mxu0 0.0
        %1589 = vmatprep.subr.mxu0 0.0
        %1590 = vmatpush1.msra.mxu0 0.0
        %1591 = vmatprep.subr.mxu0 0.0
        %1592 = vmatpush1.msra.mxu0 0.0
        %1593 = vmatprep.subr.mxu0 0.0
        %1594 = vmatpush1.msra.mxu0 0.0
        %1595 = vmatprep.subr.mxu0 0.0
        %1596 = vmatpush1.msra.mxu0 0.0
        %1597 = vmatprep.subr.mxu0 0.0
        %1598 = vmatpush1.msra.mxu0 0.0
        %1599 = vmatprep.subr.mxu0 0.0
        %1600 = vmatpush1.msra.mxu0 0.0
        %1601 = vmatprep.subr.mxu0 0.0
        %1602 = vmatpush1.msra.mxu0 0.0
        %1603 = vmatprep.subr.mxu0 0.0
        %1604 = vmatpush1.msra.mxu0 0.0
        %1605 = vmatprep.subr.mxu0 0.0
        %1606 = vmatpush1.msra.mxu0 0.0
        %1607 = vmatprep.subr.mxu0 0.0
        %1608 = vmatpush1.msra.mxu0 0.0
        %1609 = vmatprep.subr.mxu0 0.0
        %1610 = vmatpush1.msra.mxu0 0.0
        %1611 = vmatprep.subr.mxu0 0.0
        %1612 = vmatpush1.msra.mxu0 0.0
        %1613 = vmatprep.subr.mxu0 0.0
        %1614 = vmatpush1.msra.mxu0 0.0
        %1615 = vmatprep.subr.mxu0 0.0
        %1616 = vmatpush1.msra.mxu0 0.0
        %1617 = vmatprep.subr.mxu0 0.0
        %1618 = vmatpush1.msra.mxu0 0.0
        %1619 = vmatprep.subr.mxu0 0.0
        %1620 = vmatpush1.msra.mxu0 0.0
        %1621 = vmatprep.subr.mxu0 0.0
        %1622 = vmatpush1.msra.mxu0 0.0
        %1623 = vmatprep.subr.mxu0 0.0
        %1624 = vmatpush1.msra.mxu0 0.0
        %1625 = vmatprep.subr.mxu0 0.0
        %1626 = vmatpush1.msra.mxu0 0.0
        %1627 = vmatprep.subr.mxu0 0.0
        %1628 = vmatpush1.msra.mxu0 0.0
        %1629 = vmatprep.mubr.f32.mxu0 0.0
        %1630 = vmatmul.mubr.f32.gmra.mrb[0].mxu0 %v705
        %v1631 = vpop.f32.mrb[0].mxu0
        %v1632 = vadd.f32 0.0, %v1631
        %v1633 = vpop.f32.mrb[0].mxu0
        %v1634 = vadd.f32 0.0, %v1633
        %1635 = vmatprep.mubr.f32.mxu0 0.0
        %1636 = vmatmul.mubr.f32.gmra.mrb[0].mxu0 %v707
        %v1637 = vpop.f32.mrb[0].mxu0
        %v1638 = vadd.f32 0.0, %v1637
        %v1639 = vpop.f32.mrb[0].mxu0
        %v1640 = vadd.f32 0.0, %v1639
        %1641 = vdwg.mxu0
        %1642 = vmatprep.subr.mxu0 %v1562
        %1643 = vmatpush1.msra.mxu0 %v1561
        %1644 = vmatprep.subr.mxu0 %v1564
        %1645 = vmatpush1.msra.mxu0 %v1563
        %1646 = vmatprep.subr.mxu0 0.0
        %1647 = vmatpush1.msra.mxu0 0.0
        %1648 = vmatprep.subr.mxu0 0.0
        %1649 = vmatpush1.msra.mxu0 0.0
        %1650 = vmatprep.subr.mxu0 0.0
        %1651 = vmatpush1.msra.mxu0 0.0
        %1652 = vmatprep.subr.mxu0 0.0
        %1653 = vmatpush1.msra.mxu0 0.0
        %1654 = vmatprep.subr.mxu0 0.0
        %1655 = vmatpush1.msra.mxu0 0.0
        %1656 = vmatprep.subr.mxu0 0.0
        %1657 = vmatpush1.msra.mxu0 0.0
        %1658 = vmatprep.subr.mxu0 0.0
        %1659 = vmatpush1.msra.mxu0 0.0
        %1660 = vmatprep.subr.mxu0 0.0
        %1661 = vmatpush1.msra.mxu0 0.0
        %1662 = vmatprep.subr.mxu0 0.0
        %1663 = vmatpush1.msra.mxu0 0.0
        %1664 = vmatprep.subr.mxu0 0.0
        %1665 = vmatpush1.msra.mxu0 0.0
        %1666 = vmatprep.subr.mxu0 0.0
        %1667 = vmatpush1.msra.mxu0 0.0
        %1668 = vmatprep.subr.mxu0 0.0
        %1669 = vmatpush1.msra.mxu0 0.0
        %1670 = vmatprep.subr.mxu0 0.0
        %1671 = vmatpush1.msra.mxu0 0.0
        %1672 = vmatprep.subr.mxu0 0.0
        %1673 = vmatpush1.msra.mxu0 0.0
        %1674 = vmatprep.subr.mxu0 0.0
        %1675 = vmatpush1.msra.mxu0 0.0
        %1676 = vmatprep.subr.mxu0 0.0
        %1677 = vmatpush1.msra.mxu0 0.0
        %1678 = vmatprep.subr.mxu0 0.0
        %1679 = vmatpush1.msra.mxu0 0.0
        %1680 = vmatprep.subr.mxu0 0.0
        %1681 = vmatpush1.msra.mxu0 0.0
        %1682 = vmatprep.subr.mxu0 0.0
        %1683 = vmatpush1.msra.mxu0 0.0
        %1684 = vmatprep.subr.mxu0 0.0
        %1685 = vmatpush1.msra.mxu0 0.0
        %1686 = vmatprep.subr.mxu0 0.0
        %1687 = vmatpush1.msra.mxu0 0.0
        %1688 = vmatprep.subr.mxu0 0.0
        %1689 = vmatpush1.msra.mxu0 0.0
        %1690 = vmatprep.subr.mxu0 0.0
        %1691 = vmatpush1.msra.mxu0 0.0
        %1692 = vmatprep.subr.mxu0 0.0
        %1693 = vmatpush1.msra.mxu0 0.0
        %1694 = vmatprep.subr.mxu0 0.0
        %1695 = vmatpush1.msra.mxu0 0.0
        %1696 = vmatprep.subr.mxu0 0.0
        %1697 = vmatpush1.msra.mxu0 0.0
        %1698 = vmatprep.subr.mxu0 0.0
        %1699 = vmatpush1.msra.mxu0 0.0
        %1700 = vmatprep.subr.mxu0 0.0
        %1701 = vmatpush1.msra.mxu0 0.0
        %1702 = vmatprep.subr.mxu0 0.0
        %1703 = vmatpush1.msra.mxu0 0.0
        %1704 = vmatprep.subr.mxu0 0.0
        %1705 = vmatpush1.msra.mxu0 0.0
        %1706 = vmatprep.mubr.f32.mxu0 0.0
        %1707 = vmatmul.mubr.f32.gmra.mrb[0].mxu0 %v786
        %v1708 = vpop.f32.mrb[0].mxu0
        %v1709 = vadd.f32 %v1632, %v1708
        %v1710 = vpop.f32.mrb[0].mxu0
        %v1711 = vadd.f32 %v1634, %v1710
        %1712 = vmatprep.mubr.f32.mxu0 0.0
        %1713 = vmatmul.mubr.f32.gmra.mrb[0].mxu0 %v788
        %v1714 = vpop.f32.mrb[0].mxu0
        %v1715 = vadd.f32 %v1638, %v1714
        %v1716 = vpop.f32.mrb[0].mxu0
        %v1717 = vadd.f32 %v1640, %v1716
        %1718 = vdwg.mxu0
        %v1719 = vadd.f32 %v1709, %v869
        %v1720 = vadd.f32 %v1711, %v869
        %v1721 = vadd.f32 %v1715, %v873
        %v1722 = vadd.f32 %v1717, %v873
        %v1723 = vmax.f32 %v1719, 0.0
        %v1724 = vmax.f32 %v1720, 0.0
        %v1725 = vmax.f32 %v1721, 0.0
        %v1726 = vmax.f32 %v1722, 0.0
        %s1727 = sld [smem:[#allocation3 + $0x3]]
        %v1728 = vstv %s1727
        %v1729 = vmul.f32 %v1728, %v1723
        %v1730 = vmul.f32 %v1728, %v1724
        %v1731 = vmul.f32 %v1728, %v1725
        %v1732 = vmul.f32 %v1728, %v1726
        %v1733 = vmax.f32 %v1449, %v1723
        %v1734 = vmax.f32 %v1450, %v1724
        %v1735 = vmax.f32 %v1451, %v1725
        %v1736 = vmax.f32 %v1452, %v1726
        %v1737 = vadd.f32 %v1453, %v1729
        %v1738 = vadd.f32 %v1454, %v1730
        %v1739 = vadd.f32 %v1455, %v1731
        %v1740 = vadd.f32 %v1456, %v1732
        %s1741 = scalar_lea.vmem %s427, 23
        %v1742 = vld [vmem:[%s1741] ss:$8 sm:$0x3]
        %s1743 = scalar_lea.vmem %s427, 32
        %v1744 = vld [vmem:[%s1743] ss:$8 sm:$0x3]
        %s1745 = scalar_lea.vmem %s427, 33
        %v1746 = vld [vmem:[%s1745] ss:$8 sm:$0x3]
        %v1747 = vsub.f32 %v459, %v1742
        %v1748 = vsub.f32 %v461, %v1744
        %v1749 = vsub.f32 %v463, %v1746
        %v1750 = vmul.f32 %v1747, %v1747
        %v1751 = vmul.f32 %v1748, %v1748
        %v1752 = vadd.f32 %v1750, %v1751
        %v1753 = vmul.f32 %v1749, %v1749
        %v1754 = vadd.f32 %v1752, %v1753
        %v1755 = vrsqrt.pop %v1754
        %v1756 = vmul.f32 %v1754, %v1755
        %vm1757 = vcmp.eq.f32.partialorder %v1754, inf
        %v1758 = vsel %vm1757, %v1754, %v1756
        %vm1759 = vcmp.eq.f32.partialorder %v1754, 0.0
        %v1760 = vand.u32 %v1754, 2147483648
        %v1761 = vsel %vm1759, %v1760, %v1758
        %v1763 = vlaneseq
        %v1764 = vshrl.u32 %v1763, 7
        %v1765 = vsub.s32 0, %v1764
        %v1766 = vrot.slane %v1761, %v1765
        %v1767 = vlaneseq
        %v1768 = vshrl.u32 %v1767, 7
        %v1769 = vsub.s32 1, %v1768
        %v1770 = vrot.slane %v1761, %v1769
        %v1773 = vmul.f32 %v582, %v1766
        %v1774 = vmul.f32 %v582, %v1770
        %v1775 = vmul.f32 %v586, %v1766
        %v1776 = vmul.f32 %v586, %v1770
        %v1777 = vadd.f32 %v555, %v1773
        %v1778 = vadd.f32 %v556, %v1774
        %v1779 = vadd.f32 %v557, %v1775
        %v1780 = vadd.f32 %v558, %v1776
        %v1782 = vlaneseq
        %v1783 = vshrl.u32 %v1782, 7
        %v1784 = vsub.s32 0, %v1783
        %v1785 = vrot.slane %v1742, %v1784
        %v1786 = vlaneseq
        %v1787 = vshrl.u32 %v1786, 7
        %v1788 = vsub.s32 1, %v1787
        %v1789 = vrot.slane %v1742, %v1788
        %v1792 = vmul.f32 %v609, %v1785
        %v1793 = vmul.f32 %v609, %v1789
        %v1794 = vmul.f32 %v613, %v1785
        %v1795 = vmul.f32 %v613, %v1789
        %v1796 = vadd.f32 %v1777, %v1792
        %v1797 = vadd.f32 %v1778, %v1793
        %v1798 = vadd.f32 %v1779, %v1794
        %v1799 = vadd.f32 %v1780, %v1795
        %v1801 = vlaneseq
        %v1802 = vshrl.u32 %v1801, 7
        %v1803 = vsub.s32 0, %v1802
        %v1804 = vrot.slane %v1744, %v1803
        %v1805 = vlaneseq
        %v1806 = vshrl.u32 %v1805, 7
        %v1807 = vsub.s32 1, %v1806
        %v1808 = vrot.slane %v1744, %v1807
        %v1811 = vmul.f32 %v636, %v1804
        %v1812 = vmul.f32 %v636, %v1808
        %v1813 = vmul.f32 %v640, %v1804
        %v1814 = vmul.f32 %v640, %v1808
        %v1815 = vadd.f32 %v1796, %v1811
        %v1816 = vadd.f32 %v1797, %v1812
        %v1817 = vadd.f32 %v1798, %v1813
        %v1818 = vadd.f32 %v1799, %v1814
        %v1820 = vlaneseq
        %v1821 = vshrl.u32 %v1820, 7
        %v1822 = vsub.s32 0, %v1821
        %v1823 = vrot.slane %v1746, %v1822
        %v1824 = vlaneseq
        %v1825 = vshrl.u32 %v1824, 7
        %v1826 = vsub.s32 1, %v1825
        %v1827 = vrot.slane %v1746, %v1826
        %v1830 = vmul.f32 %v663, %v1823
        %v1831 = vmul.f32 %v663, %v1827
        %v1832 = vmul.f32 %v667, %v1823
        %v1833 = vmul.f32 %v667, %v1827
        %v1834 = vadd.f32 %v1815, %v1830
        %v1835 = vadd.f32 %v1816, %v1831
        %v1836 = vadd.f32 %v1817, %v1832
        %v1837 = vadd.f32 %v1818, %v1833
        %v1838 = vmax.f32 %v1834, 0.0
        %v1839 = vmax.f32 %v1835, 0.0
        %v1840 = vmax.f32 %v1836, 0.0
        %v1841 = vmax.f32 %v1837, 0.0
        %s1842 = scalar_lea.vmem %s437, 64
        %v1843 = vld [vmem:[%s1842] sm:$0xff]
        %v1844 = vld [vmem:[%s1842 + $0x8] sm:$0xff]
        %v1845 = vunpack.c.l.bf16 %v1843
        %v1846 = vunpack.c.h.bf16 %v1843
        %v1847 = vunpack.c.l.bf16 %v1844
        %v1848 = vunpack.c.h.bf16 %v1844
        %1849 = vmatprep.subr.mxu0 %v1839
        %1850 = vmatpush1.msra.mxu0 %v1838
        %1851 = vmatprep.subr.mxu0 %v1841
        %1852 = vmatpush1.msra.mxu0 %v1840
        %1853 = vmatprep.subr.mxu0 0.0
        %1854 = vmatpush1.msra.mxu0 0.0
        %1855 = vmatprep.subr.mxu0 0.0
        %1856 = vmatpush1.msra.mxu0 0.0
        %1857 = vmatprep.subr.mxu0 0.0
        %1858 = vmatpush1.msra.mxu0 0.0
        %1859 = vmatprep.subr.mxu0 0.0
        %1860 = vmatpush1.msra.mxu0 0.0
        %1861 = vmatprep.subr.mxu0 0.0
        %1862 = vmatpush1.msra.mxu0 0.0
        %1863 = vmatprep.subr.mxu0 0.0
        %1864 = vmatpush1.msra.mxu0 0.0
        %1865 = vmatprep.subr.mxu0 0.0
        %1866 = vmatpush1.msra.mxu0 0.0
        %1867 = vmatprep.subr.mxu0 0.0
        %1868 = vmatpush1.msra.mxu0 0.0
        %1869 = vmatprep.subr.mxu0 0.0
        %1870 = vmatpush1.msra.mxu0 0.0
        %1871 = vmatprep.subr.mxu0 0.0
        %1872 = vmatpush1.msra.mxu0 0.0
        %1873 = vmatprep.subr.mxu0 0.0
        %1874 = vmatpush1.msra.mxu0 0.0
        %1875 = vmatprep.subr.mxu0 0.0
        %1876 = vmatpush1.msra.mxu0 0.0
        %1877 = vmatprep.subr.mxu0 0.0
        %1878 = vmatpush1.msra.mxu0 0.0
        %1879 = vmatprep.subr.mxu0 0.0
        %1880 = vmatpush1.msra.mxu0 0.0
        %1881 = vmatprep.subr.mxu0 0.0
        %1882 = vmatpush1.msra.mxu0 0.0
        %1883 = vmatprep.subr.mxu0 0.0
        %1884 = vmatpush1.msra.mxu0 0.0
        %1885 = vmatprep.subr.mxu0 0.0
        %1886 = vmatpush1.msra.mxu0 0.0
        %1887 = vmatprep.subr.mxu0 0.0
        %1888 = vmatpush1.msra.mxu0 0.0
        %1889 = vmatprep.subr.mxu0 0.0
        %1890 = vmatpush1.msra.mxu0 0.0
        %1891 = vmatprep.subr.mxu0 0.0
        %1892 = vmatpush1.msra.mxu0 0.0
        %1893 = vmatprep.subr.mxu0 0.0
        %1894 = vmatpush1.msra.mxu0 0.0
        %1895 = vmatprep.subr.mxu0 0.0
        %1896 = vmatpush1.msra.mxu0 0.0
        %1897 = vmatprep.subr.mxu0 0.0
        %1898 = vmatpush1.msra.mxu0 0.0
        %1899 = vmatprep.subr.mxu0 0.0
        %1900 = vmatpush1.msra.mxu0 0.0
        %1901 = vmatprep.subr.mxu0 0.0
        %1902 = vmatpush1.msra.mxu0 0.0
        %1903 = vmatprep.subr.mxu0 0.0
        %1904 = vmatpush1.msra.mxu0 0.0
        %1905 = vmatprep.subr.mxu0 0.0
        %1906 = vmatpush1.msra.mxu0 0.0
        %1907 = vmatprep.subr.mxu0 0.0
        %1908 = vmatpush1.msra.mxu0 0.0
        %1909 = vmatprep.subr.mxu0 0.0
        %1910 = vmatpush1.msra.mxu0 0.0
        %1911 = vmatprep.subr.mxu0 0.0
        %1912 = vmatpush1.msra.mxu0 0.0
        %1913 = vmatprep.mubr.f32.mxu0 0.0
        %1914 = vmatmul.mubr.f32.gmra.mrb[0].mxu0 %v705
        %v1915 = vpop.f32.mrb[0].mxu0
        %v1916 = vadd.f32 0.0, %v1915
        %v1917 = vpop.f32.mrb[0].mxu0
        %v1918 = vadd.f32 0.0, %v1917
        %1919 = vmatprep.mubr.f32.mxu0 0.0
        %1920 = vmatmul.mubr.f32.gmra.mrb[0].mxu0 %v707
        %v1921 = vpop.f32.mrb[0].mxu0
        %v1922 = vadd.f32 0.0, %v1921
        %v1923 = vpop.f32.mrb[0].mxu0
        %v1924 = vadd.f32 0.0, %v1923
        %1925 = vdwg.mxu0
        %1926 = vmatprep.subr.mxu0 %v1846
        %1927 = vmatpush1.msra.mxu0 %v1845
        %1928 = vmatprep.subr.mxu0 %v1848
        %1929 = vmatpush1.msra.mxu0 %v1847
        %1930 = vmatprep.subr.mxu0 0.0
        %1931 = vmatpush1.msra.mxu0 0.0
        %1932 = vmatprep.subr.mxu0 0.0
        %1933 = vmatpush1.msra.mxu0 0.0
        %1934 = vmatprep.subr.mxu0 0.0
        %1935 = vmatpush1.msra.mxu0 0.0
        %1936 = vmatprep.subr.mxu0 0.0
        %1937 = vmatpush1.msra.mxu0 0.0
        %1938 = vmatprep.subr.mxu0 0.0
        %1939 = vmatpush1.msra.mxu0 0.0
        %1940 = vmatprep.subr.mxu0 0.0
        %1941 = vmatpush1.msra.mxu0 0.0
        %1942 = vmatprep.subr.mxu0 0.0
        %1943 = vmatpush1.msra.mxu0 0.0
        %1944 = vmatprep.subr.mxu0 0.0
        %1945 = vmatpush1.msra.mxu0 0.0
        %1946 = vmatprep.subr.mxu0 0.0
        %1947 = vmatpush1.msra.mxu0 0.0
        %1948 = vmatprep.subr.mxu0 0.0
        %1949 = vmatpush1.msra.mxu0 0.0
        %1950 = vmatprep.subr.mxu0 0.0
        %1951 = vmatpush1.msra.mxu0 0.0
        %1952 = vmatprep.subr.mxu0 0.0
        %1953 = vmatpush1.msra.mxu0 0.0
        %1954 = vmatprep.subr.mxu0 0.0
        %1955 = vmatpush1.msra.mxu0 0.0
        %1956 = vmatprep.subr.mxu0 0.0
        %1957 = vmatpush1.msra.mxu0 0.0
        %1958 = vmatprep.subr.mxu0 0.0
        %1959 = vmatpush1.msra.mxu0 0.0
        %1960 = vmatprep.subr.mxu0 0.0
        %1961 = vmatpush1.msra.mxu0 0.0
        %1962 = vmatprep.subr.mxu0 0.0
        %1963 = vmatpush1.msra.mxu0 0.0
        %1964 = vmatprep.subr.mxu0 0.0
        %1965 = vmatpush1.msra.mxu0 0.0
        %1966 = vmatprep.subr.mxu0 0.0
        %1967 = vmatpush1.msra.mxu0 0.0
        %1968 = vmatprep.subr.mxu0 0.0
        %1969 = vmatpush1.msra.mxu0 0.0
        %1970 = vmatprep.subr.mxu0 0.0
        %1971 = vmatpush1.msra.mxu0 0.0
        %1972 = vmatprep.subr.mxu0 0.0
        %1973 = vmatpush1.msra.mxu0 0.0
        %1974 = vmatprep.subr.mxu0 0.0
        %1975 = vmatpush1.msra.mxu0 0.0
        %1976 = vmatprep.subr.mxu0 0.0
        %1977 = vmatpush1.msra.mxu0 0.0
        %1978 = vmatprep.subr.mxu0 0.0
        %1979 = vmatpush1.msra.mxu0 0.0
        %1980 = vmatprep.subr.mxu0 0.0
        %1981 = vmatpush1.msra.mxu0 0.0
        %1982 = vmatprep.subr.mxu0 0.0
        %1983 = vmatpush1.msra.mxu0 0.0
        %1984 = vmatprep.subr.mxu0 0.0
        %1985 = vmatpush1.msra.mxu0 0.0
        %1986 = vmatprep.subr.mxu0 0.0
        %1987 = vmatpush1.msra.mxu0 0.0
        %1988 = vmatprep.subr.mxu0 0.0
        %1989 = vmatpush1.msra.mxu0 0.0
        %1990 = vmatprep.mubr.f32.mxu0 0.0
        %1991 = vmatmul.mubr.f32.gmra.mrb[0].mxu0 %v786
        %v1992 = vpop.f32.mrb[0].mxu0
        %v1993 = vadd.f32 %v1916, %v1992
        %v1994 = vpop.f32.mrb[0].mxu0
        %v1995 = vadd.f32 %v1918, %v1994
        %1996 = vmatprep.mubr.f32.mxu0 0.0
        %1997 = vmatmul.mubr.f32.gmra.mrb[0].mxu0 %v788
        %v1998 = vpop.f32.mrb[0].mxu0
        %v1999 = vadd.f32 %v1922, %v1998
        %v2000 = vpop.f32.mrb[0].mxu0
        %v2001 = vadd.f32 %v1924, %v2000
        %2002 = vdwg.mxu0
        %v2003 = vadd.f32 %v1993, %v869
        %v2004 = vadd.f32 %v1995, %v869
        %v2005 = vadd.f32 %v1999, %v873
        %v2006 = vadd.f32 %v2001, %v873
        %v2007 = vmax.f32 %v2003, 0.0
        %v2008 = vmax.f32 %v2004, 0.0
        %v2009 = vmax.f32 %v2005, 0.0
        %v2010 = vmax.f32 %v2006, 0.0
        %s2011 = sld [smem:[#allocation3 + $0x4]]
        %v2012 = vstv %s2011
        %v2013 = vmul.f32 %v2012, %v2007
        %v2014 = vmul.f32 %v2012, %v2008
        %v2015 = vmul.f32 %v2012, %v2009
        %v2016 = vmul.f32 %v2012, %v2010
        %v2017 = vmax.f32 %v1733, %v2007
        %v2018 = vmax.f32 %v1734, %v2008
        %v2019 = vmax.f32 %v1735, %v2009
        %v2020 = vmax.f32 %v1736, %v2010
        %v2021 = vadd.f32 %v1737, %v2013
        %v2022 = vadd.f32 %v1738, %v2014
        %v2023 = vadd.f32 %v1739, %v2015
        %v2024 = vadd.f32 %v1740, %v2016
        %s2025 = scalar_lea.vmem %s427, 34
        %v2026 = vld [vmem:[%s2025] ss:$8 sm:$0x3]
        %s2027 = scalar_lea.vmem %s427, 35
        %v2028 = vld [vmem:[%s2027] ss:$8 sm:$0x3]
        %s2029 = scalar_lea.vmem %s427, 36
        %v2030 = vld [vmem:[%s2029] ss:$8 sm:$0x3]
        %v2031 = vsub.f32 %v459, %v2026
        %v2032 = vsub.f32 %v461, %v2028
        %v2033 = vsub.f32 %v463, %v2030
        %v2034 = vmul.f32 %v2031, %v2031
        %v2035 = vmul.f32 %v2032, %v2032
        %v2036 = vadd.f32 %v2034, %v2035
        %v2037 = vmul.f32 %v2033, %v2033
        %v2038 = vadd.f32 %v2036, %v2037
        %v2039 = vrsqrt.pop %v2038
        %v2040 = vmul.f32 %v2038, %v2039
        %vm2041 = vcmp.eq.f32.partialorder %v2038, inf
        %v2042 = vsel %vm2041, %v2038, %v2040
        %vm2043 = vcmp.eq.f32.partialorder %v2038, 0.0
        %v2044 = vand.u32 %v2038, 2147483648
        %v2045 = vsel %vm2043, %v2044, %v2042
        %v2047 = vlaneseq
        %v2048 = vshrl.u32 %v2047, 7
        %v2049 = vsub.s32 0, %v2048
        %v2050 = vrot.slane %v2045, %v2049
        %v2051 = vlaneseq
        %v2052 = vshrl.u32 %v2051, 7
        %v2053 = vsub.s32 1, %v2052
        %v2054 = vrot.slane %v2045, %v2053
        %v2057 = vmul.f32 %v582, %v2050
        %v2058 = vmul.f32 %v582, %v2054
        %v2059 = vmul.f32 %v586, %v2050
        %v2060 = vmul.f32 %v586, %v2054
        %v2061 = vadd.f32 %v555, %v2057
        %v2062 = vadd.f32 %v556, %v2058
        %v2063 = vadd.f32 %v557, %v2059
        %v2064 = vadd.f32 %v558, %v2060
        %v2066 = vlaneseq
        %v2067 = vshrl.u32 %v2066, 7
        %v2068 = vsub.s32 0, %v2067
        %v2069 = vrot.slane %v2026, %v2068
        %v2070 = vlaneseq
        %v2071 = vshrl.u32 %v2070, 7
        %v2072 = vsub.s32 1, %v2071
        %v2073 = vrot.slane %v2026, %v2072
        %v2076 = vmul.f32 %v609, %v2069
        %v2077 = vmul.f32 %v609, %v2073
        %v2078 = vmul.f32 %v613, %v2069
        %v2079 = vmul.f32 %v613, %v2073
        %v2080 = vadd.f32 %v2061, %v2076
        %v2081 = vadd.f32 %v2062, %v2077
        %v2082 = vadd.f32 %v2063, %v2078
        %v2083 = vadd.f32 %v2064, %v2079
        %v2085 = vlaneseq
        %v2086 = vshrl.u32 %v2085, 7
        %v2087 = vsub.s32 0, %v2086
        %v2088 = vrot.slane %v2028, %v2087
        %v2089 = vlaneseq
        %v2090 = vshrl.u32 %v2089, 7
        %v2091 = vsub.s32 1, %v2090
        %v2092 = vrot.slane %v2028, %v2091
        %v2095 = vmul.f32 %v636, %v2088
        %v2096 = vmul.f32 %v636, %v2092
        %v2097 = vmul.f32 %v640, %v2088
        %v2098 = vmul.f32 %v640, %v2092
        %v2099 = vadd.f32 %v2080, %v2095
        %v2100 = vadd.f32 %v2081, %v2096
        %v2101 = vadd.f32 %v2082, %v2097
        %v2102 = vadd.f32 %v2083, %v2098
        %v2104 = vlaneseq
        %v2105 = vshrl.u32 %v2104, 7
        %v2106 = vsub.s32 0, %v2105
        %v2107 = vrot.slane %v2030, %v2106
        %v2108 = vlaneseq
        %v2109 = vshrl.u32 %v2108, 7
        %v2110 = vsub.s32 1, %v2109
        %v2111 = vrot.slane %v2030, %v2110
        %v2114 = vmul.f32 %v663, %v2107
        %v2115 = vmul.f32 %v663, %v2111
        %v2116 = vmul.f32 %v667, %v2107
        %v2117 = vmul.f32 %v667, %v2111
        %v2118 = vadd.f32 %v2099, %v2114
        %v2119 = vadd.f32 %v2100, %v2115
        %v2120 = vadd.f32 %v2101, %v2116
        %v2121 = vadd.f32 %v2102, %v2117
        %v2122 = vmax.f32 %v2118, 0.0
        %v2123 = vmax.f32 %v2119, 0.0
        %v2124 = vmax.f32 %v2120, 0.0
        %v2125 = vmax.f32 %v2121, 0.0
        %s2126 = scalar_lea.vmem %s437, 80
        %v2127 = vld [vmem:[%s2126] sm:$0xff]
        %v2128 = vld [vmem:[%s2126 + $0x8] sm:$0xff]
        %v2129 = vunpack.c.l.bf16 %v2127
        %v2130 = vunpack.c.h.bf16 %v2127
        %v2131 = vunpack.c.l.bf16 %v2128
        %v2132 = vunpack.c.h.bf16 %v2128
        %2133 = vmatprep.subr.mxu0 %v2123
        %2134 = vmatpush1.msra.mxu0 %v2122
        %2135 = vmatprep.subr.mxu0 %v2125
        %2136 = vmatpush1.msra.mxu0 %v2124
        %2137 = vmatprep.subr.mxu0 0.0
        %2138 = vmatpush1.msra.mxu0 0.0
        %2139 = vmatprep.subr.mxu0 0.0
        %2140 = vmatpush1.msra.mxu0 0.0
        %2141 = vmatprep.subr.mxu0 0.0
        %2142 = vmatpush1.msra.mxu0 0.0
        %2143 = vmatprep.subr.mxu0 0.0
        %2144 = vmatpush1.msra.mxu0 0.0
        %2145 = vmatprep.subr.mxu0 0.0
        %2146 = vmatpush1.msra.mxu0 0.0
        %2147 = vmatprep.subr.mxu0 0.0
        %2148 = vmatpush1.msra.mxu0 0.0
        %2149 = vmatprep.subr.mxu0 0.0
        %2150 = vmatpush1.msra.mxu0 0.0
        %2151 = vmatprep.subr.mxu0 0.0
        %2152 = vmatpush1.msra.mxu0 0.0
        %2153 = vmatprep.subr.mxu0 0.0
        %2154 = vmatpush1.msra.mxu0 0.0
        %2155 = vmatprep.subr.mxu0 0.0
        %2156 = vmatpush1.msra.mxu0 0.0
        %2157 = vmatprep.subr.mxu0 0.0
        %2158 = vmatpush1.msra.mxu0 0.0
        %2159 = vmatprep.subr.mxu0 0.0
        %2160 = vmatpush1.msra.mxu0 0.0
        %2161 = vmatprep.subr.mxu0 0.0
        %2162 = vmatpush1.msra.mxu0 0.0
        %2163 = vmatprep.subr.mxu0 0.0
        %2164 = vmatpush1.msra.mxu0 0.0
        %2165 = vmatprep.subr.mxu0 0.0
        %2166 = vmatpush1.msra.mxu0 0.0
        %2167 = vmatprep.subr.mxu0 0.0
        %2168 = vmatpush1.msra.mxu0 0.0
        %2169 = vmatprep.subr.mxu0 0.0
        %2170 = vmatpush1.msra.mxu0 0.0
        %2171 = vmatprep.subr.mxu0 0.0
        %2172 = vmatpush1.msra.mxu0 0.0
        %2173 = vmatprep.subr.mxu0 0.0
        %2174 = vmatpush1.msra.mxu0 0.0
        %2175 = vmatprep.subr.mxu0 0.0
        %2176 = vmatpush1.msra.mxu0 0.0
        %2177 = vmatprep.subr.mxu0 0.0
        %2178 = vmatpush1.msra.mxu0 0.0
        %2179 = vmatprep.subr.mxu0 0.0
        %2180 = vmatpush1.msra.mxu0 0.0
        %2181 = vmatprep.subr.mxu0 0.0
        %2182 = vmatpush1.msra.mxu0 0.0
        %2183 = vmatprep.subr.mxu0 0.0
        %2184 = vmatpush1.msra.mxu0 0.0
        %2185 = vmatprep.subr.mxu0 0.0
        %2186 = vmatpush1.msra.mxu0 0.0
        %2187 = vmatprep.subr.mxu0 0.0
        %2188 = vmatpush1.msra.mxu0 0.0
        %2189 = vmatprep.subr.mxu0 0.0
        %2190 = vmatpush1.msra.mxu0 0.0
        %2191 = vmatprep.subr.mxu0 0.0
        %2192 = vmatpush1.msra.mxu0 0.0
        %2193 = vmatprep.subr.mxu0 0.0
        %2194 = vmatpush1.msra.mxu0 0.0
        %2195 = vmatprep.subr.mxu0 0.0
        %2196 = vmatpush1.msra.mxu0 0.0
        %2197 = vmatprep.mubr.f32.mxu0 0.0
        %2198 = vmatmul.mubr.f32.gmra.mrb[0].mxu0 %v705
        %v2199 = vpop.f32.mrb[0].mxu0
        %v2200 = vadd.f32 0.0, %v2199
        %v2201 = vpop.f32.mrb[0].mxu0
        %v2202 = vadd.f32 0.0, %v2201
        %2203 = vmatprep.mubr.f32.mxu0 0.0
        %2204 = vmatmul.mubr.f32.gmra.mrb[0].mxu0 %v707
        %v2205 = vpop.f32.mrb[0].mxu0
        %v2206 = vadd.f32 0.0, %v2205
        %v2207 = vpop.f32.mrb[0].mxu0
        %v2208 = vadd.f32 0.0, %v2207
        %2209 = vdwg.mxu0
        %2210 = vmatprep.subr.mxu0 %v2130
        %2211 = vmatpush1.msra.mxu0 %v2129
        %2212 = vmatprep.subr.mxu0 %v2132
        %2213 = vmatpush1.msra.mxu0 %v2131
        %2214 = vmatprep.subr.mxu0 0.0
        %2215 = vmatpush1.msra.mxu0 0.0
        %2216 = vmatprep.subr.mxu0 0.0
        %2217 = vmatpush1.msra.mxu0 0.0
        %2218 = vmatprep.subr.mxu0 0.0
        %2219 = vmatpush1.msra.mxu0 0.0
        %2220 = vmatprep.subr.mxu0 0.0
        %2221 = vmatpush1.msra.mxu0 0.0
        %2222 = vmatprep.subr.mxu0 0.0
        %2223 = vmatpush1.msra.mxu0 0.0
        %2224 = vmatprep.subr.mxu0 0.0
        %2225 = vmatpush1.msra.mxu0 0.0
        %2226 = vmatprep.subr.mxu0 0.0
        %2227 = vmatpush1.msra.mxu0 0.0
        %2228 = vmatprep.subr.mxu0 0.0
        %2229 = vmatpush1.msra.mxu0 0.0
        %2230 = vmatprep.subr.mxu0 0.0
        %2231 = vmatpush1.msra.mxu0 0.0
        %2232 = vmatprep.subr.mxu0 0.0
        %2233 = vmatpush1.msra.mxu0 0.0
        %2234 = vmatprep.subr.mxu0 0.0
        %2235 = vmatpush1.msra.mxu0 0.0
        %2236 = vmatprep.subr.mxu0 0.0
        %2237 = vmatpush1.msra.mxu0 0.0
        %2238 = vmatprep.subr.mxu0 0.0
        %2239 = vmatpush1.msra.mxu0 0.0
        %2240 = vmatprep.subr.mxu0 0.0
        %2241 = vmatpush1.msra.mxu0 0.0
        %2242 = vmatprep.subr.mxu0 0.0
        %2243 = vmatpush1.msra.mxu0 0.0
        %2244 = vmatprep.subr.mxu0 0.0
        %2245 = vmatpush1.msra.mxu0 0.0
        %2246 = vmatprep.subr.mxu0 0.0
        %2247 = vmatpush1.msra.mxu0 0.0
        %2248 = vmatprep.subr.mxu0 0.0
        %2249 = vmatpush1.msra.mxu0 0.0
        %2250 = vmatprep.subr.mxu0 0.0
        %2251 = vmatpush1.msra.mxu0 0.0
        %2252 = vmatprep.subr.mxu0 0.0
        %2253 = vmatpush1.msra.mxu0 0.0
        %2254 = vmatprep.subr.mxu0 0.0
        %2255 = vmatpush1.msra.mxu0 0.0
        %2256 = vmatprep.subr.mxu0 0.0
        %2257 = vmatpush1.msra.mxu0 0.0
        %2258 = vmatprep.subr.mxu0 0.0
        %2259 = vmatpush1.msra.mxu0 0.0
        %2260 = vmatprep.subr.mxu0 0.0
        %2261 = vmatpush1.msra.mxu0 0.0
        %2262 = vmatprep.subr.mxu0 0.0
        %2263 = vmatpush1.msra.mxu0 0.0
        %2264 = vmatprep.subr.mxu0 0.0
        %2265 = vmatpush1.msra.mxu0 0.0
        %2266 = vmatprep.subr.mxu0 0.0
        %2267 = vmatpush1.msra.mxu0 0.0
        %2268 = vmatprep.subr.mxu0 0.0
        %2269 = vmatpush1.msra.mxu0 0.0
        %2270 = vmatprep.subr.mxu0 0.0
        %2271 = vmatpush1.msra.mxu0 0.0
        %2272 = vmatprep.subr.mxu0 0.0
        %2273 = vmatpush1.msra.mxu0 0.0
        %2274 = vmatprep.mubr.f32.mxu0 0.0
        %2275 = vmatmul.mubr.f32.gmra.mrb[0].mxu0 %v786
        %v2276 = vpop.f32.mrb[0].mxu0
        %v2277 = vadd.f32 %v2200, %v2276
        %v2278 = vpop.f32.mrb[0].mxu0
        %v2279 = vadd.f32 %v2202, %v2278
        %2280 = vmatprep.mubr.f32.mxu0 0.0
        %2281 = vmatmul.mubr.f32.gmra.mrb[0].mxu0 %v788
        %v2282 = vpop.f32.mrb[0].mxu0
        %v2283 = vadd.f32 %v2206, %v2282
        %v2284 = vpop.f32.mrb[0].mxu0
        %v2285 = vadd.f32 %v2208, %v2284
        %2286 = vdwg.mxu0
        %v2287 = vadd.f32 %v2277, %v869
        %v2288 = vadd.f32 %v2279, %v869
        %v2289 = vadd.f32 %v2283, %v873
        %v2290 = vadd.f32 %v2285, %v873
        %v2291 = vmax.f32 %v2287, 0.0
        %v2292 = vmax.f32 %v2288, 0.0
        %v2293 = vmax.f32 %v2289, 0.0
        %v2294 = vmax.f32 %v2290, 0.0
        %s2295 = sld [smem:[#allocation3 + $0x5]]
        %v2296 = vstv %s2295
        %v2297 = vmul.f32 %v2296, %v2291
        %v2298 = vmul.f32 %v2296, %v2292
        %v2299 = vmul.f32 %v2296, %v2293
        %v2300 = vmul.f32 %v2296, %v2294
        %v2301 = vmax.f32 %v2017, %v2291
        %v2302 = vmax.f32 %v2018, %v2292
        %v2303 = vmax.f32 %v2019, %v2293
        %v2304 = vmax.f32 %v2020, %v2294
        %v2305 = vadd.f32 %v2021, %v2297
        %v2306 = vadd.f32 %v2022, %v2298
        %v2307 = vadd.f32 %v2023, %v2299
        %v2308 = vadd.f32 %v2024, %v2300
        %s2309 = scalar_lea.vmem %s427, 37
        %v2310 = vld [vmem:[%s2309] ss:$8 sm:$0x3]
        %s2311 = scalar_lea.vmem %s427, 38
        %v2312 = vld [vmem:[%s2311] ss:$8 sm:$0x3]
        %s2313 = scalar_lea.vmem %s427, 39
        %v2314 = vld [vmem:[%s2313] ss:$8 sm:$0x3]
        %v2315 = vsub.f32 %v459, %v2310
        %v2316 = vsub.f32 %v461, %v2312
        %v2317 = vsub.f32 %v463, %v2314
        %v2318 = vmul.f32 %v2315, %v2315
        %v2319 = vmul.f32 %v2316, %v2316
        %v2320 = vadd.f32 %v2318, %v2319
        %v2321 = vmul.f32 %v2317, %v2317
        %v2322 = vadd.f32 %v2320, %v2321
        %v2323 = vrsqrt.pop %v2322
        %v2324 = vmul.f32 %v2322, %v2323
        %vm2325 = vcmp.eq.f32.partialorder %v2322, inf
        %v2326 = vsel %vm2325, %v2322, %v2324
        %vm2327 = vcmp.eq.f32.partialorder %v2322, 0.0
        %v2328 = vand.u32 %v2322, 2147483648
        %v2329 = vsel %vm2327, %v2328, %v2326
        %v2331 = vlaneseq
        %v2332 = vshrl.u32 %v2331, 7
        %v2333 = vsub.s32 0, %v2332
        %v2334 = vrot.slane %v2329, %v2333
        %v2335 = vlaneseq
        %v2336 = vshrl.u32 %v2335, 7
        %v2337 = vsub.s32 1, %v2336
        %v2338 = vrot.slane %v2329, %v2337
        %v2341 = vmul.f32 %v582, %v2334
        %v2342 = vmul.f32 %v582, %v2338
        %v2343 = vmul.f32 %v586, %v2334
        %v2344 = vmul.f32 %v586, %v2338
        %v2345 = vadd.f32 %v555, %v2341
        %v2346 = vadd.f32 %v556, %v2342
        %v2347 = vadd.f32 %v557, %v2343
        %v2348 = vadd.f32 %v558, %v2344
        %v2350 = vlaneseq
        %v2351 = vshrl.u32 %v2350, 7
        %v2352 = vsub.s32 0, %v2351
        %v2353 = vrot.slane %v2310, %v2352
        %v2354 = vlaneseq
        %v2355 = vshrl.u32 %v2354, 7
        %v2356 = vsub.s32 1, %v2355
        %v2357 = vrot.slane %v2310, %v2356
        %v2360 = vmul.f32 %v609, %v2353
        %v2361 = vmul.f32 %v609, %v2357
        %v2362 = vmul.f32 %v613, %v2353
        %v2363 = vmul.f32 %v613, %v2357
        %v2364 = vadd.f32 %v2345, %v2360
        %v2365 = vadd.f32 %v2346, %v2361
        %v2366 = vadd.f32 %v2347, %v2362
        %v2367 = vadd.f32 %v2348, %v2363
        %v2369 = vlaneseq
        %v2370 = vshrl.u32 %v2369, 7
        %v2371 = vsub.s32 0, %v2370
        %v2372 = vrot.slane %v2312, %v2371
        %v2373 = vlaneseq
        %v2374 = vshrl.u32 %v2373, 7
        %v2375 = vsub.s32 1, %v2374
        %v2376 = vrot.slane %v2312, %v2375
        %v2379 = vmul.f32 %v636, %v2372
        %v2380 = vmul.f32 %v636, %v2376
        %v2381 = vmul.f32 %v640, %v2372
        %v2382 = vmul.f32 %v640, %v2376
        %v2383 = vadd.f32 %v2364, %v2379
        %v2384 = vadd.f32 %v2365, %v2380
        %v2385 = vadd.f32 %v2366, %v2381
        %v2386 = vadd.f32 %v2367, %v2382
        %v2388 = vlaneseq
        %v2389 = vshrl.u32 %v2388, 7
        %v2390 = vsub.s32 0, %v2389
        %v2391 = vrot.slane %v2314, %v2390
        %v2392 = vlaneseq
        %v2393 = vshrl.u32 %v2392, 7
        %v2394 = vsub.s32 1, %v2393
        %v2395 = vrot.slane %v2314, %v2394
        %v2398 = vmul.f32 %v663, %v2391
        %v2399 = vmul.f32 %v663, %v2395
        %v2400 = vmul.f32 %v667, %v2391
        %v2401 = vmul.f32 %v667, %v2395
        %v2402 = vadd.f32 %v2383, %v2398
        %v2403 = vadd.f32 %v2384, %v2399
        %v2404 = vadd.f32 %v2385, %v2400
        %v2405 = vadd.f32 %v2386, %v2401
        %v2406 = vmax.f32 %v2402, 0.0
        %v2407 = vmax.f32 %v2403, 0.0
        %v2408 = vmax.f32 %v2404, 0.0
        %v2409 = vmax.f32 %v2405, 0.0
        %s2410 = scalar_lea.vmem %s437, 96
        %v2411 = vld [vmem:[%s2410] sm:$0xff]
        %v2412 = vld [vmem:[%s2410 + $0x8] sm:$0xff]
        %v2413 = vunpack.c.l.bf16 %v2411
        %v2414 = vunpack.c.h.bf16 %v2411
        %v2415 = vunpack.c.l.bf16 %v2412
        %v2416 = vunpack.c.h.bf16 %v2412
        %2417 = vmatprep.subr.mxu0 %v2407
        %2418 = vmatpush1.msra.mxu0 %v2406
        %2419 = vmatprep.subr.mxu0 %v2409
        %2420 = vmatpush1.msra.mxu0 %v2408
        %2421 = vmatprep.subr.mxu0 0.0
        %2422 = vmatpush1.msra.mxu0 0.0
        %2423 = vmatprep.subr.mxu0 0.0
        %2424 = vmatpush1.msra.mxu0 0.0
        %2425 = vmatprep.subr.mxu0 0.0
        %2426 = vmatpush1.msra.mxu0 0.0
        %2427 = vmatprep.subr.mxu0 0.0
        %2428 = vmatpush1.msra.mxu0 0.0
        %2429 = vmatprep.subr.mxu0 0.0
        %2430 = vmatpush1.msra.mxu0 0.0
        %2431 = vmatprep.subr.mxu0 0.0
        %2432 = vmatpush1.msra.mxu0 0.0
        %2433 = vmatprep.subr.mxu0 0.0
        %2434 = vmatpush1.msra.mxu0 0.0
        %2435 = vmatprep.subr.mxu0 0.0
        %2436 = vmatpush1.msra.mxu0 0.0
        %2437 = vmatprep.subr.mxu0 0.0
        %2438 = vmatpush1.msra.mxu0 0.0
        %2439 = vmatprep.subr.mxu0 0.0
        %2440 = vmatpush1.msra.mxu0 0.0
        %2441 = vmatprep.subr.mxu0 0.0
        %2442 = vmatpush1.msra.mxu0 0.0
        %2443 = vmatprep.subr.mxu0 0.0
        %2444 = vmatpush1.msra.mxu0 0.0
        %2445 = vmatprep.subr.mxu0 0.0
        %2446 = vmatpush1.msra.mxu0 0.0
        %2447 = vmatprep.subr.mxu0 0.0
        %2448 = vmatpush1.msra.mxu0 0.0
        %2449 = vmatprep.subr.mxu0 0.0
        %2450 = vmatpush1.msra.mxu0 0.0
        %2451 = vmatprep.subr.mxu0 0.0
        %2452 = vmatpush1.msra.mxu0 0.0
        %2453 = vmatprep.subr.mxu0 0.0
        %2454 = vmatpush1.msra.mxu0 0.0
        %2455 = vmatprep.subr.mxu0 0.0
        %2456 = vmatpush1.msra.mxu0 0.0
        %2457 = vmatprep.subr.mxu0 0.0
        %2458 = vmatpush1.msra.mxu0 0.0
        %2459 = vmatprep.subr.mxu0 0.0
        %2460 = vmatpush1.msra.mxu0 0.0
        %2461 = vmatprep.subr.mxu0 0.0
        %2462 = vmatpush1.msra.mxu0 0.0
        %2463 = vmatprep.subr.mxu0 0.0
        %2464 = vmatpush1.msra.mxu0 0.0
        %2465 = vmatprep.subr.mxu0 0.0
        %2466 = vmatpush1.msra.mxu0 0.0
        %2467 = vmatprep.subr.mxu0 0.0
        %2468 = vmatpush1.msra.mxu0 0.0
        %2469 = vmatprep.subr.mxu0 0.0
        %2470 = vmatpush1.msra.mxu0 0.0
        %2471 = vmatprep.subr.mxu0 0.0
        %2472 = vmatpush1.msra.mxu0 0.0
        %2473 = vmatprep.subr.mxu0 0.0
        %2474 = vmatpush1.msra.mxu0 0.0
        %2475 = vmatprep.subr.mxu0 0.0
        %2476 = vmatpush1.msra.mxu0 0.0
        %2477 = vmatprep.subr.mxu0 0.0
        %2478 = vmatpush1.msra.mxu0 0.0
        %2479 = vmatprep.subr.mxu0 0.0
        %2480 = vmatpush1.msra.mxu0 0.0
        %2481 = vmatprep.mubr.f32.mxu0 0.0
        %2482 = vmatmul.mubr.f32.gmra.mrb[0].mxu0 %v705
        %v2483 = vpop.f32.mrb[0].mxu0
        %v2484 = vadd.f32 0.0, %v2483
        %v2485 = vpop.f32.mrb[0].mxu0
        %v2486 = vadd.f32 0.0, %v2485
        %2487 = vmatprep.mubr.f32.mxu0 0.0
        %2488 = vmatmul.mubr.f32.gmra.mrb[0].mxu0 %v707
        %v2489 = vpop.f32.mrb[0].mxu0
        %v2490 = vadd.f32 0.0, %v2489
        %v2491 = vpop.f32.mrb[0].mxu0
        %v2492 = vadd.f32 0.0, %v2491
        %2493 = vdwg.mxu0
        %2494 = vmatprep.subr.mxu0 %v2414
        %2495 = vmatpush1.msra.mxu0 %v2413
        %2496 = vmatprep.subr.mxu0 %v2416
        %2497 = vmatpush1.msra.mxu0 %v2415
        %2498 = vmatprep.subr.mxu0 0.0
        %2499 = vmatpush1.msra.mxu0 0.0
        %2500 = vmatprep.subr.mxu0 0.0
        %2501 = vmatpush1.msra.mxu0 0.0
        %2502 = vmatprep.subr.mxu0 0.0
        %2503 = vmatpush1.msra.mxu0 0.0
        %2504 = vmatprep.subr.mxu0 0.0
        %2505 = vmatpush1.msra.mxu0 0.0
        %2506 = vmatprep.subr.mxu0 0.0
        %2507 = vmatpush1.msra.mxu0 0.0
        %2508 = vmatprep.subr.mxu0 0.0
        %2509 = vmatpush1.msra.mxu0 0.0
        %2510 = vmatprep.subr.mxu0 0.0
        %2511 = vmatpush1.msra.mxu0 0.0
        %2512 = vmatprep.subr.mxu0 0.0
        %2513 = vmatpush1.msra.mxu0 0.0
        %2514 = vmatprep.subr.mxu0 0.0
        %2515 = vmatpush1.msra.mxu0 0.0
        %2516 = vmatprep.subr.mxu0 0.0
        %2517 = vmatpush1.msra.mxu0 0.0
        %2518 = vmatprep.subr.mxu0 0.0
        %2519 = vmatpush1.msra.mxu0 0.0
        %2520 = vmatprep.subr.mxu0 0.0
        %2521 = vmatpush1.msra.mxu0 0.0
        %2522 = vmatprep.subr.mxu0 0.0
        %2523 = vmatpush1.msra.mxu0 0.0
        %2524 = vmatprep.subr.mxu0 0.0
        %2525 = vmatpush1.msra.mxu0 0.0
        %2526 = vmatprep.subr.mxu0 0.0
        %2527 = vmatpush1.msra.mxu0 0.0
        %2528 = vmatprep.subr.mxu0 0.0
        %2529 = vmatpush1.msra.mxu0 0.0
        %2530 = vmatprep.subr.mxu0 0.0
        %2531 = vmatpush1.msra.mxu0 0.0
        %2532 = vmatprep.subr.mxu0 0.0
        %2533 = vmatpush1.msra.mxu0 0.0
        %2534 = vmatprep.subr.mxu0 0.0
        %2535 = vmatpush1.msra.mxu0 0.0
        %2536 = vmatprep.subr.mxu0 0.0
        %2537 = vmatpush1.msra.mxu0 0.0
        %2538 = vmatprep.subr.mxu0 0.0
        %2539 = vmatpush1.msra.mxu0 0.0
        %2540 = vmatprep.subr.mxu0 0.0
        %2541 = vmatpush1.msra.mxu0 0.0
        %2542 = vmatprep.subr.mxu0 0.0
        %2543 = vmatpush1.msra.mxu0 0.0
        %2544 = vmatprep.subr.mxu0 0.0
        %2545 = vmatpush1.msra.mxu0 0.0
        %2546 = vmatprep.subr.mxu0 0.0
        %2547 = vmatpush1.msra.mxu0 0.0
        %2548 = vmatprep.subr.mxu0 0.0
        %2549 = vmatpush1.msra.mxu0 0.0
        %2550 = vmatprep.subr.mxu0 0.0
        %2551 = vmatpush1.msra.mxu0 0.0
        %2552 = vmatprep.subr.mxu0 0.0
        %2553 = vmatpush1.msra.mxu0 0.0
        %2554 = vmatprep.subr.mxu0 0.0
        %2555 = vmatpush1.msra.mxu0 0.0
        %2556 = vmatprep.subr.mxu0 0.0
        %2557 = vmatpush1.msra.mxu0 0.0
        %2558 = vmatprep.mubr.f32.mxu0 0.0
        %2559 = vmatmul.mubr.f32.gmra.mrb[0].mxu0 %v786
        %v2560 = vpop.f32.mrb[0].mxu0
        %v2561 = vadd.f32 %v2484, %v2560
        %v2562 = vpop.f32.mrb[0].mxu0
        %v2563 = vadd.f32 %v2486, %v2562
        %2564 = vmatprep.mubr.f32.mxu0 0.0
        %2565 = vmatmul.mubr.f32.gmra.mrb[0].mxu0 %v788
        %v2566 = vpop.f32.mrb[0].mxu0
        %v2567 = vadd.f32 %v2490, %v2566
        %v2568 = vpop.f32.mrb[0].mxu0
        %v2569 = vadd.f32 %v2492, %v2568
        %2570 = vdwg.mxu0
        %v2571 = vadd.f32 %v2561, %v869
        %v2572 = vadd.f32 %v2563, %v869
        %v2573 = vadd.f32 %v2567, %v873
        %v2574 = vadd.f32 %v2569, %v873
        %v2575 = vmax.f32 %v2571, 0.0
        %v2576 = vmax.f32 %v2572, 0.0
        %v2577 = vmax.f32 %v2573, 0.0
        %v2578 = vmax.f32 %v2574, 0.0
        %s2579 = sld [smem:[#allocation3 + $0x6]]
        %v2580 = vstv %s2579
        %v2581 = vmul.f32 %v2580, %v2575
        %v2582 = vmul.f32 %v2580, %v2576
        %v2583 = vmul.f32 %v2580, %v2577
        %v2584 = vmul.f32 %v2580, %v2578
        %v2585 = vmax.f32 %v2301, %v2575
        %v2586 = vmax.f32 %v2302, %v2576
        %v2587 = vmax.f32 %v2303, %v2577
        %v2588 = vmax.f32 %v2304, %v2578
        %v2589 = vadd.f32 %v2305, %v2581
        %v2590 = vadd.f32 %v2306, %v2582
        %v2591 = vadd.f32 %v2307, %v2583
        %v2592 = vadd.f32 %v2308, %v2584
        %s2593 = scalar_lea.vmem %s427, 48
        %v2594 = vld [vmem:[%s2593] ss:$8 sm:$0x3]
        %s2595 = scalar_lea.vmem %s427, 49
        %v2596 = vld [vmem:[%s2595] ss:$8 sm:$0x3]
        %s2597 = scalar_lea.vmem %s427, 50
        %v2598 = vld [vmem:[%s2597] ss:$8 sm:$0x3]
        %v2599 = vsub.f32 %v459, %v2594
        %v2600 = vsub.f32 %v461, %v2596
        %v2601 = vsub.f32 %v463, %v2598
        %v2602 = vmul.f32 %v2599, %v2599
        %v2603 = vmul.f32 %v2600, %v2600
        %v2604 = vadd.f32 %v2602, %v2603
        %v2605 = vmul.f32 %v2601, %v2601
        %v2606 = vadd.f32 %v2604, %v2605
        %v2607 = vrsqrt.pop %v2606
        %v2608 = vmul.f32 %v2606, %v2607
        %vm2609 = vcmp.eq.f32.partialorder %v2606, inf
        %v2610 = vsel %vm2609, %v2606, %v2608
        %vm2611 = vcmp.eq.f32.partialorder %v2606, 0.0
        %v2612 = vand.u32 %v2606, 2147483648
        %v2613 = vsel %vm2611, %v2612, %v2610
        %v2615 = vlaneseq
        %v2616 = vshrl.u32 %v2615, 7
        %v2617 = vsub.s32 0, %v2616
        %v2618 = vrot.slane %v2613, %v2617
        %v2619 = vlaneseq
        %v2620 = vshrl.u32 %v2619, 7
        %v2621 = vsub.s32 1, %v2620
        %v2622 = vrot.slane %v2613, %v2621
        %v2625 = vmul.f32 %v582, %v2618
        %v2626 = vmul.f32 %v582, %v2622
        %v2627 = vmul.f32 %v586, %v2618
        %v2628 = vmul.f32 %v586, %v2622
        %v2629 = vadd.f32 %v555, %v2625
        %v2630 = vadd.f32 %v556, %v2626
        %v2631 = vadd.f32 %v557, %v2627
        %v2632 = vadd.f32 %v558, %v2628
        %v2634 = vlaneseq
        %v2635 = vshrl.u32 %v2634, 7
        %v2636 = vsub.s32 0, %v2635
        %v2637 = vrot.slane %v2594, %v2636
        %v2638 = vlaneseq
        %v2639 = vshrl.u32 %v2638, 7
        %v2640 = vsub.s32 1, %v2639
        %v2641 = vrot.slane %v2594, %v2640
        %v2644 = vmul.f32 %v609, %v2637
        %v2645 = vmul.f32 %v609, %v2641
        %v2646 = vmul.f32 %v613, %v2637
        %v2647 = vmul.f32 %v613, %v2641
        %v2648 = vadd.f32 %v2629, %v2644
        %v2649 = vadd.f32 %v2630, %v2645
        %v2650 = vadd.f32 %v2631, %v2646
        %v2651 = vadd.f32 %v2632, %v2647
        %v2653 = vlaneseq
        %v2654 = vshrl.u32 %v2653, 7
        %v2655 = vsub.s32 0, %v2654
        %v2656 = vrot.slane %v2596, %v2655
        %v2657 = vlaneseq
        %v2658 = vshrl.u32 %v2657, 7
        %v2659 = vsub.s32 1, %v2658
        %v2660 = vrot.slane %v2596, %v2659
        %v2663 = vmul.f32 %v636, %v2656
        %v2664 = vmul.f32 %v636, %v2660
        %v2665 = vmul.f32 %v640, %v2656
        %v2666 = vmul.f32 %v640, %v2660
        %v2667 = vadd.f32 %v2648, %v2663
        %v2668 = vadd.f32 %v2649, %v2664
        %v2669 = vadd.f32 %v2650, %v2665
        %v2670 = vadd.f32 %v2651, %v2666
        %v2672 = vlaneseq
        %v2673 = vshrl.u32 %v2672, 7
        %v2674 = vsub.s32 0, %v2673
        %v2675 = vrot.slane %v2598, %v2674
        %v2676 = vlaneseq
        %v2677 = vshrl.u32 %v2676, 7
        %v2678 = vsub.s32 1, %v2677
        %v2679 = vrot.slane %v2598, %v2678
        %v2682 = vmul.f32 %v663, %v2675
        %v2683 = vmul.f32 %v663, %v2679
        %v2684 = vmul.f32 %v667, %v2675
        %v2685 = vmul.f32 %v667, %v2679
        %v2686 = vadd.f32 %v2667, %v2682
        %v2687 = vadd.f32 %v2668, %v2683
        %v2688 = vadd.f32 %v2669, %v2684
        %v2689 = vadd.f32 %v2670, %v2685
        %v2690 = vmax.f32 %v2686, 0.0
        %v2691 = vmax.f32 %v2687, 0.0
        %v2692 = vmax.f32 %v2688, 0.0
        %v2693 = vmax.f32 %v2689, 0.0
        %s2694 = scalar_lea.vmem %s437, 112
        %v2695 = vld [vmem:[%s2694] sm:$0xff]
        %v2696 = vld [vmem:[%s2694 + $0x8] sm:$0xff]
        %v2697 = vunpack.c.l.bf16 %v2695
        %v2698 = vunpack.c.h.bf16 %v2695
        %v2699 = vunpack.c.l.bf16 %v2696
        %v2700 = vunpack.c.h.bf16 %v2696
        %2701 = vmatprep.subr.mxu0 %v2691
        %2702 = vmatpush1.msra.mxu0 %v2690
        %2703 = vmatprep.subr.mxu0 %v2693
        %2704 = vmatpush1.msra.mxu0 %v2692
        %2705 = vmatprep.subr.mxu0 0.0
        %2706 = vmatpush1.msra.mxu0 0.0
        %2707 = vmatprep.subr.mxu0 0.0
        %2708 = vmatpush1.msra.mxu0 0.0
        %2709 = vmatprep.subr.mxu0 0.0
        %2710 = vmatpush1.msra.mxu0 0.0
        %2711 = vmatprep.subr.mxu0 0.0
        %2712 = vmatpush1.msra.mxu0 0.0
        %2713 = vmatprep.subr.mxu0 0.0
        %2714 = vmatpush1.msra.mxu0 0.0
        %2715 = vmatprep.subr.mxu0 0.0
        %2716 = vmatpush1.msra.mxu0 0.0
        %2717 = vmatprep.subr.mxu0 0.0
        %2718 = vmatpush1.msra.mxu0 0.0
        %2719 = vmatprep.subr.mxu0 0.0
        %2720 = vmatpush1.msra.mxu0 0.0
        %2721 = vmatprep.subr.mxu0 0.0
        %2722 = vmatpush1.msra.mxu0 0.0
        %2723 = vmatprep.subr.mxu0 0.0
        %2724 = vmatpush1.msra.mxu0 0.0
        %2725 = vmatprep.subr.mxu0 0.0
        %2726 = vmatpush1.msra.mxu0 0.0
        %2727 = vmatprep.subr.mxu0 0.0
        %2728 = vmatpush1.msra.mxu0 0.0
        %2729 = vmatprep.subr.mxu0 0.0
        %2730 = vmatpush1.msra.mxu0 0.0
        %2731 = vmatprep.subr.mxu0 0.0
        %2732 = vmatpush1.msra.mxu0 0.0
        %2733 = vmatprep.subr.mxu0 0.0
        %2734 = vmatpush1.msra.mxu0 0.0
        %2735 = vmatprep.subr.mxu0 0.0
        %2736 = vmatpush1.msra.mxu0 0.0
        %2737 = vmatprep.subr.mxu0 0.0
        %2738 = vmatpush1.msra.mxu0 0.0
        %2739 = vmatprep.subr.mxu0 0.0
        %2740 = vmatpush1.msra.mxu0 0.0
        %2741 = vmatprep.subr.mxu0 0.0
        %2742 = vmatpush1.msra.mxu0 0.0
        %2743 = vmatprep.subr.mxu0 0.0
        %2744 = vmatpush1.msra.mxu0 0.0
        %2745 = vmatprep.subr.mxu0 0.0
        %2746 = vmatpush1.msra.mxu0 0.0
        %2747 = vmatprep.subr.mxu0 0.0
        %2748 = vmatpush1.msra.mxu0 0.0
        %2749 = vmatprep.subr.mxu0 0.0
        %2750 = vmatpush1.msra.mxu0 0.0
        %2751 = vmatprep.subr.mxu0 0.0
        %2752 = vmatpush1.msra.mxu0 0.0
        %2753 = vmatprep.subr.mxu0 0.0
        %2754 = vmatpush1.msra.mxu0 0.0
        %2755 = vmatprep.subr.mxu0 0.0
        %2756 = vmatpush1.msra.mxu0 0.0
        %2757 = vmatprep.subr.mxu0 0.0
        %2758 = vmatpush1.msra.mxu0 0.0
        %2759 = vmatprep.subr.mxu0 0.0
        %2760 = vmatpush1.msra.mxu0 0.0
        %2761 = vmatprep.subr.mxu0 0.0
        %2762 = vmatpush1.msra.mxu0 0.0
        %2763 = vmatprep.subr.mxu0 0.0
        %2764 = vmatpush1.msra.mxu0 0.0
        %2765 = vmatprep.mubr.f32.mxu0 0.0
        %2766 = vmatmul.mubr.f32.gmra.mrb[0].mxu0 %v705
        %v2767 = vpop.f32.mrb[0].mxu0
        %v2768 = vadd.f32 0.0, %v2767
        %v2769 = vpop.f32.mrb[0].mxu0
        %v2770 = vadd.f32 0.0, %v2769
        %2771 = vmatprep.mubr.f32.mxu0 0.0
        %2772 = vmatmul.mubr.f32.gmra.mrb[0].mxu0 %v707
        %v2773 = vpop.f32.mrb[0].mxu0
        %v2774 = vadd.f32 0.0, %v2773
        %v2775 = vpop.f32.mrb[0].mxu0
        %v2776 = vadd.f32 0.0, %v2775
        %2777 = vdwg.mxu0
        %2778 = vmatprep.subr.mxu0 %v2698
        %2779 = vmatpush1.msra.mxu0 %v2697
        %2780 = vmatprep.subr.mxu0 %v2700
        %2781 = vmatpush1.msra.mxu0 %v2699
        %2782 = vmatprep.subr.mxu0 0.0
        %2783 = vmatpush1.msra.mxu0 0.0
        %2784 = vmatprep.subr.mxu0 0.0
        %2785 = vmatpush1.msra.mxu0 0.0
        %2786 = vmatprep.subr.mxu0 0.0
        %2787 = vmatpush1.msra.mxu0 0.0
        %2788 = vmatprep.subr.mxu0 0.0
        %2789 = vmatpush1.msra.mxu0 0.0
        %2790 = vmatprep.subr.mxu0 0.0
        %2791 = vmatpush1.msra.mxu0 0.0
        %2792 = vmatprep.subr.mxu0 0.0
        %2793 = vmatpush1.msra.mxu0 0.0
        %2794 = vmatprep.subr.mxu0 0.0
        %2795 = vmatpush1.msra.mxu0 0.0
        %2796 = vmatprep.subr.mxu0 0.0
        %2797 = vmatpush1.msra.mxu0 0.0
        %2798 = vmatprep.subr.mxu0 0.0
        %2799 = vmatpush1.msra.mxu0 0.0
        %2800 = vmatprep.subr.mxu0 0.0
        %2801 = vmatpush1.msra.mxu0 0.0
        %2802 = vmatprep.subr.mxu0 0.0
        %2803 = vmatpush1.msra.mxu0 0.0
        %2804 = vmatprep.subr.mxu0 0.0
        %2805 = vmatpush1.msra.mxu0 0.0
        %2806 = vmatprep.subr.mxu0 0.0
        %2807 = vmatpush1.msra.mxu0 0.0
        %2808 = vmatprep.subr.mxu0 0.0
        %2809 = vmatpush1.msra.mxu0 0.0
        %2810 = vmatprep.subr.mxu0 0.0
        %2811 = vmatpush1.msra.mxu0 0.0
        %2812 = vmatprep.subr.mxu0 0.0
        %2813 = vmatpush1.msra.mxu0 0.0
        %2814 = vmatprep.subr.mxu0 0.0
        %2815 = vmatpush1.msra.mxu0 0.0
        %2816 = vmatprep.subr.mxu0 0.0
        %2817 = vmatpush1.msra.mxu0 0.0
        %2818 = vmatprep.subr.mxu0 0.0
        %2819 = vmatpush1.msra.mxu0 0.0
        %2820 = vmatprep.subr.mxu0 0.0
        %2821 = vmatpush1.msra.mxu0 0.0
        %2822 = vmatprep.subr.mxu0 0.0
        %2823 = vmatpush1.msra.mxu0 0.0
        %2824 = vmatprep.subr.mxu0 0.0
        %2825 = vmatpush1.msra.mxu0 0.0
        %2826 = vmatprep.subr.mxu0 0.0
        %2827 = vmatpush1.msra.mxu0 0.0
        %2828 = vmatprep.subr.mxu0 0.0
        %2829 = vmatpush1.msra.mxu0 0.0
        %2830 = vmatprep.subr.mxu0 0.0
        %2831 = vmatpush1.msra.mxu0 0.0
        %2832 = vmatprep.subr.mxu0 0.0
        %2833 = vmatpush1.msra.mxu0 0.0
        %2834 = vmatprep.subr.mxu0 0.0
        %2835 = vmatpush1.msra.mxu0 0.0
        %2836 = vmatprep.subr.mxu0 0.0
        %2837 = vmatpush1.msra.mxu0 0.0
        %2838 = vmatprep.subr.mxu0 0.0
        %2839 = vmatpush1.msra.mxu0 0.0
        %2840 = vmatprep.subr.mxu0 0.0
        %2841 = vmatpush1.msra.mxu0 0.0
        %2842 = vmatprep.mubr.f32.mxu0 0.0
        %2843 = vmatmul.mubr.f32.gmra.mrb[0].mxu0 %v786
        %v2844 = vpop.f32.mrb[0].mxu0
        %v2845 = vadd.f32 %v2768, %v2844
        %v2846 = vpop.f32.mrb[0].mxu0
        %v2847 = vadd.f32 %v2770, %v2846
        %2848 = vmatprep.mubr.f32.mxu0 0.0
        %2849 = vmatmul.mubr.f32.gmra.mrb[0].mxu0 %v788
        %v2850 = vpop.f32.mrb[0].mxu0
        %v2851 = vadd.f32 %v2774, %v2850
        %v2852 = vpop.f32.mrb[0].mxu0
        %v2853 = vadd.f32 %v2776, %v2852
        %2854 = vdwg.mxu0
        %v2855 = vadd.f32 %v2845, %v869
        %v2856 = vadd.f32 %v2847, %v869
        %v2857 = vadd.f32 %v2851, %v873
        %v2858 = vadd.f32 %v2853, %v873
        %v2859 = vmax.f32 %v2855, 0.0
        %v2860 = vmax.f32 %v2856, 0.0
        %v2861 = vmax.f32 %v2857, 0.0
        %v2862 = vmax.f32 %v2858, 0.0
        %s2863 = sld [smem:[#allocation3 + $0x7]]
        %v2864 = vstv %s2863
        %v2865 = vmul.f32 %v2864, %v2859
        %v2866 = vmul.f32 %v2864, %v2860
        %v2867 = vmul.f32 %v2864, %v2861
        %v2868 = vmul.f32 %v2864, %v2862
        %v2869 = vmax.f32 %v2585, %v2859
        %v2870 = vmax.f32 %v2586, %v2860
        %v2871 = vmax.f32 %v2587, %v2861
        %v2872 = vmax.f32 %v2588, %v2862
        %v2873 = vadd.f32 %v2589, %v2865
        %v2874 = vadd.f32 %v2590, %v2866
        %v2875 = vadd.f32 %v2591, %v2867
        %v2876 = vadd.f32 %v2592, %v2868
        %s2877 = sld [smem:[#allocation2]]
        %v2878 = vstv %s2877
        %v2879 = vadd.f32 %v2873, %v2878
        %v2880 = vadd.f32 %v2874, %v2878
        %v2881 = vadd.f32 %v2875, %v2878
        %v2882 = vadd.f32 %v2876, %v2878
        %v2883 = vmax.f32 %v2879, %v2881
        %v2884 = vrot.slane %v2883, 4
        %v2885 = vmax.f32 %v2883, %v2884
        %v2886 = vrot.slane %v2885, 2
        %v2887 = vmax.f32 %v2885, %v2886
        %v2888 = vrot.slane %v2887, 1
        %v2889 = vmax.f32 %v2887, %v2888
        %v2890 = vmax.f32 %v2880, %v2882
        %v2891 = vrot.slane %v2890, 4
        %v2892 = vmax.f32 %v2890, %v2891
        %v2893 = vrot.slane %v2892, 2
        %v2894 = vmax.f32 %v2892, %v2893
        %v2895 = vrot.slane %v2894, 1
        %v2896 = vmax.f32 %v2894, %v2895
        %v2897 = vsub.f32 %v2879, %v2889
        %v2898 = vsub.f32 %v2880, %v2896
        %v2899 = vsub.f32 %v2881, %v2889
        %v2900 = vsub.f32 %v2882, %v2896
        %v2901 = vmul.f32 %v2897, 1.442695
        %v2902 = vpow.pop %v2901
        %v2903 = vmul.f32 %v2898, 1.442695
        %v2904 = vpow.pop %v2903
        %v2905 = vmul.f32 %v2899, 1.442695
        %v2906 = vpow.pop %v2905
        %v2907 = vmul.f32 %v2900, 1.442695
        %v2908 = vpow.pop %v2907
        %v2909 = vadd.f32 %v2902, %v2906
        %v2910 = vrot.slane %v2909, 4
        %v2911 = vadd.f32 %v2909, %v2910
        %v2912 = vrot.slane %v2911, 2
        %v2913 = vadd.f32 %v2911, %v2912
        %v2914 = vrot.slane %v2913, 1
        %v2915 = vadd.f32 %v2913, %v2914
        %v2916 = vadd.f32 %v2904, %v2908
        %v2917 = vrot.slane %v2916, 4
        %v2918 = vadd.f32 %v2916, %v2917
        %v2919 = vrot.slane %v2918, 2
        %v2920 = vadd.f32 %v2918, %v2919
        %v2921 = vrot.slane %v2920, 1
        %v2922 = vadd.f32 %v2920, %v2921
        %v2923 = vrcp.pop %v2915
        %v2924 = vmul.f32 1.0, %v2923
        %v2925 = vrcp.pop %v2922
        %v2926 = vmul.f32 1.0, %v2925
        %v2927 = vmul.f32 %v2902, %v2924
        %v2928 = vmul.f32 %v2904, %v2926
        %v2929 = vmul.f32 %v2906, %v2924
        %v2930 = vmul.f32 %v2908, %v2926
        %v2931 = vadd.f32 %v2927, 1.0
        %v2932 = vadd.f32 %v2928, 1.0
        %v2933 = vadd.f32 %v2929, 1.0
        %v2934 = vadd.f32 %v2930, 1.0
        %v2935 = vmul.f32 %v2869, %v2931
        %v2936 = vmul.f32 %v2870, %v2932
        %v2937 = vmul.f32 %v2871, %v2933
        %v2938 = vmul.f32 %v2872, %v2934
        %v2939 = vld [vmem:[%s447] sm:$0xff]
        %v2940 = vld [vmem:[%s447 + $0x8] sm:$0xff]
        %v2941 = vunpack.c.l.bf16 %v2939
        %v2942 = vunpack.c.h.bf16 %v2939
        %v2943 = vunpack.c.l.bf16 %v2940
        %v2944 = vunpack.c.h.bf16 %v2940
        %v2945 = vld [vmem:[%s5] sm:$0xff]
        %v2946 = vld [vmem:[%s5 + $0x8] sm:$0xff]
        %v2947 = vld [vmem:[%s5 + $0x10] sm:$0xff]
        %v2948 = vld [vmem:[%s5 + $0x18] sm:$0xff]
        %v2949 = vld [vmem:[%s6] sm:$0xff]
        %v2950 = vld [vmem:[%s6 + $0x8] sm:$0xff]
        %v2951 = vld [vmem:[%s6 + $0x10] sm:$0xff]
        %v2952 = vld [vmem:[%s6 + $0x18] sm:$0xff]
        %2954 = vset.pattern.permute.xlu0 16
        %2955 = vperm.xlu0 %2954, %v2945
        %v2956 = vpop.permute.xlu0 %2955
        %2959 = vset.pattern.permute.xlu0 16
        %2960 = vperm.xlu0 %2959, %v2946
        %v2961 = vpop.permute.xlu0 %2960
        %2964 = vset.pattern.permute.xlu0 16
        %2965 = vperm.xlu0 %2964, %v2947
        %v2966 = vpop.permute.xlu0 %2965
        %2969 = vset.pattern.permute.xlu0 16
        %2970 = vperm.xlu0 %2969, %v2948
        %v2971 = vpop.permute.xlu0 %2970
        %v2973 = vsel %vm704, %v2945, 0
        %v2975 = vsel %vm704, %v2946, 0
        %v2977 = vsel %vm704, %v2947, 0
        %v2979 = vsel %vm704, %v2948, 0
        %2981 = vmatprep.subr.mxu0 %v2936
        %2982 = vmatpush1.msra.mxu0 %v2935
        %2983 = vmatprep.subr.mxu0 %v2938
        %2984 = vmatpush1.msra.mxu0 %v2937
        %2985 = vmatprep.subr.mxu0 0.0
        %2986 = vmatpush1.msra.mxu0 0.0
        %2987 = vmatprep.subr.mxu0 0.0
        %2988 = vmatpush1.msra.mxu0 0.0
        %2989 = vmatprep.subr.mxu0 0.0
        %2990 = vmatpush1.msra.mxu0 0.0
        %2991 = vmatprep.subr.mxu0 0.0
        %2992 = vmatpush1.msra.mxu0 0.0
        %2993 = vmatprep.subr.mxu0 0.0
        %2994 = vmatpush1.msra.mxu0 0.0
        %2995 = vmatprep.subr.mxu0 0.0
        %2996 = vmatpush1.msra.mxu0 0.0
        %2997 = vmatprep.subr.mxu0 0.0
        %2998 = vmatpush1.msra.mxu0 0.0
        %2999 = vmatprep.subr.mxu0 0.0
        %3000 = vmatpush1.msra.mxu0 0.0
        %3001 = vmatprep.subr.mxu0 0.0
        %3002 = vmatpush1.msra.mxu0 0.0
        %3003 = vmatprep.subr.mxu0 0.0
        %3004 = vmatpush1.msra.mxu0 0.0
        %3005 = vmatprep.subr.mxu0 0.0
        %3006 = vmatpush1.msra.mxu0 0.0
        %3007 = vmatprep.subr.mxu0 0.0
        %3008 = vmatpush1.msra.mxu0 0.0
        %3009 = vmatprep.subr.mxu0 0.0
        %3010 = vmatpush1.msra.mxu0 0.0
        %3011 = vmatprep.subr.mxu0 0.0
        %3012 = vmatpush1.msra.mxu0 0.0
        %3013 = vmatprep.subr.mxu0 0.0
        %3014 = vmatpush1.msra.mxu0 0.0
        %3015 = vmatprep.subr.mxu0 0.0
        %3016 = vmatpush1.msra.mxu0 0.0
        %3017 = vmatprep.subr.mxu0 0.0
        %3018 = vmatpush1.msra.mxu0 0.0
        %3019 = vmatprep.subr.mxu0 0.0
        %3020 = vmatpush1.msra.mxu0 0.0
        %3021 = vmatprep.subr.mxu0 0.0
        %3022 = vmatpush1.msra.mxu0 0.0
        %3023 = vmatprep.subr.mxu0 0.0
        %3024 = vmatpush1.msra.mxu0 0.0
        %3025 = vmatprep.subr.mxu0 0.0
        %3026 = vmatpush1.msra.mxu0 0.0
        %3027 = vmatprep.subr.mxu0 0.0
        %3028 = vmatpush1.msra.mxu0 0.0
        %3029 = vmatprep.subr.mxu0 0.0
        %3030 = vmatpush1.msra.mxu0 0.0
        %3031 = vmatprep.subr.mxu0 0.0
        %3032 = vmatpush1.msra.mxu0 0.0
        %3033 = vmatprep.subr.mxu0 0.0
        %3034 = vmatpush1.msra.mxu0 0.0
        %3035 = vmatprep.subr.mxu0 0.0
        %3036 = vmatpush1.msra.mxu0 0.0
        %3037 = vmatprep.subr.mxu0 0.0
        %3038 = vmatpush1.msra.mxu0 0.0
        %3039 = vmatprep.subr.mxu0 0.0
        %3040 = vmatpush1.msra.mxu0 0.0
        %3041 = vmatprep.subr.mxu0 0.0
        %3042 = vmatpush1.msra.mxu0 0.0
        %3043 = vmatprep.subr.mxu0 0.0
        %3044 = vmatpush1.msra.mxu0 0.0
        %3045 = vmatprep.mubr.f32.mxu0 0.0
        %3046 = vmatmul.mubr.f32.gmra.mrb[0].mxu0 %v2973
        %v3047 = vpop.f32.mrb[0].mxu0
        %v3048 = vadd.f32 %v2956, %v3047
        %v3049 = vpop.f32.mrb[0].mxu0
        %v3050 = vadd.f32 %v2956, %v3049
        %3051 = vmatprep.mubr.f32.mxu0 0.0
        %3052 = vmatmul.mubr.f32.gmra.mrb[0].mxu0 %v2975
        %v3053 = vpop.f32.mrb[0].mxu0
        %v3054 = vadd.f32 %v2961, %v3053
        %v3055 = vpop.f32.mrb[0].mxu0
        %v3056 = vadd.f32 %v2961, %v3055
        %3057 = vmatprep.mubr.f32.mxu0 0.0
        %3058 = vmatmul.mubr.f32.gmra.mrb[0].mxu0 %v2977
        %v3059 = vpop.f32.mrb[0].mxu0
        %v3060 = vadd.f32 %v2966, %v3059
        %v3061 = vpop.f32.mrb[0].mxu0
        %v3062 = vadd.f32 %v2966, %v3061
        %3063 = vmatprep.mubr.f32.mxu0 0.0
        %3064 = vmatmul.mubr.f32.gmra.mrb[0].mxu0 %v2979
        %v3065 = vpop.f32.mrb[0].mxu0
        %v3066 = vadd.f32 %v2971, %v3065
        %v3067 = vpop.f32.mrb[0].mxu0
        %v3068 = vadd.f32 %v2971, %v3067
        %3069 = vdwg.mxu0
        %v3070 = vmax.f32 %v3048, 0.0
        %v3071 = vmax.f32 %v3050, 0.0
        %v3072 = vmax.f32 %v3054, 0.0
        %v3073 = vmax.f32 %v3056, 0.0
        %v3074 = vmax.f32 %v3060, 0.0
        %v3075 = vmax.f32 %v3062, 0.0
        %v3076 = vmax.f32 %v3066, 0.0
        %v3077 = vmax.f32 %v3068, 0.0
        %3079 = vset.pattern.permute.xlu0 16
        %3080 = vperm.xlu0 %3079, %v2949
        %v3081 = vpop.permute.xlu0 %3080
        %3084 = vset.pattern.permute.xlu0 16
        %3085 = vperm.xlu0 %3084, %v2950
        %v3086 = vpop.permute.xlu0 %3085
        %3089 = vset.pattern.permute.xlu0 16
        %3090 = vperm.xlu0 %3089, %v2951
        %v3091 = vpop.permute.xlu0 %3090
        %3094 = vset.pattern.permute.xlu0 16
        %3095 = vperm.xlu0 %3094, %v2952
        %v3096 = vpop.permute.xlu0 %3095
        %v3098 = vsel %vm704, %v2949, 0
        %v3100 = vsel %vm704, %v2950, 0
        %v3102 = vsel %vm704, %v2951, 0
        %v3104 = vsel %vm704, %v2952, 0
        %3106 = vmatprep.subr.mxu0 %v2942
        %3107 = vmatpush1.msra.mxu0 %v2941
        %3108 = vmatprep.subr.mxu0 %v2944
        %3109 = vmatpush1.msra.mxu0 %v2943
        %3110 = vmatprep.subr.mxu0 0.0
        %3111 = vmatpush1.msra.mxu0 0.0
        %3112 = vmatprep.subr.mxu0 0.0
        %3113 = vmatpush1.msra.mxu0 0.0
        %3114 = vmatprep.subr.mxu0 0.0
        %3115 = vmatpush1.msra.mxu0 0.0
        %3116 = vmatprep.subr.mxu0 0.0
        %3117 = vmatpush1.msra.mxu0 0.0
        %3118 = vmatprep.subr.mxu0 0.0
        %3119 = vmatpush1.msra.mxu0 0.0
        %3120 = vmatprep.subr.mxu0 0.0
        %3121 = vmatpush1.msra.mxu0 0.0
        %3122 = vmatprep.subr.mxu0 0.0
        %3123 = vmatpush1.msra.mxu0 0.0
        %3124 = vmatprep.subr.mxu0 0.0
        %3125 = vmatpush1.msra.mxu0 0.0
        %3126 = vmatprep.subr.mxu0 0.0
        %3127 = vmatpush1.msra.mxu0 0.0
        %3128 = vmatprep.subr.mxu0 0.0
        %3129 = vmatpush1.msra.mxu0 0.0
        %3130 = vmatprep.subr.mxu0 0.0
        %3131 = vmatpush1.msra.mxu0 0.0
        %3132 = vmatprep.subr.mxu0 0.0
        %3133 = vmatpush1.msra.mxu0 0.0
        %3134 = vmatprep.subr.mxu0 0.0
        %3135 = vmatpush1.msra.mxu0 0.0
        %3136 = vmatprep.subr.mxu0 0.0
        %3137 = vmatpush1.msra.mxu0 0.0
        %3138 = vmatprep.subr.mxu0 0.0
        %3139 = vmatpush1.msra.mxu0 0.0
        %3140 = vmatprep.subr.mxu0 0.0
        %3141 = vmatpush1.msra.mxu0 0.0
        %3142 = vmatprep.subr.mxu0 0.0
        %3143 = vmatpush1.msra.mxu0 0.0
        %3144 = vmatprep.subr.mxu0 0.0
        %3145 = vmatpush1.msra.mxu0 0.0
        %3146 = vmatprep.subr.mxu0 0.0
        %3147 = vmatpush1.msra.mxu0 0.0
        %3148 = vmatprep.subr.mxu0 0.0
        %3149 = vmatpush1.msra.mxu0 0.0
        %3150 = vmatprep.subr.mxu0 0.0
        %3151 = vmatpush1.msra.mxu0 0.0
        %3152 = vmatprep.subr.mxu0 0.0
        %3153 = vmatpush1.msra.mxu0 0.0
        %3154 = vmatprep.subr.mxu0 0.0
        %3155 = vmatpush1.msra.mxu0 0.0
        %3156 = vmatprep.subr.mxu0 0.0
        %3157 = vmatpush1.msra.mxu0 0.0
        %3158 = vmatprep.subr.mxu0 0.0
        %3159 = vmatpush1.msra.mxu0 0.0
        %3160 = vmatprep.subr.mxu0 0.0
        %3161 = vmatpush1.msra.mxu0 0.0
        %3162 = vmatprep.subr.mxu0 0.0
        %3163 = vmatpush1.msra.mxu0 0.0
        %3164 = vmatprep.subr.mxu0 0.0
        %3165 = vmatpush1.msra.mxu0 0.0
        %3166 = vmatprep.subr.mxu0 0.0
        %3167 = vmatpush1.msra.mxu0 0.0
        %3168 = vmatprep.subr.mxu0 0.0
        %3169 = vmatpush1.msra.mxu0 0.0
        %3170 = vmatprep.mubr.f32.mxu0 0.0
        %3171 = vmatmul.mubr.f32.gmra.mrb[0].mxu0 %v3098
        %v3172 = vpop.f32.mrb[0].mxu0
        %v3173 = vadd.f32 %v3081, %v3172
        %v3174 = vpop.f32.mrb[0].mxu0
        %v3175 = vadd.f32 %v3081, %v3174
        %3176 = vmatprep.mubr.f32.mxu0 0.0
        %3177 = vmatmul.mubr.f32.gmra.mrb[0].mxu0 %v3100
        %v3178 = vpop.f32.mrb[0].mxu0
        %v3179 = vadd.f32 %v3086, %v3178
        %v3180 = vpop.f32.mrb[0].mxu0
        %v3181 = vadd.f32 %v3086, %v3180
        %3182 = vmatprep.mubr.f32.mxu0 0.0
        %3183 = vmatmul.mubr.f32.gmra.mrb[0].mxu0 %v3102
        %v3184 = vpop.f32.mrb[0].mxu0
        %v3185 = vadd.f32 %v3091, %v3184
        %v3186 = vpop.f32.mrb[0].mxu0
        %v3187 = vadd.f32 %v3091, %v3186
        %3188 = vmatprep.mubr.f32.mxu0 0.0
        %3189 = vmatmul.mubr.f32.gmra.mrb[0].mxu0 %v3104
        %v3190 = vpop.f32.mrb[0].mxu0
        %v3191 = vadd.f32 %v3096, %v3190
        %v3192 = vpop.f32.mrb[0].mxu0
        %v3193 = vadd.f32 %v3096, %v3192
        %3194 = vdwg.mxu0
        %v3195 = vmax.f32 %v3173, 0.0
        %v3196 = vmax.f32 %v3175, 0.0
        %v3197 = vmax.f32 %v3179, 0.0
        %v3198 = vmax.f32 %v3181, 0.0
        %v3199 = vmax.f32 %v3185, 0.0
        %v3200 = vmax.f32 %v3187, 0.0
        %v3201 = vmax.f32 %v3191, 0.0
        %v3202 = vmax.f32 %v3193, 0.0
        %v3203 = vadd.f32 %v3070, %v3195
        %v3204 = vadd.f32 %v3071, %v3196
        %v3205 = vadd.f32 %v3072, %v3197
        %v3206 = vadd.f32 %v3073, %v3198
        %v3207 = vadd.f32 %v3074, %v3199
        %v3208 = vadd.f32 %v3075, %v3200
        %v3209 = vadd.f32 %v3076, %v3201
        %v3210 = vadd.f32 %v3077, %v3202
        %3211 = vst [vmem:[%s457] sm:$0xff] %v3203
        %3212 = vst [vmem:[%s457 + $0x8] sm:$0xff] %v3204
        %3213 = vst [vmem:[%s457 + $0x10] sm:$0xff] %v3205
        %3214 = vst [vmem:[%s457 + $0x18] sm:$0xff] %v3206
        %3215 = vst [vmem:[%s457 + $0x20] sm:$0xff] %v3207
        %3216 = vst [vmem:[%s457 + $0x28] sm:$0xff] %v3208
        %3217 = vst [vmem:[%s457 + $0x30] sm:$0xff] %v3209
        %3218 = vst [vmem:[%s457 + $0x38] sm:$0xff] %v3210
        %s3219 = smul.u32 2, %s27
        %p3220 = scmp.lt.s32.totalorder %s26, 1
        %s3221 = scalar_select %p3220, %s26, 1
        %p3222 = scmp.lt.s32.totalorder %s3219, 1
        %s3223 = scalar_select %p3222, %s3219, 1
        %s3224 = smul.addr %s3221, 8
        %s3225 = sadd.s32 %s3223, %s3224
        %s3226 = smul.addr %s3225, 8
        %s3227 = scalar_lea.vmem %s9, %s3226
        // Predicated region
        $region61: #{lfa_forward.5} parent=55 // pred_check
          %p3228 = pneg %p264
        $region62: #{lfa_forward.5} parent=55 // pred_check_branch
          %3230 = sbr.rel (%p3228) target = $region64
        $region63: #{lfa_forward.5} parent=55 // pred_region
          %s3231 = smul.u32 2, %s27
        $region64: #{lfa_forward.5} parent=55 // pred_fallthru
          _
      $region56: #{lfa_forward.5} parent=5 // pred_fallthru
        _
      %p3232 = scmp.le.s32.totalorder 2, %s17
      // Predicated region
      $region65: #{lfa_forward.5} parent=5 // pred_check
        %p3233 = pneg %p3232
      $region66: #{lfa_forward.5} parent=5 // pred_check_branch
        %3235 = sbr.rel (%p3233) target = $region68
      $region67: #{lfa_forward.5} parent=5 // pred_region
        %s3236 = ssub.s32 %s17, 2
        // Predicated region
        $region69: #{lfa_forward.5} parent=67 // pred_check
          %p3237 = pneg %p270
        $region70: #{lfa_forward.5} parent=67 // pred_check_branch
          %3239 = sbr.rel (%p3237) target = $region72
        $region71: #{lfa_forward.5} parent=67 // pred_region
          %s3240 = smul.u32 2, %s29
          %p3241 = scmp.lt.s32.totalorder %s28, 1
          %s3242 = scalar_select %p3241, %s28, 1
          %p3243 = scmp.lt.s32.totalorder %s3240, 1
          %s3244 = scalar_select %p3243, %s3240, 1
          %s3245 = smul.addr %s3242, 8
          %s3246 = sadd.s32 %s3244, %s3245
          %s3247 = smul.addr %s3246, 8
          %s3248 = scalar_lea.vmem %s9, %s3247
        $region72: #{lfa_forward.5} parent=67 // pred_fallthru
          _
      $region68: #{lfa_forward.5} parent=5 // pred_fallthru
        _
    $region6: #{lfa_forward.5} parent=1 // loop_footer
      %s21 = sadd.s32 1, %s17
    $region7: #{lfa_forward.5} parent=1 // loop_footer_branch
      %16 = sbr.rel target = $region3
    $region8: #{lfa_forward.5} parent=1 // loop_exit
      _
    %3249 = vsyncpa [#allocation4], 1
    %s3250 = scalar_lea.sflag [#allocation4], 1
    %3251 = vsyncpa %s3250, 1

</llo_original>
